<compile_context>
chip_gen: v7x
topology: tpu7x:2x2x1
jax: 0.10.0
libtpu: 0.0.40
codegen_flags: <defaults>
</compile_context>

<pallas_src>
import math
from functools import partial

import jax
import jax.numpy as jnp
from jax.experimental import pallas as pl
from jax.experimental.pallas import tpu as pltpu


# ------------------------------ tile selection ------------------------------ #

def _pick_q_tile(n, candidates=(512, 256, 128, 64, 32, 16, 8)):
    """Largest power-of-two tile (<=512) dividing n; whole array as fallback."""
    for t in candidates:
        if n % t == 0:
            return t
    return n


# ------------------------------ kernel bodies ------------------------------- #

def _attend_and_project(x_tile_bf16, qw_ref, kv_sc, pw_ref, pb_ref, attn_sc, o_ref,
                        num_heads):
    """Multi-head attention for one q tile + output projection.

    x_tile_bf16: (TQ, C) bf16 tokens.
    kv_sc:       (Nkv, 2C) bf16 VMEM scratch holding [K | V] in head-major columns.
    Result written to o_ref[0] as a single (TQ, C) token-layout store.
    """
    TQ, C = x_tile_bf16.shape
    d = C // num_heads
    # q projection (softmax scale already folded into qw on the host)
    q = jnp.dot(x_tile_bf16, qw_ref[...],
                preferred_element_type=jnp.float32).astype(jnp.bfloat16)
    kv = kv_sc[...]                                        # (Nkv, 2C) bf16
    for h in range(num_heads):                             # static unroll over heads
        lo = h * d
        qh = q[:, lo:lo + d]                               # (TQ, d)
        kh = kv[:, lo:lo + d]                              # (Nkv, d)
        vh = kv[:, C + lo:C + lo + d]                      # (Nkv, d)
        # contract head dims directly: no in-kernel transpose of K
        s = jax.lax.dot_general(qh, kh, (((1,), (1,)), ((), ())),
                                preferred_element_type=jnp.float32)
        s = s - jnp.max(s, axis=-1, keepdims=True)
        p = jnp.exp(s)
        p = p * pl.reciprocal(jnp.sum(p, axis=-1, keepdims=True), approx=True)
        pv = jnp.dot(p.astype(jnp.bfloat16), vh,
                     preferred_element_type=jnp.float32)   # (TQ, d)
        attn_sc[:, lo:lo + d] = pv                         # per-head store, no concat
    # output projection: one full-C contraction + single lane-dense store
    out = jnp.dot(attn_sc[...].astype(jnp.bfloat16), pw_ref[...],
                  preferred_element_type=jnp.float32) + pb_ref[...]
    o_ref[0] = out.astype(o_ref.dtype)


def _fused_attn_sr_kernel(num_heads, sr,
                          x_ref, xsr_ref, w3d_ref, srb_ref, g_ref, beta_ref,
                          qw_ref, kvw_ref, pw_ref, pb_ref,
                          o_ref, kv_sc, attn_sc):
    """sr_ratio > 1: sr-conv + LayerNorm + kv-proj once per batch, then attention.

    x_ref:   (1, TQ, C)           current q tile (streamed per grid step)
    xsr_ref: (Ho, sr, Wo, sr*C)   whole batch in conv-friendly layout (resident per b)
    kv_sc:   (Ho*Wo, 2C) bf16     [K | V] for the current batch
    """
    qi = pl.program_id(1)
    C = o_ref.shape[2]
    Ho, Wo, srC = xsr_ref.shape[0], xsr_ref.shape[2], xsr_ref.shape[3]
    Nkv = Ho * Wo

    @pl.when(qi == 0)
    def _compute_kv():
        acc = jnp.zeros((Nkv, C), jnp.float32)
        for dy in range(sr):                               # static unroll, big matmuls
            xd = xsr_ref[:, dy].reshape(Nkv, srC).astype(jnp.bfloat16)
            acc = acc + jnp.dot(xd, w3d_ref[dy],
                                preferred_element_type=jnp.float32)
        acc = acc + srb_ref[...]                           # conv bias
        mu = jnp.mean(acc, axis=-1, keepdims=True)         # LayerNorm (eps=1e-5)
        var = jnp.mean(jnp.square(acc - mu), axis=-1, keepdims=True)
        y = (acc - mu) * jax.lax.rsqrt(var + 1e-5)
        y = y * g_ref[...] + beta_ref[...]
        kv = jnp.dot(y.astype(jnp.bfloat16), kvw_ref[...],
                     preferred_element_type=jnp.float32)   # qkv_bias=False
        kv_sc[...] = kv.astype(kv_sc.dtype)

    x_tile = x_ref[0].astype(jnp.bfloat16)                 # (TQ, C)
    _attend_and_project(x_tile, qw_ref, kv_sc, pw_ref, pb_ref, attn_sc, o_ref,
                        num_heads)


def _fused_attn_kernel(num_heads,
                       x_ref, qw_ref, kvw_ref, pw_ref, pb_ref,
                       o_ref, kv_sc, attn_sc):
    """sr_ratio == 1: kv-proj once per batch from the resident x, then attention.

    x_ref: (1, N, C) whole batch, resident across its q tiles.
    """
    qi = pl.program_id(1)
    TQ = o_ref.shape[1]

    @pl.when(qi == 0)
    def _compute_kv():
        xb = x_ref[0].astype(jnp.bfloat16)                 # (N, C)
        kv = jnp.dot(xb, kvw_ref[...],
                     preferred_element_type=jnp.float32)   # qkv_bias=False
        kv_sc[...] = kv.astype(kv_sc.dtype)

    start = pl.multiple_of(qi * TQ, TQ)
    x_tile = x_ref[0, pl.ds(start, TQ), :].astype(jnp.bfloat16)
    _attend_and_project(x_tile, qw_ref, kv_sc, pw_ref, pb_ref, attn_sc, o_ref,
                        num_heads)


# ------------------------------ module forward ------------------------------ #

def attention_forward(params, x, H, W, num_heads, sr_ratio):
    B, N, C = x.shape
    d = C // num_heads
    scale = d ** (-0.5)
    TQ = _pick_q_tile(N)
    NQ = N // TQ

    # Host-side weight prep: fold softmax scale into q_w, pre-cast MXU weights to bf16.
    qw = (params["q_w"] * scale).astype(jnp.bfloat16)
    kvw = params["kv_w"].astype(jnp.bfloat16)
    pw = params["proj_w"].astype(jnp.bfloat16)
    pb = params["proj_b"].reshape(1, C).astype(jnp.float32)

    cparams = pltpu.CompilerParams(
        dimension_semantics=("parallel", "arbitrary"),
        vmem_limit_bytes=48 * 1024 * 1024)          # fits v7x's 64 MiB VMEM

    def wspec(shape):                                # weight/bias: resident, index 0
        return pl.BlockSpec(shape, lambda b, i: (0,) * len(shape))

    if sr_ratio > 1:
        sr = sr_ratio
        Ho, Wo = H // sr, W // sr
        Nkv = Ho * Wo
        # tokens stay channel-innermost: (B, N, C) -> (B*Ho, sr, Wo, sr*C) is free
        x_sr = x.reshape(B * Ho, sr, Wo, sr * C)
        w3d = params["sr_w3d"].astype(jnp.bfloat16)
        return pl.pallas_call(
            partial(_fused_attn_sr_kernel, num_heads, sr),
            out_shape=jax.ShapeDtypeStruct((B, N, C), jnp.float32),
            grid=(B, NQ),
            in_specs=[
                pl.BlockSpec((1, TQ, C), lambda b, i: (b, i, 0)),
                pl.BlockSpec((Ho, sr, Wo, sr * C), lambda b, i: (b, 0, 0, 0)),
                wspec((sr, sr * C, C)),
                wspec((1, C)), wspec((1, C)), wspec((1, C)),
                wspec((C, C)), wspec((C, 2 * C)), wspec((C, C)), wspec((1, C)),
            ],
            out_specs=pl.BlockSpec((1, TQ, C), lambda b, i: (b, i, 0)),
            scratch_shapes=[pltpu.VMEM((Nkv, 2 * C), jnp.bfloat16),
                            pltpu.VMEM((TQ, C), jnp.float32)],
            compiler_params=cparams,
        )(x, x_sr, w3d,
          params["sr_b"].reshape(1, C), params["ln_g"].reshape(1, C),
          params["ln_b"].reshape(1, C), qw, kvw, pw, pb)

    return pl.pallas_call(
        partial(_fused_attn_kernel, num_heads),
        out_shape=jax.ShapeDtypeStruct((B, N, C), jnp.float32),
        grid=(B, NQ),
        in_specs=[
            pl.BlockSpec((1, N, C), lambda b, i: (b, 0, 0)),
            wspec((C, C)), wspec((C, 2 * C)), wspec((C, C)), wspec((1, C)),
        ],
        out_specs=pl.BlockSpec((1, TQ, C), lambda b, i: (b, i, 0)),
        scratch_shapes=[pltpu.VMEM((N, 2 * C), jnp.bfloat16),
                        pltpu.VMEM((TQ, C), jnp.float32)],
        compiler_params=cparams,
    )(x, qw, kvw, pw, pb)


# -------------------------------- pure-JAX ref ------------------------------- #

def reference_forward(params, x, H, W, num_heads, sr_ratio):
    B, N, C = x.shape
    d = C // num_heads
    scale = d ** (-0.5)
    q = (x @ params["q_w"]).reshape(B, N, num_heads, d).transpose(0, 2, 1, 3)
    if sr_ratio > 1:
        x_nchw = jnp.transpose(x, (0, 2, 1)).reshape(B, C, H, W)
        y = jax.lax.conv_general_dilated(
            x_nchw, params["sr_w"], window_strides=(sr_ratio, sr_ratio),
            padding="VALID", dimension_numbers=("NCHW", "OIHW", "NCHW"))
        y = y + params["sr_b"].reshape(1, C, 1, 1)
        Ho, Wo = H // sr_ratio, W // sr_ratio
        x_ = y.reshape(B, C, Ho * Wo).transpose(0, 2, 1)
        mu = x_.mean(-1, keepdims=True)
        var = ((x_ - mu) ** 2).mean(-1, keepdims=True)
        x_ = (x_ - mu) / jnp.sqrt(var + 1e-5) * params["ln_g"] + params["ln_b"]
        Nkv = Ho * Wo
    else:
        x_ = x
        Nkv = N
    kv = (x_ @ params["kv_w"]).reshape(B, Nkv, 2, num_heads, d).transpose(2, 0, 3, 1, 4)
    k, v = kv[0], kv[1]
    attn = jnp.einsum("bhnd,bhmd->bhnm", q, k) * scale
    attn = jax.nn.softmax(attn, axis=-1)
    o = jnp.einsum("bhnm,bhmd->bhnd", attn, v).transpose(0, 2, 1, 3).reshape(B, N, C)
    return o @ params["proj_w"] + params["proj_b"]


# ----------------------------------- main ------------------------------------ #

if __name__ == "__main__":
    key = jax.random.PRNGKey(0)
    ks = jax.random.split(key, 8)

    B, C, H, W = 2, 32, 32, 32
    num_heads = 4
    N = H * W

    params = {
        # nn.Linear weights stored as (in, out); trunc_normal(std=0.02) ~ normal*0.02
        "q_w": 0.02 * jax.random.normal(ks[0], (C, C), jnp.float32),
        "kv_w": 0.02 * jax.random.normal(ks[1], (C, 2 * C), jnp.float32),
        "proj_w": 0.02 * jax.random.normal(ks[2], (C, C), jnp.float32),
        "proj_b": 0.02 * jax.random.normal(ks[3], (C,), jnp.float32),
        "ln_g": jnp.ones((C,), jnp.float32),
        "ln_b": jnp.zeros((C,), jnp.float32),
    }

    x = jax.random.normal(ks[4], (B, N, C), jnp.float32)

    for sr_ratio in (2, 1):
        p = dict(params)
        if sr_ratio > 1:
            # Conv2d(dim, dim, kernel=stride=sr): weight (O, I, sr, sr), Kaiming-style init
            fan_out = sr_ratio * sr_ratio * C
            sr_w = math.sqrt(2.0 / fan_out) * jax.random.normal(
                ks[5], (C, C, sr_ratio, sr_ratio), jnp.float32)
            p["sr_w"] = sr_w
            # (O, I, ky, kx) -> (ky, kx, I, O) -> (ky, kx*I, O): matches the
            # (.., Wo, sr*C) channel-innermost token layout the fused kernel reads.
            p["sr_w3d"] = jnp.transpose(sr_w, (2, 3, 1, 0)).reshape(
                sr_ratio, sr_ratio * C, C)
            p["sr_b"] = 0.02 * jax.random.normal(ks[6], (C,), jnp.float32)

        out = attention_forward(p, x, H, W, num_heads, sr_ratio)
        out = jax.block_until_ready(out)
        ref = reference_forward(p, x, H, W, num_heads, sr_ratio)
        err = float(jnp.max(jnp.abs(out - ref)))
        assert out.shape == (B, N, C)
        # bf16 MXU operands + approximate softmax reciprocal -> loosened tolerance
        assert jnp.allclose(out, ref, atol=2e-3, rtol=2e-2), \
            f"sr_ratio={sr_ratio}: max abs err {err}"

    print("KERNEL_OK")
</pallas_src>

<mosaic_0001>
module attributes {stable_mosaic.version = 11 : i64} {
  func.func @_fused_attn_sr_kernel(%arg0: i32, %arg1: i32, %arg2: memref<1x512x32xf32, #tpu.memory_space<vmem>>, %arg3: memref<16x2x16x64xf32, #tpu.memory_space<vmem>>, %arg4: memref<2x64x32xbf16, #tpu.memory_space<vmem>>, %arg5: memref<1x32xf32, #tpu.memory_space<vmem>>, %arg6: memref<1x32xf32, #tpu.memory_space<vmem>>, %arg7: memref<1x32xf32, #tpu.memory_space<vmem>>, %arg8: memref<32x32xbf16, #tpu.memory_space<vmem>>, %arg9: memref<32x64xbf16, #tpu.memory_space<vmem>>, %arg10: memref<32x32xbf16, #tpu.memory_space<vmem>>, %arg11: memref<1x32xf32, #tpu.memory_space<vmem>>, %arg12: memref<1x512x32xf32, #tpu.memory_space<vmem>>, %arg13: memref<256x64xbf16, #tpu.memory_space<vmem>>, %arg14: memref<512x32xf32, #tpu.memory_space<vmem>>) attributes {dimension_semantics = [#tpu.dimension_semantics<parallel>, #tpu.dimension_semantics<arbitrary>], iteration_bounds = array<i64: 2, 2>, scalar_prefetch = 0 : i64, scratch_operands = 2 : i64, tpu.core_type = #tpu.core_type<tc>, window_params = [{transform_indices = @transform_0, window_bounds = array<i64: 1, 512, 32>}, {transform_indices = @transform_1, window_bounds = array<i64: 16, 2, 16, 64>}, {pipeline_mode = #tpu.pipeline_mode<synchronous>, transform_indices = @transform_2, window_bounds = array<i64: 2, 64, 32>}, {pipeline_mode = #tpu.pipeline_mode<synchronous>, transform_indices = @transform_3, window_bounds = array<i64: 1, 32>}, {pipeline_mode = #tpu.pipeline_mode<synchronous>, transform_indices = @transform_4, window_bounds = array<i64: 1, 32>}, {pipeline_mode = #tpu.pipeline_mode<synchronous>, transform_indices = @transform_5, window_bounds = array<i64: 1, 32>}, {pipeline_mode = #tpu.pipeline_mode<synchronous>, transform_indices = @transform_6, window_bounds = array<i64: 32, 32>}, {pipeline_mode = #tpu.pipeline_mode<synchronous>, transform_indices = @transform_7, window_bounds = array<i64: 32, 64>}, {pipeline_mode = #tpu.pipeline_mode<synchronous>, transform_indices = @transform_8, window_bounds = array<i64: 32, 32>}, {pipeline_mode = #tpu.pipeline_mode<synchronous>, transform_indices = @transform_9, window_bounds = array<i64: 1, 32>}, {transform_indices = @transform_10, window_bounds = array<i64: 1, 512, 32>}]} {
    %c0_i32 = arith.constant 0 : i32
    %0 = arith.cmpi eq, %arg1, %c0_i32 : i32
    %1 = arith.extui %0 : i1 to i32
    %c0_i32_0 = arith.constant 0 : i32
    %2 = arith.cmpi ne, %1, %c0_i32_0 : i32
    scf.if %2 {
      %cst_38 = arith.constant 0.000000e+00 : f32
      %88 = vector.broadcast %cst_38 : f32 to vector<256x32xf32>
      %c0_39 = arith.constant 0 : index
      %c0_40 = arith.constant 0 : index
      %c0_41 = arith.constant 0 : index
      %c0_42 = arith.constant 0 : index
      %89 = vector.load %arg3[%c0_39, %c0_40, %c0_41, %c0_42] : memref<16x2x16x64xf32, #tpu.memory_space<vmem>>, vector<16x1x16x64xf32>
      %90 = vector.shape_cast %89 : vector<16x1x16x64xf32> to vector<16x16x64xf32>
      %91 = vector.shape_cast %90 : vector<16x16x64xf32> to vector<256x64xf32>
      %92 = arith.truncf %91 : vector<256x64xf32> to vector<256x64xbf16>
      %c0_43 = arith.constant 0 : index
      %c0_44 = arith.constant 0 : index
      %c0_45 = arith.constant 0 : index
      %93 = vector.load %arg4[%c0_43, %c0_44, %c0_45] : memref<2x64x32xbf16, #tpu.memory_space<vmem>>, vector<1x64x32xbf16>
      %94 = vector.shape_cast %93 : vector<1x64x32xbf16> to vector<64x32xbf16>
      %cst_46 = arith.constant dense<0.000000e+00> : vector<256x32xf32>
      %95 = tpu.matmul %92, %94, %cst_46 {dimension_numbers = #tpu.dot_dimension_numbers<[1], [0], [0], [1], [0, 0, 1, 1], [], []>} : vector<256x64xbf16>, vector<64x32xbf16>, vector<256x32xf32> -> vector<256x32xf32>
      %96 = arith.addf %88, %95 : vector<256x32xf32>
      %c0_47 = arith.constant 0 : index
      %c1 = arith.constant 1 : index
      %c0_48 = arith.constant 0 : index
      %c0_49 = arith.constant 0 : index
      %97 = vector.load %arg3[%c0_47, %c1, %c0_48, %c0_49] : memref<16x2x16x64xf32, #tpu.memory_space<vmem>>, vector<16x1x16x64xf32>
      %98 = vector.shape_cast %97 : vector<16x1x16x64xf32> to vector<16x16x64xf32>
      %99 = vector.shape_cast %98 : vector<16x16x64xf32> to vector<256x64xf32>
      %100 = arith.truncf %99 : vector<256x64xf32> to vector<256x64xbf16>
      %c1_50 = arith.constant 1 : index
      %c0_51 = arith.constant 0 : index
      %c0_52 = arith.constant 0 : index
      %101 = vector.load %arg4[%c1_50, %c0_51, %c0_52] : memref<2x64x32xbf16, #tpu.memory_space<vmem>>, vector<1x64x32xbf16>
      %102 = vector.shape_cast %101 : vector<1x64x32xbf16> to vector<64x32xbf16>
      %cst_53 = arith.constant dense<0.000000e+00> : vector<256x32xf32>
      %103 = tpu.matmul %100, %102, %cst_53 {dimension_numbers = #tpu.dot_dimension_numbers<[1], [0], [0], [1], [0, 0, 1, 1], [], []>} : vector<256x64xbf16>, vector<64x32xbf16>, vector<256x32xf32> -> vector<256x32xf32>
      %104 = arith.addf %96, %103 : vector<256x32xf32>
      %c0_54 = arith.constant 0 : index
      %c0_55 = arith.constant 0 : index
      %105 = vector.load %arg5[%c0_54, %c0_55] : memref<1x32xf32, #tpu.memory_space<vmem>>, vector<1x32xf32>
      %106 = vector.broadcast %105 : vector<1x32xf32> to vector<256x32xf32>
      %107 = arith.addf %104, %106 : vector<256x32xf32>
      %cst_56 = arith.constant dense<0.000000e+00> : vector<256xf32>
      %108 = vector.multi_reduction <add>, %107, %cst_56 [1] : vector<256x32xf32> to vector<256xf32>
      %109 = vector.shape_cast %108 : vector<256xf32> to vector<256x1xf32>
      %cst_57 = arith.constant 3.200000e+01 : f32
      %110 = vector.broadcast %cst_57 : f32 to vector<256x1xf32>
      %111 = arith.divf %109, %110 : vector<256x1xf32>
      %112 = vector.broadcast %111 : vector<256x1xf32> to vector<256x32xf32>
      %113 = arith.subf %107, %112 : vector<256x32xf32>
      %114 = arith.mulf %113, %113 : vector<256x32xf32>
      %cst_58 = arith.constant dense<0.000000e+00> : vector<256xf32>
      %115 = vector.multi_reduction <add>, %114, %cst_58 [1] : vector<256x32xf32> to vector<256xf32>
      %116 = vector.shape_cast %115 : vector<256xf32> to vector<256x1xf32>
      %cst_59 = arith.constant 3.200000e+01 : f32
      %117 = vector.broadcast %cst_59 : f32 to vector<256x1xf32>
      %118 = arith.divf %116, %117 : vector<256x1xf32>
      %119 = vector.broadcast %111 : vector<256x1xf32> to vector<256x32xf32>
      %120 = arith.subf %107, %119 : vector<256x32xf32>
      %cst_60 = arith.constant 9.99999974E-6 : f32
      %121 = vector.broadcast %cst_60 : f32 to vector<256x1xf32>
      %122 = arith.addf %118, %121 : vector<256x1xf32>
      %123 = math.rsqrt %122 : vector<256x1xf32>
      %124 = vector.broadcast %123 : vector<256x1xf32> to vector<256x32xf32>
      %125 = arith.mulf %120, %124 : vector<256x32xf32>
      %c0_61 = arith.constant 0 : index
      %c0_62 = arith.constant 0 : index
      %126 = vector.load %arg6[%c0_61, %c0_62] : memref<1x32xf32, #tpu.memory_space<vmem>>, vector<1x32xf32>
      %127 = vector.broadcast %126 : vector<1x32xf32> to vector<256x32xf32>
      %128 = arith.mulf %125, %127 : vector<256x32xf32>
      %c0_63 = arith.constant 0 : index
      %c0_64 = arith.constant 0 : index
      %129 = vector.load %arg7[%c0_63, %c0_64] : memref<1x32xf32, #tpu.memory_space<vmem>>, vector<1x32xf32>
      %130 = vector.broadcast %129 : vector<1x32xf32> to vector<256x32xf32>
      %131 = arith.addf %128, %130 : vector<256x32xf32>
      %132 = arith.truncf %131 : vector<256x32xf32> to vector<256x32xbf16>
      %c0_65 = arith.constant 0 : index
      %c0_66 = arith.constant 0 : index
      %133 = vector.load %arg9[%c0_65, %c0_66] : memref<32x64xbf16, #tpu.memory_space<vmem>>, vector<32x64xbf16>
      %cst_67 = arith.constant dense<0.000000e+00> : vector<256x64xf32>
      %134 = tpu.matmul %132, %133, %cst_67 {dimension_numbers = #tpu.dot_dimension_numbers<[1], [0], [0], [1], [0, 0, 1, 1], [], []>} : vector<256x32xbf16>, vector<32x64xbf16>, vector<256x64xf32> -> vector<256x64xf32>
      %135 = arith.truncf %134 : vector<256x64xf32> to vector<256x64xbf16>
      %c0_68 = arith.constant 0 : index
      %c0_69 = arith.constant 0 : index
      %136 = vector.load %arg13[%c0_68, %c0_69] : memref<256x64xbf16, #tpu.memory_space<vmem>>, vector<256x64xbf16>
      tpu.vector_store %arg13[%c0_68, %c0_69], %135 {strides = array<i32>} : memref<256x64xbf16, #tpu.memory_space<vmem>>, vector<256x64xbf16>,
    } else {
    }
    %c0 = arith.constant 0 : index
    %c0_1 = arith.constant 0 : index
    %c0_2 = arith.constant 0 : index
    %3 = vector.load %arg2[%c0, %c0_1, %c0_2] : memref<1x512x32xf32, #tpu.memory_space<vmem>>, vector<1x512x32xf32>
    %4 = vector.shape_cast %3 : vector<1x512x32xf32> to vector<512x32xf32>
    %5 = arith.truncf %4 : vector<512x32xf32> to vector<512x32xbf16>
    %c0_3 = arith.constant 0 : index
    %c0_4 = arith.constant 0 : index
    %6 = vector.load %arg8[%c0_3, %c0_4] : memref<32x32xbf16, #tpu.memory_space<vmem>>, vector<32x32xbf16>
    %cst = arith.constant dense<0.000000e+00> : vector<512x32xf32>
    %7 = tpu.matmul %5, %6, %cst {dimension_numbers = #tpu.dot_dimension_numbers<[1], [0], [0], [1], [0, 0, 1, 1], [], []>} : vector<512x32xbf16>, vector<32x32xbf16>, vector<512x32xf32> -> vector<512x32xf32>
    %8 = arith.truncf %7 : vector<512x32xf32> to vector<512x32xbf16>
    %c0_5 = arith.constant 0 : index
    %c0_6 = arith.constant 0 : index
    %9 = vector.load %arg13[%c0_5, %c0_6] : memref<256x64xbf16, #tpu.memory_space<vmem>>, vector<256x64xbf16>
    %10 = vector.extract_strided_slice %8 {offsets = [0, 0], sizes = [512, 8], strides = [1, 1]} : vector<512x32xbf16> to vector<512x8xbf16>
    %11 = vector.extract_strided_slice %9 {offsets = [0, 0], sizes = [256, 8], strides = [1, 1]} : vector<256x64xbf16> to vector<256x8xbf16>
    %12 = vector.extract_strided_slice %9 {offsets = [0, 32], sizes = [256, 8], strides = [1, 1]} : vector<256x64xbf16> to vector<256x8xbf16>
    %cst_7 = arith.constant dense<0.000000e+00> : vector<512x256xf32>
    %13 = tpu.matmul %10, %11, %cst_7 {dimension_numbers = #tpu.dot_dimension_numbers<[1], [1], [0], [0], [0, 0, 1, 0], [], []>} : vector<512x8xbf16>, vector<256x8xbf16>, vector<512x256xf32> -> vector<512x256xf32>
    %cst_8 = arith.constant dense<0xFF800000> : vector<512xf32>
    %14 = vector.multi_reduction <maximumf>, %13, %cst_8 [1] : vector<512x256xf32> to vector<512xf32>
    %15 = vector.shape_cast %14 : vector<512xf32> to vector<512x1xf32>
    %16 = vector.broadcast %15 : vector<512x1xf32> to vector<512x256xf32>
    %17 = arith.subf %13, %16 : vector<512x256xf32>
    %18 = math.exp %17 : vector<512x256xf32>
    %cst_9 = arith.constant dense<0.000000e+00> : vector<512xf32>
    %19 = vector.multi_reduction <add>, %18, %cst_9 [1] : vector<512x256xf32> to vector<512xf32>
    %20 = vector.shape_cast %19 : vector<512xf32> to vector<512x1xf32>
    %21 = tpu.reciprocal %20 {approx = true} : vector<512x1xf32> -> vector<512x1xf32>
    %22 = vector.broadcast %21 : vector<512x1xf32> to vector<512x256xf32>
    %23 = arith.mulf %18, %22 : vector<512x256xf32>
    %24 = arith.truncf %23 : vector<512x256xf32> to vector<512x256xbf16>
    %cst_10 = arith.constant dense<0.000000e+00> : vector<512x8xf32>
    %25 = tpu.matmul %24, %12, %cst_10 {dimension_numbers = #tpu.dot_dimension_numbers<[1], [0], [0], [1], [0, 0, 1, 1], [], []>} : vector<512x256xbf16>, vector<256x8xbf16>, vector<512x8xf32> -> vector<512x8xf32>
    %c0_11 = arith.constant 0 : index
    %c0_12 = arith.constant 0 : index
    %26 = vector.load %arg14[%c0_11, %c0_12] : memref<512x32xf32, #tpu.memory_space<vmem>>, vector<512x8xf32>
    tpu.vector_store %arg14[%c0_11, %c0_12], %25 {strides = array<i32>} : memref<512x32xf32, #tpu.memory_space<vmem>>, vector<512x8xf32>,
    %27 = vector.extract_strided_slice %8 {offsets = [0, 8], sizes = [512, 8], strides = [1, 1]} : vector<512x32xbf16> to vector<512x8xbf16>
    %28 = vector.extract_strided_slice %9 {offsets = [0, 8], sizes = [256, 8], strides = [1, 1]} : vector<256x64xbf16> to vector<256x8xbf16>
    %29 = vector.extract_strided_slice %9 {offsets = [0, 40], sizes = [256, 8], strides = [1, 1]} : vector<256x64xbf16> to vector<256x8xbf16>
    %cst_13 = arith.constant dense<0.000000e+00> : vector<512x256xf32>
    %30 = tpu.matmul %27, %28, %cst_13 {dimension_numbers = #tpu.dot_dimension_numbers<[1], [1], [0], [0], [0, 0, 1, 0], [], []>} : vector<512x8xbf16>, vector<256x8xbf16>, vector<512x256xf32> -> vector<512x256xf32>
    %cst_14 = arith.constant dense<0xFF800000> : vector<512xf32>
    %31 = vector.multi_reduction <maximumf>, %30, %cst_14 [1] : vector<512x256xf32> to vector<512xf32>
    %32 = vector.shape_cast %31 : vector<512xf32> to vector<512x1xf32>
    %33 = vector.broadcast %32 : vector<512x1xf32> to vector<512x256xf32>
    %34 = arith.subf %30, %33 : vector<512x256xf32>
    %35 = math.exp %34 : vector<512x256xf32>
    %cst_15 = arith.constant dense<0.000000e+00> : vector<512xf32>
    %36 = vector.multi_reduction <add>, %35, %cst_15 [1] : vector<512x256xf32> to vector<512xf32>
    %37 = vector.shape_cast %36 : vector<512xf32> to vector<512x1xf32>
    %38 = tpu.reciprocal %37 {approx = true} : vector<512x1xf32> -> vector<512x1xf32>
    %39 = vector.broadcast %38 : vector<512x1xf32> to vector<512x256xf32>
    %40 = arith.mulf %35, %39 : vector<512x256xf32>
    %41 = arith.truncf %40 : vector<512x256xf32> to vector<512x256xbf16>
    %cst_16 = arith.constant dense<0.000000e+00> : vector<512x8xf32>
    %42 = tpu.matmul %41, %29, %cst_16 {dimension_numbers = #tpu.dot_dimension_numbers<[1], [0], [0], [1], [0, 0, 1, 1], [], []>} : vector<512x256xbf16>, vector<256x8xbf16>, vector<512x8xf32> -> vector<512x8xf32>
    %c0_17 = arith.constant 0 : index
    %c8 = arith.constant 8 : index
    %43 = vector.load %arg14[%c0_17, %c8] : memref<512x32xf32, #tpu.memory_space<vmem>>, vector<512x8xf32>
    tpu.vector_store %arg14[%c0_17, %c8], %42 {strides = array<i32>} : memref<512x32xf32, #tpu.memory_space<vmem>>, vector<512x8xf32>,
    %44 = vector.extract_strided_slice %8 {offsets = [0, 16], sizes = [512, 8], strides = [1, 1]} : vector<512x32xbf16> to vector<512x8xbf16>
    %45 = vector.extract_strided_slice %9 {offsets = [0, 16], sizes = [256, 8], strides = [1, 1]} : vector<256x64xbf16> to vector<256x8xbf16>
    %46 = vector.extract_strided_slice %9 {offsets = [0, 48], sizes = [256, 8], strides = [1, 1]} : vector<256x64xbf16> to vector<256x8xbf16>
    %cst_18 = arith.constant dense<0.000000e+00> : vector<512x256xf32>
    %47 = tpu.matmul %44, %45, %cst_18 {dimension_numbers = #tpu.dot_dimension_numbers<[1], [1], [0], [0], [0, 0, 1, 0], [], []>} : vector<512x8xbf16>, vector<256x8xbf16>, vector<512x256xf32> -> vector<512x256xf32>
    %cst_19 = arith.constant dense<0xFF800000> : vector<512xf32>
    %48 = vector.multi_reduction <maximumf>, %47, %cst_19 [1] : vector<512x256xf32> to vector<512xf32>
    %49 = vector.shape_cast %48 : vector<512xf32> to vector<512x1xf32>
    %50 = vector.broadcast %49 : vector<512x1xf32> to vector<512x256xf32>
    %51 = arith.subf %47, %50 : vector<512x256xf32>
    %52 = math.exp %51 : vector<512x256xf32>
    %cst_20 = arith.constant dense<0.000000e+00> : vector<512xf32>
    %53 = vector.multi_reduction <add>, %52, %cst_20 [1] : vector<512x256xf32> to vector<512xf32>
    %54 = vector.shape_cast %53 : vector<512xf32> to vector<512x1xf32>
    %55 = tpu.reciprocal %54 {approx = true} : vector<512x1xf32> -> vector<512x1xf32>
    %56 = vector.broadcast %55 : vector<512x1xf32> to vector<512x256xf32>
    %57 = arith.mulf %52, %56 : vector<512x256xf32>
    %58 = arith.truncf %57 : vector<512x256xf32> to vector<512x256xbf16>
    %cst_21 = arith.constant dense<0.000000e+00> : vector<512x8xf32>
    %59 = tpu.matmul %58, %46, %cst_21 {dimension_numbers = #tpu.dot_dimension_numbers<[1], [0], [0], [1], [0, 0, 1, 1], [], []>} : vector<512x256xbf16>, vector<256x8xbf16>, vector<512x8xf32> -> vector<512x8xf32>
    %c0_22 = arith.constant 0 : index
    %c16 = arith.constant 16 : index
    %60 = vector.load %arg14[%c0_22, %c16] : memref<512x32xf32, #tpu.memory_space<vmem>>, vector<512x8xf32>
    tpu.vector_store %arg14[%c0_22, %c16], %59 {strides = array<i32>} : memref<512x32xf32, #tpu.memory_space<vmem>>, vector<512x8xf32>,
    %61 = vector.extract_strided_slice %8 {offsets = [0, 24], sizes = [512, 8], strides = [1, 1]} : vector<512x32xbf16> to vector<512x8xbf16>
    %62 = vector.extract_strided_slice %9 {offsets = [0, 24], sizes = [256, 8], strides = [1, 1]} : vector<256x64xbf16> to vector<256x8xbf16>
    %63 = vector.extract_strided_slice %9 {offsets = [0, 56], sizes = [256, 8], strides = [1, 1]} : vector<256x64xbf16> to vector<256x8xbf16>
    %cst_23 = arith.constant dense<0.000000e+00> : vector<512x256xf32>
    %64 = tpu.matmul %61, %62, %cst_23 {dimension_numbers = #tpu.dot_dimension_numbers<[1], [1], [0], [0], [0, 0, 1, 0], [], []>} : vector<512x8xbf16>, vector<256x8xbf16>, vector<512x256xf32> -> vector<512x256xf32>
    %cst_24 = arith.constant dense<0xFF800000> : vector<512xf32>
    %65 = vector.multi_reduction <maximumf>, %64, %cst_24 [1] : vector<512x256xf32> to vector<512xf32>
    %66 = vector.shape_cast %65 : vector<512xf32> to vector<512x1xf32>
    %67 = vector.broadcast %66 : vector<512x1xf32> to vector<512x256xf32>
    %68 = arith.subf %64, %67 : vector<512x256xf32>
    %69 = math.exp %68 : vector<512x256xf32>
    %cst_25 = arith.constant dense<0.000000e+00> : vector<512xf32>
    %70 = vector.multi_reduction <add>, %69, %cst_25 [1] : vector<512x256xf32> to vector<512xf32>
    %71 = vector.shape_cast %70 : vector<512xf32> to vector<512x1xf32>
    %72 = tpu.reciprocal %71 {approx = true} : vector<512x1xf32> -> vector<512x1xf32>
    %73 = vector.broadcast %72 : vector<512x1xf32> to vector<512x256xf32>
    %74 = arith.mulf %69, %73 : vector<512x256xf32>
    %75 = arith.truncf %74 : vector<512x256xf32> to vector<512x256xbf16>
    %cst_26 = arith.constant dense<0.000000e+00> : vector<512x8xf32>
    %76 = tpu.matmul %75, %63, %cst_26 {dimension_numbers = #tpu.dot_dimension_numbers<[1], [0], [0], [1], [0, 0, 1, 1], [], []>} : vector<512x256xbf16>, vector<256x8xbf16>, vector<512x8xf32> -> vector<512x8xf32>
    %c0_27 = arith.constant 0 : index
    %c24 = arith.constant 24 : index
    %77 = vector.load %arg14[%c0_27, %c24] : memref<512x32xf32, #tpu.memory_space<vmem>>, vector<512x8xf32>
    tpu.vector_store %arg14[%c0_27, %c24], %76 {strides = array<i32>} : memref<512x32xf32, #tpu.memory_space<vmem>>, vector<512x8xf32>,
    %c0_28 = arith.constant 0 : index
    %c0_29 = arith.constant 0 : index
    %78 = vector.load %arg14[%c0_28, %c0_29] : memref<512x32xf32, #tpu.memory_space<vmem>>, vector<512x32xf32>
    %79 = arith.truncf %78 : vector<512x32xf32> to vector<512x32xbf16>
    %c0_30 = arith.constant 0 : index
    %c0_31 = arith.constant 0 : index
    %80 = vector.load %arg10[%c0_30, %c0_31] : memref<32x32xbf16, #tpu.memory_space<vmem>>, vector<32x32xbf16>
    %cst_32 = arith.constant dense<0.000000e+00> : vector<512x32xf32>
    %81 = tpu.matmul %79, %80, %cst_32 {dimension_numbers = #tpu.dot_dimension_numbers<[1], [0], [0], [1], [0, 0, 1, 1], [], []>} : vector<512x32xbf16>, vector<32x32xbf16>, vector<512x32xf32> -> vector<512x32xf32>
    %c0_33 = arith.constant 0 : index
    %c0_34 = arith.constant 0 : index
    %82 = vector.load %arg11[%c0_33, %c0_34] : memref<1x32xf32, #tpu.memory_space<vmem>>, vector<1x32xf32>
    %83 = vector.broadcast %82 : vector<1x32xf32> to vector<512x32xf32>
    %84 = arith.addf %81, %83 : vector<512x32xf32>
    %c0_35 = arith.constant 0 : index
    %c0_36 = arith.constant 0 : index
    %c0_37 = arith.constant 0 : index
    %85 = vector.load %arg12[%c0_35, %c0_36, %c0_37] : memref<1x512x32xf32, #tpu.memory_space<vmem>>, vector<1x512x32xf32>
    %86 = vector.shape_cast %85 : vector<1x512x32xf32> to vector<512x32xf32>
    %87 = vector.shape_cast %84 : vector<512x32xf32> to vector<1x512x32xf32>
    tpu.vector_store %arg12[%c0_35, %c0_36, %c0_37], %87 {strides = array<i32>} : memref<1x512x32xf32, #tpu.memory_space<vmem>>, vector<1x512x32xf32>,
    return
  }
  func.func @transform_0(%arg0: i32, %arg1: i32) -> (i32, i32, i32) {
    %c0_i32 = arith.constant 0 : i32
    %c0_i32_0 = arith.constant 0 : i32
    return %arg0, %arg1, %c0_i32 : i32, i32, i32
  }
  func.func @transform_1(%arg0: i32, %arg1: i32) -> (i32, i32, i32, i32) {
    %c0_i32 = arith.constant 0 : i32
    %c0_i32_0 = arith.constant 0 : i32
    %c0_i32_1 = arith.constant 0 : i32
    %c0_i32_2 = arith.constant 0 : i32
    return %arg0, %c0_i32, %c0_i32_0, %c0_i32_1 : i32, i32, i32, i32
  }
  func.func @transform_2(%arg0: i32, %arg1: i32) -> (i32, i32, i32) {
    %c0_i32 = arith.constant 0 : i32
    %c0_i32_0 = arith.constant 0 : i32
    %c0_i32_1 = arith.constant 0 : i32
    %c0_i32_2 = arith.constant 0 : i32
    return %c0_i32, %c0_i32_0, %c0_i32_1 : i32, i32, i32
  }
  func.func @transform_3(%arg0: i32, %arg1: i32) -> (i32, i32) {
    %c0_i32 = arith.constant 0 : i32
    %c0_i32_0 = arith.constant 0 : i32
    %c0_i32_1 = arith.constant 0 : i32
    return %c0_i32, %c0_i32_0 : i32, i32
  }
  func.func @transform_4(%arg0: i32, %arg1: i32) -> (i32, i32) {
    %c0_i32 = arith.constant 0 : i32
    %c0_i32_0 = arith.constant 0 : i32
    %c0_i32_1 = arith.constant 0 : i32
    return %c0_i32, %c0_i32_0 : i32, i32
  }
  func.func @transform_5(%arg0: i32, %arg1: i32) -> (i32, i32) {
    %c0_i32 = arith.constant 0 : i32
    %c0_i32_0 = arith.constant 0 : i32
    %c0_i32_1 = arith.constant 0 : i32
    return %c0_i32, %c0_i32_0 : i32, i32
  }
  func.func @transform_6(%arg0: i32, %arg1: i32) -> (i32, i32) {
    %c0_i32 = arith.constant 0 : i32
    %c0_i32_0 = arith.constant 0 : i32
    %c0_i32_1 = arith.constant 0 : i32
    return %c0_i32, %c0_i32_0 : i32, i32
  }
  func.func @transform_7(%arg0: i32, %arg1: i32) -> (i32, i32) {
    %c0_i32 = arith.constant 0 : i32
    %c0_i32_0 = arith.constant 0 : i32
    %c0_i32_1 = arith.constant 0 : i32
    return %c0_i32, %c0_i32_0 : i32, i32
  }
  func.func @transform_8(%arg0: i32, %arg1: i32) -> (i32, i32) {
    %c0_i32 = arith.constant 0 : i32
    %c0_i32_0 = arith.constant 0 : i32
    %c0_i32_1 = arith.constant 0 : i32
    return %c0_i32, %c0_i32_0 : i32, i32
  }
  func.func @transform_9(%arg0: i32, %arg1: i32) -> (i32, i32) {
    %c0_i32 = arith.constant 0 : i32
    %c0_i32_0 = arith.constant 0 : i32
    %c0_i32_1 = arith.constant 0 : i32
    return %c0_i32, %c0_i32_0 : i32, i32
  }
  func.func @transform_10(%arg0: i32, %arg1: i32) -> (i32, i32, i32) {
    %c0_i32 = arith.constant 0 : i32
    %c0_i32_0 = arith.constant 0 : i32
    return %arg0, %arg1, %c0_i32 : i32, i32, i32
  }
}

</mosaic_0001>

<llo_original>
// kernel: tpu_custom_call.1
$region0: #{tpu_custom_call.1}
  #allocation0 [shape = 'u32[]', space=smem, size = 0x4, offset = 0x4, fixed_abs, tag = 'smem constant byte address 0x4 - core index']
  #allocation1 [shape = 'u32[144,128]{1,0:T(1,128)}', space=vmem, size = 0x12000, scoped, tag = 'internal scratch']
  #allocation2 [shape = 'bf16[256,64]{1,0:T(16,128)(2,1)}', space=vmem, size = 0x10000, scoped, tag = 'scratch operand']
  #allocation3 [shape = 'f32[512,32]{1,0:T(8,128)}', space=vmem, size = 0x40000, scoped, tag = 'scratch operand']
  %s0 = inlined_call_operand.vmem [shape: f32[2,1024,32], index: 0, kind: input, shape index: {}]
  %s1 = inlined_call_operand.vmem [shape: f32[32,2,16,64], index: 1, kind: input, shape index: {}]
  %s2 = inlined_call_operand.vmem [shape: bf16[2,64,32], index: 2, kind: input, shape index: {}]
  %s3 = inlined_call_operand.vmem [shape: f32[1,32], index: 3, kind: input, shape index: {}]
  %s4 = inlined_call_operand.vmem [shape: f32[1,32], index: 4, kind: input, shape index: {}]
  %s5 = inlined_call_operand.vmem [shape: f32[1,32], index: 5, kind: input, shape index: {}]
  %s6 = inlined_call_operand.vmem [shape: bf16[32,32], index: 6, kind: input, shape index: {}]
  %s7 = inlined_call_operand.vmem [shape: bf16[32,64], index: 7, kind: input, shape index: {}]
  %s8 = inlined_call_operand.vmem [shape: bf16[32,32], index: 8, kind: input, shape index: {}]
  %s9 = inlined_call_operand.vmem [shape: f32[1,32], index: 9, kind: input, shape index: {}]
  %s10 = inlined_call_operand.vmem [shape: f32[2,1024,32], index: 10, kind: output, shape index: {}]
  %s11 = sld [smem:[#allocation0]]
  $region77: #{tpu_custom_call.1} parent=0
    _
  %s13 = ssub.s32 1, %s11
  %s14 = scalar_select 0, %s13, %s11
  loop: start=0, step=1, limit=6
  $region2: #{tpu_custom_call.1} parent=0 // loop_pre_header
    _
  $region3: #{tpu_custom_call.1} parent=0 // loop_header
    %s16 = sphi 0, %s20
    %p17 = scmp.ge.s32.totalorder %s16, 6
    %s23 = sphi 0, %s35
    %s24 = sphi 0, %s31
    %s25 = sphi 0, %s23
    %s26 = sphi 0, %s24
    %s27 = sphi 0, %s25
    %s28 = sphi 0, %s26
    %s40 = sphi 0, %s42
    %s43 = sphi 0, %s40
    %s44 = sphi 0, %s43
    %s60 = sphi 0, %s44
    %s66 = sphi 0, %s68
    %s69 = sphi 0, %s66
    %s70 = sphi 0, %s69
    %s86 = sphi 0, %s70
    %s90 = sphi 0, %s90
    %s92 = sphi 0, %s90
    %s93 = sphi 0, %s92
    %s107 = sphi 0, %s93
    %s111 = sphi 0, %s111
    %s113 = sphi 0, %s111
    %s114 = sphi 0, %s113
    %s128 = sphi 0, %s114
    %s132 = sphi 0, %s132
    %s134 = sphi 0, %s132
    %s135 = sphi 0, %s134
    %s149 = sphi 0, %s135
    %s153 = sphi 0, %s153
    %s155 = sphi 0, %s153
    %s156 = sphi 0, %s155
    %s170 = sphi 0, %s156
    %s174 = sphi 0, %s174
    %s176 = sphi 0, %s174
    %s177 = sphi 0, %s176
    %s191 = sphi 0, %s177
    %s195 = sphi 0, %s195
    %s197 = sphi 0, %s195
    %s198 = sphi 0, %s197
    %s212 = sphi 0, %s198
    %s216 = sphi 0, %s216
    %s218 = sphi 0, %s216
    %s219 = sphi 0, %s218
    %s233 = sphi 0, %s219
    %s237 = sphi 0, %s237
    %s239 = sphi 0, %s237
    %s240 = sphi 0, %s239
    %s254 = sphi 0, %s240
    %s262 = sphi 0, %s264
    %s265 = sphi 0, %s262
    %s266 = sphi 0, %s265
    %s282 = sphi 0, %s266
  $region4: #{tpu_custom_call.1} parent=0 // loop_header_branch
    %19 = sbr.rel (%p17) target = $region8
  $region5: #{tpu_custom_call.1} parent=0 // loop_body
    %s21 = ssub.s32 %s16, 1
    %s22 = ssub.s32 %s16, 2
    %s29 = sadd.s32 1, %s24
    %p30 = scmp.ge.s32.totalorder %s29, 2
    %s31 = scalar_select %p30, 0, %s29
    %s32 = sadd.s32 1, %s23
    %s33 = scalar_select %p30, %s32, %s23
    %p34 = scmp.ge.s32.totalorder %s33, 2
    %s35 = scalar_select %p34, 0, %s33
    %s36 = ssub.s32 %s23, %s35
    %s37 = ssub.s32 %s24, %s31
    %s38 = sor.u32 %s36, %s37
    %p39 = scmp.eq.s32.totalorder %s38, 0
    %s41 = sadd.s32 %s40, 1
    %s42 = scalar_select %p39, %s40, %s41
    %p45 = pneg %p39
    %p46 = scmp.eq.s32.totalorder %s16, 3
    %p47 = por %p45, %p46
    %p48 = scmp.ne.s32.totalorder %s40, %s43
    %p49 = scmp.eq.s32.totalorder %s16, 0
    %p50 = por %p48, %p49
    %p51 = scmp.ne.s32.totalorder %s40, %s43
    %p52 = scmp.eq.s32.totalorder %s21, 3
    %p53 = por %p51, %p52
    %p54 = scmp.ne.s32.totalorder %s43, %s44
    %p55 = scmp.eq.s32.totalorder %s21, 0
    %p56 = por %p54, %p55
    %p57 = scmp.ne.s32.totalorder %s43, %s44
    %p58 = scmp.eq.s32.totalorder %s22, 3
    %p59 = por %p57, %p58
    %p61 = scmp.ne.s32.totalorder %s44, %s60
    %p62 = scmp.eq.s32.totalorder %s22, 0
    %p63 = por %p61, %p62
    %s64 = ssub.s32 %s23, %s35
    %p65 = scmp.eq.s32.totalorder %s64, 0
    %s67 = sadd.s32 %s66, 1
    %s68 = scalar_select %p65, %s66, %s67
    %p71 = pneg %p65
    %p72 = scmp.eq.s32.totalorder %s16, 3
    %p73 = por %p71, %p72
    %p74 = scmp.ne.s32.totalorder %s66, %s69
    %p75 = scmp.eq.s32.totalorder %s16, 0
    %p76 = por %p74, %p75
    %p77 = scmp.ne.s32.totalorder %s66, %s69
    %p78 = scmp.eq.s32.totalorder %s21, 3
    %p79 = por %p77, %p78
    %p80 = scmp.ne.s32.totalorder %s69, %s70
    %p81 = scmp.eq.s32.totalorder %s21, 0
    %p82 = por %p80, %p81
    %p83 = scmp.ne.s32.totalorder %s69, %s70
    %p84 = scmp.eq.s32.totalorder %s22, 3
    %p85 = por %p83, %p84
    %p87 = scmp.ne.s32.totalorder %s70, %s86
    %p88 = scmp.eq.s32.totalorder %s22, 0
    %p89 = por %p87, %p88
    %s91 = sadd.s32 %s90, 1
    %p94 = scmp.eq.s32.totalorder %s16, 3
    %p95 = scmp.ne.s32.totalorder %s90, %s92
    %p96 = scmp.eq.s32.totalorder %s16, 0
    %p97 = por %p95, %p96
    %p98 = scmp.ne.s32.totalorder %s90, %s92
    %p99 = scmp.eq.s32.totalorder %s21, 3
    %p100 = por %p98, %p99
    %p101 = scmp.ne.s32.totalorder %s92, %s93
    %p102 = scmp.eq.s32.totalorder %s21, 0
    %p103 = por %p101, %p102
    %p104 = scmp.ne.s32.totalorder %s92, %s93
    %p105 = scmp.eq.s32.totalorder %s22, 3
    %p106 = por %p104, %p105
    %p108 = scmp.ne.s32.totalorder %s93, %s107
    %p109 = scmp.eq.s32.totalorder %s22, 0
    %p110 = por %p108, %p109
    %s112 = sadd.s32 %s111, 1
    %p115 = scmp.eq.s32.totalorder %s16, 3
    %p116 = scmp.ne.s32.totalorder %s111, %s113
    %p117 = scmp.eq.s32.totalorder %s16, 0
    %p118 = por %p116, %p117
    %p119 = scmp.ne.s32.totalorder %s111, %s113
    %p120 = scmp.eq.s32.totalorder %s21, 3
    %p121 = por %p119, %p120
    %p122 = scmp.ne.s32.totalorder %s113, %s114
    %p123 = scmp.eq.s32.totalorder %s21, 0
    %p124 = por %p122, %p123
    %p125 = scmp.ne.s32.totalorder %s113, %s114
    %p126 = scmp.eq.s32.totalorder %s22, 3
    %p127 = por %p125, %p126
    %p129 = scmp.ne.s32.totalorder %s114, %s128
    %p130 = scmp.eq.s32.totalorder %s22, 0
    %p131 = por %p129, %p130
    %s133 = sadd.s32 %s132, 1
    %p136 = scmp.eq.s32.totalorder %s16, 3
    %p137 = scmp.ne.s32.totalorder %s132, %s134
    %p138 = scmp.eq.s32.totalorder %s16, 0
    %p139 = por %p137, %p138
    %p140 = scmp.ne.s32.totalorder %s132, %s134
    %p141 = scmp.eq.s32.totalorder %s21, 3
    %p142 = por %p140, %p141
    %p143 = scmp.ne.s32.totalorder %s134, %s135
    %p144 = scmp.eq.s32.totalorder %s21, 0
    %p145 = por %p143, %p144
    %p146 = scmp.ne.s32.totalorder %s134, %s135
    %p147 = scmp.eq.s32.totalorder %s22, 3
    %p148 = por %p146, %p147
    %p150 = scmp.ne.s32.totalorder %s135, %s149
    %p151 = scmp.eq.s32.totalorder %s22, 0
    %p152 = por %p150, %p151
    %s154 = sadd.s32 %s153, 1
    %p157 = scmp.eq.s32.totalorder %s16, 3
    %p158 = scmp.ne.s32.totalorder %s153, %s155
    %p159 = scmp.eq.s32.totalorder %s16, 0
    %p160 = por %p158, %p159
    %p161 = scmp.ne.s32.totalorder %s153, %s155
    %p162 = scmp.eq.s32.totalorder %s21, 3
    %p163 = por %p161, %p162
    %p164 = scmp.ne.s32.totalorder %s155, %s156
    %p165 = scmp.eq.s32.totalorder %s21, 0
    %p166 = por %p164, %p165
    %p167 = scmp.ne.s32.totalorder %s155, %s156
    %p168 = scmp.eq.s32.totalorder %s22, 3
    %p169 = por %p167, %p168
    %p171 = scmp.ne.s32.totalorder %s156, %s170
    %p172 = scmp.eq.s32.totalorder %s22, 0
    %p173 = por %p171, %p172
    %s175 = sadd.s32 %s174, 1
    %p178 = scmp.eq.s32.totalorder %s16, 3
    %p179 = scmp.ne.s32.totalorder %s174, %s176
    %p180 = scmp.eq.s32.totalorder %s16, 0
    %p181 = por %p179, %p180
    %p182 = scmp.ne.s32.totalorder %s174, %s176
    %p183 = scmp.eq.s32.totalorder %s21, 3
    %p184 = por %p182, %p183
    %p185 = scmp.ne.s32.totalorder %s176, %s177
    %p186 = scmp.eq.s32.totalorder %s21, 0
    %p187 = por %p185, %p186
    %p188 = scmp.ne.s32.totalorder %s176, %s177
    %p189 = scmp.eq.s32.totalorder %s22, 3
    %p190 = por %p188, %p189
    %p192 = scmp.ne.s32.totalorder %s177, %s191
    %p193 = scmp.eq.s32.totalorder %s22, 0
    %p194 = por %p192, %p193
    %s196 = sadd.s32 %s195, 1
    %p199 = scmp.eq.s32.totalorder %s16, 3
    %p200 = scmp.ne.s32.totalorder %s195, %s197
    %p201 = scmp.eq.s32.totalorder %s16, 0
    %p202 = por %p200, %p201
    %p203 = scmp.ne.s32.totalorder %s195, %s197
    %p204 = scmp.eq.s32.totalorder %s21, 3
    %p205 = por %p203, %p204
    %p206 = scmp.ne.s32.totalorder %s197, %s198
    %p207 = scmp.eq.s32.totalorder %s21, 0
    %p208 = por %p206, %p207
    %p209 = scmp.ne.s32.totalorder %s197, %s198
    %p210 = scmp.eq.s32.totalorder %s22, 3
    %p211 = por %p209, %p210
    %p213 = scmp.ne.s32.totalorder %s198, %s212
    %p214 = scmp.eq.s32.totalorder %s22, 0
    %p215 = por %p213, %p214
    %s217 = sadd.s32 %s216, 1
    %p220 = scmp.eq.s32.totalorder %s16, 3
    %p221 = scmp.ne.s32.totalorder %s216, %s218
    %p222 = scmp.eq.s32.totalorder %s16, 0
    %p223 = por %p221, %p222
    %p224 = scmp.ne.s32.totalorder %s216, %s218
    %p225 = scmp.eq.s32.totalorder %s21, 3
    %p226 = por %p224, %p225
    %p227 = scmp.ne.s32.totalorder %s218, %s219
    %p228 = scmp.eq.s32.totalorder %s21, 0
    %p229 = por %p227, %p228
    %p230 = scmp.ne.s32.totalorder %s218, %s219
    %p231 = scmp.eq.s32.totalorder %s22, 3
    %p232 = por %p230, %p231
    %p234 = scmp.ne.s32.totalorder %s219, %s233
    %p235 = scmp.eq.s32.totalorder %s22, 0
    %p236 = por %p234, %p235
    %s238 = sadd.s32 %s237, 1
    %p241 = scmp.eq.s32.totalorder %s16, 3
    %p242 = scmp.ne.s32.totalorder %s237, %s239
    %p243 = scmp.eq.s32.totalorder %s16, 0
    %p244 = por %p242, %p243
    %p245 = scmp.ne.s32.totalorder %s237, %s239
    %p246 = scmp.eq.s32.totalorder %s21, 3
    %p247 = por %p245, %p246
    %p248 = scmp.ne.s32.totalorder %s239, %s240
    %p249 = scmp.eq.s32.totalorder %s21, 0
    %p250 = por %p248, %p249
    %p251 = scmp.ne.s32.totalorder %s239, %s240
    %p252 = scmp.eq.s32.totalorder %s22, 3
    %p253 = por %p251, %p252
    %p255 = scmp.ne.s32.totalorder %s240, %s254
    %p256 = scmp.eq.s32.totalorder %s22, 0
    %p257 = por %p255, %p256
    %s258 = ssub.s32 %s23, %s35
    %s259 = ssub.s32 %s24, %s31
    %s260 = sor.u32 %s258, %s259
    %p261 = scmp.eq.s32.totalorder %s260, 0
    %s263 = sadd.s32 %s262, 1
    %s264 = scalar_select %p261, %s262, %s263
    %p267 = pneg %p261
    %p268 = scmp.eq.s32.totalorder %s16, 3
    %p269 = por %p267, %p268
    %p270 = scmp.ne.s32.totalorder %s262, %s265
    %p271 = scmp.eq.s32.totalorder %s16, 0
    %p272 = por %p270, %p271
    %p273 = scmp.ne.s32.totalorder %s262, %s265
    %p274 = scmp.eq.s32.totalorder %s21, 3
    %p275 = por %p273, %p274
    %p276 = scmp.ne.s32.totalorder %s265, %s266
    %p277 = scmp.eq.s32.totalorder %s21, 0
    %p278 = por %p276, %p277
    %p279 = scmp.ne.s32.totalorder %s265, %s266
    %p280 = scmp.eq.s32.totalorder %s22, 3
    %p281 = por %p279, %p280
    %p283 = scmp.ne.s32.totalorder %s266, %s282
    %p284 = scmp.eq.s32.totalorder %s22, 0
    %p285 = por %p283, %p284
    %p286 = scmp.le.s32.totalorder 1, %s16
    %p287 = scmp.lt.s32.totalorder %s16, 5
    %p288 = pnand %p286, %p287
    %p289 = pneg %p288
    // Predicated region
    $region9: #{tpu_custom_call.1} parent=5 // pred_check
      _
    $region10: #{tpu_custom_call.1} parent=5 // pred_check_branch
      %291 = sbr.rel (%p288) target = $region12
    $region11: #{tpu_custom_call.1} parent=5 // pred_region
      %s292 = ssub.s32 %s16, 1
      // Predicated region
      $region13: #{tpu_custom_call.1} parent=11 // pred_check
        %p293 = pneg %p103
      $region14: #{tpu_custom_call.1} parent=11 // pred_check_branch
        %295 = sbr.rel (%p293) target = $region16
      $region15: #{tpu_custom_call.1} parent=11 // pred_region
        _
      $region16: #{tpu_custom_call.1} parent=11 // pred_fallthru
        _
      // Predicated region
      $region17: #{tpu_custom_call.1} parent=11 // pred_check
        %p296 = pneg %p124
      $region18: #{tpu_custom_call.1} parent=11 // pred_check_branch
        %298 = sbr.rel (%p296) target = $region20
      $region19: #{tpu_custom_call.1} parent=11 // pred_region
        _
      $region20: #{tpu_custom_call.1} parent=11 // pred_fallthru
        _
      // Predicated region
      $region21: #{tpu_custom_call.1} parent=11 // pred_check
        %p299 = pneg %p145
      $region22: #{tpu_custom_call.1} parent=11 // pred_check_branch
        %301 = sbr.rel (%p299) target = $region24
      $region23: #{tpu_custom_call.1} parent=11 // pred_region
        _
      $region24: #{tpu_custom_call.1} parent=11 // pred_fallthru
        _
      // Predicated region
      $region25: #{tpu_custom_call.1} parent=11 // pred_check
        %p302 = pneg %p166
      $region26: #{tpu_custom_call.1} parent=11 // pred_check_branch
        %304 = sbr.rel (%p302) target = $region28
      $region27: #{tpu_custom_call.1} parent=11 // pred_region
        _
      $region28: #{tpu_custom_call.1} parent=11 // pred_fallthru
        _
      // Predicated region
      $region29: #{tpu_custom_call.1} parent=11 // pred_check
        %p305 = pneg %p187
      $region30: #{tpu_custom_call.1} parent=11 // pred_check_branch
        %307 = sbr.rel (%p305) target = $region32
      $region31: #{tpu_custom_call.1} parent=11 // pred_region
        _
      $region32: #{tpu_custom_call.1} parent=11 // pred_fallthru
        _
      // Predicated region
      $region33: #{tpu_custom_call.1} parent=11 // pred_check
        %p308 = pneg %p208
      $region34: #{tpu_custom_call.1} parent=11 // pred_check_branch
        %310 = sbr.rel (%p308) target = $region36
      $region35: #{tpu_custom_call.1} parent=11 // pred_region
        _
      $region36: #{tpu_custom_call.1} parent=11 // pred_fallthru
        _
      // Predicated region
      $region37: #{tpu_custom_call.1} parent=11 // pred_check
        %p311 = pneg %p229
      $region38: #{tpu_custom_call.1} parent=11 // pred_check_branch
        %313 = sbr.rel (%p311) target = $region40
      $region39: #{tpu_custom_call.1} parent=11 // pred_region
        _
      $region40: #{tpu_custom_call.1} parent=11 // pred_fallthru
        _
      // Predicated region
      $region41: #{tpu_custom_call.1} parent=11 // pred_check
        %p314 = pneg %p250
      $region42: #{tpu_custom_call.1} parent=11 // pred_check_branch
        %316 = sbr.rel (%p314) target = $region44
      $region43: #{tpu_custom_call.1} parent=11 // pred_region
        _
      $region44: #{tpu_custom_call.1} parent=11 // pred_fallthru
        _
    $region12: #{tpu_custom_call.1} parent=5 // pred_fallthru
      _
    %p317 = scmp.lt.s32.totalorder %s16, 4
    // Predicated region
    $region45: #{tpu_custom_call.1} parent=5 // pred_check
      %p318 = pneg %p317
    $region46: #{tpu_custom_call.1} parent=5 // pred_check_branch
      %320 = sbr.rel (%p318) target = $region48
    $region47: #{tpu_custom_call.1} parent=5 // pred_region
      // Predicated region
      $region49: #{tpu_custom_call.1} parent=47 // pred_check
        %p321 = pneg %p50
      $region50: #{tpu_custom_call.1} parent=47 // pred_check_branch
        %323 = sbr.rel (%p321) target = $region52
      $region51: #{tpu_custom_call.1} parent=47 // pred_region
        %s324 = smul.u32 64, %s24
        %p325 = scmp.lt.s32.totalorder %s23, 1
        %s326 = scalar_select %p325, %s23, 1
        %p327 = scmp.lt.s32.totalorder %s324, 127
        %s328 = scalar_select %p327, %s324, 127
        %s329 = smul.addr %s326, 128
        %s330 = sadd.s32 %s328, %s329
        %s331 = smul.addr %s330, 8
        %s332 = scalar_lea.vmem %s0, %s331
        %s333 = smul.u32 64, %s24
      $region52: #{tpu_custom_call.1} parent=47 // pred_fallthru
        _
      // Predicated region
      $region53: #{tpu_custom_call.1} parent=47 // pred_check
        %p334 = pneg %p76
      $region54: #{tpu_custom_call.1} parent=47 // pred_check_branch
        %336 = sbr.rel (%p334) target = $region56
      $region55: #{tpu_custom_call.1} parent=47 // pred_region
        %s337 = smul.u32 16, %s23
        %p338 = scmp.lt.s32.totalorder %s337, 31
        %s339 = scalar_select %p338, %s337, 31
        %s340 = smul.addr %s339, 4
        %s341 = smul.addr %s340, 8
        %s342 = scalar_lea.vmem %s1, %s341
        %s343 = smul.u32 16, %s23
      $region56: #{tpu_custom_call.1} parent=47 // pred_fallthru
        _
    $region48: #{tpu_custom_call.1} parent=5 // pred_fallthru
      _
    %p344 = scmp.le.s32.totalorder 1, %s16
    %p345 = scmp.lt.s32.totalorder %s16, 5
    %p346 = pnand %p344, %p345
    %p347 = pneg %p346
    // Predicated region
    $region57: #{tpu_custom_call.1} parent=5 // pred_check
      _
    $region58: #{tpu_custom_call.1} parent=5 // pred_check_branch
      %349 = sbr.rel (%p346) target = $region60
    $region59: #{tpu_custom_call.1} parent=5 // pred_region
      %s350 = ssub.s32 %s16, 1
      %s351 = smul.u32 64, %s26
      %p352 = scmp.lt.s32.totalorder %s25, 1
      %s353 = scalar_select %p352, %s25, 1
      %p354 = scmp.lt.s32.totalorder %s351, 127
      %s355 = scalar_select %p354, %s351, 127
      %s356 = smul.addr %s353, 128
      %s357 = sadd.s32 %s355, %s356
      %s358 = smul.addr %s357, 8
      %s359 = scalar_lea.vmem %s0, %s358
      %p360 = pneg %p56
      %p361 = pneg %p53
      %s362 = smul.u32 16, %s25
      %p363 = scmp.lt.s32.totalorder %s362, 31
      %s364 = scalar_select %p363, %s362, 31
      %s365 = smul.addr %s364, 4
      %s366 = smul.addr %s365, 8
      %s367 = scalar_lea.vmem %s1, %s366
      %p368 = pneg %p82
      %p369 = pneg %p79
      %p370 = pneg %p103
      %p371 = pneg %p100
      %p372 = pneg %p124
      %p373 = pneg %p121
      %p374 = pneg %p145
      %p375 = pneg %p142
      %p376 = pneg %p166
      %p377 = pneg %p163
      %p378 = pneg %p187
      %p379 = pneg %p184
      %p380 = pneg %p208
      %p381 = pneg %p205
      %p382 = pneg %p229
      %p383 = pneg %p226
      %p384 = pneg %p250
      %p385 = pneg %p247
      %p386 = pneg %p278
      %p387 = pneg %p275
      %s388 = smul.u32 64, %s26
      %p389 = scmp.lt.s32.totalorder %s25, 1
      %s390 = scalar_select %p389, %s25, 1
      %p391 = scmp.lt.s32.totalorder %s388, 127
      %s392 = scalar_select %p391, %s388, 127
      %s393 = smul.addr %s390, 128
      %s394 = sadd.s32 %s392, %s393
      %s395 = smul.addr %s394, 8
      %s396 = scalar_lea.vmem %s10, %s395
      %s397 = smul.u32 64, %s26
      %p398 = scmp.lt.s32.totalorder %s25, 1
      %s399 = scalar_select %p398, %s25, 1
      %p400 = scmp.lt.s32.totalorder %s397, 127
      %s401 = scalar_select %p400, %s397, 127
      %s402 = smul.addr %s399, 128
      %s403 = sadd.s32 %s401, %s402
      %s404 = smul.addr %s403, 8
      %s405 = scalar_lea.vmem %s0, %s404
      %s406 = smul.u32 64, %s26
      %s407 = smul.u32 16, %s25
      %p408 = scmp.lt.s32.totalorder %s407, 31
      %s409 = scalar_select %p408, %s407, 31
      %s410 = smul.addr %s409, 4
      %s411 = smul.addr %s410, 8
      %s412 = scalar_lea.vmem %s1, %s411
      %s413 = smul.u32 16, %s25
      %s414 = smul.u32 64, %s26
      %p415 = scmp.lt.s32.totalorder %s25, 1
      %s416 = scalar_select %p415, %s25, 1
      %p417 = scmp.lt.s32.totalorder %s414, 127
      %s418 = scalar_select %p417, %s414, 127
      %s419 = smul.addr %s416, 128
      %s420 = sadd.s32 %s418, %s419
      %s421 = smul.addr %s420, 8
      %s422 = scalar_lea.vmem %s10, %s421
      %s423 = smul.u32 64, %s26
      %p425 = scmp.eq.s32.totalorder %s26, 0
      // Predicated region
      $region61: #{tpu_custom_call.1} parent=59 // pred_check
        %p426 = pneg %p425
      $region62: #{tpu_custom_call.1} parent=59 // pred_check_branch
        %428 = sbr.rel (%p426) target = $region64
      $region63: #{tpu_custom_call.1} parent=59 // pred_region
        %v429 = vld [vmem:[%s412] sm:$0xff]
        %v430 = vld [vmem:[%s412 + $0x8] sm:$0xff]
        %v431 = vld [vmem:[%s412 + $0x20] sm:$0xff]
        %v432 = vld [vmem:[%s412 + $0x28] sm:$0xff]
        %v433 = vld [vmem:[%s412 + $0x40] sm:$0xff]
        %v434 = vld [vmem:[%s412 + $0x48] sm:$0xff]
        %v435 = vld [vmem:[%s412 + $0x60] sm:$0xff]
        %v436 = vld [vmem:[%s412 + $0x68] sm:$0xff]
        %v437 = vld [vmem:[%s412 + $0x80] sm:$0xff]
        %v438 = vld [vmem:[%s412 + $0x88] sm:$0xff]
        %v439 = vld [vmem:[%s412 + $0xa0] sm:$0xff]
        %v440 = vld [vmem:[%s412 + $0xa8] sm:$0xff]
        %v441 = vld [vmem:[%s412 + $0xc0] sm:$0xff]
        %v442 = vld [vmem:[%s412 + $0xc8] sm:$0xff]
        %v443 = vld [vmem:[%s412 + $0xe0] sm:$0xff]
        %v444 = vld [vmem:[%s412 + $0xe8] sm:$0xff]
        %v445 = vld [vmem:[%s412 + $0x100] sm:$0xff]
        %v446 = vld [vmem:[%s412 + $0x108] sm:$0xff]
        %v447 = vld [vmem:[%s412 + $0x120] sm:$0xff]
        %v448 = vld [vmem:[%s412 + $0x128] sm:$0xff]
        %v449 = vld [vmem:[%s412 + $0x140] sm:$0xff]
        %v450 = vld [vmem:[%s412 + $0x148] sm:$0xff]
        %v451 = vld [vmem:[%s412 + $0x160] sm:$0xff]
        %v452 = vld [vmem:[%s412 + $0x168] sm:$0xff]
        %v453 = vld [vmem:[%s412 + $0x180] sm:$0xff]
        %v454 = vld [vmem:[%s412 + $0x188] sm:$0xff]
        %v455 = vld [vmem:[%s412 + $0x1a0] sm:$0xff]
        %v456 = vld [vmem:[%s412 + $0x1a8] sm:$0xff]
        %v457 = vld [vmem:[%s412 + $0x1c0] sm:$0xff]
        %v458 = vld [vmem:[%s412 + $0x1c8] sm:$0xff]
        %v459 = vld [vmem:[%s412 + $0x1e0] sm:$0xff]
        %v460 = vld [vmem:[%s412 + $0x1e8] sm:$0xff]
        %v461 = vpack.c.bf16 %v430, %v429
        %v462 = vpack.c.bf16 %v432, %v431
        %v463 = vpack.c.bf16 %v434, %v433
        %v464 = vpack.c.bf16 %v436, %v435
        %v465 = vpack.c.bf16 %v438, %v437
        %v466 = vpack.c.bf16 %v440, %v439
        %v467 = vpack.c.bf16 %v442, %v441
        %v468 = vpack.c.bf16 %v444, %v443
        %v469 = vpack.c.bf16 %v446, %v445
        %v470 = vpack.c.bf16 %v448, %v447
        %v471 = vpack.c.bf16 %v450, %v449
        %v472 = vpack.c.bf16 %v452, %v451
        %v473 = vpack.c.bf16 %v454, %v453
        %v474 = vpack.c.bf16 %v456, %v455
        %v475 = vpack.c.bf16 %v458, %v457
        %v476 = vpack.c.bf16 %v460, %v459
        %v477 = vld [vmem:[%s2] sm:$0xf]
        %v478 = vld [vmem:[%s2 + $0x4] sm:$0xf]
        %v479 = vld [vmem:[%s2 + $0x8] sm:$0xf]
        %v480 = vld [vmem:[%s2 + $0xc] sm:$0xf]
        %v481 = vld [vmem:[%s2 + $0x10] sm:$0xf]
        %v482 = vld [vmem:[%s2 + $0x14] sm:$0xf]
        %v483 = vld [vmem:[%s2 + $0x18] sm:$0xf]
        %v484 = vld [vmem:[%s2 + $0x1c] sm:$0xf]
        %s485 = scalar_lea.vmem %s412, 16
        %v486 = vld [vmem:[%s485] sm:$0xff]
        %v487 = vld [vmem:[%s485 + $0x8] sm:$0xff]
        %v488 = vld [vmem:[%s485 + $0x20] sm:$0xff]
        %v489 = vld [vmem:[%s485 + $0x28] sm:$0xff]
        %v490 = vld [vmem:[%s485 + $0x40] sm:$0xff]
        %v491 = vld [vmem:[%s485 + $0x48] sm:$0xff]
        %v492 = vld [vmem:[%s485 + $0x60] sm:$0xff]
        %v493 = vld [vmem:[%s485 + $0x68] sm:$0xff]
        %v494 = vld [vmem:[%s485 + $0x80] sm:$0xff]
        %v495 = vld [vmem:[%s485 + $0x88] sm:$0xff]
        %v496 = vld [vmem:[%s485 + $0xa0] sm:$0xff]
        %v497 = vld [vmem:[%s485 + $0xa8] sm:$0xff]
        %v498 = vld [vmem:[%s485 + $0xc0] sm:$0xff]
        %v499 = vld [vmem:[%s485 + $0xc8] sm:$0xff]
        %v500 = vld [vmem:[%s485 + $0xe0] sm:$0xff]
        %v501 = vld [vmem:[%s485 + $0xe8] sm:$0xff]
        %v502 = vld [vmem:[%s485 + $0x100] sm:$0xff]
        %v503 = vld [vmem:[%s485 + $0x108] sm:$0xff]
        %v504 = vld [vmem:[%s485 + $0x120] sm:$0xff]
        %v505 = vld [vmem:[%s485 + $0x128] sm:$0xff]
        %v506 = vld [vmem:[%s485 + $0x140] sm:$0xff]
        %v507 = vld [vmem:[%s485 + $0x148] sm:$0xff]
        %v508 = vld [vmem:[%s485 + $0x160] sm:$0xff]
        %v509 = vld [vmem:[%s485 + $0x168] sm:$0xff]
        %v510 = vld [vmem:[%s485 + $0x180] sm:$0xff]
        %v511 = vld [vmem:[%s485 + $0x188] sm:$0xff]
        %v512 = vld [vmem:[%s485 + $0x1a0] sm:$0xff]
        %v513 = vld [vmem:[%s485 + $0x1a8] sm:$0xff]
        %v514 = vld [vmem:[%s485 + $0x1c0] sm:$0xff]
        %v515 = vld [vmem:[%s485 + $0x1c8] sm:$0xff]
        %v516 = vld [vmem:[%s485 + $0x1e0] sm:$0xff]
        %v517 = vld [vmem:[%s485 + $0x1e8] sm:$0xff]
        %v518 = vpack.c.bf16 %v487, %v486
        %v519 = vpack.c.bf16 %v489, %v488
        %v520 = vpack.c.bf16 %v491, %v490
        %v521 = vpack.c.bf16 %v493, %v492
        %v522 = vpack.c.bf16 %v495, %v494
        %v523 = vpack.c.bf16 %v497, %v496
        %v524 = vpack.c.bf16 %v499, %v498
        %v525 = vpack.c.bf16 %v501, %v500
        %v526 = vpack.c.bf16 %v503, %v502
        %v527 = vpack.c.bf16 %v505, %v504
        %v528 = vpack.c.bf16 %v507, %v506
        %v529 = vpack.c.bf16 %v509, %v508
        %v530 = vpack.c.bf16 %v511, %v510
        %v531 = vpack.c.bf16 %v513, %v512
        %v532 = vpack.c.bf16 %v515, %v514
        %v533 = vpack.c.bf16 %v517, %v516
        %s534 = scalar_lea.vmem %s2, 32
        %v535 = vld [vmem:[%s534] sm:$0xf]
        %v536 = vld [vmem:[%s534 + $0x4] sm:$0xf]
        %v537 = vld [vmem:[%s534 + $0x8] sm:$0xf]
        %v538 = vld [vmem:[%s534 + $0xc] sm:$0xf]
        %v539 = vld [vmem:[%s534 + $0x10] sm:$0xf]
        %v540 = vld [vmem:[%s534 + $0x14] sm:$0xf]
        %v541 = vld [vmem:[%s534 + $0x18] sm:$0xf]
        %v542 = vld [vmem:[%s534 + $0x1c] sm:$0xf]
        %v551 = vunpack.c.l.b16 %v535
        %v552 = vunpack.c.l.b16 %v536
        %v553 = vunpack.c.l.b16 %v537
        %v554 = vunpack.c.l.b16 %v538
        %v555 = vunpack.c.l.b16 %v539
        %v556 = vunpack.c.l.b16 %v540
        %v557 = vunpack.c.l.b16 %v541
        %v558 = vunpack.c.l.b16 %v542
        %v559 = vpack.c.b16 %v552, %v551
        %v560 = vpack.c.b16 %v554, %v553
        %v561 = vpack.c.b16 %v556, %v555
        %v562 = vpack.c.b16 %v558, %v557
        %vm567 = vcmask 523264
        %v569 = vsel %vm567, %v518, 0
        %v572 = vsel %vm567, %v519, 0
        %v575 = vsel %vm567, %v520, 0
        %v578 = vsel %vm567, %v521, 0
        %v581 = vsel %vm567, %v522, 0
        %v584 = vsel %vm567, %v523, 0
        %v587 = vsel %vm567, %v524, 0
        %v590 = vsel %vm567, %v525, 0
        %v593 = vsel %vm567, %v526, 0
        %v596 = vsel %vm567, %v527, 0
        %v599 = vsel %vm567, %v528, 0
        %v602 = vsel %vm567, %v529, 0
        %v605 = vsel %vm567, %v530, 0
        %v608 = vsel %vm567, %v531, 0
        %v611 = vsel %vm567, %v532, 0
        %v614 = vsel %vm567, %v533, 0
        %616 = vmatprep.subr.bf16.mxu0 0
        %617 = vmatpush1.bf16.msra.mxu0 %v559
        %618 = vmatprep.subr.bf16.mxu0 0
        %619 = vmatpush1.bf16.msra.mxu0 %v560
        %620 = vmatprep.subr.bf16.mxu0 0
        %621 = vmatpush1.bf16.msra.mxu0 %v561
        %622 = vmatprep.subr.bf16.mxu0 0
        %623 = vmatpush1.bf16.msra.mxu0 %v562
        %624 = vmatprep.subr.bf16.mxu0 0
        %625 = vmatpush1.bf16.msra.mxu0 0
        %626 = vmatprep.subr.bf16.mxu0 0
        %627 = vmatpush1.bf16.msra.mxu0 0
        %628 = vmatprep.subr.bf16.mxu0 0
        %629 = vmatpush1.bf16.msra.mxu0 0
        %630 = vmatprep.subr.bf16.mxu0 0
        %631 = vmatpush1.bf16.msra.mxu0 0
        %632 = vmatprep.subr.bf16.mxu0 0
        %633 = vmatpush1.bf16.msra.mxu0 0
        %634 = vmatprep.subr.bf16.mxu0 0
        %635 = vmatpush1.bf16.msra.mxu0 0
        %636 = vmatprep.subr.bf16.mxu0 0
        %637 = vmatpush1.bf16.msra.mxu0 0
        %638 = vmatprep.subr.bf16.mxu0 0
        %639 = vmatpush1.bf16.msra.mxu0 0
        %640 = vmatprep.subr.bf16.mxu0 0
        %641 = vmatpush1.bf16.msra.mxu0 0
        %642 = vmatprep.subr.bf16.mxu0 0
        %643 = vmatpush1.bf16.msra.mxu0 0
        %644 = vmatprep.subr.bf16.mxu0 0
        %645 = vmatpush1.bf16.msra.mxu0 0
        %646 = vmatprep.subr.bf16.mxu0 0
        %647 = vmatpush1.bf16.msra.mxu0 0
        %648 = vmatprep.mubr.bf16.mxu0 0
        %649 = vmatmul.mubr.bf16.gmra.mrb[0].mxu0 %v569
        %v650 = vpop.f32.mrb[0].mxu0
        %v651 = vadd.f32 0.0, %v650
        %v652 = vpop.f32.mrb[0].mxu0
        %v653 = vpop.f32.mrb[0].mxu0
        %v654 = vadd.f32 0.0, %v653
        %v655 = vpop.f32.mrb[0].mxu0
        %656 = vmatprep.mubr.bf16.mxu0 0
        %657 = vmatmul.mubr.bf16.gmra.mrb[0].mxu0 %v572
        %v658 = vpop.f32.mrb[0].mxu0
        %v659 = vadd.f32 0.0, %v658
        %v660 = vpop.f32.mrb[0].mxu0
        %v661 = vpop.f32.mrb[0].mxu0
        %v662 = vadd.f32 0.0, %v661
        %v663 = vpop.f32.mrb[0].mxu0
        %664 = vmatprep.mubr.bf16.mxu0 0
        %665 = vmatmul.mubr.bf16.gmra.mrb[0].mxu0 %v575
        %v666 = vpop.f32.mrb[0].mxu0
        %v667 = vadd.f32 0.0, %v666
        %v668 = vpop.f32.mrb[0].mxu0
        %v669 = vpop.f32.mrb[0].mxu0
        %v670 = vadd.f32 0.0, %v669
        %v671 = vpop.f32.mrb[0].mxu0
        %672 = vmatprep.mubr.bf16.mxu0 0
        %673 = vmatmul.mubr.bf16.gmra.mrb[0].mxu0 %v578
        %v674 = vpop.f32.mrb[0].mxu0
        %v675 = vadd.f32 0.0, %v674
        %v676 = vpop.f32.mrb[0].mxu0
        %v677 = vpop.f32.mrb[0].mxu0
        %v678 = vadd.f32 0.0, %v677
        %v679 = vpop.f32.mrb[0].mxu0
        %680 = vmatprep.mubr.bf16.mxu0 0
        %681 = vmatmul.mubr.bf16.gmra.mrb[0].mxu0 %v581
        %v682 = vpop.f32.mrb[0].mxu0
        %v683 = vadd.f32 0.0, %v682
        %v684 = vpop.f32.mrb[0].mxu0
        %v685 = vpop.f32.mrb[0].mxu0
        %v686 = vadd.f32 0.0, %v685
        %v687 = vpop.f32.mrb[0].mxu0
        %688 = vmatprep.mubr.bf16.mxu0 0
        %689 = vmatmul.mubr.bf16.gmra.mrb[0].mxu0 %v584
        %v690 = vpop.f32.mrb[0].mxu0
        %v691 = vadd.f32 0.0, %v690
        %v692 = vpop.f32.mrb[0].mxu0
        %v693 = vpop.f32.mrb[0].mxu0
        %v694 = vadd.f32 0.0, %v693
        %v695 = vpop.f32.mrb[0].mxu0
        %696 = vmatprep.mubr.bf16.mxu0 0
        %697 = vmatmul.mubr.bf16.gmra.mrb[0].mxu0 %v587
        %v698 = vpop.f32.mrb[0].mxu0
        %v699 = vadd.f32 0.0, %v698
        %v700 = vpop.f32.mrb[0].mxu0
        %v701 = vpop.f32.mrb[0].mxu0
        %v702 = vadd.f32 0.0, %v701
        %v703 = vpop.f32.mrb[0].mxu0
        %704 = vmatprep.mubr.bf16.mxu0 0
        %705 = vmatmul.mubr.bf16.gmra.mrb[0].mxu0 %v590
        %v706 = vpop.f32.mrb[0].mxu0
        %v707 = vadd.f32 0.0, %v706
        %v708 = vpop.f32.mrb[0].mxu0
        %v709 = vpop.f32.mrb[0].mxu0
        %v710 = vadd.f32 0.0, %v709
        %v711 = vpop.f32.mrb[0].mxu0
        %712 = vmatprep.mubr.bf16.mxu0 0
        %713 = vmatmul.mubr.bf16.gmra.mrb[0].mxu0 %v593
        %v714 = vpop.f32.mrb[0].mxu0
        %v715 = vadd.f32 0.0, %v714
        %v716 = vpop.f32.mrb[0].mxu0
        %v717 = vpop.f32.mrb[0].mxu0
        %v718 = vadd.f32 0.0, %v717
        %v719 = vpop.f32.mrb[0].mxu0
        %720 = vmatprep.mubr.bf16.mxu0 0
        %721 = vmatmul.mubr.bf16.gmra.mrb[0].mxu0 %v596
        %v722 = vpop.f32.mrb[0].mxu0
        %v723 = vadd.f32 0.0, %v722
        %v724 = vpop.f32.mrb[0].mxu0
        %v725 = vpop.f32.mrb[0].mxu0
        %v726 = vadd.f32 0.0, %v725
        %v727 = vpop.f32.mrb[0].mxu0
        %728 = vmatprep.mubr.bf16.mxu0 0
        %729 = vmatmul.mubr.bf16.gmra.mrb[0].mxu0 %v599
        %v730 = vpop.f32.mrb[0].mxu0
        %v731 = vadd.f32 0.0, %v730
        %v732 = vpop.f32.mrb[0].mxu0
        %v733 = vpop.f32.mrb[0].mxu0
        %v734 = vadd.f32 0.0, %v733
        %v735 = vpop.f32.mrb[0].mxu0
        %736 = vmatprep.mubr.bf16.mxu0 0
        %737 = vmatmul.mubr.bf16.gmra.mrb[0].mxu0 %v602
        %v738 = vpop.f32.mrb[0].mxu0
        %v739 = vadd.f32 0.0, %v738
        %v740 = vpop.f32.mrb[0].mxu0
        %v741 = vpop.f32.mrb[0].mxu0
        %v742 = vadd.f32 0.0, %v741
        %v743 = vpop.f32.mrb[0].mxu0
        %744 = vmatprep.mubr.bf16.mxu0 0
        %745 = vmatmul.mubr.bf16.gmra.mrb[0].mxu0 %v605
        %v746 = vpop.f32.mrb[0].mxu0
        %v747 = vadd.f32 0.0, %v746
        %v748 = vpop.f32.mrb[0].mxu0
        %v749 = vpop.f32.mrb[0].mxu0
        %v750 = vadd.f32 0.0, %v749
        %v751 = vpop.f32.mrb[0].mxu0
        %752 = vmatprep.mubr.bf16.mxu0 0
        %753 = vmatmul.mubr.bf16.gmra.mrb[0].mxu0 %v608
        %v754 = vpop.f32.mrb[0].mxu0
        %v755 = vadd.f32 0.0, %v754
        %v756 = vpop.f32.mrb[0].mxu0
        %v757 = vpop.f32.mrb[0].mxu0
        %v758 = vadd.f32 0.0, %v757
        %v759 = vpop.f32.mrb[0].mxu0
        %760 = vmatprep.mubr.bf16.mxu0 0
        %761 = vmatmul.mubr.bf16.gmra.mrb[0].mxu0 %v611
        %v762 = vpop.f32.mrb[0].mxu0
        %v763 = vadd.f32 0.0, %v762
        %v764 = vpop.f32.mrb[0].mxu0
        %v765 = vpop.f32.mrb[0].mxu0
        %v766 = vadd.f32 0.0, %v765
        %v767 = vpop.f32.mrb[0].mxu0
        %768 = vmatprep.mubr.bf16.mxu0 0
        %769 = vmatmul.mubr.bf16.gmra.mrb[0].mxu0 %v614
        %v770 = vpop.f32.mrb[0].mxu0
        %v771 = vadd.f32 0.0, %v770
        %v772 = vpop.f32.mrb[0].mxu0
        %v773 = vpop.f32.mrb[0].mxu0
        %v774 = vadd.f32 0.0, %v773
        %v775 = vpop.f32.mrb[0].mxu0
        %776 = vdwg.mxu0
        %v785 = vunpack.c.l.b16 %v477
        %v786 = vunpack.c.l.b16 %v478
        %v787 = vunpack.c.l.b16 %v479
        %v788 = vunpack.c.l.b16 %v480
        %v789 = vunpack.c.l.b16 %v481
        %v790 = vunpack.c.l.b16 %v482
        %v791 = vunpack.c.l.b16 %v483
        %v792 = vunpack.c.l.b16 %v484
        %v793 = vpack.c.b16 %v786, %v785
        %v794 = vpack.c.b16 %v788, %v787
        %v795 = vpack.c.b16 %v790, %v789
        %v796 = vpack.c.b16 %v792, %v791
        %v802 = vsel %vm567, %v461, 0
        %v805 = vsel %vm567, %v462, 0
        %v808 = vsel %vm567, %v463, 0
        %v811 = vsel %vm567, %v464, 0
        %v814 = vsel %vm567, %v465, 0
        %v817 = vsel %vm567, %v466, 0
        %v820 = vsel %vm567, %v467, 0
        %v823 = vsel %vm567, %v468, 0
        %v826 = vsel %vm567, %v469, 0
        %v829 = vsel %vm567, %v470, 0
        %v832 = vsel %vm567, %v471, 0
        %v835 = vsel %vm567, %v472, 0
        %v838 = vsel %vm567, %v473, 0
        %v841 = vsel %vm567, %v474, 0
        %v844 = vsel %vm567, %v475, 0
        %v847 = vsel %vm567, %v476, 0
        %849 = vmatprep.subr.bf16.mxu0 0
        %850 = vmatpush1.bf16.msra.mxu0 %v793
        %851 = vmatprep.subr.bf16.mxu0 0
        %852 = vmatpush1.bf16.msra.mxu0 %v794
        %853 = vmatprep.subr.bf16.mxu0 0
        %854 = vmatpush1.bf16.msra.mxu0 %v795
        %855 = vmatprep.subr.bf16.mxu0 0
        %856 = vmatpush1.bf16.msra.mxu0 %v796
        %857 = vmatprep.subr.bf16.mxu0 0
        %858 = vmatpush1.bf16.msra.mxu0 0
        %859 = vmatprep.subr.bf16.mxu0 0
        %860 = vmatpush1.bf16.msra.mxu0 0
        %861 = vmatprep.subr.bf16.mxu0 0
        %862 = vmatpush1.bf16.msra.mxu0 0
        %863 = vmatprep.subr.bf16.mxu0 0
        %864 = vmatpush1.bf16.msra.mxu0 0
        %865 = vmatprep.subr.bf16.mxu0 0
        %866 = vmatpush1.bf16.msra.mxu0 0
        %867 = vmatprep.subr.bf16.mxu0 0
        %868 = vmatpush1.bf16.msra.mxu0 0
        %869 = vmatprep.subr.bf16.mxu0 0
        %870 = vmatpush1.bf16.msra.mxu0 0
        %871 = vmatprep.subr.bf16.mxu0 0
        %872 = vmatpush1.bf16.msra.mxu0 0
        %873 = vmatprep.subr.bf16.mxu0 0
        %874 = vmatpush1.bf16.msra.mxu0 0
        %875 = vmatprep.subr.bf16.mxu0 0
        %876 = vmatpush1.bf16.msra.mxu0 0
        %877 = vmatprep.subr.bf16.mxu0 0
        %878 = vmatpush1.bf16.msra.mxu0 0
        %879 = vmatprep.subr.bf16.mxu0 0
        %880 = vmatpush1.bf16.msra.mxu0 0
        %881 = vmatprep.mubr.bf16.mxu0 0
        %882 = vmatmul.mubr.bf16.gmra.mrb[0].mxu0 %v802
        %v883 = vpop.f32.mrb[0].mxu0
        %v884 = vadd.f32 %v651, %v883
        %v885 = vpop.f32.mrb[0].mxu0
        %v886 = vpop.f32.mrb[0].mxu0
        %v887 = vadd.f32 %v654, %v886
        %v888 = vpop.f32.mrb[0].mxu0
        %889 = vmatprep.mubr.bf16.mxu0 0
        %890 = vmatmul.mubr.bf16.gmra.mrb[0].mxu0 %v805
        %v891 = vpop.f32.mrb[0].mxu0
        %v892 = vadd.f32 %v659, %v891
        %v893 = vpop.f32.mrb[0].mxu0
        %v894 = vpop.f32.mrb[0].mxu0
        %v895 = vadd.f32 %v662, %v894
        %v896 = vpop.f32.mrb[0].mxu0
        %897 = vmatprep.mubr.bf16.mxu0 0
        %898 = vmatmul.mubr.bf16.gmra.mrb[0].mxu0 %v808
        %v899 = vpop.f32.mrb[0].mxu0
        %v900 = vadd.f32 %v667, %v899
        %v901 = vpop.f32.mrb[0].mxu0
        %v902 = vpop.f32.mrb[0].mxu0
        %v903 = vadd.f32 %v670, %v902
        %v904 = vpop.f32.mrb[0].mxu0
        %905 = vmatprep.mubr.bf16.mxu0 0
        %906 = vmatmul.mubr.bf16.gmra.mrb[0].mxu0 %v811
        %v907 = vpop.f32.mrb[0].mxu0
        %v908 = vadd.f32 %v675, %v907
        %v909 = vpop.f32.mrb[0].mxu0
        %v910 = vpop.f32.mrb[0].mxu0
        %v911 = vadd.f32 %v678, %v910
        %v912 = vpop.f32.mrb[0].mxu0
        %913 = vmatprep.mubr.bf16.mxu0 0
        %914 = vmatmul.mubr.bf16.gmra.mrb[0].mxu0 %v814
        %v915 = vpop.f32.mrb[0].mxu0
        %v916 = vadd.f32 %v683, %v915
        %v917 = vpop.f32.mrb[0].mxu0
        %v918 = vpop.f32.mrb[0].mxu0
        %v919 = vadd.f32 %v686, %v918
        %v920 = vpop.f32.mrb[0].mxu0
        %921 = vmatprep.mubr.bf16.mxu0 0
        %922 = vmatmul.mubr.bf16.gmra.mrb[0].mxu0 %v817
        %v923 = vpop.f32.mrb[0].mxu0
        %v924 = vadd.f32 %v691, %v923
        %v925 = vpop.f32.mrb[0].mxu0
        %v926 = vpop.f32.mrb[0].mxu0
        %v927 = vadd.f32 %v694, %v926
        %v928 = vpop.f32.mrb[0].mxu0
        %929 = vmatprep.mubr.bf16.mxu0 0
        %930 = vmatmul.mubr.bf16.gmra.mrb[0].mxu0 %v820
        %v931 = vpop.f32.mrb[0].mxu0
        %v932 = vadd.f32 %v699, %v931
        %v933 = vpop.f32.mrb[0].mxu0
        %v934 = vpop.f32.mrb[0].mxu0
        %v935 = vadd.f32 %v702, %v934
        %v936 = vpop.f32.mrb[0].mxu0
        %937 = vmatprep.mubr.bf16.mxu0 0
        %938 = vmatmul.mubr.bf16.gmra.mrb[0].mxu0 %v823
        %v939 = vpop.f32.mrb[0].mxu0
        %v940 = vadd.f32 %v707, %v939
        %v941 = vpop.f32.mrb[0].mxu0
        %v942 = vpop.f32.mrb[0].mxu0
        %v943 = vadd.f32 %v710, %v942
        %v944 = vpop.f32.mrb[0].mxu0
        %945 = vmatprep.mubr.bf16.mxu0 0
        %946 = vmatmul.mubr.bf16.gmra.mrb[0].mxu0 %v826
        %v947 = vpop.f32.mrb[0].mxu0
        %v948 = vadd.f32 %v715, %v947
        %v949 = vpop.f32.mrb[0].mxu0
        %v950 = vpop.f32.mrb[0].mxu0
        %v951 = vadd.f32 %v718, %v950
        %v952 = vpop.f32.mrb[0].mxu0
        %953 = vmatprep.mubr.bf16.mxu0 0
        %954 = vmatmul.mubr.bf16.gmra.mrb[0].mxu0 %v829
        %v955 = vpop.f32.mrb[0].mxu0
        %v956 = vadd.f32 %v723, %v955
        %v957 = vpop.f32.mrb[0].mxu0
        %v958 = vpop.f32.mrb[0].mxu0
        %v959 = vadd.f32 %v726, %v958
        %v960 = vpop.f32.mrb[0].mxu0
        %961 = vmatprep.mubr.bf16.mxu0 0
        %962 = vmatmul.mubr.bf16.gmra.mrb[0].mxu0 %v832
        %v963 = vpop.f32.mrb[0].mxu0
        %v964 = vadd.f32 %v731, %v963
        %v965 = vpop.f32.mrb[0].mxu0
        %v966 = vpop.f32.mrb[0].mxu0
        %v967 = vadd.f32 %v734, %v966
        %v968 = vpop.f32.mrb[0].mxu0
        %969 = vmatprep.mubr.bf16.mxu0 0
        %970 = vmatmul.mubr.bf16.gmra.mrb[0].mxu0 %v835
        %v971 = vpop.f32.mrb[0].mxu0
        %v972 = vadd.f32 %v739, %v971
        %v973 = vpop.f32.mrb[0].mxu0
        %v974 = vpop.f32.mrb[0].mxu0
        %v975 = vadd.f32 %v742, %v974
        %v976 = vpop.f32.mrb[0].mxu0
        %977 = vmatprep.mubr.bf16.mxu0 0
        %978 = vmatmul.mubr.bf16.gmra.mrb[0].mxu0 %v838
        %v979 = vpop.f32.mrb[0].mxu0
        %v980 = vadd.f32 %v747, %v979
        %v981 = vpop.f32.mrb[0].mxu0
        %v982 = vpop.f32.mrb[0].mxu0
        %v983 = vadd.f32 %v750, %v982
        %v984 = vpop.f32.mrb[0].mxu0
        %985 = vmatprep.mubr.bf16.mxu0 0
        %986 = vmatmul.mubr.bf16.gmra.mrb[0].mxu0 %v841
        %v987 = vpop.f32.mrb[0].mxu0
        %v988 = vadd.f32 %v755, %v987
        %v989 = vpop.f32.mrb[0].mxu0
        %v990 = vpop.f32.mrb[0].mxu0
        %v991 = vadd.f32 %v758, %v990
        %v992 = vpop.f32.mrb[0].mxu0
        %993 = vmatprep.mubr.bf16.mxu0 0
        %994 = vmatmul.mubr.bf16.gmra.mrb[0].mxu0 %v844
        %v995 = vpop.f32.mrb[0].mxu0
        %v996 = vadd.f32 %v763, %v995
        %v997 = vpop.f32.mrb[0].mxu0
        %v998 = vpop.f32.mrb[0].mxu0
        %v999 = vadd.f32 %v766, %v998
        %v1000 = vpop.f32.mrb[0].mxu0
        %1001 = vmatprep.mubr.bf16.mxu0 0
        %1002 = vmatmul.mubr.bf16.gmra.mrb[0].mxu0 %v847
        %v1003 = vpop.f32.mrb[0].mxu0
        %v1004 = vadd.f32 %v771, %v1003
        %v1005 = vpop.f32.mrb[0].mxu0
        %v1006 = vpop.f32.mrb[0].mxu0
        %v1007 = vadd.f32 %v774, %v1006
        %v1008 = vpop.f32.mrb[0].mxu0
        %1009 = vdwg.mxu0
        %v1010 = vld [vmem:[%s3] sm:$0x1]
        %v1012 = vlaneseq
        %v1013 = vshrl.u32 %v1012, 7
        %v1014 = vsub.s32 0, %v1013
        %v1015 = vrot.slane %v1010, %v1014
        %v1017 = vadd.f32 %v884, %v1015
        %v1018 = vadd.f32 %v887, %v1015
        %v1019 = vadd.f32 %v892, %v1015
        %v1020 = vadd.f32 %v895, %v1015
        %v1021 = vadd.f32 %v900, %v1015
        %v1022 = vadd.f32 %v903, %v1015
        %v1023 = vadd.f32 %v908, %v1015
        %v1024 = vadd.f32 %v911, %v1015
        %v1025 = vadd.f32 %v916, %v1015
        %v1026 = vadd.f32 %v919, %v1015
        %v1027 = vadd.f32 %v924, %v1015
        %v1028 = vadd.f32 %v927, %v1015
        %v1029 = vadd.f32 %v932, %v1015
        %v1030 = vadd.f32 %v935, %v1015
        %v1031 = vadd.f32 %v940, %v1015
        %v1032 = vadd.f32 %v943, %v1015
        %v1033 = vadd.f32 %v948, %v1015
        %v1034 = vadd.f32 %v951, %v1015
        %v1035 = vadd.f32 %v956, %v1015
        %v1036 = vadd.f32 %v959, %v1015
        %v1037 = vadd.f32 %v964, %v1015
        %v1038 = vadd.f32 %v967, %v1015
        %v1039 = vadd.f32 %v972, %v1015
        %v1040 = vadd.f32 %v975, %v1015
        %v1041 = vadd.f32 %v980, %v1015
        %v1042 = vadd.f32 %v983, %v1015
        %v1043 = vadd.f32 %v988, %v1015
        %v1044 = vadd.f32 %v991, %v1015
        %v1045 = vadd.f32 %v996, %v1015
        %v1046 = vadd.f32 %v999, %v1015
        %v1047 = vadd.f32 %v1004, %v1015
        %v1048 = vadd.f32 %v1007, %v1015
        %vm1049 = vcmask 261120
        %v1050 = vsel %vm1049, %v1017, 0.0
        %1051 = vadd.xlane.f32.xlu0 %v1050
        %v1052 = vpop.xlane.xlu0 %1051
        %v1053 = vsel %vm1049, %v1018, 0.0
        %1054 = vadd.xlane.f32.xlu0 %v1053
        %v1055 = vpop.xlane.xlu0 %1054
        %v1056 = vsel %vm1049, %v1019, 0.0
        %1057 = vadd.xlane.f32.xlu0 %v1056
        %v1058 = vpop.xlane.xlu0 %1057
        %v1059 = vsel %vm1049, %v1020, 0.0
        %1060 = vadd.xlane.f32.xlu0 %v1059
        %v1061 = vpop.xlane.xlu0 %1060
        %v1062 = vsel %vm1049, %v1021, 0.0
        %1063 = vadd.xlane.f32.xlu0 %v1062
        %v1064 = vpop.xlane.xlu0 %1063
        %v1065 = vsel %vm1049, %v1022, 0.0
        %1066 = vadd.xlane.f32.xlu0 %v1065
        %v1067 = vpop.xlane.xlu0 %1066
        %v1068 = vsel %vm1049, %v1023, 0.0
        %1069 = vadd.xlane.f32.xlu0 %v1068
        %v1070 = vpop.xlane.xlu0 %1069
        %v1071 = vsel %vm1049, %v1024, 0.0
        %1072 = vadd.xlane.f32.xlu0 %v1071
        %v1073 = vpop.xlane.xlu0 %1072
        %v1074 = vsel %vm1049, %v1025, 0.0
        %1075 = vadd.xlane.f32.xlu0 %v1074
        %v1076 = vpop.xlane.xlu0 %1075
        %v1077 = vsel %vm1049, %v1026, 0.0
        %1078 = vadd.xlane.f32.xlu0 %v1077
        %v1079 = vpop.xlane.xlu0 %1078
        %v1080 = vsel %vm1049, %v1027, 0.0
        %1081 = vadd.xlane.f32.xlu0 %v1080
        %v1082 = vpop.xlane.xlu0 %1081
        %v1083 = vsel %vm1049, %v1028, 0.0
        %1084 = vadd.xlane.f32.xlu0 %v1083
        %v1085 = vpop.xlane.xlu0 %1084
        %v1086 = vsel %vm1049, %v1029, 0.0
        %1087 = vadd.xlane.f32.xlu0 %v1086
        %v1088 = vpop.xlane.xlu0 %1087
        %v1089 = vsel %vm1049, %v1030, 0.0
        %1090 = vadd.xlane.f32.xlu0 %v1089
        %v1091 = vpop.xlane.xlu0 %1090
        %v1092 = vsel %vm1049, %v1031, 0.0
        %1093 = vadd.xlane.f32.xlu0 %v1092
        %v1094 = vpop.xlane.xlu0 %1093
        %v1095 = vsel %vm1049, %v1032, 0.0
        %1096 = vadd.xlane.f32.xlu0 %v1095
        %v1097 = vpop.xlane.xlu0 %1096
        %v1098 = vsel %vm1049, %v1033, 0.0
        %1099 = vadd.xlane.f32.xlu0 %v1098
        %v1100 = vpop.xlane.xlu0 %1099
        %v1101 = vsel %vm1049, %v1034, 0.0
        %1102 = vadd.xlane.f32.xlu0 %v1101
        %v1103 = vpop.xlane.xlu0 %1102
        %v1104 = vsel %vm1049, %v1035, 0.0
        %1105 = vadd.xlane.f32.xlu0 %v1104
        %v1106 = vpop.xlane.xlu0 %1105
        %v1107 = vsel %vm1049, %v1036, 0.0
        %1108 = vadd.xlane.f32.xlu0 %v1107
        %v1109 = vpop.xlane.xlu0 %1108
        %v1110 = vsel %vm1049, %v1037, 0.0
        %1111 = vadd.xlane.f32.xlu0 %v1110
        %v1112 = vpop.xlane.xlu0 %1111
        %v1113 = vsel %vm1049, %v1038, 0.0
        %1114 = vadd.xlane.f32.xlu0 %v1113
        %v1115 = vpop.xlane.xlu0 %1114
        %v1116 = vsel %vm1049, %v1039, 0.0
        %1117 = vadd.xlane.f32.xlu0 %v1116
        %v1118 = vpop.xlane.xlu0 %1117
        %v1119 = vsel %vm1049, %v1040, 0.0
        %1120 = vadd.xlane.f32.xlu0 %v1119
        %v1121 = vpop.xlane.xlu0 %1120
        %v1122 = vsel %vm1049, %v1041, 0.0
        %1123 = vadd.xlane.f32.xlu0 %v1122
        %v1124 = vpop.xlane.xlu0 %1123
        %v1125 = vsel %vm1049, %v1042, 0.0
        %1126 = vadd.xlane.f32.xlu0 %v1125
        %v1127 = vpop.xlane.xlu0 %1126
        %v1128 = vsel %vm1049, %v1043, 0.0
        %1129 = vadd.xlane.f32.xlu0 %v1128
        %v1130 = vpop.xlane.xlu0 %1129
        %v1131 = vsel %vm1049, %v1044, 0.0
        %1132 = vadd.xlane.f32.xlu0 %v1131
        %v1133 = vpop.xlane.xlu0 %1132
        %v1134 = vsel %vm1049, %v1045, 0.0
        %1135 = vadd.xlane.f32.xlu0 %v1134
        %v1136 = vpop.xlane.xlu0 %1135
        %v1137 = vsel %vm1049, %v1046, 0.0
        %1138 = vadd.xlane.f32.xlu0 %v1137
        %v1139 = vpop.xlane.xlu0 %1138
        %v1140 = vsel %vm1049, %v1047, 0.0
        %1141 = vadd.xlane.f32.xlu0 %v1140
        %v1142 = vpop.xlane.xlu0 %1141
        %v1143 = vsel %vm1049, %v1048, 0.0
        %1144 = vadd.xlane.f32.xlu0 %v1143
        %v1145 = vpop.xlane.xlu0 %1144
        %v1146 = vrcp.pop 32.0
        %v1147 = vmul.f32 %v1052, %v1146
        %v1148 = vmul.f32 %v1055, %v1146
        %v1149 = vmul.f32 %v1058, %v1146
        %v1150 = vmul.f32 %v1061, %v1146
        %v1151 = vmul.f32 %v1064, %v1146
        %v1152 = vmul.f32 %v1067, %v1146
        %v1153 = vmul.f32 %v1070, %v1146
        %v1154 = vmul.f32 %v1073, %v1146
        %v1155 = vmul.f32 %v1076, %v1146
        %v1156 = vmul.f32 %v1079, %v1146
        %v1157 = vmul.f32 %v1082, %v1146
        %v1158 = vmul.f32 %v1085, %v1146
        %v1159 = vmul.f32 %v1088, %v1146
        %v1160 = vmul.f32 %v1091, %v1146
        %v1161 = vmul.f32 %v1094, %v1146
        %v1162 = vmul.f32 %v1097, %v1146
        %v1163 = vmul.f32 %v1100, %v1146
        %v1164 = vmul.f32 %v1103, %v1146
        %v1165 = vmul.f32 %v1106, %v1146
        %v1166 = vmul.f32 %v1109, %v1146
        %v1167 = vmul.f32 %v1112, %v1146
        %v1168 = vmul.f32 %v1115, %v1146
        %v1169 = vmul.f32 %v1118, %v1146
        %v1170 = vmul.f32 %v1121, %v1146
        %v1171 = vmul.f32 %v1124, %v1146
        %v1172 = vmul.f32 %v1127, %v1146
        %v1173 = vmul.f32 %v1130, %v1146
        %v1174 = vmul.f32 %v1133, %v1146
        %v1175 = vmul.f32 %v1136, %v1146
        %v1176 = vmul.f32 %v1139, %v1146
        %v1177 = vmul.f32 %v1142, %v1146
        %v1178 = vmul.f32 %v1145, %v1146
        %v1179 = vsub.f32 %v1017, %v1147
        %v1180 = vsub.f32 %v1018, %v1148
        %v1181 = vsub.f32 %v1019, %v1149
        %v1182 = vsub.f32 %v1020, %v1150
        %v1183 = vsub.f32 %v1021, %v1151
        %v1184 = vsub.f32 %v1022, %v1152
        %v1185 = vsub.f32 %v1023, %v1153
        %v1186 = vsub.f32 %v1024, %v1154
        %v1187 = vsub.f32 %v1025, %v1155
        %v1188 = vsub.f32 %v1026, %v1156
        %v1189 = vsub.f32 %v1027, %v1157
        %v1190 = vsub.f32 %v1028, %v1158
        %v1191 = vsub.f32 %v1029, %v1159
        %v1192 = vsub.f32 %v1030, %v1160
        %v1193 = vsub.f32 %v1031, %v1161
        %v1194 = vsub.f32 %v1032, %v1162
        %v1195 = vsub.f32 %v1033, %v1163
        %v1196 = vsub.f32 %v1034, %v1164
        %v1197 = vsub.f32 %v1035, %v1165
        %v1198 = vsub.f32 %v1036, %v1166
        %v1199 = vsub.f32 %v1037, %v1167
        %v1200 = vsub.f32 %v1038, %v1168
        %v1201 = vsub.f32 %v1039, %v1169
        %v1202 = vsub.f32 %v1040, %v1170
        %v1203 = vsub.f32 %v1041, %v1171
        %v1204 = vsub.f32 %v1042, %v1172
        %v1205 = vsub.f32 %v1043, %v1173
        %v1206 = vsub.f32 %v1044, %v1174
        %v1207 = vsub.f32 %v1045, %v1175
        %v1208 = vsub.f32 %v1046, %v1176
        %v1209 = vsub.f32 %v1047, %v1177
        %v1210 = vsub.f32 %v1048, %v1178
        %v1211 = vmul.f32 %v1179, %v1179
        %v1212 = vmul.f32 %v1180, %v1180
        %v1213 = vmul.f32 %v1181, %v1181
        %v1214 = vmul.f32 %v1182, %v1182
        %v1215 = vmul.f32 %v1183, %v1183
        %v1216 = vmul.f32 %v1184, %v1184
        %v1217 = vmul.f32 %v1185, %v1185
        %v1218 = vmul.f32 %v1186, %v1186
        %v1219 = vmul.f32 %v1187, %v1187
        %v1220 = vmul.f32 %v1188, %v1188
        %v1221 = vmul.f32 %v1189, %v1189
        %v1222 = vmul.f32 %v1190, %v1190
        %v1223 = vmul.f32 %v1191, %v1191
        %v1224 = vmul.f32 %v1192, %v1192
        %v1225 = vmul.f32 %v1193, %v1193
        %v1226 = vmul.f32 %v1194, %v1194
        %v1227 = vmul.f32 %v1195, %v1195
        %v1228 = vmul.f32 %v1196, %v1196
        %v1229 = vmul.f32 %v1197, %v1197
        %v1230 = vmul.f32 %v1198, %v1198
        %v1231 = vmul.f32 %v1199, %v1199
        %v1232 = vmul.f32 %v1200, %v1200
        %v1233 = vmul.f32 %v1201, %v1201
        %v1234 = vmul.f32 %v1202, %v1202
        %v1235 = vmul.f32 %v1203, %v1203
        %v1236 = vmul.f32 %v1204, %v1204
        %v1237 = vmul.f32 %v1205, %v1205
        %v1238 = vmul.f32 %v1206, %v1206
        %v1239 = vmul.f32 %v1207, %v1207
        %v1240 = vmul.f32 %v1208, %v1208
        %v1241 = vmul.f32 %v1209, %v1209
        %v1242 = vmul.f32 %v1210, %v1210
        %v1243 = vsel %vm1049, %v1211, 0.0
        %1244 = vadd.xlane.f32.xlu0 %v1243
        %v1245 = vpop.xlane.xlu0 %1244
        %v1246 = vsel %vm1049, %v1212, 0.0
        %1247 = vadd.xlane.f32.xlu0 %v1246
        %v1248 = vpop.xlane.xlu0 %1247
        %v1249 = vsel %vm1049, %v1213, 0.0
        %1250 = vadd.xlane.f32.xlu0 %v1249
        %v1251 = vpop.xlane.xlu0 %1250
        %v1252 = vsel %vm1049, %v1214, 0.0
        %1253 = vadd.xlane.f32.xlu0 %v1252
        %v1254 = vpop.xlane.xlu0 %1253
        %v1255 = vsel %vm1049, %v1215, 0.0
        %1256 = vadd.xlane.f32.xlu0 %v1255
        %v1257 = vpop.xlane.xlu0 %1256
        %v1258 = vsel %vm1049, %v1216, 0.0
        %1259 = vadd.xlane.f32.xlu0 %v1258
        %v1260 = vpop.xlane.xlu0 %1259
        %v1261 = vsel %vm1049, %v1217, 0.0
        %1262 = vadd.xlane.f32.xlu0 %v1261
        %v1263 = vpop.xlane.xlu0 %1262
        %v1264 = vsel %vm1049, %v1218, 0.0
        %1265 = vadd.xlane.f32.xlu0 %v1264
        %v1266 = vpop.xlane.xlu0 %1265
        %v1267 = vsel %vm1049, %v1219, 0.0
        %1268 = vadd.xlane.f32.xlu0 %v1267
        %v1269 = vpop.xlane.xlu0 %1268
        %v1270 = vsel %vm1049, %v1220, 0.0
        %1271 = vadd.xlane.f32.xlu0 %v1270
        %v1272 = vpop.xlane.xlu0 %1271
        %v1273 = vsel %vm1049, %v1221, 0.0
        %1274 = vadd.xlane.f32.xlu0 %v1273
        %v1275 = vpop.xlane.xlu0 %1274
        %v1276 = vsel %vm1049, %v1222, 0.0
        %1277 = vadd.xlane.f32.xlu0 %v1276
        %v1278 = vpop.xlane.xlu0 %1277
        %v1279 = vsel %vm1049, %v1223, 0.0
        %1280 = vadd.xlane.f32.xlu0 %v1279
        %v1281 = vpop.xlane.xlu0 %1280
        %v1282 = vsel %vm1049, %v1224, 0.0
        %1283 = vadd.xlane.f32.xlu0 %v1282
        %v1284 = vpop.xlane.xlu0 %1283
        %v1285 = vsel %vm1049, %v1225, 0.0
        %1286 = vadd.xlane.f32.xlu0 %v1285
        %v1287 = vpop.xlane.xlu0 %1286
        %v1288 = vsel %vm1049, %v1226, 0.0
        %1289 = vadd.xlane.f32.xlu0 %v1288
        %v1290 = vpop.xlane.xlu0 %1289
        %v1291 = vsel %vm1049, %v1227, 0.0
        %1292 = vadd.xlane.f32.xlu0 %v1291
        %v1293 = vpop.xlane.xlu0 %1292
        %v1294 = vsel %vm1049, %v1228, 0.0
        %1295 = vadd.xlane.f32.xlu0 %v1294
        %v1296 = vpop.xlane.xlu0 %1295
        %v1297 = vsel %vm1049, %v1229, 0.0
        %1298 = vadd.xlane.f32.xlu0 %v1297
        %v1299 = vpop.xlane.xlu0 %1298
        %v1300 = vsel %vm1049, %v1230, 0.0
        %1301 = vadd.xlane.f32.xlu0 %v1300
        %v1302 = vpop.xlane.xlu0 %1301
        %v1303 = vsel %vm1049, %v1231, 0.0
        %1304 = vadd.xlane.f32.xlu0 %v1303
        %v1305 = vpop.xlane.xlu0 %1304
        %v1306 = vsel %vm1049, %v1232, 0.0
        %1307 = vadd.xlane.f32.xlu0 %v1306
        %v1308 = vpop.xlane.xlu0 %1307
        %v1309 = vsel %vm1049, %v1233, 0.0
        %1310 = vadd.xlane.f32.xlu0 %v1309
        %v1311 = vpop.xlane.xlu0 %1310
        %v1312 = vsel %vm1049, %v1234, 0.0
        %1313 = vadd.xlane.f32.xlu0 %v1312
        %v1314 = vpop.xlane.xlu0 %1313
        %v1315 = vsel %vm1049, %v1235, 0.0
        %1316 = vadd.xlane.f32.xlu0 %v1315
        %v1317 = vpop.xlane.xlu0 %1316
        %v1318 = vsel %vm1049, %v1236, 0.0
        %1319 = vadd.xlane.f32.xlu0 %v1318
        %v1320 = vpop.xlane.xlu0 %1319
        %v1321 = vsel %vm1049, %v1237, 0.0
        %1322 = vadd.xlane.f32.xlu0 %v1321
        %v1323 = vpop.xlane.xlu0 %1322
        %v1324 = vsel %vm1049, %v1238, 0.0
        %1325 = vadd.xlane.f32.xlu0 %v1324
        %v1326 = vpop.xlane.xlu0 %1325
        %v1327 = vsel %vm1049, %v1239, 0.0
        %1328 = vadd.xlane.f32.xlu0 %v1327
        %v1329 = vpop.xlane.xlu0 %1328
        %v1330 = vsel %vm1049, %v1240, 0.0
        %1331 = vadd.xlane.f32.xlu0 %v1330
        %v1332 = vpop.xlane.xlu0 %1331
        %v1333 = vsel %vm1049, %v1241, 0.0
        %1334 = vadd.xlane.f32.xlu0 %v1333
        %v1335 = vpop.xlane.xlu0 %1334
        %v1336 = vsel %vm1049, %v1242, 0.0
        %1337 = vadd.xlane.f32.xlu0 %v1336
        %v1338 = vpop.xlane.xlu0 %1337
        %v1339 = vmul.f32 %v1245, %v1146
        %v1340 = vmul.f32 %v1248, %v1146
        %v1341 = vmul.f32 %v1251, %v1146
        %v1342 = vmul.f32 %v1254, %v1146
        %v1343 = vmul.f32 %v1257, %v1146
        %v1344 = vmul.f32 %v1260, %v1146
        %v1345 = vmul.f32 %v1263, %v1146
        %v1346 = vmul.f32 %v1266, %v1146
        %v1347 = vmul.f32 %v1269, %v1146
        %v1348 = vmul.f32 %v1272, %v1146
        %v1349 = vmul.f32 %v1275, %v1146
        %v1350 = vmul.f32 %v1278, %v1146
        %v1351 = vmul.f32 %v1281, %v1146
        %v1352 = vmul.f32 %v1284, %v1146
        %v1353 = vmul.f32 %v1287, %v1146
        %v1354 = vmul.f32 %v1290, %v1146
        %v1355 = vmul.f32 %v1293, %v1146
        %v1356 = vmul.f32 %v1296, %v1146
        %v1357 = vmul.f32 %v1299, %v1146
        %v1358 = vmul.f32 %v1302, %v1146
        %v1359 = vmul.f32 %v1305, %v1146
        %v1360 = vmul.f32 %v1308, %v1146
        %v1361 = vmul.f32 %v1311, %v1146
        %v1362 = vmul.f32 %v1314, %v1146
        %v1363 = vmul.f32 %v1317, %v1146
        %v1364 = vmul.f32 %v1320, %v1146
        %v1365 = vmul.f32 %v1323, %v1146
        %v1366 = vmul.f32 %v1326, %v1146
        %v1367 = vmul.f32 %v1329, %v1146
        %v1368 = vmul.f32 %v1332, %v1146
        %v1369 = vmul.f32 %v1335, %v1146
        %v1370 = vmul.f32 %v1338, %v1146
        %v1371 = vadd.f32 %v1339, 1e-05
        %v1372 = vadd.f32 %v1340, 1e-05
        %v1373 = vadd.f32 %v1341, 1e-05
        %v1374 = vadd.f32 %v1342, 1e-05
        %v1375 = vadd.f32 %v1343, 1e-05
        %v1376 = vadd.f32 %v1344, 1e-05
        %v1377 = vadd.f32 %v1345, 1e-05
        %v1378 = vadd.f32 %v1346, 1e-05
        %v1379 = vadd.f32 %v1347, 1e-05
        %v1380 = vadd.f32 %v1348, 1e-05
        %v1381 = vadd.f32 %v1349, 1e-05
        %v1382 = vadd.f32 %v1350, 1e-05
        %v1383 = vadd.f32 %v1351, 1e-05
        %v1384 = vadd.f32 %v1352, 1e-05
        %v1385 = vadd.f32 %v1353, 1e-05
        %v1386 = vadd.f32 %v1354, 1e-05
        %v1387 = vadd.f32 %v1355, 1e-05
        %v1388 = vadd.f32 %v1356, 1e-05
        %v1389 = vadd.f32 %v1357, 1e-05
        %v1390 = vadd.f32 %v1358, 1e-05
        %v1391 = vadd.f32 %v1359, 1e-05
        %v1392 = vadd.f32 %v1360, 1e-05
        %v1393 = vadd.f32 %v1361, 1e-05
        %v1394 = vadd.f32 %v1362, 1e-05
        %v1395 = vadd.f32 %v1363, 1e-05
        %v1396 = vadd.f32 %v1364, 1e-05
        %v1397 = vadd.f32 %v1365, 1e-05
        %v1398 = vadd.f32 %v1366, 1e-05
        %v1399 = vadd.f32 %v1367, 1e-05
        %v1400 = vadd.f32 %v1368, 1e-05
        %v1401 = vadd.f32 %v1369, 1e-05
        %v1402 = vadd.f32 %v1370, 1e-05
        %v1403 = vrsqrt.pop %v1371
        %v1404 = vrsqrt.pop %v1372
        %v1405 = vrsqrt.pop %v1373
        %v1406 = vrsqrt.pop %v1374
        %v1407 = vrsqrt.pop %v1375
        %v1408 = vrsqrt.pop %v1376
        %v1409 = vrsqrt.pop %v1377
        %v1410 = vrsqrt.pop %v1378
        %v1411 = vrsqrt.pop %v1379
        %v1412 = vrsqrt.pop %v1380
        %v1413 = vrsqrt.pop %v1381
        %v1414 = vrsqrt.pop %v1382
        %v1415 = vrsqrt.pop %v1383
        %v1416 = vrsqrt.pop %v1384
        %v1417 = vrsqrt.pop %v1385
        %v1418 = vrsqrt.pop %v1386
        %v1419 = vrsqrt.pop %v1387
        %v1420 = vrsqrt.pop %v1388
        %v1421 = vrsqrt.pop %v1389
        %v1422 = vrsqrt.pop %v1390
        %v1423 = vrsqrt.pop %v1391
        %v1424 = vrsqrt.pop %v1392
        %v1425 = vrsqrt.pop %v1393
        %v1426 = vrsqrt.pop %v1394
        %v1427 = vrsqrt.pop %v1395
        %v1428 = vrsqrt.pop %v1396
        %v1429 = vrsqrt.pop %v1397
        %v1430 = vrsqrt.pop %v1398
        %v1431 = vrsqrt.pop %v1399
        %v1432 = vrsqrt.pop %v1400
        %v1433 = vrsqrt.pop %v1401
        %v1434 = vrsqrt.pop %v1402
        %v1435 = vmul.f32 %v1179, %v1403
        %v1436 = vmul.f32 %v1180, %v1404
        %v1437 = vmul.f32 %v1181, %v1405
        %v1438 = vmul.f32 %v1182, %v1406
        %v1439 = vmul.f32 %v1183, %v1407
        %v1440 = vmul.f32 %v1184, %v1408
        %v1441 = vmul.f32 %v1185, %v1409
        %v1442 = vmul.f32 %v1186, %v1410
        %v1443 = vmul.f32 %v1187, %v1411
        %v1444 = vmul.f32 %v1188, %v1412
        %v1445 = vmul.f32 %v1189, %v1413
        %v1446 = vmul.f32 %v1190, %v1414
        %v1447 = vmul.f32 %v1191, %v1415
        %v1448 = vmul.f32 %v1192, %v1416
        %v1449 = vmul.f32 %v1193, %v1417
        %v1450 = vmul.f32 %v1194, %v1418
        %v1451 = vmul.f32 %v1195, %v1419
        %v1452 = vmul.f32 %v1196, %v1420
        %v1453 = vmul.f32 %v1197, %v1421
        %v1454 = vmul.f32 %v1198, %v1422
        %v1455 = vmul.f32 %v1199, %v1423
        %v1456 = vmul.f32 %v1200, %v1424
        %v1457 = vmul.f32 %v1201, %v1425
        %v1458 = vmul.f32 %v1202, %v1426
        %v1459 = vmul.f32 %v1203, %v1427
        %v1460 = vmul.f32 %v1204, %v1428
        %v1461 = vmul.f32 %v1205, %v1429
        %v1462 = vmul.f32 %v1206, %v1430
        %v1463 = vmul.f32 %v1207, %v1431
        %v1464 = vmul.f32 %v1208, %v1432
        %v1465 = vmul.f32 %v1209, %v1433
        %v1466 = vmul.f32 %v1210, %v1434
        %v1467 = vld [vmem:[%s4] sm:$0x1]
        %v1469 = vlaneseq
        %v1470 = vshrl.u32 %v1469, 7
        %v1471 = vsub.s32 0, %v1470
        %v1472 = vrot.slane %v1467, %v1471
        %v1474 = vmul.f32 %v1435, %v1472
        %v1475 = vmul.f32 %v1436, %v1472
        %v1476 = vmul.f32 %v1437, %v1472
        %v1477 = vmul.f32 %v1438, %v1472
        %v1478 = vmul.f32 %v1439, %v1472
        %v1479 = vmul.f32 %v1440, %v1472
        %v1480 = vmul.f32 %v1441, %v1472
        %v1481 = vmul.f32 %v1442, %v1472
        %v1482 = vmul.f32 %v1443, %v1472
        %v1483 = vmul.f32 %v1444, %v1472
        %v1484 = vmul.f32 %v1445, %v1472
        %v1485 = vmul.f32 %v1446, %v1472
        %v1486 = vmul.f32 %v1447, %v1472
        %v1487 = vmul.f32 %v1448, %v1472
        %v1488 = vmul.f32 %v1449, %v1472
        %v1489 = vmul.f32 %v1450, %v1472
        %v1490 = vmul.f32 %v1451, %v1472
        %v1491 = vmul.f32 %v1452, %v1472
        %v1492 = vmul.f32 %v1453, %v1472
        %v1493 = vmul.f32 %v1454, %v1472
        %v1494 = vmul.f32 %v1455, %v1472
        %v1495 = vmul.f32 %v1456, %v1472
        %v1496 = vmul.f32 %v1457, %v1472
        %v1497 = vmul.f32 %v1458, %v1472
        %v1498 = vmul.f32 %v1459, %v1472
        %v1499 = vmul.f32 %v1460, %v1472
        %v1500 = vmul.f32 %v1461, %v1472
        %v1501 = vmul.f32 %v1462, %v1472
        %v1502 = vmul.f32 %v1463, %v1472
        %v1503 = vmul.f32 %v1464, %v1472
        %v1504 = vmul.f32 %v1465, %v1472
        %v1505 = vmul.f32 %v1466, %v1472
        %v1506 = vld [vmem:[%s5] sm:$0x1]
        %v1508 = vlaneseq
        %v1509 = vshrl.u32 %v1508, 7
        %v1510 = vsub.s32 0, %v1509
        %v1511 = vrot.slane %v1506, %v1510
        %v1513 = vadd.f32 %v1474, %v1511
        %v1514 = vadd.f32 %v1475, %v1511
        %v1515 = vadd.f32 %v1476, %v1511
        %v1516 = vadd.f32 %v1477, %v1511
        %v1517 = vadd.f32 %v1478, %v1511
        %v1518 = vadd.f32 %v1479, %v1511
        %v1519 = vadd.f32 %v1480, %v1511
        %v1520 = vadd.f32 %v1481, %v1511
        %v1521 = vadd.f32 %v1482, %v1511
        %v1522 = vadd.f32 %v1483, %v1511
        %v1523 = vadd.f32 %v1484, %v1511
        %v1524 = vadd.f32 %v1485, %v1511
        %v1525 = vadd.f32 %v1486, %v1511
        %v1526 = vadd.f32 %v1487, %v1511
        %v1527 = vadd.f32 %v1488, %v1511
        %v1528 = vadd.f32 %v1489, %v1511
        %v1529 = vadd.f32 %v1490, %v1511
        %v1530 = vadd.f32 %v1491, %v1511
        %v1531 = vadd.f32 %v1492, %v1511
        %v1532 = vadd.f32 %v1493, %v1511
        %v1533 = vadd.f32 %v1494, %v1511
        %v1534 = vadd.f32 %v1495, %v1511
        %v1535 = vadd.f32 %v1496, %v1511
        %v1536 = vadd.f32 %v1497, %v1511
        %v1537 = vadd.f32 %v1498, %v1511
        %v1538 = vadd.f32 %v1499, %v1511
        %v1539 = vadd.f32 %v1500, %v1511
        %v1540 = vadd.f32 %v1501, %v1511
        %v1541 = vadd.f32 %v1502, %v1511
        %v1542 = vadd.f32 %v1503, %v1511
        %v1543 = vadd.f32 %v1504, %v1511
        %v1544 = vadd.f32 %v1505, %v1511
        %v1545 = vpack.c.bf16 %v1514, %v1513
        %v1546 = vpack.c.bf16 %v1516, %v1515
        %v1547 = vpack.c.bf16 %v1518, %v1517
        %v1548 = vpack.c.bf16 %v1520, %v1519
        %v1549 = vpack.c.bf16 %v1522, %v1521
        %v1550 = vpack.c.bf16 %v1524, %v1523
        %v1551 = vpack.c.bf16 %v1526, %v1525
        %v1552 = vpack.c.bf16 %v1528, %v1527
        %v1553 = vpack.c.bf16 %v1530, %v1529
        %v1554 = vpack.c.bf16 %v1532, %v1531
        %v1555 = vpack.c.bf16 %v1534, %v1533
        %v1556 = vpack.c.bf16 %v1536, %v1535
        %v1557 = vpack.c.bf16 %v1538, %v1537
        %v1558 = vpack.c.bf16 %v1540, %v1539
        %v1559 = vpack.c.bf16 %v1542, %v1541
        %v1560 = vpack.c.bf16 %v1544, %v1543
        %v1561 = vld [vmem:[%s7] sm:$0xf]
        %v1562 = vld [vmem:[%s7 + $0x4] sm:$0xf]
        %v1563 = vld [vmem:[%s7 + $0x8] sm:$0xf]
        %v1564 = vld [vmem:[%s7 + $0xc] sm:$0xf]
        %v1569 = vunpack.c.l.b16 %v1561
        %v1570 = vunpack.c.l.b16 %v1562
        %v1571 = vunpack.c.l.b16 %v1563
        %v1572 = vunpack.c.l.b16 %v1564
        %v1573 = vpack.c.b16 %v1570, %v1569
        %v1574 = vpack.c.b16 %v1572, %v1571
        %v1578 = vsel %vm1049, %v1545, 0
        %v1581 = vsel %vm1049, %v1546, 0
        %v1584 = vsel %vm1049, %v1547, 0
        %v1587 = vsel %vm1049, %v1548, 0
        %v1590 = vsel %vm1049, %v1549, 0
        %v1593 = vsel %vm1049, %v1550, 0
        %v1596 = vsel %vm1049, %v1551, 0
        %v1599 = vsel %vm1049, %v1552, 0
        %v1602 = vsel %vm1049, %v1553, 0
        %v1605 = vsel %vm1049, %v1554, 0
        %v1608 = vsel %vm1049, %v1555, 0
        %v1611 = vsel %vm1049, %v1556, 0
        %v1614 = vsel %vm1049, %v1557, 0
        %v1617 = vsel %vm1049, %v1558, 0
        %v1620 = vsel %vm1049, %v1559, 0
        %v1623 = vsel %vm1049, %v1560, 0
        %1625 = vmatprep.subr.bf16.mxu0 0
        %1626 = vmatpush1.bf16.msra.mxu0 %v1573
        %1627 = vmatprep.subr.bf16.mxu0 0
        %1628 = vmatpush1.bf16.msra.mxu0 %v1574
        %1629 = vmatprep.subr.bf16.mxu0 0
        %1630 = vmatpush1.bf16.msra.mxu0 0
        %1631 = vmatprep.subr.bf16.mxu0 0
        %1632 = vmatpush1.bf16.msra.mxu0 0
        %1633 = vmatprep.subr.bf16.mxu0 0
        %1634 = vmatpush1.bf16.msra.mxu0 0
        %1635 = vmatprep.subr.bf16.mxu0 0
        %1636 = vmatpush1.bf16.msra.mxu0 0
        %1637 = vmatprep.subr.bf16.mxu0 0
        %1638 = vmatpush1.bf16.msra.mxu0 0
        %1639 = vmatprep.subr.bf16.mxu0 0
        %1640 = vmatpush1.bf16.msra.mxu0 0
        %1641 = vmatprep.subr.bf16.mxu0 0
        %1642 = vmatpush1.bf16.msra.mxu0 0
        %1643 = vmatprep.subr.bf16.mxu0 0
        %1644 = vmatpush1.bf16.msra.mxu0 0
        %1645 = vmatprep.subr.bf16.mxu0 0
        %1646 = vmatpush1.bf16.msra.mxu0 0
        %1647 = vmatprep.subr.bf16.mxu0 0
        %1648 = vmatpush1.bf16.msra.mxu0 0
        %1649 = vmatprep.subr.bf16.mxu0 0
        %1650 = vmatpush1.bf16.msra.mxu0 0
        %1651 = vmatprep.subr.bf16.mxu0 0
        %1652 = vmatpush1.bf16.msra.mxu0 0
        %1653 = vmatprep.subr.bf16.mxu0 0
        %1654 = vmatpush1.bf16.msra.mxu0 0
        %1655 = vmatprep.subr.bf16.mxu0 0
        %1656 = vmatpush1.bf16.msra.mxu0 0
        %1657 = vmatprep.mubr.bf16.mxu0 0
        %1658 = vmatmul.mubr.bf16.gmra.mrb[0].mxu0 %v1578
        %v1659 = vpop.f32.mrb[0].mxu0
        %v1660 = vadd.f32 0.0, %v1659
        %v1661 = vpop.f32.mrb[0].mxu0
        %v1662 = vpop.f32.mrb[0].mxu0
        %v1663 = vadd.f32 0.0, %v1662
        %v1664 = vpop.f32.mrb[0].mxu0
        %1665 = vmatprep.mubr.bf16.mxu0 0
        %1666 = vmatmul.mubr.bf16.gmra.mrb[0].mxu0 %v1581
        %v1667 = vpop.f32.mrb[0].mxu0
        %v1668 = vadd.f32 0.0, %v1667
        %v1669 = vpop.f32.mrb[0].mxu0
        %v1670 = vpop.f32.mrb[0].mxu0
        %v1671 = vadd.f32 0.0, %v1670
        %v1672 = vpop.f32.mrb[0].mxu0
        %1673 = vmatprep.mubr.bf16.mxu0 0
        %1674 = vmatmul.mubr.bf16.gmra.mrb[0].mxu0 %v1584
        %v1675 = vpop.f32.mrb[0].mxu0
        %v1676 = vadd.f32 0.0, %v1675
        %v1677 = vpop.f32.mrb[0].mxu0
        %v1678 = vpop.f32.mrb[0].mxu0
        %v1679 = vadd.f32 0.0, %v1678
        %v1680 = vpop.f32.mrb[0].mxu0
        %1681 = vmatprep.mubr.bf16.mxu0 0
        %1682 = vmatmul.mubr.bf16.gmra.mrb[0].mxu0 %v1587
        %v1683 = vpop.f32.mrb[0].mxu0
        %v1684 = vadd.f32 0.0, %v1683
        %v1685 = vpop.f32.mrb[0].mxu0
        %v1686 = vpop.f32.mrb[0].mxu0
        %v1687 = vadd.f32 0.0, %v1686
        %v1688 = vpop.f32.mrb[0].mxu0
        %1689 = vmatprep.mubr.bf16.mxu0 0
        %1690 = vmatmul.mubr.bf16.gmra.mrb[0].mxu0 %v1590
        %v1691 = vpop.f32.mrb[0].mxu0
        %v1692 = vadd.f32 0.0, %v1691
        %v1693 = vpop.f32.mrb[0].mxu0
        %v1694 = vpop.f32.mrb[0].mxu0
        %v1695 = vadd.f32 0.0, %v1694
        %v1696 = vpop.f32.mrb[0].mxu0
        %1697 = vmatprep.mubr.bf16.mxu0 0
        %1698 = vmatmul.mubr.bf16.gmra.mrb[0].mxu0 %v1593
        %v1699 = vpop.f32.mrb[0].mxu0
        %v1700 = vadd.f32 0.0, %v1699
        %v1701 = vpop.f32.mrb[0].mxu0
        %v1702 = vpop.f32.mrb[0].mxu0
        %v1703 = vadd.f32 0.0, %v1702
        %v1704 = vpop.f32.mrb[0].mxu0
        %1705 = vmatprep.mubr.bf16.mxu0 0
        %1706 = vmatmul.mubr.bf16.gmra.mrb[0].mxu0 %v1596
        %v1707 = vpop.f32.mrb[0].mxu0
        %v1708 = vadd.f32 0.0, %v1707
        %v1709 = vpop.f32.mrb[0].mxu0
        %v1710 = vpop.f32.mrb[0].mxu0
        %v1711 = vadd.f32 0.0, %v1710
        %v1712 = vpop.f32.mrb[0].mxu0
        %1713 = vmatprep.mubr.bf16.mxu0 0
        %1714 = vmatmul.mubr.bf16.gmra.mrb[0].mxu0 %v1599
        %v1715 = vpop.f32.mrb[0].mxu0
        %v1716 = vadd.f32 0.0, %v1715
        %v1717 = vpop.f32.mrb[0].mxu0
        %v1718 = vpop.f32.mrb[0].mxu0
        %v1719 = vadd.f32 0.0, %v1718
        %v1720 = vpop.f32.mrb[0].mxu0
        %1721 = vmatprep.mubr.bf16.mxu0 0
        %1722 = vmatmul.mubr.bf16.gmra.mrb[0].mxu0 %v1602
        %v1723 = vpop.f32.mrb[0].mxu0
        %v1724 = vadd.f32 0.0, %v1723
        %v1725 = vpop.f32.mrb[0].mxu0
        %v1726 = vpop.f32.mrb[0].mxu0
        %v1727 = vadd.f32 0.0, %v1726
        %v1728 = vpop.f32.mrb[0].mxu0
        %1729 = vmatprep.mubr.bf16.mxu0 0
        %1730 = vmatmul.mubr.bf16.gmra.mrb[0].mxu0 %v1605
        %v1731 = vpop.f32.mrb[0].mxu0
        %v1732 = vadd.f32 0.0, %v1731
        %v1733 = vpop.f32.mrb[0].mxu0
        %v1734 = vpop.f32.mrb[0].mxu0
        %v1735 = vadd.f32 0.0, %v1734
        %v1736 = vpop.f32.mrb[0].mxu0
        %1737 = vmatprep.mubr.bf16.mxu0 0
        %1738 = vmatmul.mubr.bf16.gmra.mrb[0].mxu0 %v1608
        %v1739 = vpop.f32.mrb[0].mxu0
        %v1740 = vadd.f32 0.0, %v1739
        %v1741 = vpop.f32.mrb[0].mxu0
        %v1742 = vpop.f32.mrb[0].mxu0
        %v1743 = vadd.f32 0.0, %v1742
        %v1744 = vpop.f32.mrb[0].mxu0
        %1745 = vmatprep.mubr.bf16.mxu0 0
        %1746 = vmatmul.mubr.bf16.gmra.mrb[0].mxu0 %v1611
        %v1747 = vpop.f32.mrb[0].mxu0
        %v1748 = vadd.f32 0.0, %v1747
        %v1749 = vpop.f32.mrb[0].mxu0
        %v1750 = vpop.f32.mrb[0].mxu0
        %v1751 = vadd.f32 0.0, %v1750
        %v1752 = vpop.f32.mrb[0].mxu0
        %1753 = vmatprep.mubr.bf16.mxu0 0
        %1754 = vmatmul.mubr.bf16.gmra.mrb[0].mxu0 %v1614
        %v1755 = vpop.f32.mrb[0].mxu0
        %v1756 = vadd.f32 0.0, %v1755
        %v1757 = vpop.f32.mrb[0].mxu0
        %v1758 = vpop.f32.mrb[0].mxu0
        %v1759 = vadd.f32 0.0, %v1758
        %v1760 = vpop.f32.mrb[0].mxu0
        %1761 = vmatprep.mubr.bf16.mxu0 0
        %1762 = vmatmul.mubr.bf16.gmra.mrb[0].mxu0 %v1617
        %v1763 = vpop.f32.mrb[0].mxu0
        %v1764 = vadd.f32 0.0, %v1763
        %v1765 = vpop.f32.mrb[0].mxu0
        %v1766 = vpop.f32.mrb[0].mxu0
        %v1767 = vadd.f32 0.0, %v1766
        %v1768 = vpop.f32.mrb[0].mxu0
        %1769 = vmatprep.mubr.bf16.mxu0 0
        %1770 = vmatmul.mubr.bf16.gmra.mrb[0].mxu0 %v1620
        %v1771 = vpop.f32.mrb[0].mxu0
        %v1772 = vadd.f32 0.0, %v1771
        %v1773 = vpop.f32.mrb[0].mxu0
        %v1774 = vpop.f32.mrb[0].mxu0
        %v1775 = vadd.f32 0.0, %v1774
        %v1776 = vpop.f32.mrb[0].mxu0
        %1777 = vmatprep.mubr.bf16.mxu0 0
        %1778 = vmatmul.mubr.bf16.gmra.mrb[0].mxu0 %v1623
        %v1779 = vpop.f32.mrb[0].mxu0
        %v1780 = vadd.f32 0.0, %v1779
        %v1781 = vpop.f32.mrb[0].mxu0
        %v1782 = vpop.f32.mrb[0].mxu0
        %v1783 = vadd.f32 0.0, %v1782
        %v1784 = vpop.f32.mrb[0].mxu0
        %1785 = vdwg.mxu0
        %v1786 = vpack.c.bf16 %v1663, %v1660
        %v1787 = vpack.c.bf16 %v1671, %v1668
        %v1788 = vpack.c.bf16 %v1679, %v1676
        %v1789 = vpack.c.bf16 %v1687, %v1684
        %v1790 = vpack.c.bf16 %v1695, %v1692
        %v1791 = vpack.c.bf16 %v1703, %v1700
        %v1792 = vpack.c.bf16 %v1711, %v1708
        %v1793 = vpack.c.bf16 %v1719, %v1716
        %v1794 = vpack.c.bf16 %v1727, %v1724
        %v1795 = vpack.c.bf16 %v1735, %v1732
        %v1796 = vpack.c.bf16 %v1743, %v1740
        %v1797 = vpack.c.bf16 %v1751, %v1748
        %v1798 = vpack.c.bf16 %v1759, %v1756
        %v1799 = vpack.c.bf16 %v1767, %v1764
        %v1800 = vpack.c.bf16 %v1775, %v1772
        %v1801 = vpack.c.bf16 %v1783, %v1780
        %1802 = vst.msk [vmem:[#allocation2] sm:$0xff] %vm567, %v1786
        %1803 = vst.msk [vmem:[#allocation2 + $0x8] sm:$0xff] %vm567, %v1787
        %1804 = vst.msk [vmem:[#allocation2 + $0x10] sm:$0xff] %vm567, %v1788
        %1805 = vst.msk [vmem:[#allocation2 + $0x18] sm:$0xff] %vm567, %v1789
        %1806 = vst.msk [vmem:[#allocation2 + $0x20] sm:$0xff] %vm567, %v1790
        %1807 = vst.msk [vmem:[#allocation2 + $0x28] sm:$0xff] %vm567, %v1791
        %1808 = vst.msk [vmem:[#allocation2 + $0x30] sm:$0xff] %vm567, %v1792
        %1809 = vst.msk [vmem:[#allocation2 + $0x38] sm:$0xff] %vm567, %v1793
        %1810 = vst.msk [vmem:[#allocation2 + $0x40] sm:$0xff] %vm567, %v1794
        %1811 = vst.msk [vmem:[#allocation2 + $0x48] sm:$0xff] %vm567, %v1795
        %1812 = vst.msk [vmem:[#allocation2 + $0x50] sm:$0xff] %vm567, %v1796
        %1813 = vst.msk [vmem:[#allocation2 + $0x58] sm:$0xff] %vm567, %v1797
        %1814 = vst.msk [vmem:[#allocation2 + $0x60] sm:$0xff] %vm567, %v1798
        %1815 = vst.msk [vmem:[#allocation2 + $0x68] sm:$0xff] %vm567, %v1799
        %1816 = vst.msk [vmem:[#allocation2 + $0x70] sm:$0xff] %vm567, %v1800
        %1817 = vst.msk [vmem:[#allocation2 + $0x78] sm:$0xff] %vm567, %v1801
      $region64: #{tpu_custom_call.1} parent=59 // pred_fallthru
        _
      %v1818 = vld [vmem:[%s405] sm:$0xff]
      %v1819 = vld [vmem:[%s405 + $0x8] sm:$0xff]
      %v1820 = vld [vmem:[%s405 + $0x10] sm:$0xff]
      %v1821 = vld [vmem:[%s405 + $0x18] sm:$0xff]
      %v1822 = vld [vmem:[%s405 + $0x20] sm:$0xff]
      %v1823 = vld [vmem:[%s405 + $0x28] sm:$0xff]
      %v1824 = vld [vmem:[%s405 + $0x30] sm:$0xff]
      %v1825 = vld [vmem:[%s405 + $0x38] sm:$0xff]
      %v1826 = vld [vmem:[%s405 + $0x40] sm:$0xff]
      %v1827 = vld [vmem:[%s405 + $0x48] sm:$0xff]
      %v1828 = vld [vmem:[%s405 + $0x50] sm:$0xff]
      %v1829 = vld [vmem:[%s405 + $0x58] sm:$0xff]
      %v1830 = vld [vmem:[%s405 + $0x60] sm:$0xff]
      %v1831 = vld [vmem:[%s405 + $0x68] sm:$0xff]
      %v1832 = vld [vmem:[%s405 + $0x70] sm:$0xff]
      %v1833 = vld [vmem:[%s405 + $0x78] sm:$0xff]
      %v1834 = vld [vmem:[%s405 + $0x80] sm:$0xff]
      %v1835 = vld [vmem:[%s405 + $0x88] sm:$0xff]
      %v1836 = vld [vmem:[%s405 + $0x90] sm:$0xff]
      %v1837 = vld [vmem:[%s405 + $0x98] sm:$0xff]
      %v1838 = vld [vmem:[%s405 + $0xa0] sm:$0xff]
      %v1839 = vld [vmem:[%s405 + $0xa8] sm:$0xff]
      %v1840 = vld [vmem:[%s405 + $0xb0] sm:$0xff]
      %v1841 = vld [vmem:[%s405 + $0xb8] sm:$0xff]
      %v1842 = vld [vmem:[%s405 + $0xc0] sm:$0xff]
      %v1843 = vld [vmem:[%s405 + $0xc8] sm:$0xff]
      %v1844 = vld [vmem:[%s405 + $0xd0] sm:$0xff]
      %v1845 = vld [vmem:[%s405 + $0xd8] sm:$0xff]
      %v1846 = vld [vmem:[%s405 + $0xe0] sm:$0xff]
      %v1847 = vld [vmem:[%s405 + $0xe8] sm:$0xff]
      %v1848 = vld [vmem:[%s405 + $0xf0] sm:$0xff]
      %v1849 = vld [vmem:[%s405 + $0xf8] sm:$0xff]
      %v1850 = vld [vmem:[%s405 + $0x100] sm:$0xff]
      %v1851 = vld [vmem:[%s405 + $0x108] sm:$0xff]
      %v1852 = vld [vmem:[%s405 + $0x110] sm:$0xff]
      %v1853 = vld [vmem:[%s405 + $0x118] sm:$0xff]
      %v1854 = vld [vmem:[%s405 + $0x120] sm:$0xff]
      %v1855 = vld [vmem:[%s405 + $0x128] sm:$0xff]
      %v1856 = vld [vmem:[%s405 + $0x130] sm:$0xff]
      %v1857 = vld [vmem:[%s405 + $0x138] sm:$0xff]
      %v1858 = vld [vmem:[%s405 + $0x140] sm:$0xff]
      %v1859 = vld [vmem:[%s405 + $0x148] sm:$0xff]
      %v1860 = vld [vmem:[%s405 + $0x150] sm:$0xff]
      %v1861 = vld [vmem:[%s405 + $0x158] sm:$0xff]
      %v1862 = vld [vmem:[%s405 + $0x160] sm:$0xff]
      %v1863 = vld [vmem:[%s405 + $0x168] sm:$0xff]
      %v1864 = vld [vmem:[%s405 + $0x170] sm:$0xff]
      %v1865 = vld [vmem:[%s405 + $0x178] sm:$0xff]
      %v1866 = vld [vmem:[%s405 + $0x180] sm:$0xff]
      %v1867 = vld [vmem:[%s405 + $0x188] sm:$0xff]
      %v1868 = vld [vmem:[%s405 + $0x190] sm:$0xff]
      %v1869 = vld [vmem:[%s405 + $0x198] sm:$0xff]
      %v1870 = vld [vmem:[%s405 + $0x1a0] sm:$0xff]
      %v1871 = vld [vmem:[%s405 + $0x1a8] sm:$0xff]
      %v1872 = vld [vmem:[%s405 + $0x1b0] sm:$0xff]
      %v1873 = vld [vmem:[%s405 + $0x1b8] sm:$0xff]
      %v1874 = vld [vmem:[%s405 + $0x1c0] sm:$0xff]
      %v1875 = vld [vmem:[%s405 + $0x1c8] sm:$0xff]
      %v1876 = vld [vmem:[%s405 + $0x1d0] sm:$0xff]
      %v1877 = vld [vmem:[%s405 + $0x1d8] sm:$0xff]
      %v1878 = vld [vmem:[%s405 + $0x1e0] sm:$0xff]
      %v1879 = vld [vmem:[%s405 + $0x1e8] sm:$0xff]
      %v1880 = vld [vmem:[%s405 + $0x1f0] sm:$0xff]
      %v1881 = vld [vmem:[%s405 + $0x1f8] sm:$0xff]
      %v1882 = vpack.c.bf16 %v1819, %v1818
      %v1883 = vpack.c.bf16 %v1821, %v1820
      %v1884 = vpack.c.bf16 %v1823, %v1822
      %v1885 = vpack.c.bf16 %v1825, %v1824
      %v1886 = vpack.c.bf16 %v1827, %v1826
      %v1887 = vpack.c.bf16 %v1829, %v1828
      %v1888 = vpack.c.bf16 %v1831, %v1830
      %v1889 = vpack.c.bf16 %v1833, %v1832
      %v1890 = vpack.c.bf16 %v1835, %v1834
      %v1891 = vpack.c.bf16 %v1837, %v1836
      %v1892 = vpack.c.bf16 %v1839, %v1838
      %v1893 = vpack.c.bf16 %v1841, %v1840
      %v1894 = vpack.c.bf16 %v1843, %v1842
      %v1895 = vpack.c.bf16 %v1845, %v1844
      %v1896 = vpack.c.bf16 %v1847, %v1846
      %v1897 = vpack.c.bf16 %v1849, %v1848
      %v1898 = vpack.c.bf16 %v1851, %v1850
      %v1899 = vpack.c.bf16 %v1853, %v1852
      %v1900 = vpack.c.bf16 %v1855, %v1854
      %v1901 = vpack.c.bf16 %v1857, %v1856
      %v1902 = vpack.c.bf16 %v1859, %v1858
      %v1903 = vpack.c.bf16 %v1861, %v1860
      %v1904 = vpack.c.bf16 %v1863, %v1862
      %v1905 = vpack.c.bf16 %v1865, %v1864
      %v1906 = vpack.c.bf16 %v1867, %v1866
      %v1907 = vpack.c.bf16 %v1869, %v1868
      %v1908 = vpack.c.bf16 %v1871, %v1870
      %v1909 = vpack.c.bf16 %v1873, %v1872
      %v1910 = vpack.c.bf16 %v1875, %v1874
      %v1911 = vpack.c.bf16 %v1877, %v1876
      %v1912 = vpack.c.bf16 %v1879, %v1878
      %v1913 = vpack.c.bf16 %v1881, %v1880
      %v1914 = vld [vmem:[%s6] sm:$0xf]
      %v1915 = vld [vmem:[%s6 + $0x4] sm:$0xf]
      %v1916 = vld [vmem:[%s6 + $0x8] sm:$0xf]
      %v1917 = vld [vmem:[%s6 + $0xc] sm:$0xf]
      %v1922 = vunpack.c.l.b16 %v1914
      %v1923 = vunpack.c.l.b16 %v1915
      %v1924 = vunpack.c.l.b16 %v1916
      %v1925 = vunpack.c.l.b16 %v1917
      %v1926 = vpack.c.b16 %v1923, %v1922
      %v1927 = vpack.c.b16 %v1925, %v1924
      %vm1930 = vcmask 261120
      %v1932 = vsel %vm1930, %v1882, 0
      %v1935 = vsel %vm1930, %v1883, 0
      %v1938 = vsel %vm1930, %v1884, 0
      %v1941 = vsel %vm1930, %v1885, 0
      %v1944 = vsel %vm1930, %v1886, 0
      %v1947 = vsel %vm1930, %v1887, 0
      %v1950 = vsel %vm1930, %v1888, 0
      %v1953 = vsel %vm1930, %v1889, 0
      %v1956 = vsel %vm1930, %v1890, 0
      %v1959 = vsel %vm1930, %v1891, 0
      %v1962 = vsel %vm1930, %v1892, 0
      %v1965 = vsel %vm1930, %v1893, 0
      %v1968 = vsel %vm1930, %v1894, 0
      %v1971 = vsel %vm1930, %v1895, 0
      %v1974 = vsel %vm1930, %v1896, 0
      %v1977 = vsel %vm1930, %v1897, 0
      %v1980 = vsel %vm1930, %v1898, 0
      %v1983 = vsel %vm1930, %v1899, 0
      %v1986 = vsel %vm1930, %v1900, 0
      %v1989 = vsel %vm1930, %v1901, 0
      %v1992 = vsel %vm1930, %v1902, 0
      %v1995 = vsel %vm1930, %v1903, 0
      %v1998 = vsel %vm1930, %v1904, 0
      %v2001 = vsel %vm1930, %v1905, 0
      %v2004 = vsel %vm1930, %v1906, 0
      %v2007 = vsel %vm1930, %v1907, 0
      %v2010 = vsel %vm1930, %v1908, 0
      %v2013 = vsel %vm1930, %v1909, 0
      %v2016 = vsel %vm1930, %v1910, 0
      %v2019 = vsel %vm1930, %v1911, 0
      %v2022 = vsel %vm1930, %v1912, 0
      %v2025 = vsel %vm1930, %v1913, 0
      %2027 = vmatprep.subr.bf16.mxu0 0
      %2028 = vmatpush1.bf16.msra.mxu0 %v1926
      %2029 = vmatprep.subr.bf16.mxu0 0
      %2030 = vmatpush1.bf16.msra.mxu0 %v1927
      %2031 = vmatprep.subr.bf16.mxu0 0
      %2032 = vmatpush1.bf16.msra.mxu0 0
      %2033 = vmatprep.subr.bf16.mxu0 0
      %2034 = vmatpush1.bf16.msra.mxu0 0
      %2035 = vmatprep.subr.bf16.mxu0 0
      %2036 = vmatpush1.bf16.msra.mxu0 0
      %2037 = vmatprep.subr.bf16.mxu0 0
      %2038 = vmatpush1.bf16.msra.mxu0 0
      %2039 = vmatprep.subr.bf16.mxu0 0
      %2040 = vmatpush1.bf16.msra.mxu0 0
      %2041 = vmatprep.subr.bf16.mxu0 0
      %2042 = vmatpush1.bf16.msra.mxu0 0
      %2043 = vmatprep.subr.bf16.mxu0 0
      %2044 = vmatpush1.bf16.msra.mxu0 0
      %2045 = vmatprep.subr.bf16.mxu0 0
      %2046 = vmatpush1.bf16.msra.mxu0 0
      %2047 = vmatprep.subr.bf16.mxu0 0
      %2048 = vmatpush1.bf16.msra.mxu0 0
      %2049 = vmatprep.subr.bf16.mxu0 0
      %2050 = vmatpush1.bf16.msra.mxu0 0
      %2051 = vmatprep.subr.bf16.mxu0 0
      %2052 = vmatpush1.bf16.msra.mxu0 0
      %2053 = vmatprep.subr.bf16.mxu0 0
      %2054 = vmatpush1.bf16.msra.mxu0 0
      %2055 = vmatprep.subr.bf16.mxu0 0
      %2056 = vmatpush1.bf16.msra.mxu0 0
      %2057 = vmatprep.subr.bf16.mxu0 0
      %2058 = vmatpush1.bf16.msra.mxu0 0
      %2059 = vmatprep.mubr.bf16.mxu0 0
      %2060 = vmatmul.mubr.bf16.gmra.mrb[0].mxu0 %v1932
      %v2061 = vpop.f32.mrb[0].mxu0
      %v2062 = vadd.f32 0.0, %v2061
      %v2063 = vpop.f32.mrb[0].mxu0
      %v2064 = vpop.f32.mrb[0].mxu0
      %v2065 = vadd.f32 0.0, %v2064
      %v2066 = vpop.f32.mrb[0].mxu0
      %2067 = vmatprep.mubr.bf16.mxu0 0
      %2068 = vmatmul.mubr.bf16.gmra.mrb[0].mxu0 %v1935
      %v2069 = vpop.f32.mrb[0].mxu0
      %v2070 = vadd.f32 0.0, %v2069
      %v2071 = vpop.f32.mrb[0].mxu0
      %v2072 = vpop.f32.mrb[0].mxu0
      %v2073 = vadd.f32 0.0, %v2072
      %v2074 = vpop.f32.mrb[0].mxu0
      %2075 = vmatprep.mubr.bf16.mxu0 0
      %2076 = vmatmul.mubr.bf16.gmra.mrb[0].mxu0 %v1938
      %v2077 = vpop.f32.mrb[0].mxu0
      %v2078 = vadd.f32 0.0, %v2077
      %v2079 = vpop.f32.mrb[0].mxu0
      %v2080 = vpop.f32.mrb[0].mxu0
      %v2081 = vadd.f32 0.0, %v2080
      %v2082 = vpop.f32.mrb[0].mxu0
      %2083 = vmatprep.mubr.bf16.mxu0 0
      %2084 = vmatmul.mubr.bf16.gmra.mrb[0].mxu0 %v1941
      %v2085 = vpop.f32.mrb[0].mxu0
      %v2086 = vadd.f32 0.0, %v2085
      %v2087 = vpop.f32.mrb[0].mxu0
      %v2088 = vpop.f32.mrb[0].mxu0
      %v2089 = vadd.f32 0.0, %v2088
      %v2090 = vpop.f32.mrb[0].mxu0
      %2091 = vmatprep.mubr.bf16.mxu0 0
      %2092 = vmatmul.mubr.bf16.gmra.mrb[0].mxu0 %v1944
      %v2093 = vpop.f32.mrb[0].mxu0
      %v2094 = vadd.f32 0.0, %v2093
      %v2095 = vpop.f32.mrb[0].mxu0
      %v2096 = vpop.f32.mrb[0].mxu0
      %v2097 = vadd.f32 0.0, %v2096
      %v2098 = vpop.f32.mrb[0].mxu0
      %2099 = vmatprep.mubr.bf16.mxu0 0
      %2100 = vmatmul.mubr.bf16.gmra.mrb[0].mxu0 %v1947
      %v2101 = vpop.f32.mrb[0].mxu0
      %v2102 = vadd.f32 0.0, %v2101
      %v2103 = vpop.f32.mrb[0].mxu0
      %v2104 = vpop.f32.mrb[0].mxu0
      %v2105 = vadd.f32 0.0, %v2104
      %v2106 = vpop.f32.mrb[0].mxu0
      %2107 = vmatprep.mubr.bf16.mxu0 0
      %2108 = vmatmul.mubr.bf16.gmra.mrb[0].mxu0 %v1950
      %v2109 = vpop.f32.mrb[0].mxu0
      %v2110 = vadd.f32 0.0, %v2109
      %v2111 = vpop.f32.mrb[0].mxu0
      %v2112 = vpop.f32.mrb[0].mxu0
      %v2113 = vadd.f32 0.0, %v2112
      %v2114 = vpop.f32.mrb[0].mxu0
      %2115 = vmatprep.mubr.bf16.mxu0 0
      %2116 = vmatmul.mubr.bf16.gmra.mrb[0].mxu0 %v1953
      %v2117 = vpop.f32.mrb[0].mxu0
      %v2118 = vadd.f32 0.0, %v2117
      %v2119 = vpop.f32.mrb[0].mxu0
      %v2120 = vpop.f32.mrb[0].mxu0
      %v2121 = vadd.f32 0.0, %v2120
      %v2122 = vpop.f32.mrb[0].mxu0
      %2123 = vmatprep.mubr.bf16.mxu0 0
      %2124 = vmatmul.mubr.bf16.gmra.mrb[0].mxu0 %v1956
      %v2125 = vpop.f32.mrb[0].mxu0
      %v2126 = vadd.f32 0.0, %v2125
      %v2127 = vpop.f32.mrb[0].mxu0
      %v2128 = vpop.f32.mrb[0].mxu0
      %v2129 = vadd.f32 0.0, %v2128
      %v2130 = vpop.f32.mrb[0].mxu0
      %2131 = vmatprep.mubr.bf16.mxu0 0
      %2132 = vmatmul.mubr.bf16.gmra.mrb[0].mxu0 %v1959
      %v2133 = vpop.f32.mrb[0].mxu0
      %v2134 = vadd.f32 0.0, %v2133
      %v2135 = vpop.f32.mrb[0].mxu0
      %v2136 = vpop.f32.mrb[0].mxu0
      %v2137 = vadd.f32 0.0, %v2136
      %v2138 = vpop.f32.mrb[0].mxu0
      %2139 = vmatprep.mubr.bf16.mxu0 0
      %2140 = vmatmul.mubr.bf16.gmra.mrb[0].mxu0 %v1962
      %v2141 = vpop.f32.mrb[0].mxu0
      %v2142 = vadd.f32 0.0, %v2141
      %v2143 = vpop.f32.mrb[0].mxu0
      %v2144 = vpop.f32.mrb[0].mxu0
      %v2145 = vadd.f32 0.0, %v2144
      %v2146 = vpop.f32.mrb[0].mxu0
      %2147 = vmatprep.mubr.bf16.mxu0 0
      %2148 = vmatmul.mubr.bf16.gmra.mrb[0].mxu0 %v1965
      %v2149 = vpop.f32.mrb[0].mxu0
      %v2150 = vadd.f32 0.0, %v2149
      %v2151 = vpop.f32.mrb[0].mxu0
      %v2152 = vpop.f32.mrb[0].mxu0
      %v2153 = vadd.f32 0.0, %v2152
      %v2154 = vpop.f32.mrb[0].mxu0
      %2155 = vmatprep.mubr.bf16.mxu0 0
      %2156 = vmatmul.mubr.bf16.gmra.mrb[0].mxu0 %v1968
      %v2157 = vpop.f32.mrb[0].mxu0
      %v2158 = vadd.f32 0.0, %v2157
      %v2159 = vpop.f32.mrb[0].mxu0
      %v2160 = vpop.f32.mrb[0].mxu0
      %v2161 = vadd.f32 0.0, %v2160
      %v2162 = vpop.f32.mrb[0].mxu0
      %2163 = vmatprep.mubr.bf16.mxu0 0
      %2164 = vmatmul.mubr.bf16.gmra.mrb[0].mxu0 %v1971
      %v2165 = vpop.f32.mrb[0].mxu0
      %v2166 = vadd.f32 0.0, %v2165
      %v2167 = vpop.f32.mrb[0].mxu0
      %v2168 = vpop.f32.mrb[0].mxu0
      %v2169 = vadd.f32 0.0, %v2168
      %v2170 = vpop.f32.mrb[0].mxu0
      %2171 = vmatprep.mubr.bf16.mxu0 0
      %2172 = vmatmul.mubr.bf16.gmra.mrb[0].mxu0 %v1974
      %v2173 = vpop.f32.mrb[0].mxu0
      %v2174 = vadd.f32 0.0, %v2173
      %v2175 = vpop.f32.mrb[0].mxu0
      %v2176 = vpop.f32.mrb[0].mxu0
      %v2177 = vadd.f32 0.0, %v2176
      %v2178 = vpop.f32.mrb[0].mxu0
      %2179 = vmatprep.mubr.bf16.mxu0 0
      %2180 = vmatmul.mubr.bf16.gmra.mrb[0].mxu0 %v1977
      %v2181 = vpop.f32.mrb[0].mxu0
      %v2182 = vadd.f32 0.0, %v2181
      %v2183 = vpop.f32.mrb[0].mxu0
      %v2184 = vpop.f32.mrb[0].mxu0
      %v2185 = vadd.f32 0.0, %v2184
      %v2186 = vpop.f32.mrb[0].mxu0
      %2187 = vmatprep.mubr.bf16.mxu0 0
      %2188 = vmatmul.mubr.bf16.gmra.mrb[0].mxu0 %v1980
      %v2189 = vpop.f32.mrb[0].mxu0
      %v2190 = vadd.f32 0.0, %v2189
      %v2191 = vpop.f32.mrb[0].mxu0
      %v2192 = vpop.f32.mrb[0].mxu0
      %v2193 = vadd.f32 0.0, %v2192
      %v2194 = vpop.f32.mrb[0].mxu0
      %2195 = vmatprep.mubr.bf16.mxu0 0
      %2196 = vmatmul.mubr.bf16.gmra.mrb[0].mxu0 %v1983
      %v2197 = vpop.f32.mrb[0].mxu0
      %v2198 = vadd.f32 0.0, %v2197
      %v2199 = vpop.f32.mrb[0].mxu0
      %v2200 = vpop.f32.mrb[0].mxu0
      %v2201 = vadd.f32 0.0, %v2200
      %v2202 = vpop.f32.mrb[0].mxu0
      %2203 = vmatprep.mubr.bf16.mxu0 0
      %2204 = vmatmul.mubr.bf16.gmra.mrb[0].mxu0 %v1986
      %v2205 = vpop.f32.mrb[0].mxu0
      %v2206 = vadd.f32 0.0, %v2205
      %v2207 = vpop.f32.mrb[0].mxu0
      %v2208 = vpop.f32.mrb[0].mxu0
      %v2209 = vadd.f32 0.0, %v2208
      %v2210 = vpop.f32.mrb[0].mxu0
      %2211 = vmatprep.mubr.bf16.mxu0 0
      %2212 = vmatmul.mubr.bf16.gmra.mrb[0].mxu0 %v1989
      %v2213 = vpop.f32.mrb[0].mxu0
      %v2214 = vadd.f32 0.0, %v2213
      %v2215 = vpop.f32.mrb[0].mxu0
      %v2216 = vpop.f32.mrb[0].mxu0
      %v2217 = vadd.f32 0.0, %v2216
      %v2218 = vpop.f32.mrb[0].mxu0
      %2219 = vmatprep.mubr.bf16.mxu0 0
      %2220 = vmatmul.mubr.bf16.gmra.mrb[0].mxu0 %v1992
      %v2221 = vpop.f32.mrb[0].mxu0
      %v2222 = vadd.f32 0.0, %v2221
      %v2223 = vpop.f32.mrb[0].mxu0
      %v2224 = vpop.f32.mrb[0].mxu0
      %v2225 = vadd.f32 0.0, %v2224
      %v2226 = vpop.f32.mrb[0].mxu0
      %2227 = vmatprep.mubr.bf16.mxu0 0
      %2228 = vmatmul.mubr.bf16.gmra.mrb[0].mxu0 %v1995
      %v2229 = vpop.f32.mrb[0].mxu0
      %v2230 = vadd.f32 0.0, %v2229
      %v2231 = vpop.f32.mrb[0].mxu0
      %v2232 = vpop.f32.mrb[0].mxu0
      %v2233 = vadd.f32 0.0, %v2232
      %v2234 = vpop.f32.mrb[0].mxu0
      %2235 = vmatprep.mubr.bf16.mxu0 0
      %2236 = vmatmul.mubr.bf16.gmra.mrb[0].mxu0 %v1998
      %v2237 = vpop.f32.mrb[0].mxu0
      %v2238 = vadd.f32 0.0, %v2237
      %v2239 = vpop.f32.mrb[0].mxu0
      %v2240 = vpop.f32.mrb[0].mxu0
      %v2241 = vadd.f32 0.0, %v2240
      %v2242 = vpop.f32.mrb[0].mxu0
      %2243 = vmatprep.mubr.bf16.mxu0 0
      %2244 = vmatmul.mubr.bf16.gmra.mrb[0].mxu0 %v2001
      %v2245 = vpop.f32.mrb[0].mxu0
      %v2246 = vadd.f32 0.0, %v2245
      %v2247 = vpop.f32.mrb[0].mxu0
      %v2248 = vpop.f32.mrb[0].mxu0
      %v2249 = vadd.f32 0.0, %v2248
      %v2250 = vpop.f32.mrb[0].mxu0
      %2251 = vmatprep.mubr.bf16.mxu0 0
      %2252 = vmatmul.mubr.bf16.gmra.mrb[0].mxu0 %v2004
      %v2253 = vpop.f32.mrb[0].mxu0
      %v2254 = vadd.f32 0.0, %v2253
      %v2255 = vpop.f32.mrb[0].mxu0
      %v2256 = vpop.f32.mrb[0].mxu0
      %v2257 = vadd.f32 0.0, %v2256
      %v2258 = vpop.f32.mrb[0].mxu0
      %2259 = vmatprep.mubr.bf16.mxu0 0
      %2260 = vmatmul.mubr.bf16.gmra.mrb[0].mxu0 %v2007
      %v2261 = vpop.f32.mrb[0].mxu0
      %v2262 = vadd.f32 0.0, %v2261
      %v2263 = vpop.f32.mrb[0].mxu0
      %v2264 = vpop.f32.mrb[0].mxu0
      %v2265 = vadd.f32 0.0, %v2264
      %v2266 = vpop.f32.mrb[0].mxu0
      %2267 = vmatprep.mubr.bf16.mxu0 0
      %2268 = vmatmul.mubr.bf16.gmra.mrb[0].mxu0 %v2010
      %v2269 = vpop.f32.mrb[0].mxu0
      %v2270 = vadd.f32 0.0, %v2269
      %v2271 = vpop.f32.mrb[0].mxu0
      %v2272 = vpop.f32.mrb[0].mxu0
      %v2273 = vadd.f32 0.0, %v2272
      %v2274 = vpop.f32.mrb[0].mxu0
      %2275 = vmatprep.mubr.bf16.mxu0 0
      %2276 = vmatmul.mubr.bf16.gmra.mrb[0].mxu0 %v2013
      %v2277 = vpop.f32.mrb[0].mxu0
      %v2278 = vadd.f32 0.0, %v2277
      %v2279 = vpop.f32.mrb[0].mxu0
      %v2280 = vpop.f32.mrb[0].mxu0
      %v2281 = vadd.f32 0.0, %v2280
      %v2282 = vpop.f32.mrb[0].mxu0
      %2283 = vmatprep.mubr.bf16.mxu0 0
      %2284 = vmatmul.mubr.bf16.gmra.mrb[0].mxu0 %v2016
      %v2285 = vpop.f32.mrb[0].mxu0
      %v2286 = vadd.f32 0.0, %v2285
      %v2287 = vpop.f32.mrb[0].mxu0
      %v2288 = vpop.f32.mrb[0].mxu0
      %v2289 = vadd.f32 0.0, %v2288
      %v2290 = vpop.f32.mrb[0].mxu0
      %2291 = vmatprep.mubr.bf16.mxu0 0
      %2292 = vmatmul.mubr.bf16.gmra.mrb[0].mxu0 %v2019
      %v2293 = vpop.f32.mrb[0].mxu0
      %v2294 = vadd.f32 0.0, %v2293
      %v2295 = vpop.f32.mrb[0].mxu0
      %v2296 = vpop.f32.mrb[0].mxu0
      %v2297 = vadd.f32 0.0, %v2296
      %v2298 = vpop.f32.mrb[0].mxu0
      %2299 = vmatprep.mubr.bf16.mxu0 0
      %2300 = vmatmul.mubr.bf16.gmra.mrb[0].mxu0 %v2022
      %v2301 = vpop.f32.mrb[0].mxu0
      %v2302 = vadd.f32 0.0, %v2301
      %v2303 = vpop.f32.mrb[0].mxu0
      %v2304 = vpop.f32.mrb[0].mxu0
      %v2305 = vadd.f32 0.0, %v2304
      %v2306 = vpop.f32.mrb[0].mxu0
      %2307 = vmatprep.mubr.bf16.mxu0 0
      %2308 = vmatmul.mubr.bf16.gmra.mrb[0].mxu0 %v2025
      %v2309 = vpop.f32.mrb[0].mxu0
      %v2310 = vadd.f32 0.0, %v2309
      %v2311 = vpop.f32.mrb[0].mxu0
      %v2312 = vpop.f32.mrb[0].mxu0
      %v2313 = vadd.f32 0.0, %v2312
      %v2314 = vpop.f32.mrb[0].mxu0
      %2315 = vdwg.mxu0
      %v2316 = vpack.c.bf16 %v2065, %v2062
      %v2317 = vpack.c.bf16 %v2073, %v2070
      %v2318 = vpack.c.bf16 %v2081, %v2078
      %v2319 = vpack.c.bf16 %v2089, %v2086
      %v2320 = vpack.c.bf16 %v2097, %v2094
      %v2321 = vpack.c.bf16 %v2105, %v2102
      %v2322 = vpack.c.bf16 %v2113, %v2110
      %v2323 = vpack.c.bf16 %v2121, %v2118
      %v2324 = vpack.c.bf16 %v2129, %v2126
      %v2325 = vpack.c.bf16 %v2137, %v2134
      %v2326 = vpack.c.bf16 %v2145, %v2142
      %v2327 = vpack.c.bf16 %v2153, %v2150
      %v2328 = vpack.c.bf16 %v2161, %v2158
      %v2329 = vpack.c.bf16 %v2169, %v2166
      %v2330 = vpack.c.bf16 %v2177, %v2174
      %v2331 = vpack.c.bf16 %v2185, %v2182
      %v2332 = vpack.c.bf16 %v2193, %v2190
      %v2333 = vpack.c.bf16 %v2201, %v2198
      %v2334 = vpack.c.bf16 %v2209, %v2206
      %v2335 = vpack.c.bf16 %v2217, %v2214
      %v2336 = vpack.c.bf16 %v2225, %v2222
      %v2337 = vpack.c.bf16 %v2233, %v2230
      %v2338 = vpack.c.bf16 %v2241, %v2238
      %v2339 = vpack.c.bf16 %v2249, %v2246
      %v2340 = vpack.c.bf16 %v2257, %v2254
      %v2341 = vpack.c.bf16 %v2265, %v2262
      %v2342 = vpack.c.bf16 %v2273, %v2270
      %v2343 = vpack.c.bf16 %v2281, %v2278
      %v2344 = vpack.c.bf16 %v2289, %v2286
      %v2345 = vpack.c.bf16 %v2297, %v2294
      %v2346 = vpack.c.bf16 %v2305, %v2302
      %v2347 = vpack.c.bf16 %v2313, %v2310
      %v2348 = vld [vmem:[#allocation2] sm:$0xff]
      %v2349 = vld [vmem:[#allocation2 + $0x8] sm:$0xff]
      %v2350 = vld [vmem:[#allocation2 + $0x10] sm:$0xff]
      %v2351 = vld [vmem:[#allocation2 + $0x18] sm:$0xff]
      %v2352 = vld [vmem:[#allocation2 + $0x20] sm:$0xff]
      %v2353 = vld [vmem:[#allocation2 + $0x28] sm:$0xff]
      %v2354 = vld [vmem:[#allocation2 + $0x30] sm:$0xff]
      %v2355 = vld [vmem:[#allocation2 + $0x38] sm:$0xff]
      %v2356 = vld [vmem:[#allocation2 + $0x40] sm:$0xff]
      %v2357 = vld [vmem:[#allocation2 + $0x48] sm:$0xff]
      %v2358 = vld [vmem:[#allocation2 + $0x50] sm:$0xff]
      %v2359 = vld [vmem:[#allocation2 + $0x58] sm:$0xff]
      %v2360 = vld [vmem:[#allocation2 + $0x60] sm:$0xff]
      %v2361 = vld [vmem:[#allocation2 + $0x68] sm:$0xff]
      %v2362 = vld [vmem:[#allocation2 + $0x70] sm:$0xff]
      %v2363 = vld [vmem:[#allocation2 + $0x78] sm:$0xff]
      %vm2364 = vcmask 64512
      %v2366 = vsel %vm2364, %v2316, 0
      %v2369 = vsel %vm2364, %v2317, 0
      %v2372 = vsel %vm2364, %v2318, 0
      %v2375 = vsel %vm2364, %v2319, 0
      %v2378 = vsel %vm2364, %v2320, 0
      %v2381 = vsel %vm2364, %v2321, 0
      %v2384 = vsel %vm2364, %v2322, 0
      %v2387 = vsel %vm2364, %v2323, 0
      %v2390 = vsel %vm2364, %v2324, 0
      %v2393 = vsel %vm2364, %v2325, 0
      %v2396 = vsel %vm2364, %v2326, 0
      %v2399 = vsel %vm2364, %v2327, 0
      %v2402 = vsel %vm2364, %v2328, 0
      %v2405 = vsel %vm2364, %v2329, 0
      %v2408 = vsel %vm2364, %v2330, 0
      %v2411 = vsel %vm2364, %v2331, 0
      %v2414 = vsel %vm2364, %v2332, 0
      %v2417 = vsel %vm2364, %v2333, 0
      %v2420 = vsel %vm2364, %v2334, 0
      %v2423 = vsel %vm2364, %v2335, 0
      %v2426 = vsel %vm2364, %v2336, 0
      %v2429 = vsel %vm2364, %v2337, 0
      %v2432 = vsel %vm2364, %v2338, 0
      %v2435 = vsel %vm2364, %v2339, 0
      %v2438 = vsel %vm2364, %v2340, 0
      %v2441 = vsel %vm2364, %v2341, 0
      %v2444 = vsel %vm2364, %v2342, 0
      %v2447 = vsel %vm2364, %v2343, 0
      %v2450 = vsel %vm2364, %v2344, 0
      %v2453 = vsel %vm2364, %v2345, 0
      %v2456 = vsel %vm2364, %v2346, 0
      %v2459 = vsel %vm2364, %v2347, 0
      %v2462 = vsel %vm2364, %v2348, 0
      %v2465 = vsel %vm2364, %v2349, 0
      %v2468 = vsel %vm2364, %v2350, 0
      %v2471 = vsel %vm2364, %v2351, 0
      %v2474 = vsel %vm2364, %v2352, 0
      %v2477 = vsel %vm2364, %v2353, 0
      %v2480 = vsel %vm2364, %v2354, 0
      %v2483 = vsel %vm2364, %v2355, 0
      %v2486 = vsel %vm2364, %v2356, 0
      %v2489 = vsel %vm2364, %v2357, 0
      %v2492 = vsel %vm2364, %v2358, 0
      %v2495 = vsel %vm2364, %v2359, 0
      %v2498 = vsel %vm2364, %v2360, 0
      %v2501 = vsel %vm2364, %v2361, 0
      %v2504 = vsel %vm2364, %v2362, 0
      %v2507 = vsel %vm2364, %v2363, 0
      %2509 = vmatprep.subr.bf16.mxu0 0
      %2510 = vmatpush1.bf16.xpose.msra.mxu0 %v2462
      %2511 = vmatprep.subr.bf16.mxu0 0
      %2512 = vmatpush1.bf16.xpose.msra.mxu0 %v2465
      %2513 = vmatprep.subr.bf16.mxu0 0
      %2514 = vmatpush1.bf16.xpose.msra.mxu0 %v2468
      %2515 = vmatprep.subr.bf16.mxu0 0
      %2516 = vmatpush1.bf16.xpose.msra.mxu0 %v2471
      %2517 = vmatprep.subr.bf16.mxu0 0
      %2518 = vmatpush1.bf16.xpose.msra.mxu0 %v2474
      %2519 = vmatprep.subr.bf16.mxu0 0
      %2520 = vmatpush1.bf16.xpose.msra.mxu0 %v2477
      %2521 = vmatprep.subr.bf16.mxu0 0
      %2522 = vmatpush1.bf16.xpose.msra.mxu0 %v2480
      %2523 = vmatprep.subr.bf16.mxu0 0
      %2524 = vmatpush1.bf16.xpose.msra.mxu0 %v2483
      %2525 = vmatprep.subr.bf16.mxu0 0
      %2526 = vmatpush1.bf16.xpose.msra.mxu0 %v2486
      %2527 = vmatprep.subr.bf16.mxu0 0
      %2528 = vmatpush1.bf16.xpose.msra.mxu0 %v2489
      %2529 = vmatprep.subr.bf16.mxu0 0
      %2530 = vmatpush1.bf16.xpose.msra.mxu0 %v2492
      %2531 = vmatprep.subr.bf16.mxu0 0
      %2532 = vmatpush1.bf16.xpose.msra.mxu0 %v2495
      %2533 = vmatprep.subr.bf16.mxu0 0
      %2534 = vmatpush1.bf16.xpose.msra.mxu0 %v2498
      %2535 = vmatprep.subr.bf16.mxu0 0
      %2536 = vmatpush1.bf16.xpose.msra.mxu0 %v2501
      %2537 = vmatprep.subr.bf16.mxu0 0
      %2538 = vmatpush1.bf16.xpose.msra.mxu0 %v2504
      %2539 = vmatprep.subr.bf16.mxu0 0
      %2540 = vmatpush1.bf16.xpose.msra.mxu0 %v2507
      %2541 = vmatprep.mubr.bf16.mxu0 0
      %2542 = vmatmul.mubr.bf16.gmra.mrb[0].mxu0 %v2366
      %v2543 = vpop.f32.mrb[0].mxu0
      %v2544 = vadd.f32 0.0, %v2543
      %v2545 = vpop.f32.mrb[0].mxu0
      %v2546 = vadd.f32 0.0, %v2545
      %v2547 = vpop.f32.mrb[0].mxu0
      %v2548 = vadd.f32 0.0, %v2547
      %v2549 = vpop.f32.mrb[0].mxu0
      %v2550 = vadd.f32 0.0, %v2549
      %2551 = vmatprep.mubr.bf16.mxu0 0
      %2552 = vmatmul.mubr.bf16.gmra.mrb[0].mxu0 %v2369
      %v2553 = vpop.f32.mrb[0].mxu0
      %v2554 = vadd.f32 0.0, %v2553
      %v2555 = vpop.f32.mrb[0].mxu0
      %v2556 = vadd.f32 0.0, %v2555
      %v2557 = vpop.f32.mrb[0].mxu0
      %v2558 = vadd.f32 0.0, %v2557
      %v2559 = vpop.f32.mrb[0].mxu0
      %v2560 = vadd.f32 0.0, %v2559
      %2561 = vmatprep.mubr.bf16.mxu0 0
      %2562 = vmatmul.mubr.bf16.gmra.mrb[0].mxu0 %v2372
      %v2563 = vpop.f32.mrb[0].mxu0
      %v2564 = vadd.f32 0.0, %v2563
      %v2565 = vpop.f32.mrb[0].mxu0
      %v2566 = vadd.f32 0.0, %v2565
      %v2567 = vpop.f32.mrb[0].mxu0
      %v2568 = vadd.f32 0.0, %v2567
      %v2569 = vpop.f32.mrb[0].mxu0
      %v2570 = vadd.f32 0.0, %v2569
      %2571 = vmatprep.mubr.bf16.mxu0 0
      %2572 = vmatmul.mubr.bf16.gmra.mrb[0].mxu0 %v2375
      %v2573 = vpop.f32.mrb[0].mxu0
      %v2574 = vadd.f32 0.0, %v2573
      %v2575 = vpop.f32.mrb[0].mxu0
      %v2576 = vadd.f32 0.0, %v2575
      %v2577 = vpop.f32.mrb[0].mxu0
      %v2578 = vadd.f32 0.0, %v2577
      %v2579 = vpop.f32.mrb[0].mxu0
      %v2580 = vadd.f32 0.0, %v2579
      %2581 = vmatprep.mubr.bf16.mxu0 0
      %2582 = vmatmul.mubr.bf16.gmra.mrb[0].mxu0 %v2378
      %v2583 = vpop.f32.mrb[0].mxu0
      %v2584 = vadd.f32 0.0, %v2583
      %v2585 = vpop.f32.mrb[0].mxu0
      %v2586 = vadd.f32 0.0, %v2585
      %v2587 = vpop.f32.mrb[0].mxu0
      %v2588 = vadd.f32 0.0, %v2587
      %v2589 = vpop.f32.mrb[0].mxu0
      %v2590 = vadd.f32 0.0, %v2589
      %2591 = vmatprep.mubr.bf16.mxu0 0
      %2592 = vmatmul.mubr.bf16.gmra.mrb[0].mxu0 %v2381
      %v2593 = vpop.f32.mrb[0].mxu0
      %v2594 = vadd.f32 0.0, %v2593
      %v2595 = vpop.f32.mrb[0].mxu0
      %v2596 = vadd.f32 0.0, %v2595
      %v2597 = vpop.f32.mrb[0].mxu0
      %v2598 = vadd.f32 0.0, %v2597
      %v2599 = vpop.f32.mrb[0].mxu0
      %v2600 = vadd.f32 0.0, %v2599
      %2601 = vmatprep.mubr.bf16.mxu0 0
      %2602 = vmatmul.mubr.bf16.gmra.mrb[0].mxu0 %v2384
      %v2603 = vpop.f32.mrb[0].mxu0
      %v2604 = vadd.f32 0.0, %v2603
      %v2605 = vpop.f32.mrb[0].mxu0
      %v2606 = vadd.f32 0.0, %v2605
      %v2607 = vpop.f32.mrb[0].mxu0
      %v2608 = vadd.f32 0.0, %v2607
      %v2609 = vpop.f32.mrb[0].mxu0
      %v2610 = vadd.f32 0.0, %v2609
      %2611 = vmatprep.mubr.bf16.mxu0 0
      %2612 = vmatmul.mubr.bf16.gmra.mrb[0].mxu0 %v2387
      %v2613 = vpop.f32.mrb[0].mxu0
      %v2614 = vadd.f32 0.0, %v2613
      %v2615 = vpop.f32.mrb[0].mxu0
      %v2616 = vadd.f32 0.0, %v2615
      %v2617 = vpop.f32.mrb[0].mxu0
      %v2618 = vadd.f32 0.0, %v2617
      %v2619 = vpop.f32.mrb[0].mxu0
      %v2620 = vadd.f32 0.0, %v2619
      %2621 = vmatprep.mubr.bf16.mxu0 0
      %2622 = vmatmul.mubr.bf16.gmra.mrb[0].mxu0 %v2390
      %v2623 = vpop.f32.mrb[0].mxu0
      %v2624 = vadd.f32 0.0, %v2623
      %v2625 = vpop.f32.mrb[0].mxu0
      %v2626 = vadd.f32 0.0, %v2625
      %v2627 = vpop.f32.mrb[0].mxu0
      %v2628 = vadd.f32 0.0, %v2627
      %v2629 = vpop.f32.mrb[0].mxu0
      %v2630 = vadd.f32 0.0, %v2629
      %2631 = vmatprep.mubr.bf16.mxu0 0
      %2632 = vmatmul.mubr.bf16.gmra.mrb[0].mxu0 %v2393
      %v2633 = vpop.f32.mrb[0].mxu0
      %v2634 = vadd.f32 0.0, %v2633
      %v2635 = vpop.f32.mrb[0].mxu0
      %v2636 = vadd.f32 0.0, %v2635
      %v2637 = vpop.f32.mrb[0].mxu0
      %v2638 = vadd.f32 0.0, %v2637
      %v2639 = vpop.f32.mrb[0].mxu0
      %v2640 = vadd.f32 0.0, %v2639
      %2641 = vmatprep.mubr.bf16.mxu0 0
      %2642 = vmatmul.mubr.bf16.gmra.mrb[0].mxu0 %v2396
      %v2643 = vpop.f32.mrb[0].mxu0
      %v2644 = vadd.f32 0.0, %v2643
      %v2645 = vpop.f32.mrb[0].mxu0
      %v2646 = vadd.f32 0.0, %v2645
      %v2647 = vpop.f32.mrb[0].mxu0
      %v2648 = vadd.f32 0.0, %v2647
      %v2649 = vpop.f32.mrb[0].mxu0
      %v2650 = vadd.f32 0.0, %v2649
      %2651 = vmatprep.mubr.bf16.mxu0 0
      %2652 = vmatmul.mubr.bf16.gmra.mrb[0].mxu0 %v2399
      %v2653 = vpop.f32.mrb[0].mxu0
      %v2654 = vadd.f32 0.0, %v2653
      %v2655 = vpop.f32.mrb[0].mxu0
      %v2656 = vadd.f32 0.0, %v2655
      %v2657 = vpop.f32.mrb[0].mxu0
      %v2658 = vadd.f32 0.0, %v2657
      %v2659 = vpop.f32.mrb[0].mxu0
      %v2660 = vadd.f32 0.0, %v2659
      %2661 = vmatprep.mubr.bf16.mxu0 0
      %2662 = vmatmul.mubr.bf16.gmra.mrb[0].mxu0 %v2402
      %v2663 = vpop.f32.mrb[0].mxu0
      %v2664 = vadd.f32 0.0, %v2663
      %v2665 = vpop.f32.mrb[0].mxu0
      %v2666 = vadd.f32 0.0, %v2665
      %v2667 = vpop.f32.mrb[0].mxu0
      %v2668 = vadd.f32 0.0, %v2667
      %v2669 = vpop.f32.mrb[0].mxu0
      %v2670 = vadd.f32 0.0, %v2669
      %2671 = vmatprep.mubr.bf16.mxu0 0
      %2672 = vmatmul.mubr.bf16.gmra.mrb[0].mxu0 %v2405
      %v2673 = vpop.f32.mrb[0].mxu0
      %v2674 = vadd.f32 0.0, %v2673
      %v2675 = vpop.f32.mrb[0].mxu0
      %v2676 = vadd.f32 0.0, %v2675
      %v2677 = vpop.f32.mrb[0].mxu0
      %v2678 = vadd.f32 0.0, %v2677
      %v2679 = vpop.f32.mrb[0].mxu0
      %v2680 = vadd.f32 0.0, %v2679
      %2681 = vmatprep.mubr.bf16.mxu0 0
      %2682 = vmatmul.mubr.bf16.gmra.mrb[0].mxu0 %v2408
      %v2683 = vpop.f32.mrb[0].mxu0
      %v2684 = vadd.f32 0.0, %v2683
      %v2685 = vpop.f32.mrb[0].mxu0
      %v2686 = vadd.f32 0.0, %v2685
      %v2687 = vpop.f32.mrb[0].mxu0
      %v2688 = vadd.f32 0.0, %v2687
      %v2689 = vpop.f32.mrb[0].mxu0
      %v2690 = vadd.f32 0.0, %v2689
      %2691 = vmatprep.mubr.bf16.mxu0 0
      %2692 = vmatmul.mubr.bf16.gmra.mrb[0].mxu0 %v2411
      %v2693 = vpop.f32.mrb[0].mxu0
      %v2694 = vadd.f32 0.0, %v2693
      %v2695 = vpop.f32.mrb[0].mxu0
      %v2696 = vadd.f32 0.0, %v2695
      %v2697 = vpop.f32.mrb[0].mxu0
      %v2698 = vadd.f32 0.0, %v2697
      %v2699 = vpop.f32.mrb[0].mxu0
      %v2700 = vadd.f32 0.0, %v2699
      %2701 = vmatprep.mubr.bf16.mxu0 0
      %2702 = vmatmul.mubr.bf16.gmra.mrb[0].mxu0 %v2414
      %v2703 = vpop.f32.mrb[0].mxu0
      %v2704 = vadd.f32 0.0, %v2703
      %v2705 = vpop.f32.mrb[0].mxu0
      %v2706 = vadd.f32 0.0, %v2705
      %v2707 = vpop.f32.mrb[0].mxu0
      %v2708 = vadd.f32 0.0, %v2707
      %v2709 = vpop.f32.mrb[0].mxu0
      %v2710 = vadd.f32 0.0, %v2709
      %2711 = vmatprep.mubr.bf16.mxu0 0
      %2712 = vmatmul.mubr.bf16.gmra.mrb[0].mxu0 %v2417
      %v2713 = vpop.f32.mrb[0].mxu0
      %v2714 = vadd.f32 0.0, %v2713
      %v2715 = vpop.f32.mrb[0].mxu0
      %v2716 = vadd.f32 0.0, %v2715
      %v2717 = vpop.f32.mrb[0].mxu0
      %v2718 = vadd.f32 0.0, %v2717
      %v2719 = vpop.f32.mrb[0].mxu0
      %v2720 = vadd.f32 0.0, %v2719
      %2721 = vmatprep.mubr.bf16.mxu0 0
      %2722 = vmatmul.mubr.bf16.gmra.mrb[0].mxu0 %v2420
      %v2723 = vpop.f32.mrb[0].mxu0
      %v2724 = vadd.f32 0.0, %v2723
      %v2725 = vpop.f32.mrb[0].mxu0
      %v2726 = vadd.f32 0.0, %v2725
      %v2727 = vpop.f32.mrb[0].mxu0
      %v2728 = vadd.f32 0.0, %v2727
      %v2729 = vpop.f32.mrb[0].mxu0
      %v2730 = vadd.f32 0.0, %v2729
      %2731 = vmatprep.mubr.bf16.mxu0 0
      %2732 = vmatmul.mubr.bf16.gmra.mrb[0].mxu0 %v2423
      %v2733 = vpop.f32.mrb[0].mxu0
      %v2734 = vadd.f32 0.0, %v2733
      %v2735 = vpop.f32.mrb[0].mxu0
      %v2736 = vadd.f32 0.0, %v2735
      %v2737 = vpop.f32.mrb[0].mxu0
      %v2738 = vadd.f32 0.0, %v2737
      %v2739 = vpop.f32.mrb[0].mxu0
      %v2740 = vadd.f32 0.0, %v2739
      %2741 = vmatprep.mubr.bf16.mxu0 0
      %2742 = vmatmul.mubr.bf16.gmra.mrb[0].mxu0 %v2426
      %v2743 = vpop.f32.mrb[0].mxu0
      %v2744 = vadd.f32 0.0, %v2743
      %v2745 = vpop.f32.mrb[0].mxu0
      %v2746 = vadd.f32 0.0, %v2745
      %v2747 = vpop.f32.mrb[0].mxu0
      %v2748 = vadd.f32 0.0, %v2747
      %v2749 = vpop.f32.mrb[0].mxu0
      %v2750 = vadd.f32 0.0, %v2749
      %2751 = vmatprep.mubr.bf16.mxu0 0
      %2752 = vmatmul.mubr.bf16.gmra.mrb[0].mxu0 %v2429
      %v2753 = vpop.f32.mrb[0].mxu0
      %v2754 = vadd.f32 0.0, %v2753
      %v2755 = vpop.f32.mrb[0].mxu0
      %v2756 = vadd.f32 0.0, %v2755
      %v2757 = vpop.f32.mrb[0].mxu0
      %v2758 = vadd.f32 0.0, %v2757
      %v2759 = vpop.f32.mrb[0].mxu0
      %v2760 = vadd.f32 0.0, %v2759
      %2761 = vmatprep.mubr.bf16.mxu0 0
      %2762 = vmatmul.mubr.bf16.gmra.mrb[0].mxu0 %v2432
      %v2763 = vpop.f32.mrb[0].mxu0
      %v2764 = vadd.f32 0.0, %v2763
      %v2765 = vpop.f32.mrb[0].mxu0
      %v2766 = vadd.f32 0.0, %v2765
      %v2767 = vpop.f32.mrb[0].mxu0
      %v2768 = vadd.f32 0.0, %v2767
      %v2769 = vpop.f32.mrb[0].mxu0
      %v2770 = vadd.f32 0.0, %v2769
      %2771 = vmatprep.mubr.bf16.mxu0 0
      %2772 = vmatmul.mubr.bf16.gmra.mrb[0].mxu0 %v2435
      %v2773 = vpop.f32.mrb[0].mxu0
      %v2774 = vadd.f32 0.0, %v2773
      %v2775 = vpop.f32.mrb[0].mxu0
      %v2776 = vadd.f32 0.0, %v2775
      %v2777 = vpop.f32.mrb[0].mxu0
      %v2778 = vadd.f32 0.0, %v2777
      %v2779 = vpop.f32.mrb[0].mxu0
      %v2780 = vadd.f32 0.0, %v2779
      %2781 = vmatprep.mubr.bf16.mxu0 0
      %2782 = vmatmul.mubr.bf16.gmra.mrb[0].mxu0 %v2438
      %v2783 = vpop.f32.mrb[0].mxu0
      %v2784 = vadd.f32 0.0, %v2783
      %v2785 = vpop.f32.mrb[0].mxu0
      %v2786 = vadd.f32 0.0, %v2785
      %v2787 = vpop.f32.mrb[0].mxu0
      %v2788 = vadd.f32 0.0, %v2787
      %v2789 = vpop.f32.mrb[0].mxu0
      %v2790 = vadd.f32 0.0, %v2789
      %2791 = vmatprep.mubr.bf16.mxu0 0
      %2792 = vmatmul.mubr.bf16.gmra.mrb[0].mxu0 %v2441
      %v2793 = vpop.f32.mrb[0].mxu0
      %v2794 = vadd.f32 0.0, %v2793
      %v2795 = vpop.f32.mrb[0].mxu0
      %v2796 = vadd.f32 0.0, %v2795
      %v2797 = vpop.f32.mrb[0].mxu0
      %v2798 = vadd.f32 0.0, %v2797
      %v2799 = vpop.f32.mrb[0].mxu0
      %v2800 = vadd.f32 0.0, %v2799
      %2801 = vmatprep.mubr.bf16.mxu0 0
      %2802 = vmatmul.mubr.bf16.gmra.mrb[0].mxu0 %v2444
      %v2803 = vpop.f32.mrb[0].mxu0
      %v2804 = vadd.f32 0.0, %v2803
      %v2805 = vpop.f32.mrb[0].mxu0
      %v2806 = vadd.f32 0.0, %v2805
      %v2807 = vpop.f32.mrb[0].mxu0
      %v2808 = vadd.f32 0.0, %v2807
      %v2809 = vpop.f32.mrb[0].mxu0
      %v2810 = vadd.f32 0.0, %v2809
      %2811 = vmatprep.mubr.bf16.mxu0 0
      %2812 = vmatmul.mubr.bf16.gmra.mrb[0].mxu0 %v2447
      %v2813 = vpop.f32.mrb[0].mxu0
      %v2814 = vadd.f32 0.0, %v2813
      %v2815 = vpop.f32.mrb[0].mxu0
      %v2816 = vadd.f32 0.0, %v2815
      %v2817 = vpop.f32.mrb[0].mxu0
      %v2818 = vadd.f32 0.0, %v2817
      %v2819 = vpop.f32.mrb[0].mxu0
      %v2820 = vadd.f32 0.0, %v2819
      %2821 = vmatprep.mubr.bf16.mxu0 0
      %2822 = vmatmul.mubr.bf16.gmra.mrb[0].mxu0 %v2450
      %v2823 = vpop.f32.mrb[0].mxu0
      %v2824 = vadd.f32 0.0, %v2823
      %v2825 = vpop.f32.mrb[0].mxu0
      %v2826 = vadd.f32 0.0, %v2825
      %v2827 = vpop.f32.mrb[0].mxu0
      %v2828 = vadd.f32 0.0, %v2827
      %v2829 = vpop.f32.mrb[0].mxu0
      %v2830 = vadd.f32 0.0, %v2829
      %2831 = vmatprep.mubr.bf16.mxu0 0
      %2832 = vmatmul.mubr.bf16.gmra.mrb[0].mxu0 %v2453
      %v2833 = vpop.f32.mrb[0].mxu0
      %v2834 = vadd.f32 0.0, %v2833
      %v2835 = vpop.f32.mrb[0].mxu0
      %v2836 = vadd.f32 0.0, %v2835
      %v2837 = vpop.f32.mrb[0].mxu0
      %v2838 = vadd.f32 0.0, %v2837
      %v2839 = vpop.f32.mrb[0].mxu0
      %v2840 = vadd.f32 0.0, %v2839
      %2841 = vmatprep.mubr.bf16.mxu0 0
      %2842 = vmatmul.mubr.bf16.gmra.mrb[0].mxu0 %v2456
      %v2843 = vpop.f32.mrb[0].mxu0
      %v2844 = vadd.f32 0.0, %v2843
      %v2845 = vpop.f32.mrb[0].mxu0
      %v2846 = vadd.f32 0.0, %v2845
      %v2847 = vpop.f32.mrb[0].mxu0
      %v2848 = vadd.f32 0.0, %v2847
      %v2849 = vpop.f32.mrb[0].mxu0
      %v2850 = vadd.f32 0.0, %v2849
      %2851 = vmatprep.mubr.bf16.mxu0 0
      %2852 = vmatmul.mubr.bf16.gmra.mrb[0].mxu0 %v2459
      %v2853 = vpop.f32.mrb[0].mxu0
      %v2854 = vadd.f32 0.0, %v2853
      %v2855 = vpop.f32.mrb[0].mxu0
      %v2856 = vadd.f32 0.0, %v2855
      %v2857 = vpop.f32.mrb[0].mxu0
      %v2858 = vadd.f32 0.0, %v2857
      %v2859 = vpop.f32.mrb[0].mxu0
      %v2860 = vadd.f32 0.0, %v2859
      %2861 = vdwg.mxu0
      %v2862 = vmax.f32 %v2544, %v2546
      %2863 = vmax.xlane.f32.xlu0 %v2862
      %v2864 = vpop.xlane.xlu0 %2863
      %v2865 = vmax.f32 %v2548, %v2550
      %2866 = vmax.xlane.f32.xlu0 %v2865
      %v2867 = vpop.xlane.xlu0 %2866
      %v2868 = vmax.f32 %v2554, %v2556
      %2869 = vmax.xlane.f32.xlu0 %v2868
      %v2870 = vpop.xlane.xlu0 %2869
      %v2871 = vmax.f32 %v2558, %v2560
      %2872 = vmax.xlane.f32.xlu0 %v2871
      %v2873 = vpop.xlane.xlu0 %2872
      %v2874 = vmax.f32 %v2564, %v2566
      %2875 = vmax.xlane.f32.xlu0 %v2874
      %v2876 = vpop.xlane.xlu0 %2875
      %v2877 = vmax.f32 %v2568, %v2570
      %2878 = vmax.xlane.f32.xlu0 %v2877
      %v2879 = vpop.xlane.xlu0 %2878
      %v2880 = vmax.f32 %v2574, %v2576
      %2881 = vmax.xlane.f32.xlu0 %v2880
      %v2882 = vpop.xlane.xlu0 %2881
      %v2883 = vmax.f32 %v2578, %v2580
      %2884 = vmax.xlane.f32.xlu0 %v2883
      %v2885 = vpop.xlane.xlu0 %2884
      %v2886 = vmax.f32 %v2584, %v2586
      %2887 = vmax.xlane.f32.xlu0 %v2886
      %v2888 = vpop.xlane.xlu0 %2887
      %v2889 = vmax.f32 %v2588, %v2590
      %2890 = vmax.xlane.f32.xlu0 %v2889
      %v2891 = vpop.xlane.xlu0 %2890
      %v2892 = vmax.f32 %v2594, %v2596
      %2893 = vmax.xlane.f32.xlu0 %v2892
      %v2894 = vpop.xlane.xlu0 %2893
      %v2895 = vmax.f32 %v2598, %v2600
      %2896 = vmax.xlane.f32.xlu0 %v2895
      %v2897 = vpop.xlane.xlu0 %2896
      %v2898 = vmax.f32 %v2604, %v2606
      %2899 = vmax.xlane.f32.xlu0 %v2898
      %v2900 = vpop.xlane.xlu0 %2899
      %v2901 = vmax.f32 %v2608, %v2610
      %2902 = vmax.xlane.f32.xlu0 %v2901
      %v2903 = vpop.xlane.xlu0 %2902
      %v2904 = vmax.f32 %v2614, %v2616
      %2905 = vmax.xlane.f32.xlu0 %v2904
      %v2906 = vpop.xlane.xlu0 %2905
      %v2907 = vmax.f32 %v2618, %v2620
      %2908 = vmax.xlane.f32.xlu0 %v2907
      %v2909 = vpop.xlane.xlu0 %2908
      %v2910 = vmax.f32 %v2624, %v2626
      %2911 = vmax.xlane.f32.xlu0 %v2910
      %v2912 = vpop.xlane.xlu0 %2911
      %v2913 = vmax.f32 %v2628, %v2630
      %2914 = vmax.xlane.f32.xlu0 %v2913
      %v2915 = vpop.xlane.xlu0 %2914
      %v2916 = vmax.f32 %v2634, %v2636
      %2917 = vmax.xlane.f32.xlu0 %v2916
      %v2918 = vpop.xlane.xlu0 %2917
      %v2919 = vmax.f32 %v2638, %v2640
      %2920 = vmax.xlane.f32.xlu0 %v2919
      %v2921 = vpop.xlane.xlu0 %2920
      %v2922 = vmax.f32 %v2644, %v2646
      %2923 = vmax.xlane.f32.xlu0 %v2922
      %v2924 = vpop.xlane.xlu0 %2923
      %v2925 = vmax.f32 %v2648, %v2650
      %2926 = vmax.xlane.f32.xlu0 %v2925
      %v2927 = vpop.xlane.xlu0 %2926
      %v2928 = vmax.f32 %v2654, %v2656
      %2929 = vmax.xlane.f32.xlu0 %v2928
      %v2930 = vpop.xlane.xlu0 %2929
      %v2931 = vmax.f32 %v2658, %v2660
      %2932 = vmax.xlane.f32.xlu0 %v2931
      %v2933 = vpop.xlane.xlu0 %2932
      %v2934 = vmax.f32 %v2664, %v2666
      %2935 = vmax.xlane.f32.xlu0 %v2934
      %v2936 = vpop.xlane.xlu0 %2935
      %v2937 = vmax.f32 %v2668, %v2670
      %2938 = vmax.xlane.f32.xlu0 %v2937
      %v2939 = vpop.xlane.xlu0 %2938
      %v2940 = vmax.f32 %v2674, %v2676
      %2941 = vmax.xlane.f32.xlu0 %v2940
      %v2942 = vpop.xlane.xlu0 %2941
      %v2943 = vmax.f32 %v2678, %v2680
      %2944 = vmax.xlane.f32.xlu0 %v2943
      %v2945 = vpop.xlane.xlu0 %2944
      %v2946 = vmax.f32 %v2684, %v2686
      %2947 = vmax.xlane.f32.xlu0 %v2946
      %v2948 = vpop.xlane.xlu0 %2947
      %v2949 = vmax.f32 %v2688, %v2690
      %2950 = vmax.xlane.f32.xlu0 %v2949
      %v2951 = vpop.xlane.xlu0 %2950
      %v2952 = vmax.f32 %v2694, %v2696
      %2953 = vmax.xlane.f32.xlu0 %v2952
      %v2954 = vpop.xlane.xlu0 %2953
      %v2955 = vmax.f32 %v2698, %v2700
      %2956 = vmax.xlane.f32.xlu0 %v2955
      %v2957 = vpop.xlane.xlu0 %2956
      %v2958 = vmax.f32 %v2704, %v2706
      %2959 = vmax.xlane.f32.xlu0 %v2958
      %v2960 = vpop.xlane.xlu0 %2959
      %v2961 = vmax.f32 %v2708, %v2710
      %2962 = vmax.xlane.f32.xlu0 %v2961
      %v2963 = vpop.xlane.xlu0 %2962
      %v2964 = vmax.f32 %v2714, %v2716
      %2965 = vmax.xlane.f32.xlu0 %v2964
      %v2966 = vpop.xlane.xlu0 %2965
      %v2967 = vmax.f32 %v2718, %v2720
      %2968 = vmax.xlane.f32.xlu0 %v2967
      %v2969 = vpop.xlane.xlu0 %2968
      %v2970 = vmax.f32 %v2724, %v2726
      %2971 = vmax.xlane.f32.xlu0 %v2970
      %v2972 = vpop.xlane.xlu0 %2971
      %v2973 = vmax.f32 %v2728, %v2730
      %2974 = vmax.xlane.f32.xlu0 %v2973
      %v2975 = vpop.xlane.xlu0 %2974
      %v2976 = vmax.f32 %v2734, %v2736
      %2977 = vmax.xlane.f32.xlu0 %v2976
      %v2978 = vpop.xlane.xlu0 %2977
      %v2979 = vmax.f32 %v2738, %v2740
      %2980 = vmax.xlane.f32.xlu0 %v2979
      %v2981 = vpop.xlane.xlu0 %2980
      %v2982 = vmax.f32 %v2744, %v2746
      %2983 = vmax.xlane.f32.xlu0 %v2982
      %v2984 = vpop.xlane.xlu0 %2983
      %v2985 = vmax.f32 %v2748, %v2750
      %2986 = vmax.xlane.f32.xlu0 %v2985
      %v2987 = vpop.xlane.xlu0 %2986
      %v2988 = vmax.f32 %v2754, %v2756
      %2989 = vmax.xlane.f32.xlu0 %v2988
      %v2990 = vpop.xlane.xlu0 %2989
      %v2991 = vmax.f32 %v2758, %v2760
      %2992 = vmax.xlane.f32.xlu0 %v2991
      %v2993 = vpop.xlane.xlu0 %2992
      %v2994 = vmax.f32 %v2764, %v2766
      %2995 = vmax.xlane.f32.xlu0 %v2994
      %v2996 = vpop.xlane.xlu0 %2995
      %v2997 = vmax.f32 %v2768, %v2770
      %2998 = vmax.xlane.f32.xlu0 %v2997
      %v2999 = vpop.xlane.xlu0 %2998
      %v3000 = vmax.f32 %v2774, %v2776
      %3001 = vmax.xlane.f32.xlu0 %v3000
      %v3002 = vpop.xlane.xlu0 %3001
      %v3003 = vmax.f32 %v2778, %v2780
      %3004 = vmax.xlane.f32.xlu0 %v3003
      %v3005 = vpop.xlane.xlu0 %3004
      %v3006 = vmax.f32 %v2784, %v2786
      %3007 = vmax.xlane.f32.xlu0 %v3006
      %v3008 = vpop.xlane.xlu0 %3007
      %v3009 = vmax.f32 %v2788, %v2790
      %3010 = vmax.xlane.f32.xlu0 %v3009
      %v3011 = vpop.xlane.xlu0 %3010
      %v3012 = vmax.f32 %v2794, %v2796
      %3013 = vmax.xlane.f32.xlu0 %v3012
      %v3014 = vpop.xlane.xlu0 %3013
      %v3015 = vmax.f32 %v2798, %v2800
      %3016 = vmax.xlane.f32.xlu0 %v3015
      %v3017 = vpop.xlane.xlu0 %3016
      %v3018 = vmax.f32 %v2804, %v2806
      %3019 = vmax.xlane.f32.xlu0 %v3018
      %v3020 = vpop.xlane.xlu0 %3019
      %v3021 = vmax.f32 %v2808, %v2810
      %3022 = vmax.xlane.f32.xlu0 %v3021
      %v3023 = vpop.xlane.xlu0 %3022
      %v3024 = vmax.f32 %v2814, %v2816
      %3025 = vmax.xlane.f32.xlu0 %v3024
      %v3026 = vpop.xlane.xlu0 %3025
      %v3027 = vmax.f32 %v2818, %v2820
      %3028 = vmax.xlane.f32.xlu0 %v3027
      %v3029 = vpop.xlane.xlu0 %3028
      %v3030 = vmax.f32 %v2824, %v2826
      %3031 = vmax.xlane.f32.xlu0 %v3030
      %v3032 = vpop.xlane.xlu0 %3031
      %v3033 = vmax.f32 %v2828, %v2830
      %3034 = vmax.xlane.f32.xlu0 %v3033
      %v3035 = vpop.xlane.xlu0 %3034
      %v3036 = vmax.f32 %v2834, %v2836
      %3037 = vmax.xlane.f32.xlu0 %v3036
      %v3038 = vpop.xlane.xlu0 %3037
      %v3039 = vmax.f32 %v2838, %v2840
      %3040 = vmax.xlane.f32.xlu0 %v3039
      %v3041 = vpop.xlane.xlu0 %3040
      %v3042 = vmax.f32 %v2844, %v2846
      %3043 = vmax.xlane.f32.xlu0 %v3042
      %v3044 = vpop.xlane.xlu0 %3043
      %v3045 = vmax.f32 %v2848, %v2850
      %3046 = vmax.xlane.f32.xlu0 %v3045
      %v3047 = vpop.xlane.xlu0 %3046
      %v3048 = vmax.f32 %v2854, %v2856
      %3049 = vmax.xlane.f32.xlu0 %v3048
      %v3050 = vpop.xlane.xlu0 %3049
      %v3051 = vmax.f32 %v2858, %v2860
      %3052 = vmax.xlane.f32.xlu0 %v3051
      %v3053 = vpop.xlane.xlu0 %3052
      %v3054 = vsub.f32 %v2544, %v2864
      %v3055 = vsub.f32 %v2546, %v2864
      %v3056 = vsub.f32 %v2548, %v2867
      %v3057 = vsub.f32 %v2550, %v2867
      %v3058 = vsub.f32 %v2554, %v2870
      %v3059 = vsub.f32 %v2556, %v2870
      %v3060 = vsub.f32 %v2558, %v2873
      %v3061 = vsub.f32 %v2560, %v2873
      %v3062 = vsub.f32 %v2564, %v2876
      %v3063 = vsub.f32 %v2566, %v2876
      %v3064 = vsub.f32 %v2568, %v2879
      %v3065 = vsub.f32 %v2570, %v2879
      %v3066 = vsub.f32 %v2574, %v2882
      %v3067 = vsub.f32 %v2576, %v2882
      %v3068 = vsub.f32 %v2578, %v2885
      %v3069 = vsub.f32 %v2580, %v2885
      %v3070 = vsub.f32 %v2584, %v2888
      %v3071 = vsub.f32 %v2586, %v2888
      %v3072 = vsub.f32 %v2588, %v2891
      %v3073 = vsub.f32 %v2590, %v2891
      %v3074 = vsub.f32 %v2594, %v2894
      %v3075 = vsub.f32 %v2596, %v2894
      %v3076 = vsub.f32 %v2598, %v2897
      %v3077 = vsub.f32 %v2600, %v2897
      %v3078 = vsub.f32 %v2604, %v2900
      %v3079 = vsub.f32 %v2606, %v2900
      %v3080 = vsub.f32 %v2608, %v2903
      %v3081 = vsub.f32 %v2610, %v2903
      %v3082 = vsub.f32 %v2614, %v2906
      %v3083 = vsub.f32 %v2616, %v2906
      %v3084 = vsub.f32 %v2618, %v2909
      %v3085 = vsub.f32 %v2620, %v2909
      %v3086 = vsub.f32 %v2624, %v2912
      %v3087 = vsub.f32 %v2626, %v2912
      %v3088 = vsub.f32 %v2628, %v2915
      %v3089 = vsub.f32 %v2630, %v2915
      %v3090 = vsub.f32 %v2634, %v2918
      %v3091 = vsub.f32 %v2636, %v2918
      %v3092 = vsub.f32 %v2638, %v2921
      %v3093 = vsub.f32 %v2640, %v2921
      %v3094 = vsub.f32 %v2644, %v2924
      %v3095 = vsub.f32 %v2646, %v2924
      %v3096 = vsub.f32 %v2648, %v2927
      %v3097 = vsub.f32 %v2650, %v2927
      %v3098 = vsub.f32 %v2654, %v2930
      %v3099 = vsub.f32 %v2656, %v2930
      %v3100 = vsub.f32 %v2658, %v2933
      %v3101 = vsub.f32 %v2660, %v2933
      %v3102 = vsub.f32 %v2664, %v2936
      %v3103 = vsub.f32 %v2666, %v2936
      %v3104 = vsub.f32 %v2668, %v2939
      %v3105 = vsub.f32 %v2670, %v2939
      %v3106 = vsub.f32 %v2674, %v2942
      %v3107 = vsub.f32 %v2676, %v2942
      %v3108 = vsub.f32 %v2678, %v2945
      %v3109 = vsub.f32 %v2680, %v2945
      %v3110 = vsub.f32 %v2684, %v2948
      %v3111 = vsub.f32 %v2686, %v2948
      %v3112 = vsub.f32 %v2688, %v2951
      %v3113 = vsub.f32 %v2690, %v2951
      %v3114 = vsub.f32 %v2694, %v2954
      %v3115 = vsub.f32 %v2696, %v2954
      %v3116 = vsub.f32 %v2698, %v2957
      %v3117 = vsub.f32 %v2700, %v2957
      %v3118 = vsub.f32 %v2704, %v2960
      %v3119 = vsub.f32 %v2706, %v2960
      %v3120 = vsub.f32 %v2708, %v2963
      %v3121 = vsub.f32 %v2710, %v2963
      %v3122 = vsub.f32 %v2714, %v2966
      %v3123 = vsub.f32 %v2716, %v2966
      %v3124 = vsub.f32 %v2718, %v2969
      %v3125 = vsub.f32 %v2720, %v2969
      %v3126 = vsub.f32 %v2724, %v2972
      %v3127 = vsub.f32 %v2726, %v2972
      %v3128 = vsub.f32 %v2728, %v2975
      %v3129 = vsub.f32 %v2730, %v2975
      %v3130 = vsub.f32 %v2734, %v2978
      %v3131 = vsub.f32 %v2736, %v2978
      %v3132 = vsub.f32 %v2738, %v2981
      %v3133 = vsub.f32 %v2740, %v2981
      %v3134 = vsub.f32 %v2744, %v2984
      %v3135 = vsub.f32 %v2746, %v2984
      %v3136 = vsub.f32 %v2748, %v2987
      %v3137 = vsub.f32 %v2750, %v2987
      %v3138 = vsub.f32 %v2754, %v2990
      %v3139 = vsub.f32 %v2756, %v2990
      %v3140 = vsub.f32 %v2758, %v2993
      %v3141 = vsub.f32 %v2760, %v2993
      %v3142 = vsub.f32 %v2764, %v2996
      %v3143 = vsub.f32 %v2766, %v2996
      %v3144 = vsub.f32 %v2768, %v2999
      %v3145 = vsub.f32 %v2770, %v2999
      %v3146 = vsub.f32 %v2774, %v3002
      %v3147 = vsub.f32 %v2776, %v3002
      %v3148 = vsub.f32 %v2778, %v3005
      %v3149 = vsub.f32 %v2780, %v3005
      %v3150 = vsub.f32 %v2784, %v3008
      %v3151 = vsub.f32 %v2786, %v3008
      %v3152 = vsub.f32 %v2788, %v3011
      %v3153 = vsub.f32 %v2790, %v3011
      %v3154 = vsub.f32 %v2794, %v3014
      %v3155 = vsub.f32 %v2796, %v3014
      %v3156 = vsub.f32 %v2798, %v3017
      %v3157 = vsub.f32 %v2800, %v3017
      %v3158 = vsub.f32 %v2804, %v3020
      %v3159 = vsub.f32 %v2806, %v3020
      %v3160 = vsub.f32 %v2808, %v3023
      %v3161 = vsub.f32 %v2810, %v3023
      %v3162 = vsub.f32 %v2814, %v3026
      %v3163 = vsub.f32 %v2816, %v3026
      %v3164 = vsub.f32 %v2818, %v3029
      %v3165 = vsub.f32 %v2820, %v3029
      %v3166 = vsub.f32 %v2824, %v3032
      %v3167 = vsub.f32 %v2826, %v3032
      %v3168 = vsub.f32 %v2828, %v3035
      %v3169 = vsub.f32 %v2830, %v3035
      %v3170 = vsub.f32 %v2834, %v3038
      %v3171 = vsub.f32 %v2836, %v3038
      %v3172 = vsub.f32 %v2838, %v3041
      %v3173 = vsub.f32 %v2840, %v3041
      %v3174 = vsub.f32 %v2844, %v3044
      %v3175 = vsub.f32 %v2846, %v3044
      %v3176 = vsub.f32 %v2848, %v3047
      %v3177 = vsub.f32 %v2850, %v3047
      %v3178 = vsub.f32 %v2854, %v3050
      %v3179 = vsub.f32 %v2856, %v3050
      %v3180 = vsub.f32 %v2858, %v3053
      %v3181 = vsub.f32 %v2860, %v3053
      %v3182 = vmul.f32 %v3054, 1.442695
      %v3183 = vpow.pop %v3182
      %v3184 = vmul.f32 %v3055, 1.442695
      %v3185 = vpow.pop %v3184
      %v3186 = vmul.f32 %v3056, 1.442695
      %v3187 = vpow.pop %v3186
      %v3188 = vmul.f32 %v3057, 1.442695
      %v3189 = vpow.pop %v3188
      %v3190 = vmul.f32 %v3058, 1.442695
      %v3191 = vpow.pop %v3190
      %v3192 = vmul.f32 %v3059, 1.442695
      %v3193 = vpow.pop %v3192
      %v3194 = vmul.f32 %v3060, 1.442695
      %v3195 = vpow.pop %v3194
      %v3196 = vmul.f32 %v3061, 1.442695
      %v3197 = vpow.pop %v3196
      %v3198 = vmul.f32 %v3062, 1.442695
      %v3199 = vpow.pop %v3198
      %v3200 = vmul.f32 %v3063, 1.442695
      %v3201 = vpow.pop %v3200
      %v3202 = vmul.f32 %v3064, 1.442695
      %v3203 = vpow.pop %v3202
      %v3204 = vmul.f32 %v3065, 1.442695
      %v3205 = vpow.pop %v3204
      %v3206 = vmul.f32 %v3066, 1.442695
      %v3207 = vpow.pop %v3206
      %v3208 = vmul.f32 %v3067, 1.442695
      %v3209 = vpow.pop %v3208
      %v3210 = vmul.f32 %v3068, 1.442695
      %v3211 = vpow.pop %v3210
      %v3212 = vmul.f32 %v3069, 1.442695
      %v3213 = vpow.pop %v3212
      %v3214 = vmul.f32 %v3070, 1.442695
      %v3215 = vpow.pop %v3214
      %v3216 = vmul.f32 %v3071, 1.442695
      %v3217 = vpow.pop %v3216
      %v3218 = vmul.f32 %v3072, 1.442695
      %v3219 = vpow.pop %v3218
      %v3220 = vmul.f32 %v3073, 1.442695
      %v3221 = vpow.pop %v3220
      %v3222 = vmul.f32 %v3074, 1.442695
      %v3223 = vpow.pop %v3222
      %v3224 = vmul.f32 %v3075, 1.442695
      %v3225 = vpow.pop %v3224
      %v3226 = vmul.f32 %v3076, 1.442695
      %v3227 = vpow.pop %v3226
      %v3228 = vmul.f32 %v3077, 1.442695
      %v3229 = vpow.pop %v3228
      %v3230 = vmul.f32 %v3078, 1.442695
      %v3231 = vpow.pop %v3230
      %v3232 = vmul.f32 %v3079, 1.442695
      %v3233 = vpow.pop %v3232
      %v3234 = vmul.f32 %v3080, 1.442695
      %v3235 = vpow.pop %v3234
      %v3236 = vmul.f32 %v3081, 1.442695
      %v3237 = vpow.pop %v3236
      %v3238 = vmul.f32 %v3082, 1.442695
      %v3239 = vpow.pop %v3238
      %v3240 = vmul.f32 %v3083, 1.442695
      %v3241 = vpow.pop %v3240
      %v3242 = vmul.f32 %v3084, 1.442695
      %v3243 = vpow.pop %v3242
      %v3244 = vmul.f32 %v3085, 1.442695
      %v3245 = vpow.pop %v3244
      %v3246 = vmul.f32 %v3086, 1.442695
      %v3247 = vpow.pop %v3246
      %v3248 = vmul.f32 %v3087, 1.442695
      %v3249 = vpow.pop %v3248
      %v3250 = vmul.f32 %v3088, 1.442695
      %v3251 = vpow.pop %v3250
      %v3252 = vmul.f32 %v3089, 1.442695
      %v3253 = vpow.pop %v3252
      %v3254 = vmul.f32 %v3090, 1.442695
      %v3255 = vpow.pop %v3254
      %v3256 = vmul.f32 %v3091, 1.442695
      %v3257 = vpow.pop %v3256
      %v3258 = vmul.f32 %v3092, 1.442695
      %v3259 = vpow.pop %v3258
      %v3260 = vmul.f32 %v3093, 1.442695
      %v3261 = vpow.pop %v3260
      %v3262 = vmul.f32 %v3094, 1.442695
      %v3263 = vpow.pop %v3262
      %v3264 = vmul.f32 %v3095, 1.442695
      %v3265 = vpow.pop %v3264
      %v3266 = vmul.f32 %v3096, 1.442695
      %v3267 = vpow.pop %v3266
      %v3268 = vmul.f32 %v3097, 1.442695
      %v3269 = vpow.pop %v3268
      %v3270 = vmul.f32 %v3098, 1.442695
      %v3271 = vpow.pop %v3270
      %v3272 = vmul.f32 %v3099, 1.442695
      %v3273 = vpow.pop %v3272
      %v3274 = vmul.f32 %v3100, 1.442695
      %v3275 = vpow.pop %v3274
      %v3276 = vmul.f32 %v3101, 1.442695
      %v3277 = vpow.pop %v3276
      %v3278 = vmul.f32 %v3102, 1.442695
      %v3279 = vpow.pop %v3278
      %v3280 = vmul.f32 %v3103, 1.442695
      %v3281 = vpow.pop %v3280
      %v3282 = vmul.f32 %v3104, 1.442695
      %v3283 = vpow.pop %v3282
      %v3284 = vmul.f32 %v3105, 1.442695
      %v3285 = vpow.pop %v3284
      %v3286 = vmul.f32 %v3106, 1.442695
      %v3287 = vpow.pop %v3286
      %v3288 = vmul.f32 %v3107, 1.442695
      %v3289 = vpow.pop %v3288
      %v3290 = vmul.f32 %v3108, 1.442695
      %v3291 = vpow.pop %v3290
      %v3292 = vmul.f32 %v3109, 1.442695
      %v3293 = vpow.pop %v3292
      %v3294 = vmul.f32 %v3110, 1.442695
      %v3295 = vpow.pop %v3294
      %v3296 = vmul.f32 %v3111, 1.442695
      %v3297 = vpow.pop %v3296
      %v3298 = vmul.f32 %v3112, 1.442695
      %v3299 = vpow.pop %v3298
      %v3300 = vmul.f32 %v3113, 1.442695
      %v3301 = vpow.pop %v3300
      %v3302 = vmul.f32 %v3114, 1.442695
      %v3303 = vpow.pop %v3302
      %v3304 = vmul.f32 %v3115, 1.442695
      %v3305 = vpow.pop %v3304
      %v3306 = vmul.f32 %v3116, 1.442695
      %v3307 = vpow.pop %v3306
      %v3308 = vmul.f32 %v3117, 1.442695
      %v3309 = vpow.pop %v3308
      %v3310 = vmul.f32 %v3118, 1.442695
      %v3311 = vpow.pop %v3310
      %v3312 = vmul.f32 %v3119, 1.442695
      %v3313 = vpow.pop %v3312
      %v3314 = vmul.f32 %v3120, 1.442695
      %v3315 = vpow.pop %v3314
      %v3316 = vmul.f32 %v3121, 1.442695
      %v3317 = vpow.pop %v3316
      %v3318 = vmul.f32 %v3122, 1.442695
      %v3319 = vpow.pop %v3318
      %v3320 = vmul.f32 %v3123, 1.442695
      %v3321 = vpow.pop %v3320
      %v3322 = vmul.f32 %v3124, 1.442695
      %v3323 = vpow.pop %v3322
      %v3324 = vmul.f32 %v3125, 1.442695
      %v3325 = vpow.pop %v3324
      %v3326 = vmul.f32 %v3126, 1.442695
      %v3327 = vpow.pop %v3326
      %v3328 = vmul.f32 %v3127, 1.442695
      %v3329 = vpow.pop %v3328
      %v3330 = vmul.f32 %v3128, 1.442695
      %v3331 = vpow.pop %v3330
      %v3332 = vmul.f32 %v3129, 1.442695
      %v3333 = vpow.pop %v3332
      %v3334 = vmul.f32 %v3130, 1.442695
      %v3335 = vpow.pop %v3334
      %v3336 = vmul.f32 %v3131, 1.442695
      %v3337 = vpow.pop %v3336
      %v3338 = vmul.f32 %v3132, 1.442695
      %v3339 = vpow.pop %v3338
      %v3340 = vmul.f32 %v3133, 1.442695
      %v3341 = vpow.pop %v3340
      %v3342 = vmul.f32 %v3134, 1.442695
      %v3343 = vpow.pop %v3342
      %v3344 = vmul.f32 %v3135, 1.442695
      %v3345 = vpow.pop %v3344
      %v3346 = vmul.f32 %v3136, 1.442695
      %v3347 = vpow.pop %v3346
      %v3348 = vmul.f32 %v3137, 1.442695
      %v3349 = vpow.pop %v3348
      %v3350 = vmul.f32 %v3138, 1.442695
      %v3351 = vpow.pop %v3350
      %v3352 = vmul.f32 %v3139, 1.442695
      %v3353 = vpow.pop %v3352
      %v3354 = vmul.f32 %v3140, 1.442695
      %v3355 = vpow.pop %v3354
      %v3356 = vmul.f32 %v3141, 1.442695
      %v3357 = vpow.pop %v3356
      %v3358 = vmul.f32 %v3142, 1.442695
      %v3359 = vpow.pop %v3358
      %v3360 = vmul.f32 %v3143, 1.442695
      %v3361 = vpow.pop %v3360
      %v3362 = vmul.f32 %v3144, 1.442695
      %v3363 = vpow.pop %v3362
      %v3364 = vmul.f32 %v3145, 1.442695
      %v3365 = vpow.pop %v3364
      %v3366 = vmul.f32 %v3146, 1.442695
      %v3367 = vpow.pop %v3366
      %v3368 = vmul.f32 %v3147, 1.442695
      %v3369 = vpow.pop %v3368
      %v3370 = vmul.f32 %v3148, 1.442695
      %v3371 = vpow.pop %v3370
      %v3372 = vmul.f32 %v3149, 1.442695
      %v3373 = vpow.pop %v3372
      %v3374 = vmul.f32 %v3150, 1.442695
      %v3375 = vpow.pop %v3374
      %v3376 = vmul.f32 %v3151, 1.442695
      %v3377 = vpow.pop %v3376
      %v3378 = vmul.f32 %v3152, 1.442695
      %v3379 = vpow.pop %v3378
      %v3380 = vmul.f32 %v3153, 1.442695
      %v3381 = vpow.pop %v3380
      %v3382 = vmul.f32 %v3154, 1.442695
      %v3383 = vpow.pop %v3382
      %v3384 = vmul.f32 %v3155, 1.442695
      %v3385 = vpow.pop %v3384
      %v3386 = vmul.f32 %v3156, 1.442695
      %v3387 = vpow.pop %v3386
      %v3388 = vmul.f32 %v3157, 1.442695
      %v3389 = vpow.pop %v3388
      %v3390 = vmul.f32 %v3158, 1.442695
      %v3391 = vpow.pop %v3390
      %v3392 = vmul.f32 %v3159, 1.442695
      %v3393 = vpow.pop %v3392
      %v3394 = vmul.f32 %v3160, 1.442695
      %v3395 = vpow.pop %v3394
      %v3396 = vmul.f32 %v3161, 1.442695
      %v3397 = vpow.pop %v3396
      %v3398 = vmul.f32 %v3162, 1.442695
      %v3399 = vpow.pop %v3398
      %v3400 = vmul.f32 %v3163, 1.442695
      %v3401 = vpow.pop %v3400
      %v3402 = vmul.f32 %v3164, 1.442695
      %v3403 = vpow.pop %v3402
      %v3404 = vmul.f32 %v3165, 1.442695
      %v3405 = vpow.pop %v3404
      %v3406 = vmul.f32 %v3166, 1.442695
      %v3407 = vpow.pop %v3406
      %v3408 = vmul.f32 %v3167, 1.442695
      %v3409 = vpow.pop %v3408
      %v3410 = vmul.f32 %v3168, 1.442695
      %v3411 = vpow.pop %v3410
      %v3412 = vmul.f32 %v3169, 1.442695
      %v3413 = vpow.pop %v3412
      %v3414 = vmul.f32 %v3170, 1.442695
      %v3415 = vpow.pop %v3414
      %v3416 = vmul.f32 %v3171, 1.442695
      %v3417 = vpow.pop %v3416
      %v3418 = vmul.f32 %v3172, 1.442695
      %v3419 = vpow.pop %v3418
      %v3420 = vmul.f32 %v3173, 1.442695
      %v3421 = vpow.pop %v3420
      %v3422 = vmul.f32 %v3174, 1.442695
      %v3423 = vpow.pop %v3422
      %v3424 = vmul.f32 %v3175, 1.442695
      %v3425 = vpow.pop %v3424
      %v3426 = vmul.f32 %v3176, 1.442695
      %v3427 = vpow.pop %v3426
      %v3428 = vmul.f32 %v3177, 1.442695
      %v3429 = vpow.pop %v3428
      %v3430 = vmul.f32 %v3178, 1.442695
      %v3431 = vpow.pop %v3430
      %v3432 = vmul.f32 %v3179, 1.442695
      %v3433 = vpow.pop %v3432
      %v3434 = vmul.f32 %v3180, 1.442695
      %v3435 = vpow.pop %v3434
      %v3436 = vmul.f32 %v3181, 1.442695
      %v3437 = vpow.pop %v3436
      %v3438 = vadd.f32 %v3183, %v3185
      %3439 = vadd.xlane.f32.xlu0 %v3438
      %v3440 = vpop.xlane.xlu0 %3439
      %v3441 = vadd.f32 %v3187, %v3189
      %3442 = vadd.xlane.f32.xlu0 %v3441
      %v3443 = vpop.xlane.xlu0 %3442
      %v3444 = vadd.f32 %v3191, %v3193
      %3445 = vadd.xlane.f32.xlu0 %v3444
      %v3446 = vpop.xlane.xlu0 %3445
      %v3447 = vadd.f32 %v3195, %v3197
      %3448 = vadd.xlane.f32.xlu0 %v3447
      %v3449 = vpop.xlane.xlu0 %3448
      %v3450 = vadd.f32 %v3199, %v3201
      %3451 = vadd.xlane.f32.xlu0 %v3450
      %v3452 = vpop.xlane.xlu0 %3451
      %v3453 = vadd.f32 %v3203, %v3205
      %3454 = vadd.xlane.f32.xlu0 %v3453
      %v3455 = vpop.xlane.xlu0 %3454
      %v3456 = vadd.f32 %v3207, %v3209
      %3457 = vadd.xlane.f32.xlu0 %v3456
      %v3458 = vpop.xlane.xlu0 %3457
      %v3459 = vadd.f32 %v3211, %v3213
      %3460 = vadd.xlane.f32.xlu0 %v3459
      %v3461 = vpop.xlane.xlu0 %3460
      %v3462 = vadd.f32 %v3215, %v3217
      %3463 = vadd.xlane.f32.xlu0 %v3462
      %v3464 = vpop.xlane.xlu0 %3463
      %v3465 = vadd.f32 %v3219, %v3221
      %3466 = vadd.xlane.f32.xlu0 %v3465
      %v3467 = vpop.xlane.xlu0 %3466
      %v3468 = vadd.f32 %v3223, %v3225
      %3469 = vadd.xlane.f32.xlu0 %v3468
      %v3470 = vpop.xlane.xlu0 %3469
      %v3471 = vadd.f32 %v3227, %v3229
      %3472 = vadd.xlane.f32.xlu0 %v3471
      %v3473 = vpop.xlane.xlu0 %3472
      %v3474 = vadd.f32 %v3231, %v3233
      %3475 = vadd.xlane.f32.xlu0 %v3474
      %v3476 = vpop.xlane.xlu0 %3475
      %v3477 = vadd.f32 %v3235, %v3237
      %3478 = vadd.xlane.f32.xlu0 %v3477
      %v3479 = vpop.xlane.xlu0 %3478
      %v3480 = vadd.f32 %v3239, %v3241
      %3481 = vadd.xlane.f32.xlu0 %v3480
      %v3482 = vpop.xlane.xlu0 %3481
      %v3483 = vadd.f32 %v3243, %v3245
      %3484 = vadd.xlane.f32.xlu0 %v3483
      %v3485 = vpop.xlane.xlu0 %3484
      %v3486 = vadd.f32 %v3247, %v3249
      %3487 = vadd.xlane.f32.xlu0 %v3486
      %v3488 = vpop.xlane.xlu0 %3487
      %v3489 = vadd.f32 %v3251, %v3253
      %3490 = vadd.xlane.f32.xlu0 %v3489
      %v3491 = vpop.xlane.xlu0 %3490
      %v3492 = vadd.f32 %v3255, %v3257
      %3493 = vadd.xlane.f32.xlu0 %v3492
      %v3494 = vpop.xlane.xlu0 %3493
      %v3495 = vadd.f32 %v3259, %v3261
      %3496 = vadd.xlane.f32.xlu0 %v3495
      %v3497 = vpop.xlane.xlu0 %3496
      %v3498 = vadd.f32 %v3263, %v3265
      %3499 = vadd.xlane.f32.xlu0 %v3498
      %v3500 = vpop.xlane.xlu0 %3499
      %v3501 = vadd.f32 %v3267, %v3269
      %3502 = vadd.xlane.f32.xlu0 %v3501
      %v3503 = vpop.xlane.xlu0 %3502
      %v3504 = vadd.f32 %v3271, %v3273
      %3505 = vadd.xlane.f32.xlu0 %v3504
      %v3506 = vpop.xlane.xlu0 %3505
      %v3507 = vadd.f32 %v3275, %v3277
      %3508 = vadd.xlane.f32.xlu0 %v3507
      %v3509 = vpop.xlane.xlu0 %3508
      %v3510 = vadd.f32 %v3279, %v3281
      %3511 = vadd.xlane.f32.xlu0 %v3510
      %v3512 = vpop.xlane.xlu0 %3511
      %v3513 = vadd.f32 %v3283, %v3285
      %3514 = vadd.xlane.f32.xlu0 %v3513
      %v3515 = vpop.xlane.xlu0 %3514
      %v3516 = vadd.f32 %v3287, %v3289
      %3517 = vadd.xlane.f32.xlu0 %v3516
      %v3518 = vpop.xlane.xlu0 %3517
      %v3519 = vadd.f32 %v3291, %v3293
      %3520 = vadd.xlane.f32.xlu0 %v3519
      %v3521 = vpop.xlane.xlu0 %3520
      %v3522 = vadd.f32 %v3295, %v3297
      %3523 = vadd.xlane.f32.xlu0 %v3522
      %v3524 = vpop.xlane.xlu0 %3523
      %v3525 = vadd.f32 %v3299, %v3301
      %3526 = vadd.xlane.f32.xlu0 %v3525
      %v3527 = vpop.xlane.xlu0 %3526
      %v3528 = vadd.f32 %v3303, %v3305
      %3529 = vadd.xlane.f32.xlu0 %v3528
      %v3530 = vpop.xlane.xlu0 %3529
      %v3531 = vadd.f32 %v3307, %v3309
      %3532 = vadd.xlane.f32.xlu0 %v3531
      %v3533 = vpop.xlane.xlu0 %3532
      %v3534 = vadd.f32 %v3311, %v3313
      %3535 = vadd.xlane.f32.xlu0 %v3534
      %v3536 = vpop.xlane.xlu0 %3535
      %v3537 = vadd.f32 %v3315, %v3317
      %3538 = vadd.xlane.f32.xlu0 %v3537
      %v3539 = vpop.xlane.xlu0 %3538
      %v3540 = vadd.f32 %v3319, %v3321
      %3541 = vadd.xlane.f32.xlu0 %v3540
      %v3542 = vpop.xlane.xlu0 %3541
      %v3543 = vadd.f32 %v3323, %v3325
      %3544 = vadd.xlane.f32.xlu0 %v3543
      %v3545 = vpop.xlane.xlu0 %3544
      %v3546 = vadd.f32 %v3327, %v3329
      %3547 = vadd.xlane.f32.xlu0 %v3546
      %v3548 = vpop.xlane.xlu0 %3547
      %v3549 = vadd.f32 %v3331, %v3333
      %3550 = vadd.xlane.f32.xlu0 %v3549
      %v3551 = vpop.xlane.xlu0 %3550
      %v3552 = vadd.f32 %v3335, %v3337
      %3553 = vadd.xlane.f32.xlu0 %v3552
      %v3554 = vpop.xlane.xlu0 %3553
      %v3555 = vadd.f32 %v3339, %v3341
      %3556 = vadd.xlane.f32.xlu0 %v3555
      %v3557 = vpop.xlane.xlu0 %3556
      %v3558 = vadd.f32 %v3343, %v3345
      %3559 = vadd.xlane.f32.xlu0 %v3558
      %v3560 = vpop.xlane.xlu0 %3559
      %v3561 = vadd.f32 %v3347, %v3349
      %3562 = vadd.xlane.f32.xlu0 %v3561
      %v3563 = vpop.xlane.xlu0 %3562
      %v3564 = vadd.f32 %v3351, %v3353
      %3565 = vadd.xlane.f32.xlu0 %v3564
      %v3566 = vpop.xlane.xlu0 %3565
      %v3567 = vadd.f32 %v3355, %v3357
      %3568 = vadd.xlane.f32.xlu0 %v3567
      %v3569 = vpop.xlane.xlu0 %3568
      %v3570 = vadd.f32 %v3359, %v3361
      %3571 = vadd.xlane.f32.xlu0 %v3570
      %v3572 = vpop.xlane.xlu0 %3571
      %v3573 = vadd.f32 %v3363, %v3365
      %3574 = vadd.xlane.f32.xlu0 %v3573
      %v3575 = vpop.xlane.xlu0 %3574
      %v3576 = vadd.f32 %v3367, %v3369
      %3577 = vadd.xlane.f32.xlu0 %v3576
      %v3578 = vpop.xlane.xlu0 %3577
      %v3579 = vadd.f32 %v3371, %v3373
      %3580 = vadd.xlane.f32.xlu0 %v3579
      %v3581 = vpop.xlane.xlu0 %3580
      %v3582 = vadd.f32 %v3375, %v3377
      %3583 = vadd.xlane.f32.xlu0 %v3582
      %v3584 = vpop.xlane.xlu0 %3583
      %v3585 = vadd.f32 %v3379, %v3381
      %3586 = vadd.xlane.f32.xlu0 %v3585
      %v3587 = vpop.xlane.xlu0 %3586
      %v3588 = vadd.f32 %v3383, %v3385
      %3589 = vadd.xlane.f32.xlu0 %v3588
      %v3590 = vpop.xlane.xlu0 %3589
      %v3591 = vadd.f32 %v3387, %v3389
      %3592 = vadd.xlane.f32.xlu0 %v3591
      %v3593 = vpop.xlane.xlu0 %3592
      %v3594 = vadd.f32 %v3391, %v3393
      %3595 = vadd.xlane.f32.xlu0 %v3594
      %v3596 = vpop.xlane.xlu0 %3595
      %v3597 = vadd.f32 %v3395, %v3397
      %3598 = vadd.xlane.f32.xlu0 %v3597
      %v3599 = vpop.xlane.xlu0 %3598
      %v3600 = vadd.f32 %v3399, %v3401
      %3601 = vadd.xlane.f32.xlu0 %v3600
      %v3602 = vpop.xlane.xlu0 %3601
      %v3603 = vadd.f32 %v3403, %v3405
      %3604 = vadd.xlane.f32.xlu0 %v3603
      %v3605 = vpop.xlane.xlu0 %3604
      %v3606 = vadd.f32 %v3407, %v3409
      %3607 = vadd.xlane.f32.xlu0 %v3606
      %v3608 = vpop.xlane.xlu0 %3607
      %v3609 = vadd.f32 %v3411, %v3413
      %3610 = vadd.xlane.f32.xlu0 %v3609
      %v3611 = vpop.xlane.xlu0 %3610
      %v3612 = vadd.f32 %v3415, %v3417
      %3613 = vadd.xlane.f32.xlu0 %v3612
      %v3614 = vpop.xlane.xlu0 %3613
      %v3615 = vadd.f32 %v3419, %v3421
      %3616 = vadd.xlane.f32.xlu0 %v3615
      %v3617 = vpop.xlane.xlu0 %3616
      %v3618 = vadd.f32 %v3423, %v3425
      %3619 = vadd.xlane.f32.xlu0 %v3618
      %v3620 = vpop.xlane.xlu0 %3619
      %v3621 = vadd.f32 %v3427, %v3429
      %3622 = vadd.xlane.f32.xlu0 %v3621
      %v3623 = vpop.xlane.xlu0 %3622
      %v3624 = vadd.f32 %v3431, %v3433
      %3625 = vadd.xlane.f32.xlu0 %v3624
      %v3626 = vpop.xlane.xlu0 %3625
      %v3627 = vadd.f32 %v3435, %v3437
      %3628 = vadd.xlane.f32.xlu0 %v3627
      %v3629 = vpop.xlane.xlu0 %3628
      %v3630 = vrcp.pop %v3440
      %v3631 = vrcp.pop %v3443
      %v3632 = vrcp.pop %v3446
      %v3633 = vrcp.pop %v3449
      %v3634 = vrcp.pop %v3452
      %v3635 = vrcp.pop %v3455
      %v3636 = vrcp.pop %v3458
      %v3637 = vrcp.pop %v3461
      %v3638 = vrcp.pop %v3464
      %v3639 = vrcp.pop %v3467
      %v3640 = vrcp.pop %v3470
      %v3641 = vrcp.pop %v3473
      %v3642 = vrcp.pop %v3476
      %v3643 = vrcp.pop %v3479
      %v3644 = vrcp.pop %v3482
      %v3645 = vrcp.pop %v3485
      %v3646 = vrcp.pop %v3488
      %v3647 = vrcp.pop %v3491
      %v3648 = vrcp.pop %v3494
      %v3649 = vrcp.pop %v3497
      %v3650 = vrcp.pop %v3500
      %v3651 = vrcp.pop %v3503
      %v3652 = vrcp.pop %v3506
      %v3653 = vrcp.pop %v3509
      %v3654 = vrcp.pop %v3512
      %v3655 = vrcp.pop %v3515
      %v3656 = vrcp.pop %v3518
      %v3657 = vrcp.pop %v3521
      %v3658 = vrcp.pop %v3524
      %v3659 = vrcp.pop %v3527
      %v3660 = vrcp.pop %v3530
      %v3661 = vrcp.pop %v3533
      %v3662 = vrcp.pop %v3536
      %v3663 = vrcp.pop %v3539
      %v3664 = vrcp.pop %v3542
      %v3665 = vrcp.pop %v3545
      %v3666 = vrcp.pop %v3548
      %v3667 = vrcp.pop %v3551
      %v3668 = vrcp.pop %v3554
      %v3669 = vrcp.pop %v3557
      %v3670 = vrcp.pop %v3560
      %v3671 = vrcp.pop %v3563
      %v3672 = vrcp.pop %v3566
      %v3673 = vrcp.pop %v3569
      %v3674 = vrcp.pop %v3572
      %v3675 = vrcp.pop %v3575
      %v3676 = vrcp.pop %v3578
      %v3677 = vrcp.pop %v3581
      %v3678 = vrcp.pop %v3584
      %v3679 = vrcp.pop %v3587
      %v3680 = vrcp.pop %v3590
      %v3681 = vrcp.pop %v3593
      %v3682 = vrcp.pop %v3596
      %v3683 = vrcp.pop %v3599
      %v3684 = vrcp.pop %v3602
      %v3685 = vrcp.pop %v3605
      %v3686 = vrcp.pop %v3608
      %v3687 = vrcp.pop %v3611
      %v3688 = vrcp.pop %v3614
      %v3689 = vrcp.pop %v3617
      %v3690 = vrcp.pop %v3620
      %v3691 = vrcp.pop %v3623
      %v3692 = vrcp.pop %v3626
      %v3693 = vrcp.pop %v3629
      %v3694 = vmul.f32 %v3183, %v3630
      %v3695 = vmul.f32 %v3185, %v3630
      %v3696 = vmul.f32 %v3187, %v3631
      %v3697 = vmul.f32 %v3189, %v3631
      %v3698 = vmul.f32 %v3191, %v3632
      %v3699 = vmul.f32 %v3193, %v3632
      %v3700 = vmul.f32 %v3195, %v3633
      %v3701 = vmul.f32 %v3197, %v3633
      %v3702 = vmul.f32 %v3199, %v3634
      %v3703 = vmul.f32 %v3201, %v3634
      %v3704 = vmul.f32 %v3203, %v3635
      %v3705 = vmul.f32 %v3205, %v3635
      %v3706 = vmul.f32 %v3207, %v3636
      %v3707 = vmul.f32 %v3209, %v3636
      %v3708 = vmul.f32 %v3211, %v3637
      %v3709 = vmul.f32 %v3213, %v3637
      %v3710 = vmul.f32 %v3215, %v3638
      %v3711 = vmul.f32 %v3217, %v3638
      %v3712 = vmul.f32 %v3219, %v3639
      %v3713 = vmul.f32 %v3221, %v3639
      %v3714 = vmul.f32 %v3223, %v3640
      %v3715 = vmul.f32 %v3225, %v3640
      %v3716 = vmul.f32 %v3227, %v3641
      %v3717 = vmul.f32 %v3229, %v3641
      %v3718 = vmul.f32 %v3231, %v3642
      %v3719 = vmul.f32 %v3233, %v3642
      %v3720 = vmul.f32 %v3235, %v3643
      %v3721 = vmul.f32 %v3237, %v3643
      %v3722 = vmul.f32 %v3239, %v3644
      %v3723 = vmul.f32 %v3241, %v3644
      %v3724 = vmul.f32 %v3243, %v3645
      %v3725 = vmul.f32 %v3245, %v3645
      %v3726 = vmul.f32 %v3247, %v3646
      %v3727 = vmul.f32 %v3249, %v3646
      %v3728 = vmul.f32 %v3251, %v3647
      %v3729 = vmul.f32 %v3253, %v3647
      %v3730 = vmul.f32 %v3255, %v3648
      %v3731 = vmul.f32 %v3257, %v3648
      %v3732 = vmul.f32 %v3259, %v3649
      %v3733 = vmul.f32 %v3261, %v3649
      %v3734 = vmul.f32 %v3263, %v3650
      %v3735 = vmul.f32 %v3265, %v3650
      %v3736 = vmul.f32 %v3267, %v3651
      %v3737 = vmul.f32 %v3269, %v3651
      %v3738 = vmul.f32 %v3271, %v3652
      %v3739 = vmul.f32 %v3273, %v3652
      %v3740 = vmul.f32 %v3275, %v3653
      %v3741 = vmul.f32 %v3277, %v3653
      %v3742 = vmul.f32 %v3279, %v3654
      %v3743 = vmul.f32 %v3281, %v3654
      %v3744 = vmul.f32 %v3283, %v3655
      %v3745 = vmul.f32 %v3285, %v3655
      %v3746 = vmul.f32 %v3287, %v3656
      %v3747 = vmul.f32 %v3289, %v3656
      %v3748 = vmul.f32 %v3291, %v3657
      %v3749 = vmul.f32 %v3293, %v3657
      %v3750 = vmul.f32 %v3295, %v3658
      %v3751 = vmul.f32 %v3297, %v3658
      %v3752 = vmul.f32 %v3299, %v3659
      %v3753 = vmul.f32 %v3301, %v3659
      %v3754 = vmul.f32 %v3303, %v3660
      %v3755 = vmul.f32 %v3305, %v3660
      %v3756 = vmul.f32 %v3307, %v3661
      %v3757 = vmul.f32 %v3309, %v3661
      %v3758 = vmul.f32 %v3311, %v3662
      %v3759 = vmul.f32 %v3313, %v3662
      %v3760 = vmul.f32 %v3315, %v3663
      %v3761 = vmul.f32 %v3317, %v3663
      %v3762 = vmul.f32 %v3319, %v3664
      %v3763 = vmul.f32 %v3321, %v3664
      %v3764 = vmul.f32 %v3323, %v3665
      %v3765 = vmul.f32 %v3325, %v3665
      %v3766 = vmul.f32 %v3327, %v3666
      %v3767 = vmul.f32 %v3329, %v3666
      %v3768 = vmul.f32 %v3331, %v3667
      %v3769 = vmul.f32 %v3333, %v3667
      %v3770 = vmul.f32 %v3335, %v3668
      %v3771 = vmul.f32 %v3337, %v3668
      %v3772 = vmul.f32 %v3339, %v3669
      %v3773 = vmul.f32 %v3341, %v3669
      %v3774 = vmul.f32 %v3343, %v3670
      %v3775 = vmul.f32 %v3345, %v3670
      %v3776 = vmul.f32 %v3347, %v3671
      %v3777 = vmul.f32 %v3349, %v3671
      %v3778 = vmul.f32 %v3351, %v3672
      %v3779 = vmul.f32 %v3353, %v3672
      %v3780 = vmul.f32 %v3355, %v3673
      %v3781 = vmul.f32 %v3357, %v3673
      %v3782 = vmul.f32 %v3359, %v3674
      %v3783 = vmul.f32 %v3361, %v3674
      %v3784 = vmul.f32 %v3363, %v3675
      %v3785 = vmul.f32 %v3365, %v3675
      %v3786 = vmul.f32 %v3367, %v3676
      %v3787 = vmul.f32 %v3369, %v3676
      %v3788 = vmul.f32 %v3371, %v3677
      %v3789 = vmul.f32 %v3373, %v3677
      %v3790 = vmul.f32 %v3375, %v3678
      %v3791 = vmul.f32 %v3377, %v3678
      %v3792 = vmul.f32 %v3379, %v3679
      %v3793 = vmul.f32 %v3381, %v3679
      %v3794 = vmul.f32 %v3383, %v3680
      %v3795 = vmul.f32 %v3385, %v3680
      %v3796 = vmul.f32 %v3387, %v3681
      %v3797 = vmul.f32 %v3389, %v3681
      %v3798 = vmul.f32 %v3391, %v3682
      %v3799 = vmul.f32 %v3393, %v3682
      %v3800 = vmul.f32 %v3395, %v3683
      %v3801 = vmul.f32 %v3397, %v3683
      %v3802 = vmul.f32 %v3399, %v3684
      %v3803 = vmul.f32 %v3401, %v3684
      %v3804 = vmul.f32 %v3403, %v3685
      %v3805 = vmul.f32 %v3405, %v3685
      %v3806 = vmul.f32 %v3407, %v3686
      %v3807 = vmul.f32 %v3409, %v3686
      %v3808 = vmul.f32 %v3411, %v3687
      %v3809 = vmul.f32 %v3413, %v3687
      %v3810 = vmul.f32 %v3415, %v3688
      %v3811 = vmul.f32 %v3417, %v3688
      %v3812 = vmul.f32 %v3419, %v3689
      %v3813 = vmul.f32 %v3421, %v3689
      %v3814 = vmul.f32 %v3423, %v3690
      %v3815 = vmul.f32 %v3425, %v3690
      %v3816 = vmul.f32 %v3427, %v3691
      %v3817 = vmul.f32 %v3429, %v3691
      %v3818 = vmul.f32 %v3431, %v3692
      %v3819 = vmul.f32 %v3433, %v3692
      %v3820 = vmul.f32 %v3435, %v3693
      %v3821 = vmul.f32 %v3437, %v3693
      %v3822 = vpack.c.bf16 %v3696, %v3694
      %v3823 = vpack.c.bf16 %v3697, %v3695
      %v3824 = vpack.c.bf16 %v3700, %v3698
      %v3825 = vpack.c.bf16 %v3701, %v3699
      %v3826 = vpack.c.bf16 %v3704, %v3702
      %v3827 = vpack.c.bf16 %v3705, %v3703
      %v3828 = vpack.c.bf16 %v3708, %v3706
      %v3829 = vpack.c.bf16 %v3709, %v3707
      %v3830 = vpack.c.bf16 %v3712, %v3710
      %v3831 = vpack.c.bf16 %v3713, %v3711
      %v3832 = vpack.c.bf16 %v3716, %v3714
      %v3833 = vpack.c.bf16 %v3717, %v3715
      %v3834 = vpack.c.bf16 %v3720, %v3718
      %v3835 = vpack.c.bf16 %v3721, %v3719
      %v3836 = vpack.c.bf16 %v3724, %v3722
      %v3837 = vpack.c.bf16 %v3725, %v3723
      %v3838 = vpack.c.bf16 %v3728, %v3726
      %v3839 = vpack.c.bf16 %v3729, %v3727
      %v3840 = vpack.c.bf16 %v3732, %v3730
      %v3841 = vpack.c.bf16 %v3733, %v3731
      %v3842 = vpack.c.bf16 %v3736, %v3734
      %v3843 = vpack.c.bf16 %v3737, %v3735
      %v3844 = vpack.c.bf16 %v3740, %v3738
      %v3845 = vpack.c.bf16 %v3741, %v3739
      %v3846 = vpack.c.bf16 %v3744, %v3742
      %v3847 = vpack.c.bf16 %v3745, %v3743
      %v3848 = vpack.c.bf16 %v3748, %v3746
      %v3849 = vpack.c.bf16 %v3749, %v3747
      %v3850 = vpack.c.bf16 %v3752, %v3750
      %v3851 = vpack.c.bf16 %v3753, %v3751
      %v3852 = vpack.c.bf16 %v3756, %v3754
      %v3853 = vpack.c.bf16 %v3757, %v3755
      %v3854 = vpack.c.bf16 %v3760, %v3758
      %v3855 = vpack.c.bf16 %v3761, %v3759
      %v3856 = vpack.c.bf16 %v3764, %v3762
      %v3857 = vpack.c.bf16 %v3765, %v3763
      %v3858 = vpack.c.bf16 %v3768, %v3766
      %v3859 = vpack.c.bf16 %v3769, %v3767
      %v3860 = vpack.c.bf16 %v3772, %v3770
      %v3861 = vpack.c.bf16 %v3773, %v3771
      %v3862 = vpack.c.bf16 %v3776, %v3774
      %v3863 = vpack.c.bf16 %v3777, %v3775
      %v3864 = vpack.c.bf16 %v3780, %v3778
      %v3865 = vpack.c.bf16 %v3781, %v3779
      %v3866 = vpack.c.bf16 %v3784, %v3782
      %v3867 = vpack.c.bf16 %v3785, %v3783
      %v3868 = vpack.c.bf16 %v3788, %v3786
      %v3869 = vpack.c.bf16 %v3789, %v3787
      %v3870 = vpack.c.bf16 %v3792, %v3790
      %v3871 = vpack.c.bf16 %v3793, %v3791
      %v3872 = vpack.c.bf16 %v3796, %v3794
      %v3873 = vpack.c.bf16 %v3797, %v3795
      %v3874 = vpack.c.bf16 %v3800, %v3798
      %v3875 = vpack.c.bf16 %v3801, %v3799
      %v3876 = vpack.c.bf16 %v3804, %v3802
      %v3877 = vpack.c.bf16 %v3805, %v3803
      %v3878 = vpack.c.bf16 %v3808, %v3806
      %v3879 = vpack.c.bf16 %v3809, %v3807
      %v3880 = vpack.c.bf16 %v3812, %v3810
      %v3881 = vpack.c.bf16 %v3813, %v3811
      %v3882 = vpack.c.bf16 %v3816, %v3814
      %v3883 = vpack.c.bf16 %v3817, %v3815
      %v3884 = vpack.c.bf16 %v3820, %v3818
      %v3885 = vpack.c.bf16 %v3821, %v3819
      %3902 = vrot.lane.b32.xlu0 %v2348, 96
      %v3903 = vpop.permute.xlu0 %3902
      %3904 = vrot.lane.b32.xlu0 %v2349, 96
      %v3905 = vpop.permute.xlu0 %3904
      %3906 = vrot.lane.b32.xlu0 %v2350, 96
      %v3907 = vpop.permute.xlu0 %3906
      %3908 = vrot.lane.b32.xlu0 %v2351, 96
      %v3909 = vpop.permute.xlu0 %3908
      %3910 = vrot.lane.b32.xlu0 %v2352, 96
      %v3911 = vpop.permute.xlu0 %3910
      %3912 = vrot.lane.b32.xlu0 %v2353, 96
      %v3913 = vpop.permute.xlu0 %3912
      %3914 = vrot.lane.b32.xlu0 %v2354, 96
      %v3915 = vpop.permute.xlu0 %3914
      %3916 = vrot.lane.b32.xlu0 %v2355, 96
      %v3917 = vpop.permute.xlu0 %3916
      %3918 = vrot.lane.b32.xlu0 %v2356, 96
      %v3919 = vpop.permute.xlu0 %3918
      %3920 = vrot.lane.b32.xlu0 %v2357, 96
      %v3921 = vpop.permute.xlu0 %3920
      %3922 = vrot.lane.b32.xlu0 %v2358, 96
      %v3923 = vpop.permute.xlu0 %3922
      %3924 = vrot.lane.b32.xlu0 %v2359, 96
      %v3925 = vpop.permute.xlu0 %3924
      %3926 = vrot.lane.b32.xlu0 %v2360, 96
      %v3927 = vpop.permute.xlu0 %3926
      %3928 = vrot.lane.b32.xlu0 %v2361, 96
      %v3929 = vpop.permute.xlu0 %3928
      %3930 = vrot.lane.b32.xlu0 %v2362, 96
      %v3931 = vpop.permute.xlu0 %3930
      %3932 = vrot.lane.b32.xlu0 %v2363, 96
      %v3933 = vpop.permute.xlu0 %3932
      %3950 = vmatprep.subr.bf16.mxu0 0
      %3951 = vmatpush1.bf16.msra.mxu0 %v3903
      %3952 = vmatprep.subr.bf16.mxu0 0
      %3953 = vmatpush1.bf16.msra.mxu0 %v3905
      %3954 = vmatprep.subr.bf16.mxu0 0
      %3955 = vmatpush1.bf16.msra.mxu0 %v3907
      %3956 = vmatprep.subr.bf16.mxu0 0
      %3957 = vmatpush1.bf16.msra.mxu0 %v3909
      %3958 = vmatprep.subr.bf16.mxu0 0
      %3959 = vmatpush1.bf16.msra.mxu0 %v3911
      %3960 = vmatprep.subr.bf16.mxu0 0
      %3961 = vmatpush1.bf16.msra.mxu0 %v3913
      %3962 = vmatprep.subr.bf16.mxu0 0
      %3963 = vmatpush1.bf16.msra.mxu0 %v3915
      %3964 = vmatprep.subr.bf16.mxu0 0
      %3965 = vmatpush1.bf16.msra.mxu0 %v3917
      %3966 = vmatprep.subr.bf16.mxu0 0
      %3967 = vmatpush1.bf16.msra.mxu0 %v3919
      %3968 = vmatprep.subr.bf16.mxu0 0
      %3969 = vmatpush1.bf16.msra.mxu0 %v3921
      %3970 = vmatprep.subr.bf16.mxu0 0
      %3971 = vmatpush1.bf16.msra.mxu0 %v3923
      %3972 = vmatprep.subr.bf16.mxu0 0
      %3973 = vmatpush1.bf16.msra.mxu0 %v3925
      %3974 = vmatprep.subr.bf16.mxu0 0
      %3975 = vmatpush1.bf16.msra.mxu0 %v3927
      %3976 = vmatprep.subr.bf16.mxu0 0
      %3977 = vmatpush1.bf16.msra.mxu0 %v3929
      %3978 = vmatprep.subr.bf16.mxu0 0
      %3979 = vmatpush1.bf16.msra.mxu0 %v3931
      %3980 = vmatprep.subr.bf16.mxu0 0
      %3981 = vmatpush1.bf16.msra.mxu0 %v3933
      %3982 = vmatprep.mubr.bf16.mxu0 %v3823
      %3983 = vmatmul.mubr.bf16.gmra.mrb[0].mxu0 %v3822
      %v3984 = vpop.f32.mrb[0].mxu0
      %v3985 = vadd.f32 0.0, %v3984
      %v3986 = vpop.f32.mrb[0].mxu0
      %v3987 = vpop.f32.mrb[0].mxu0
      %v3988 = vadd.f32 0.0, %v3987
      %v3989 = vpop.f32.mrb[0].mxu0
      %3990 = vmatprep.mubr.bf16.mxu0 %v3825
      %3991 = vmatmul.mubr.bf16.gmra.mrb[0].mxu0 %v3824
      %v3992 = vpop.f32.mrb[0].mxu0
      %v3993 = vadd.f32 0.0, %v3992
      %v3994 = vpop.f32.mrb[0].mxu0
      %v3995 = vpop.f32.mrb[0].mxu0
      %v3996 = vadd.f32 0.0, %v3995
      %v3997 = vpop.f32.mrb[0].mxu0
      %3998 = vmatprep.mubr.bf16.mxu0 %v3827
      %3999 = vmatmul.mubr.bf16.gmra.mrb[0].mxu0 %v3826
      %v4000 = vpop.f32.mrb[0].mxu0
      %v4001 = vadd.f32 0.0, %v4000
      %v4002 = vpop.f32.mrb[0].mxu0
      %v4003 = vpop.f32.mrb[0].mxu0
      %v4004 = vadd.f32 0.0, %v4003
      %v4005 = vpop.f32.mrb[0].mxu0
      %4006 = vmatprep.mubr.bf16.mxu0 %v3829
      %4007 = vmatmul.mubr.bf16.gmra.mrb[0].mxu0 %v3828
      %v4008 = vpop.f32.mrb[0].mxu0
      %v4009 = vadd.f32 0.0, %v4008
      %v4010 = vpop.f32.mrb[0].mxu0
      %v4011 = vpop.f32.mrb[0].mxu0
      %v4012 = vadd.f32 0.0, %v4011
      %v4013 = vpop.f32.mrb[0].mxu0
      %4014 = vmatprep.mubr.bf16.mxu0 %v3831
      %4015 = vmatmul.mubr.bf16.gmra.mrb[0].mxu0 %v3830
      %v4016 = vpop.f32.mrb[0].mxu0
      %v4017 = vadd.f32 0.0, %v4016
      %v4018 = vpop.f32.mrb[0].mxu0
      %v4019 = vpop.f32.mrb[0].mxu0
      %v4020 = vadd.f32 0.0, %v4019
      %v4021 = vpop.f32.mrb[0].mxu0
      %4022 = vmatprep.mubr.bf16.mxu0 %v3833
      %4023 = vmatmul.mubr.bf16.gmra.mrb[0].mxu0 %v3832
      %v4024 = vpop.f32.mrb[0].mxu0
      %v4025 = vadd.f32 0.0, %v4024
      %v4026 = vpop.f32.mrb[0].mxu0
      %v4027 = vpop.f32.mrb[0].mxu0
      %v4028 = vadd.f32 0.0, %v4027
      %v4029 = vpop.f32.mrb[0].mxu0
      %4030 = vmatprep.mubr.bf16.mxu0 %v3835
      %4031 = vmatmul.mubr.bf16.gmra.mrb[0].mxu0 %v3834
      %v4032 = vpop.f32.mrb[0].mxu0
      %v4033 = vadd.f32 0.0, %v4032
      %v4034 = vpop.f32.mrb[0].mxu0
      %v4035 = vpop.f32.mrb[0].mxu0
      %v4036 = vadd.f32 0.0, %v4035
      %v4037 = vpop.f32.mrb[0].mxu0
      %4038 = vmatprep.mubr.bf16.mxu0 %v3837
      %4039 = vmatmul.mubr.bf16.gmra.mrb[0].mxu0 %v3836
      %v4040 = vpop.f32.mrb[0].mxu0
      %v4041 = vadd.f32 0.0, %v4040
      %v4042 = vpop.f32.mrb[0].mxu0
      %v4043 = vpop.f32.mrb[0].mxu0
      %v4044 = vadd.f32 0.0, %v4043
      %v4045 = vpop.f32.mrb[0].mxu0
      %4046 = vmatprep.mubr.bf16.mxu0 %v3839
      %4047 = vmatmul.mubr.bf16.gmra.mrb[0].mxu0 %v3838
      %v4048 = vpop.f32.mrb[0].mxu0
      %v4049 = vadd.f32 0.0, %v4048
      %v4050 = vpop.f32.mrb[0].mxu0
      %v4051 = vpop.f32.mrb[0].mxu0
      %v4052 = vadd.f32 0.0, %v4051
      %v4053 = vpop.f32.mrb[0].mxu0
      %4054 = vmatprep.mubr.bf16.mxu0 %v3841
      %4055 = vmatmul.mubr.bf16.gmra.mrb[0].mxu0 %v3840
      %v4056 = vpop.f32.mrb[0].mxu0
      %v4057 = vadd.f32 0.0, %v4056
      %v4058 = vpop.f32.mrb[0].mxu0
      %v4059 = vpop.f32.mrb[0].mxu0
      %v4060 = vadd.f32 0.0, %v4059
      %v4061 = vpop.f32.mrb[0].mxu0
      %4062 = vmatprep.mubr.bf16.mxu0 %v3843
      %4063 = vmatmul.mubr.bf16.gmra.mrb[0].mxu0 %v3842
      %v4064 = vpop.f32.mrb[0].mxu0
      %v4065 = vadd.f32 0.0, %v4064
      %v4066 = vpop.f32.mrb[0].mxu0
      %v4067 = vpop.f32.mrb[0].mxu0
      %v4068 = vadd.f32 0.0, %v4067
      %v4069 = vpop.f32.mrb[0].mxu0
      %4070 = vmatprep.mubr.bf16.mxu0 %v3845
      %4071 = vmatmul.mubr.bf16.gmra.mrb[0].mxu0 %v3844
      %v4072 = vpop.f32.mrb[0].mxu0
      %v4073 = vadd.f32 0.0, %v4072
      %v4074 = vpop.f32.mrb[0].mxu0
      %v4075 = vpop.f32.mrb[0].mxu0
      %v4076 = vadd.f32 0.0, %v4075
      %v4077 = vpop.f32.mrb[0].mxu0
      %4078 = vmatprep.mubr.bf16.mxu0 %v3847
      %4079 = vmatmul.mubr.bf16.gmra.mrb[0].mxu0 %v3846
      %v4080 = vpop.f32.mrb[0].mxu0
      %v4081 = vadd.f32 0.0, %v4080
      %v4082 = vpop.f32.mrb[0].mxu0
      %v4083 = vpop.f32.mrb[0].mxu0
      %v4084 = vadd.f32 0.0, %v4083
      %v4085 = vpop.f32.mrb[0].mxu0
      %4086 = vmatprep.mubr.bf16.mxu0 %v3849
      %4087 = vmatmul.mubr.bf16.gmra.mrb[0].mxu0 %v3848
      %v4088 = vpop.f32.mrb[0].mxu0
      %v4089 = vadd.f32 0.0, %v4088
      %v4090 = vpop.f32.mrb[0].mxu0
      %v4091 = vpop.f32.mrb[0].mxu0
      %v4092 = vadd.f32 0.0, %v4091
      %v4093 = vpop.f32.mrb[0].mxu0
      %4094 = vmatprep.mubr.bf16.mxu0 %v3851
      %4095 = vmatmul.mubr.bf16.gmra.mrb[0].mxu0 %v3850
      %v4096 = vpop.f32.mrb[0].mxu0
      %v4097 = vadd.f32 0.0, %v4096
      %v4098 = vpop.f32.mrb[0].mxu0
      %v4099 = vpop.f32.mrb[0].mxu0
      %v4100 = vadd.f32 0.0, %v4099
      %v4101 = vpop.f32.mrb[0].mxu0
      %4102 = vmatprep.mubr.bf16.mxu0 %v3853
      %4103 = vmatmul.mubr.bf16.gmra.mrb[0].mxu0 %v3852
      %v4104 = vpop.f32.mrb[0].mxu0
      %v4105 = vadd.f32 0.0, %v4104
      %v4106 = vpop.f32.mrb[0].mxu0
      %v4107 = vpop.f32.mrb[0].mxu0
      %v4108 = vadd.f32 0.0, %v4107
      %v4109 = vpop.f32.mrb[0].mxu0
      %4110 = vmatprep.mubr.bf16.mxu0 %v3855
      %4111 = vmatmul.mubr.bf16.gmra.mrb[0].mxu0 %v3854
      %v4112 = vpop.f32.mrb[0].mxu0
      %v4113 = vadd.f32 0.0, %v4112
      %v4114 = vpop.f32.mrb[0].mxu0
      %v4115 = vpop.f32.mrb[0].mxu0
      %v4116 = vadd.f32 0.0, %v4115
      %v4117 = vpop.f32.mrb[0].mxu0
      %4118 = vmatprep.mubr.bf16.mxu0 %v3857
      %4119 = vmatmul.mubr.bf16.gmra.mrb[0].mxu0 %v3856
      %v4120 = vpop.f32.mrb[0].mxu0
      %v4121 = vadd.f32 0.0, %v4120
      %v4122 = vpop.f32.mrb[0].mxu0
      %v4123 = vpop.f32.mrb[0].mxu0
      %v4124 = vadd.f32 0.0, %v4123
      %v4125 = vpop.f32.mrb[0].mxu0
      %4126 = vmatprep.mubr.bf16.mxu0 %v3859
      %4127 = vmatmul.mubr.bf16.gmra.mrb[0].mxu0 %v3858
      %v4128 = vpop.f32.mrb[0].mxu0
      %v4129 = vadd.f32 0.0, %v4128
      %v4130 = vpop.f32.mrb[0].mxu0
      %v4131 = vpop.f32.mrb[0].mxu0
      %v4132 = vadd.f32 0.0, %v4131
      %v4133 = vpop.f32.mrb[0].mxu0
      %4134 = vmatprep.mubr.bf16.mxu0 %v3861
      %4135 = vmatmul.mubr.bf16.gmra.mrb[0].mxu0 %v3860
      %v4136 = vpop.f32.mrb[0].mxu0
      %v4137 = vadd.f32 0.0, %v4136
      %v4138 = vpop.f32.mrb[0].mxu0
      %v4139 = vpop.f32.mrb[0].mxu0
      %v4140 = vadd.f32 0.0, %v4139
      %v4141 = vpop.f32.mrb[0].mxu0
      %4142 = vmatprep.mubr.bf16.mxu0 %v3863
      %4143 = vmatmul.mubr.bf16.gmra.mrb[0].mxu0 %v3862
      %v4144 = vpop.f32.mrb[0].mxu0
      %v4145 = vadd.f32 0.0, %v4144
      %v4146 = vpop.f32.mrb[0].mxu0
      %v4147 = vpop.f32.mrb[0].mxu0
      %v4148 = vadd.f32 0.0, %v4147
      %v4149 = vpop.f32.mrb[0].mxu0
      %4150 = vmatprep.mubr.bf16.mxu0 %v3865
      %4151 = vmatmul.mubr.bf16.gmra.mrb[0].mxu0 %v3864
      %v4152 = vpop.f32.mrb[0].mxu0
      %v4153 = vadd.f32 0.0, %v4152
      %v4154 = vpop.f32.mrb[0].mxu0
      %v4155 = vpop.f32.mrb[0].mxu0
      %v4156 = vadd.f32 0.0, %v4155
      %v4157 = vpop.f32.mrb[0].mxu0
      %4158 = vmatprep.mubr.bf16.mxu0 %v3867
      %4159 = vmatmul.mubr.bf16.gmra.mrb[0].mxu0 %v3866
      %v4160 = vpop.f32.mrb[0].mxu0
      %v4161 = vadd.f32 0.0, %v4160
      %v4162 = vpop.f32.mrb[0].mxu0
      %v4163 = vpop.f32.mrb[0].mxu0
      %v4164 = vadd.f32 0.0, %v4163
      %v4165 = vpop.f32.mrb[0].mxu0
      %4166 = vmatprep.mubr.bf16.mxu0 %v3869
      %4167 = vmatmul.mubr.bf16.gmra.mrb[0].mxu0 %v3868
      %v4168 = vpop.f32.mrb[0].mxu0
      %v4169 = vadd.f32 0.0, %v4168
      %v4170 = vpop.f32.mrb[0].mxu0
      %v4171 = vpop.f32.mrb[0].mxu0
      %v4172 = vadd.f32 0.0, %v4171
      %v4173 = vpop.f32.mrb[0].mxu0
      %4174 = vmatprep.mubr.bf16.mxu0 %v3871
      %4175 = vmatmul.mubr.bf16.gmra.mrb[0].mxu0 %v3870
      %v4176 = vpop.f32.mrb[0].mxu0
      %v4177 = vadd.f32 0.0, %v4176
      %v4178 = vpop.f32.mrb[0].mxu0
      %v4179 = vpop.f32.mrb[0].mxu0
      %v4180 = vadd.f32 0.0, %v4179
      %v4181 = vpop.f32.mrb[0].mxu0
      %4182 = vmatprep.mubr.bf16.mxu0 %v3873
      %4183 = vmatmul.mubr.bf16.gmra.mrb[0].mxu0 %v3872
      %v4184 = vpop.f32.mrb[0].mxu0
      %v4185 = vadd.f32 0.0, %v4184
      %v4186 = vpop.f32.mrb[0].mxu0
      %v4187 = vpop.f32.mrb[0].mxu0
      %v4188 = vadd.f32 0.0, %v4187
      %v4189 = vpop.f32.mrb[0].mxu0
      %4190 = vmatprep.mubr.bf16.mxu0 %v3875
      %4191 = vmatmul.mubr.bf16.gmra.mrb[0].mxu0 %v3874
      %v4192 = vpop.f32.mrb[0].mxu0
      %v4193 = vadd.f32 0.0, %v4192
      %v4194 = vpop.f32.mrb[0].mxu0
      %v4195 = vpop.f32.mrb[0].mxu0
      %v4196 = vadd.f32 0.0, %v4195
      %v4197 = vpop.f32.mrb[0].mxu0
      %4198 = vmatprep.mubr.bf16.mxu0 %v3877
      %4199 = vmatmul.mubr.bf16.gmra.mrb[0].mxu0 %v3876
      %v4200 = vpop.f32.mrb[0].mxu0
      %v4201 = vadd.f32 0.0, %v4200
      %v4202 = vpop.f32.mrb[0].mxu0
      %v4203 = vpop.f32.mrb[0].mxu0
      %v4204 = vadd.f32 0.0, %v4203
      %v4205 = vpop.f32.mrb[0].mxu0
      %4206 = vmatprep.mubr.bf16.mxu0 %v3879
      %4207 = vmatmul.mubr.bf16.gmra.mrb[0].mxu0 %v3878
      %v4208 = vpop.f32.mrb[0].mxu0
      %v4209 = vadd.f32 0.0, %v4208
      %v4210 = vpop.f32.mrb[0].mxu0
      %v4211 = vpop.f32.mrb[0].mxu0
      %v4212 = vadd.f32 0.0, %v4211
      %v4213 = vpop.f32.mrb[0].mxu0
      %4214 = vmatprep.mubr.bf16.mxu0 %v3881
      %4215 = vmatmul.mubr.bf16.gmra.mrb[0].mxu0 %v3880
      %v4216 = vpop.f32.mrb[0].mxu0
      %v4217 = vadd.f32 0.0, %v4216
      %v4218 = vpop.f32.mrb[0].mxu0
      %v4219 = vpop.f32.mrb[0].mxu0
      %v4220 = vadd.f32 0.0, %v4219
      %v4221 = vpop.f32.mrb[0].mxu0
      %4222 = vmatprep.mubr.bf16.mxu0 %v3883
      %4223 = vmatmul.mubr.bf16.gmra.mrb[0].mxu0 %v3882
      %v4224 = vpop.f32.mrb[0].mxu0
      %v4225 = vadd.f32 0.0, %v4224
      %v4226 = vpop.f32.mrb[0].mxu0
      %v4227 = vpop.f32.mrb[0].mxu0
      %v4228 = vadd.f32 0.0, %v4227
      %v4229 = vpop.f32.mrb[0].mxu0
      %4230 = vmatprep.mubr.bf16.mxu0 %v3885
      %4231 = vmatmul.mubr.bf16.gmra.mrb[0].mxu0 %v3884
      %v4232 = vpop.f32.mrb[0].mxu0
      %v4233 = vadd.f32 0.0, %v4232
      %v4234 = vpop.f32.mrb[0].mxu0
      %v4235 = vpop.f32.mrb[0].mxu0
      %v4236 = vadd.f32 0.0, %v4235
      %v4237 = vpop.f32.mrb[0].mxu0
      %4238 = vdwg.mxu0
      %4239 = vst.msk [vmem:[#allocation3] sm:$0xff] %vm2364, %v3985
      %4240 = vst.msk [vmem:[#allocation3 + $0x8] sm:$0xff] %vm2364, %v3988
      %4241 = vst.msk [vmem:[#allocation3 + $0x10] sm:$0xff] %vm2364, %v3993
      %4242 = vst.msk [vmem:[#allocation3 + $0x18] sm:$0xff] %vm2364, %v3996
      %4243 = vst.msk [vmem:[#allocation3 + $0x20] sm:$0xff] %vm2364, %v4001
      %4244 = vst.msk [vmem:[#allocation3 + $0x28] sm:$0xff] %vm2364, %v4004
      %4245 = vst.msk [vmem:[#allocation3 + $0x30] sm:$0xff] %vm2364, %v4009
      %4246 = vst.msk [vmem:[#allocation3 + $0x38] sm:$0xff] %vm2364, %v4012
      %4247 = vst.msk [vmem:[#allocation3 + $0x40] sm:$0xff] %vm2364, %v4017
      %4248 = vst.msk [vmem:[#allocation3 + $0x48] sm:$0xff] %vm2364, %v4020
      %4249 = vst.msk [vmem:[#allocation3 + $0x50] sm:$0xff] %vm2364, %v4025
      %4250 = vst.msk [vmem:[#allocation3 + $0x58] sm:$0xff] %vm2364, %v4028
      %4251 = vst.msk [vmem:[#allocation3 + $0x60] sm:$0xff] %vm2364, %v4033
      %4252 = vst.msk [vmem:[#allocation3 + $0x68] sm:$0xff] %vm2364, %v4036
      %4253 = vst.msk [vmem:[#allocation3 + $0x70] sm:$0xff] %vm2364, %v4041
      %4254 = vst.msk [vmem:[#allocation3 + $0x78] sm:$0xff] %vm2364, %v4044
      %4255 = vst.msk [vmem:[#allocation3 + $0x80] sm:$0xff] %vm2364, %v4049
      %4256 = vst.msk [vmem:[#allocation3 + $0x88] sm:$0xff] %vm2364, %v4052
      %4257 = vst.msk [vmem:[#allocation3 + $0x90] sm:$0xff] %vm2364, %v4057
      %4258 = vst.msk [vmem:[#allocation3 + $0x98] sm:$0xff] %vm2364, %v4060
      %4259 = vst.msk [vmem:[#allocation3 + $0xa0] sm:$0xff] %vm2364, %v4065
      %4260 = vst.msk [vmem:[#allocation3 + $0xa8] sm:$0xff] %vm2364, %v4068
      %4261 = vst.msk [vmem:[#allocation3 + $0xb0] sm:$0xff] %vm2364, %v4073
      %4262 = vst.msk [vmem:[#allocation3 + $0xb8] sm:$0xff] %vm2364, %v4076
      %4263 = vst.msk [vmem:[#allocation3 + $0xc0] sm:$0xff] %vm2364, %v4081
      %4264 = vst.msk [vmem:[#allocation3 + $0xc8] sm:$0xff] %vm2364, %v4084
      %4265 = vst.msk [vmem:[#allocation3 + $0xd0] sm:$0xff] %vm2364, %v4089
      %4266 = vst.msk [vmem:[#allocation3 + $0xd8] sm:$0xff] %vm2364, %v4092
      %4267 = vst.msk [vmem:[#allocation3 + $0xe0] sm:$0xff] %vm2364, %v4097
      %4268 = vst.msk [vmem:[#allocation3 + $0xe8] sm:$0xff] %vm2364, %v4100
      %4269 = vst.msk [vmem:[#allocation3 + $0xf0] sm:$0xff] %vm2364, %v4105
      %4270 = vst.msk [vmem:[#allocation3 + $0xf8] sm:$0xff] %vm2364, %v4108
      %4271 = vst.msk [vmem:[#allocation3 + $0x100] sm:$0xff] %vm2364, %v4113
      %4272 = vst.msk [vmem:[#allocation3 + $0x108] sm:$0xff] %vm2364, %v4116
      %4273 = vst.msk [vmem:[#allocation3 + $0x110] sm:$0xff] %vm2364, %v4121
      %4274 = vst.msk [vmem:[#allocation3 + $0x118] sm:$0xff] %vm2364, %v4124
      %4275 = vst.msk [vmem:[#allocation3 + $0x120] sm:$0xff] %vm2364, %v4129
      %4276 = vst.msk [vmem:[#allocation3 + $0x128] sm:$0xff] %vm2364, %v4132
      %4277 = vst.msk [vmem:[#allocation3 + $0x130] sm:$0xff] %vm2364, %v4137
      %4278 = vst.msk [vmem:[#allocation3 + $0x138] sm:$0xff] %vm2364, %v4140
      %4279 = vst.msk [vmem:[#allocation3 + $0x140] sm:$0xff] %vm2364, %v4145
      %4280 = vst.msk [vmem:[#allocation3 + $0x148] sm:$0xff] %vm2364, %v4148
      %4281 = vst.msk [vmem:[#allocation3 + $0x150] sm:$0xff] %vm2364, %v4153
      %4282 = vst.msk [vmem:[#allocation3 + $0x158] sm:$0xff] %vm2364, %v4156
      %4283 = vst.msk [vmem:[#allocation3 + $0x160] sm:$0xff] %vm2364, %v4161
      %4284 = vst.msk [vmem:[#allocation3 + $0x168] sm:$0xff] %vm2364, %v4164
      %4285 = vst.msk [vmem:[#allocation3 + $0x170] sm:$0xff] %vm2364, %v4169
      %4286 = vst.msk [vmem:[#allocation3 + $0x178] sm:$0xff] %vm2364, %v4172
      %4287 = vst.msk [vmem:[#allocation3 + $0x180] sm:$0xff] %vm2364, %v4177
      %4288 = vst.msk [vmem:[#allocation3 + $0x188] sm:$0xff] %vm2364, %v4180
      %4289 = vst.msk [vmem:[#allocation3 + $0x190] sm:$0xff] %vm2364, %v4185
      %4290 = vst.msk [vmem:[#allocation3 + $0x198] sm:$0xff] %vm2364, %v4188
      %4291 = vst.msk [vmem:[#allocation3 + $0x1a0] sm:$0xff] %vm2364, %v4193
      %4292 = vst.msk [vmem:[#allocation3 + $0x1a8] sm:$0xff] %vm2364, %v4196
      %4293 = vst.msk [vmem:[#allocation3 + $0x1b0] sm:$0xff] %vm2364, %v4201
      %4294 = vst.msk [vmem:[#allocation3 + $0x1b8] sm:$0xff] %vm2364, %v4204
      %4295 = vst.msk [vmem:[#allocation3 + $0x1c0] sm:$0xff] %vm2364, %v4209
      %4296 = vst.msk [vmem:[#allocation3 + $0x1c8] sm:$0xff] %vm2364, %v4212
      %4297 = vst.msk [vmem:[#allocation3 + $0x1d0] sm:$0xff] %vm2364, %v4217
      %4298 = vst.msk [vmem:[#allocation3 + $0x1d8] sm:$0xff] %vm2364, %v4220
      %4299 = vst.msk [vmem:[#allocation3 + $0x1e0] sm:$0xff] %vm2364, %v4225
      %4300 = vst.msk [vmem:[#allocation3 + $0x1e8] sm:$0xff] %vm2364, %v4228
      %4301 = vst.msk [vmem:[#allocation3 + $0x1f0] sm:$0xff] %vm2364, %v4233
      %4302 = vst.msk [vmem:[#allocation3 + $0x1f8] sm:$0xff] %vm2364, %v4236
      %4335 = vrot.lane.b32.xlu0 %v2316, 120
      %v4336 = vpop.permute.xlu0 %4335
      %4337 = vrot.lane.b32.xlu0 %v2317, 120
      %v4338 = vpop.permute.xlu0 %4337
      %4339 = vrot.lane.b32.xlu0 %v2318, 120
      %v4340 = vpop.permute.xlu0 %4339
      %4341 = vrot.lane.b32.xlu0 %v2319, 120
      %v4342 = vpop.permute.xlu0 %4341
      %4343 = vrot.lane.b32.xlu0 %v2320, 120
      %v4344 = vpop.permute.xlu0 %4343
      %4345 = vrot.lane.b32.xlu0 %v2321, 120
      %v4346 = vpop.permute.xlu0 %4345
      %4347 = vrot.lane.b32.xlu0 %v2322, 120
      %v4348 = vpop.permute.xlu0 %4347
      %4349 = vrot.lane.b32.xlu0 %v2323, 120
      %v4350 = vpop.permute.xlu0 %4349
      %4351 = vrot.lane.b32.xlu0 %v2324, 120
      %v4352 = vpop.permute.xlu0 %4351
      %4353 = vrot.lane.b32.xlu0 %v2325, 120
      %v4354 = vpop.permute.xlu0 %4353
      %4355 = vrot.lane.b32.xlu0 %v2326, 120
      %v4356 = vpop.permute.xlu0 %4355
      %4357 = vrot.lane.b32.xlu0 %v2327, 120
      %v4358 = vpop.permute.xlu0 %4357
      %4359 = vrot.lane.b32.xlu0 %v2328, 120
      %v4360 = vpop.permute.xlu0 %4359
      %4361 = vrot.lane.b32.xlu0 %v2329, 120
      %v4362 = vpop.permute.xlu0 %4361
      %4363 = vrot.lane.b32.xlu0 %v2330, 120
      %v4364 = vpop.permute.xlu0 %4363
      %4365 = vrot.lane.b32.xlu0 %v2331, 120
      %v4366 = vpop.permute.xlu0 %4365
      %4367 = vrot.lane.b32.xlu0 %v2332, 120
      %v4368 = vpop.permute.xlu0 %4367
      %4369 = vrot.lane.b32.xlu0 %v2333, 120
      %v4370 = vpop.permute.xlu0 %4369
      %4371 = vrot.lane.b32.xlu0 %v2334, 120
      %v4372 = vpop.permute.xlu0 %4371
      %4373 = vrot.lane.b32.xlu0 %v2335, 120
      %v4374 = vpop.permute.xlu0 %4373
      %4375 = vrot.lane.b32.xlu0 %v2336, 120
      %v4376 = vpop.permute.xlu0 %4375
      %4377 = vrot.lane.b32.xlu0 %v2337, 120
      %v4378 = vpop.permute.xlu0 %4377
      %4379 = vrot.lane.b32.xlu0 %v2338, 120
      %v4380 = vpop.permute.xlu0 %4379
      %4381 = vrot.lane.b32.xlu0 %v2339, 120
      %v4382 = vpop.permute.xlu0 %4381
      %4383 = vrot.lane.b32.xlu0 %v2340, 120
      %v4384 = vpop.permute.xlu0 %4383
      %4385 = vrot.lane.b32.xlu0 %v2341, 120
      %v4386 = vpop.permute.xlu0 %4385
      %4387 = vrot.lane.b32.xlu0 %v2342, 120
      %v4388 = vpop.permute.xlu0 %4387
      %4389 = vrot.lane.b32.xlu0 %v2343, 120
      %v4390 = vpop.permute.xlu0 %4389
      %4391 = vrot.lane.b32.xlu0 %v2344, 120
      %v4392 = vpop.permute.xlu0 %4391
      %4393 = vrot.lane.b32.xlu0 %v2345, 120
      %v4394 = vpop.permute.xlu0 %4393
      %4395 = vrot.lane.b32.xlu0 %v2346, 120
      %v4396 = vpop.permute.xlu0 %4395
      %4397 = vrot.lane.b32.xlu0 %v2347, 120
      %v4398 = vpop.permute.xlu0 %4397
      %4399 = vrot.lane.b32.xlu0 %v2348, 120
      %v4400 = vpop.permute.xlu0 %4399
      %4401 = vrot.lane.b32.xlu0 %v2349, 120
      %v4402 = vpop.permute.xlu0 %4401
      %4403 = vrot.lane.b32.xlu0 %v2350, 120
      %v4404 = vpop.permute.xlu0 %4403
      %4405 = vrot.lane.b32.xlu0 %v2351, 120
      %v4406 = vpop.permute.xlu0 %4405
      %4407 = vrot.lane.b32.xlu0 %v2352, 120
      %v4408 = vpop.permute.xlu0 %4407
      %4409 = vrot.lane.b32.xlu0 %v2353, 120
      %v4410 = vpop.permute.xlu0 %4409
      %4411 = vrot.lane.b32.xlu0 %v2354, 120
      %v4412 = vpop.permute.xlu0 %4411
      %4413 = vrot.lane.b32.xlu0 %v2355, 120
      %v4414 = vpop.permute.xlu0 %4413
      %4415 = vrot.lane.b32.xlu0 %v2356, 120
      %v4416 = vpop.permute.xlu0 %4415
      %4417 = vrot.lane.b32.xlu0 %v2357, 120
      %v4418 = vpop.permute.xlu0 %4417
      %4419 = vrot.lane.b32.xlu0 %v2358, 120
      %v4420 = vpop.permute.xlu0 %4419
      %4421 = vrot.lane.b32.xlu0 %v2359, 120
      %v4422 = vpop.permute.xlu0 %4421
      %4423 = vrot.lane.b32.xlu0 %v2360, 120
      %v4424 = vpop.permute.xlu0 %4423
      %4425 = vrot.lane.b32.xlu0 %v2361, 120
      %v4426 = vpop.permute.xlu0 %4425
      %4427 = vrot.lane.b32.xlu0 %v2362, 120
      %v4428 = vpop.permute.xlu0 %4427
      %4429 = vrot.lane.b32.xlu0 %v2363, 120
      %v4430 = vpop.permute.xlu0 %4429
      %v4432 = vsel %vm2364, %v4336, 0
      %v4435 = vsel %vm2364, %v4338, 0
      %v4438 = vsel %vm2364, %v4340, 0
      %v4441 = vsel %vm2364, %v4342, 0
      %v4444 = vsel %vm2364, %v4344, 0
      %v4447 = vsel %vm2364, %v4346, 0
      %v4450 = vsel %vm2364, %v4348, 0
      %v4453 = vsel %vm2364, %v4350, 0
      %v4456 = vsel %vm2364, %v4352, 0
      %v4459 = vsel %vm2364, %v4354, 0
      %v4462 = vsel %vm2364, %v4356, 0
      %v4465 = vsel %vm2364, %v4358, 0
      %v4468 = vsel %vm2364, %v4360, 0
      %v4471 = vsel %vm2364, %v4362, 0
      %v4474 = vsel %vm2364, %v4364, 0
      %v4477 = vsel %vm2364, %v4366, 0
      %v4480 = vsel %vm2364, %v4368, 0
      %v4483 = vsel %vm2364, %v4370, 0
      %v4486 = vsel %vm2364, %v4372, 0
      %v4489 = vsel %vm2364, %v4374, 0
      %v4492 = vsel %vm2364, %v4376, 0
      %v4495 = vsel %vm2364, %v4378, 0
      %v4498 = vsel %vm2364, %v4380, 0
      %v4501 = vsel %vm2364, %v4382, 0
      %v4504 = vsel %vm2364, %v4384, 0
      %v4507 = vsel %vm2364, %v4386, 0
      %v4510 = vsel %vm2364, %v4388, 0
      %v4513 = vsel %vm2364, %v4390, 0
      %v4516 = vsel %vm2364, %v4392, 0
      %v4519 = vsel %vm2364, %v4394, 0
      %v4522 = vsel %vm2364, %v4396, 0
      %v4525 = vsel %vm2364, %v4398, 0
      %v4528 = vsel %vm2364, %v4400, 0
      %v4531 = vsel %vm2364, %v4402, 0
      %v4534 = vsel %vm2364, %v4404, 0
      %v4537 = vsel %vm2364, %v4406, 0
      %v4540 = vsel %vm2364, %v4408, 0
      %v4543 = vsel %vm2364, %v4410, 0
      %v4546 = vsel %vm2364, %v4412, 0
      %v4549 = vsel %vm2364, %v4414, 0
      %v4552 = vsel %vm2364, %v4416, 0
      %v4555 = vsel %vm2364, %v4418, 0
      %v4558 = vsel %vm2364, %v4420, 0
      %v4561 = vsel %vm2364, %v4422, 0
      %v4564 = vsel %vm2364, %v4424, 0
      %v4567 = vsel %vm2364, %v4426, 0
      %v4570 = vsel %vm2364, %v4428, 0
      %v4573 = vsel %vm2364, %v4430, 0
      %4575 = vmatprep.subr.bf16.mxu0 0
      %4576 = vmatpush1.bf16.xpose.msra.mxu0 %v4528
      %4577 = vmatprep.subr.bf16.mxu0 0
      %4578 = vmatpush1.bf16.xpose.msra.mxu0 %v4531
      %4579 = vmatprep.subr.bf16.mxu0 0
      %4580 = vmatpush1.bf16.xpose.msra.mxu0 %v4534
      %4581 = vmatprep.subr.bf16.mxu0 0
      %4582 = vmatpush1.bf16.xpose.msra.mxu0 %v4537
      %4583 = vmatprep.subr.bf16.mxu0 0
      %4584 = vmatpush1.bf16.xpose.msra.mxu0 %v4540
      %4585 = vmatprep.subr.bf16.mxu0 0
      %4586 = vmatpush1.bf16.xpose.msra.mxu0 %v4543
      %4587 = vmatprep.subr.bf16.mxu0 0
      %4588 = vmatpush1.bf16.xpose.msra.mxu0 %v4546
      %4589 = vmatprep.subr.bf16.mxu0 0
      %4590 = vmatpush1.bf16.xpose.msra.mxu0 %v4549
      %4591 = vmatprep.subr.bf16.mxu0 0
      %4592 = vmatpush1.bf16.xpose.msra.mxu0 %v4552
      %4593 = vmatprep.subr.bf16.mxu0 0
      %4594 = vmatpush1.bf16.xpose.msra.mxu0 %v4555
      %4595 = vmatprep.subr.bf16.mxu0 0
      %4596 = vmatpush1.bf16.xpose.msra.mxu0 %v4558
      %4597 = vmatprep.subr.bf16.mxu0 0
      %4598 = vmatpush1.bf16.xpose.msra.mxu0 %v4561
      %4599 = vmatprep.subr.bf16.mxu0 0
      %4600 = vmatpush1.bf16.xpose.msra.mxu0 %v4564
      %4601 = vmatprep.subr.bf16.mxu0 0
      %4602 = vmatpush1.bf16.xpose.msra.mxu0 %v4567
      %4603 = vmatprep.subr.bf16.mxu0 0
      %4604 = vmatpush1.bf16.xpose.msra.mxu0 %v4570
      %4605 = vmatprep.subr.bf16.mxu0 0
      %4606 = vmatpush1.bf16.xpose.msra.mxu0 %v4573
      %4607 = vmatprep.mubr.bf16.mxu0 0
      %4608 = vmatmul.mubr.bf16.gmra.mrb[0].mxu0 %v4432
      %v4609 = vpop.f32.mrb[0].mxu0
      %v4610 = vadd.f32 0.0, %v4609
      %v4611 = vpop.f32.mrb[0].mxu0
      %v4612 = vadd.f32 0.0, %v4611
      %v4613 = vpop.f32.mrb[0].mxu0
      %v4614 = vadd.f32 0.0, %v4613
      %v4615 = vpop.f32.mrb[0].mxu0
      %v4616 = vadd.f32 0.0, %v4615
      %4617 = vmatprep.mubr.bf16.mxu0 0
      %4618 = vmatmul.mubr.bf16.gmra.mrb[0].mxu0 %v4435
      %v4619 = vpop.f32.mrb[0].mxu0
      %v4620 = vadd.f32 0.0, %v4619
      %v4621 = vpop.f32.mrb[0].mxu0
      %v4622 = vadd.f32 0.0, %v4621
      %v4623 = vpop.f32.mrb[0].mxu0
      %v4624 = vadd.f32 0.0, %v4623
      %v4625 = vpop.f32.mrb[0].mxu0
      %v4626 = vadd.f32 0.0, %v4625
      %4627 = vmatprep.mubr.bf16.mxu0 0
      %4628 = vmatmul.mubr.bf16.gmra.mrb[0].mxu0 %v4438
      %v4629 = vpop.f32.mrb[0].mxu0
      %v4630 = vadd.f32 0.0, %v4629
      %v4631 = vpop.f32.mrb[0].mxu0
      %v4632 = vadd.f32 0.0, %v4631
      %v4633 = vpop.f32.mrb[0].mxu0
      %v4634 = vadd.f32 0.0, %v4633
      %v4635 = vpop.f32.mrb[0].mxu0
      %v4636 = vadd.f32 0.0, %v4635
      %4637 = vmatprep.mubr.bf16.mxu0 0
      %4638 = vmatmul.mubr.bf16.gmra.mrb[0].mxu0 %v4441
      %v4639 = vpop.f32.mrb[0].mxu0
      %v4640 = vadd.f32 0.0, %v4639
      %v4641 = vpop.f32.mrb[0].mxu0
      %v4642 = vadd.f32 0.0, %v4641
      %v4643 = vpop.f32.mrb[0].mxu0
      %v4644 = vadd.f32 0.0, %v4643
      %v4645 = vpop.f32.mrb[0].mxu0
      %v4646 = vadd.f32 0.0, %v4645
      %4647 = vmatprep.mubr.bf16.mxu0 0
      %4648 = vmatmul.mubr.bf16.gmra.mrb[0].mxu0 %v4444
      %v4649 = vpop.f32.mrb[0].mxu0
      %v4650 = vadd.f32 0.0, %v4649
      %v4651 = vpop.f32.mrb[0].mxu0
      %v4652 = vadd.f32 0.0, %v4651
      %v4653 = vpop.f32.mrb[0].mxu0
      %v4654 = vadd.f32 0.0, %v4653
      %v4655 = vpop.f32.mrb[0].mxu0
      %v4656 = vadd.f32 0.0, %v4655
      %4657 = vmatprep.mubr.bf16.mxu0 0
      %4658 = vmatmul.mubr.bf16.gmra.mrb[0].mxu0 %v4447
      %v4659 = vpop.f32.mrb[0].mxu0
      %v4660 = vadd.f32 0.0, %v4659
      %v4661 = vpop.f32.mrb[0].mxu0
      %v4662 = vadd.f32 0.0, %v4661
      %v4663 = vpop.f32.mrb[0].mxu0
      %v4664 = vadd.f32 0.0, %v4663
      %v4665 = vpop.f32.mrb[0].mxu0
      %v4666 = vadd.f32 0.0, %v4665
      %4667 = vmatprep.mubr.bf16.mxu0 0
      %4668 = vmatmul.mubr.bf16.gmra.mrb[0].mxu0 %v4450
      %v4669 = vpop.f32.mrb[0].mxu0
      %v4670 = vadd.f32 0.0, %v4669
      %v4671 = vpop.f32.mrb[0].mxu0
      %v4672 = vadd.f32 0.0, %v4671
      %v4673 = vpop.f32.mrb[0].mxu0
      %v4674 = vadd.f32 0.0, %v4673
      %v4675 = vpop.f32.mrb[0].mxu0
      %v4676 = vadd.f32 0.0, %v4675
      %4677 = vmatprep.mubr.bf16.mxu0 0
      %4678 = vmatmul.mubr.bf16.gmra.mrb[0].mxu0 %v4453
      %v4679 = vpop.f32.mrb[0].mxu0
      %v4680 = vadd.f32 0.0, %v4679
      %v4681 = vpop.f32.mrb[0].mxu0
      %v4682 = vadd.f32 0.0, %v4681
      %v4683 = vpop.f32.mrb[0].mxu0
      %v4684 = vadd.f32 0.0, %v4683
      %v4685 = vpop.f32.mrb[0].mxu0
      %v4686 = vadd.f32 0.0, %v4685
      %4687 = vmatprep.mubr.bf16.mxu0 0
      %4688 = vmatmul.mubr.bf16.gmra.mrb[0].mxu0 %v4456
      %v4689 = vpop.f32.mrb[0].mxu0
      %v4690 = vadd.f32 0.0, %v4689
      %v4691 = vpop.f32.mrb[0].mxu0
      %v4692 = vadd.f32 0.0, %v4691
      %v4693 = vpop.f32.mrb[0].mxu0
      %v4694 = vadd.f32 0.0, %v4693
      %v4695 = vpop.f32.mrb[0].mxu0
      %v4696 = vadd.f32 0.0, %v4695
      %4697 = vmatprep.mubr.bf16.mxu0 0
      %4698 = vmatmul.mubr.bf16.gmra.mrb[0].mxu0 %v4459
      %v4699 = vpop.f32.mrb[0].mxu0
      %v4700 = vadd.f32 0.0, %v4699
      %v4701 = vpop.f32.mrb[0].mxu0
      %v4702 = vadd.f32 0.0, %v4701
      %v4703 = vpop.f32.mrb[0].mxu0
      %v4704 = vadd.f32 0.0, %v4703
      %v4705 = vpop.f32.mrb[0].mxu0
      %v4706 = vadd.f32 0.0, %v4705
      %4707 = vmatprep.mubr.bf16.mxu0 0
      %4708 = vmatmul.mubr.bf16.gmra.mrb[0].mxu0 %v4462
      %v4709 = vpop.f32.mrb[0].mxu0
      %v4710 = vadd.f32 0.0, %v4709
      %v4711 = vpop.f32.mrb[0].mxu0
      %v4712 = vadd.f32 0.0, %v4711
      %v4713 = vpop.f32.mrb[0].mxu0
      %v4714 = vadd.f32 0.0, %v4713
      %v4715 = vpop.f32.mrb[0].mxu0
      %v4716 = vadd.f32 0.0, %v4715
      %4717 = vmatprep.mubr.bf16.mxu0 0
      %4718 = vmatmul.mubr.bf16.gmra.mrb[0].mxu0 %v4465
      %v4719 = vpop.f32.mrb[0].mxu0
      %v4720 = vadd.f32 0.0, %v4719
      %v4721 = vpop.f32.mrb[0].mxu0
      %v4722 = vadd.f32 0.0, %v4721
      %v4723 = vpop.f32.mrb[0].mxu0
      %v4724 = vadd.f32 0.0, %v4723
      %v4725 = vpop.f32.mrb[0].mxu0
      %v4726 = vadd.f32 0.0, %v4725
      %4727 = vmatprep.mubr.bf16.mxu0 0
      %4728 = vmatmul.mubr.bf16.gmra.mrb[0].mxu0 %v4468
      %v4729 = vpop.f32.mrb[0].mxu0
      %v4730 = vadd.f32 0.0, %v4729
      %v4731 = vpop.f32.mrb[0].mxu0
      %v4732 = vadd.f32 0.0, %v4731
      %v4733 = vpop.f32.mrb[0].mxu0
      %v4734 = vadd.f32 0.0, %v4733
      %v4735 = vpop.f32.mrb[0].mxu0
      %v4736 = vadd.f32 0.0, %v4735
      %4737 = vmatprep.mubr.bf16.mxu0 0
      %4738 = vmatmul.mubr.bf16.gmra.mrb[0].mxu0 %v4471
      %v4739 = vpop.f32.mrb[0].mxu0
      %v4740 = vadd.f32 0.0, %v4739
      %v4741 = vpop.f32.mrb[0].mxu0
      %v4742 = vadd.f32 0.0, %v4741
      %v4743 = vpop.f32.mrb[0].mxu0
      %v4744 = vadd.f32 0.0, %v4743
      %v4745 = vpop.f32.mrb[0].mxu0
      %v4746 = vadd.f32 0.0, %v4745
      %4747 = vmatprep.mubr.bf16.mxu0 0
      %4748 = vmatmul.mubr.bf16.gmra.mrb[0].mxu0 %v4474
      %v4749 = vpop.f32.mrb[0].mxu0
      %v4750 = vadd.f32 0.0, %v4749
      %v4751 = vpop.f32.mrb[0].mxu0
      %v4752 = vadd.f32 0.0, %v4751
      %v4753 = vpop.f32.mrb[0].mxu0
      %v4754 = vadd.f32 0.0, %v4753
      %v4755 = vpop.f32.mrb[0].mxu0
      %v4756 = vadd.f32 0.0, %v4755
      %4757 = vmatprep.mubr.bf16.mxu0 0
      %4758 = vmatmul.mubr.bf16.gmra.mrb[0].mxu0 %v4477
      %v4759 = vpop.f32.mrb[0].mxu0
      %v4760 = vadd.f32 0.0, %v4759
      %v4761 = vpop.f32.mrb[0].mxu0
      %v4762 = vadd.f32 0.0, %v4761
      %v4763 = vpop.f32.mrb[0].mxu0
      %v4764 = vadd.f32 0.0, %v4763
      %v4765 = vpop.f32.mrb[0].mxu0
      %v4766 = vadd.f32 0.0, %v4765
      %4767 = vmatprep.mubr.bf16.mxu0 0
      %4768 = vmatmul.mubr.bf16.gmra.mrb[0].mxu0 %v4480
      %v4769 = vpop.f32.mrb[0].mxu0
      %v4770 = vadd.f32 0.0, %v4769
      %v4771 = vpop.f32.mrb[0].mxu0
      %v4772 = vadd.f32 0.0, %v4771
      %v4773 = vpop.f32.mrb[0].mxu0
      %v4774 = vadd.f32 0.0, %v4773
      %v4775 = vpop.f32.mrb[0].mxu0
      %v4776 = vadd.f32 0.0, %v4775
      %4777 = vmatprep.mubr.bf16.mxu0 0
      %4778 = vmatmul.mubr.bf16.gmra.mrb[0].mxu0 %v4483
      %v4779 = vpop.f32.mrb[0].mxu0
      %v4780 = vadd.f32 0.0, %v4779
      %v4781 = vpop.f32.mrb[0].mxu0
      %v4782 = vadd.f32 0.0, %v4781
      %v4783 = vpop.f32.mrb[0].mxu0
      %v4784 = vadd.f32 0.0, %v4783
      %v4785 = vpop.f32.mrb[0].mxu0
      %v4786 = vadd.f32 0.0, %v4785
      %4787 = vmatprep.mubr.bf16.mxu0 0
      %4788 = vmatmul.mubr.bf16.gmra.mrb[0].mxu0 %v4486
      %v4789 = vpop.f32.mrb[0].mxu0
      %v4790 = vadd.f32 0.0, %v4789
      %v4791 = vpop.f32.mrb[0].mxu0
      %v4792 = vadd.f32 0.0, %v4791
      %v4793 = vpop.f32.mrb[0].mxu0
      %v4794 = vadd.f32 0.0, %v4793
      %v4795 = vpop.f32.mrb[0].mxu0
      %v4796 = vadd.f32 0.0, %v4795
      %4797 = vmatprep.mubr.bf16.mxu0 0
      %4798 = vmatmul.mubr.bf16.gmra.mrb[0].mxu0 %v4489
      %v4799 = vpop.f32.mrb[0].mxu0
      %v4800 = vadd.f32 0.0, %v4799
      %v4801 = vpop.f32.mrb[0].mxu0
      %v4802 = vadd.f32 0.0, %v4801
      %v4803 = vpop.f32.mrb[0].mxu0
      %v4804 = vadd.f32 0.0, %v4803
      %v4805 = vpop.f32.mrb[0].mxu0
      %v4806 = vadd.f32 0.0, %v4805
      %4807 = vmatprep.mubr.bf16.mxu0 0
      %4808 = vmatmul.mubr.bf16.gmra.mrb[0].mxu0 %v4492
      %v4809 = vpop.f32.mrb[0].mxu0
      %v4810 = vadd.f32 0.0, %v4809
      %v4811 = vpop.f32.mrb[0].mxu0
      %v4812 = vadd.f32 0.0, %v4811
      %v4813 = vpop.f32.mrb[0].mxu0
      %v4814 = vadd.f32 0.0, %v4813
      %v4815 = vpop.f32.mrb[0].mxu0
      %v4816 = vadd.f32 0.0, %v4815
      %4817 = vmatprep.mubr.bf16.mxu0 0
      %4818 = vmatmul.mubr.bf16.gmra.mrb[0].mxu0 %v4495
      %v4819 = vpop.f32.mrb[0].mxu0
      %v4820 = vadd.f32 0.0, %v4819
      %v4821 = vpop.f32.mrb[0].mxu0
      %v4822 = vadd.f32 0.0, %v4821
      %v4823 = vpop.f32.mrb[0].mxu0
      %v4824 = vadd.f32 0.0, %v4823
      %v4825 = vpop.f32.mrb[0].mxu0
      %v4826 = vadd.f32 0.0, %v4825
      %4827 = vmatprep.mubr.bf16.mxu0 0
      %4828 = vmatmul.mubr.bf16.gmra.mrb[0].mxu0 %v4498
      %v4829 = vpop.f32.mrb[0].mxu0
      %v4830 = vadd.f32 0.0, %v4829
      %v4831 = vpop.f32.mrb[0].mxu0
      %v4832 = vadd.f32 0.0, %v4831
      %v4833 = vpop.f32.mrb[0].mxu0
      %v4834 = vadd.f32 0.0, %v4833
      %v4835 = vpop.f32.mrb[0].mxu0
      %v4836 = vadd.f32 0.0, %v4835
      %4837 = vmatprep.mubr.bf16.mxu0 0
      %4838 = vmatmul.mubr.bf16.gmra.mrb[0].mxu0 %v4501
      %v4839 = vpop.f32.mrb[0].mxu0
      %v4840 = vadd.f32 0.0, %v4839
      %v4841 = vpop.f32.mrb[0].mxu0
      %v4842 = vadd.f32 0.0, %v4841
      %v4843 = vpop.f32.mrb[0].mxu0
      %v4844 = vadd.f32 0.0, %v4843
      %v4845 = vpop.f32.mrb[0].mxu0
      %v4846 = vadd.f32 0.0, %v4845
      %4847 = vmatprep.mubr.bf16.mxu0 0
      %4848 = vmatmul.mubr.bf16.gmra.mrb[0].mxu0 %v4504
      %v4849 = vpop.f32.mrb[0].mxu0
      %v4850 = vadd.f32 0.0, %v4849
      %v4851 = vpop.f32.mrb[0].mxu0
      %v4852 = vadd.f32 0.0, %v4851
      %v4853 = vpop.f32.mrb[0].mxu0
      %v4854 = vadd.f32 0.0, %v4853
      %v4855 = vpop.f32.mrb[0].mxu0
      %v4856 = vadd.f32 0.0, %v4855
      %4857 = vmatprep.mubr.bf16.mxu0 0
      %4858 = vmatmul.mubr.bf16.gmra.mrb[0].mxu0 %v4507
      %v4859 = vpop.f32.mrb[0].mxu0
      %v4860 = vadd.f32 0.0, %v4859
      %v4861 = vpop.f32.mrb[0].mxu0
      %v4862 = vadd.f32 0.0, %v4861
      %v4863 = vpop.f32.mrb[0].mxu0
      %v4864 = vadd.f32 0.0, %v4863
      %v4865 = vpop.f32.mrb[0].mxu0
      %v4866 = vadd.f32 0.0, %v4865
      %4867 = vmatprep.mubr.bf16.mxu0 0
      %4868 = vmatmul.mubr.bf16.gmra.mrb[0].mxu0 %v4510
      %v4869 = vpop.f32.mrb[0].mxu0
      %v4870 = vadd.f32 0.0, %v4869
      %v4871 = vpop.f32.mrb[0].mxu0
      %v4872 = vadd.f32 0.0, %v4871
      %v4873 = vpop.f32.mrb[0].mxu0
      %v4874 = vadd.f32 0.0, %v4873
      %v4875 = vpop.f32.mrb[0].mxu0
      %v4876 = vadd.f32 0.0, %v4875
      %4877 = vmatprep.mubr.bf16.mxu0 0
      %4878 = vmatmul.mubr.bf16.gmra.mrb[0].mxu0 %v4513
      %v4879 = vpop.f32.mrb[0].mxu0
      %v4880 = vadd.f32 0.0, %v4879
      %v4881 = vpop.f32.mrb[0].mxu0
      %v4882 = vadd.f32 0.0, %v4881
      %v4883 = vpop.f32.mrb[0].mxu0
      %v4884 = vadd.f32 0.0, %v4883
      %v4885 = vpop.f32.mrb[0].mxu0
      %v4886 = vadd.f32 0.0, %v4885
      %4887 = vmatprep.mubr.bf16.mxu0 0
      %4888 = vmatmul.mubr.bf16.gmra.mrb[0].mxu0 %v4516
      %v4889 = vpop.f32.mrb[0].mxu0
      %v4890 = vadd.f32 0.0, %v4889
      %v4891 = vpop.f32.mrb[0].mxu0
      %v4892 = vadd.f32 0.0, %v4891
      %v4893 = vpop.f32.mrb[0].mxu0
      %v4894 = vadd.f32 0.0, %v4893
      %v4895 = vpop.f32.mrb[0].mxu0
      %v4896 = vadd.f32 0.0, %v4895
      %4897 = vmatprep.mubr.bf16.mxu0 0
      %4898 = vmatmul.mubr.bf16.gmra.mrb[0].mxu0 %v4519
      %v4899 = vpop.f32.mrb[0].mxu0
      %v4900 = vadd.f32 0.0, %v4899
      %v4901 = vpop.f32.mrb[0].mxu0
      %v4902 = vadd.f32 0.0, %v4901
      %v4903 = vpop.f32.mrb[0].mxu0
      %v4904 = vadd.f32 0.0, %v4903
      %v4905 = vpop.f32.mrb[0].mxu0
      %v4906 = vadd.f32 0.0, %v4905
      %4907 = vmatprep.mubr.bf16.mxu0 0
      %4908 = vmatmul.mubr.bf16.gmra.mrb[0].mxu0 %v4522
      %v4909 = vpop.f32.mrb[0].mxu0
      %v4910 = vadd.f32 0.0, %v4909
      %v4911 = vpop.f32.mrb[0].mxu0
      %v4912 = vadd.f32 0.0, %v4911
      %v4913 = vpop.f32.mrb[0].mxu0
      %v4914 = vadd.f32 0.0, %v4913
      %v4915 = vpop.f32.mrb[0].mxu0
      %v4916 = vadd.f32 0.0, %v4915
      %4917 = vmatprep.mubr.bf16.mxu0 0
      %4918 = vmatmul.mubr.bf16.gmra.mrb[0].mxu0 %v4525
      %v4919 = vpop.f32.mrb[0].mxu0
      %v4920 = vadd.f32 0.0, %v4919
      %v4921 = vpop.f32.mrb[0].mxu0
      %v4922 = vadd.f32 0.0, %v4921
      %v4923 = vpop.f32.mrb[0].mxu0
      %v4924 = vadd.f32 0.0, %v4923
      %v4925 = vpop.f32.mrb[0].mxu0
      %v4926 = vadd.f32 0.0, %v4925
      %4927 = vdwg.mxu0
      %v4928 = vmax.f32 %v4610, %v4612
      %4929 = vmax.xlane.f32.xlu0 %v4928
      %v4930 = vpop.xlane.xlu0 %4929
      %v4931 = vmax.f32 %v4614, %v4616
      %4932 = vmax.xlane.f32.xlu0 %v4931
      %v4933 = vpop.xlane.xlu0 %4932
      %v4934 = vmax.f32 %v4620, %v4622
      %4935 = vmax.xlane.f32.xlu0 %v4934
      %v4936 = vpop.xlane.xlu0 %4935
      %v4937 = vmax.f32 %v4624, %v4626
      %4938 = vmax.xlane.f32.xlu0 %v4937
      %v4939 = vpop.xlane.xlu0 %4938
      %v4940 = vmax.f32 %v4630, %v4632
      %4941 = vmax.xlane.f32.xlu0 %v4940
      %v4942 = vpop.xlane.xlu0 %4941
      %v4943 = vmax.f32 %v4634, %v4636
      %4944 = vmax.xlane.f32.xlu0 %v4943
      %v4945 = vpop.xlane.xlu0 %4944
      %v4946 = vmax.f32 %v4640, %v4642
      %4947 = vmax.xlane.f32.xlu0 %v4946
      %v4948 = vpop.xlane.xlu0 %4947
      %v4949 = vmax.f32 %v4644, %v4646
      %4950 = vmax.xlane.f32.xlu0 %v4949
      %v4951 = vpop.xlane.xlu0 %4950
      %v4952 = vmax.f32 %v4650, %v4652
      %4953 = vmax.xlane.f32.xlu0 %v4952
      %v4954 = vpop.xlane.xlu0 %4953
      %v4955 = vmax.f32 %v4654, %v4656
      %4956 = vmax.xlane.f32.xlu0 %v4955
      %v4957 = vpop.xlane.xlu0 %4956
      %v4958 = vmax.f32 %v4660, %v4662
      %4959 = vmax.xlane.f32.xlu0 %v4958
      %v4960 = vpop.xlane.xlu0 %4959
      %v4961 = vmax.f32 %v4664, %v4666
      %4962 = vmax.xlane.f32.xlu0 %v4961
      %v4963 = vpop.xlane.xlu0 %4962
      %v4964 = vmax.f32 %v4670, %v4672
      %4965 = vmax.xlane.f32.xlu0 %v4964
      %v4966 = vpop.xlane.xlu0 %4965
      %v4967 = vmax.f32 %v4674, %v4676
      %4968 = vmax.xlane.f32.xlu0 %v4967
      %v4969 = vpop.xlane.xlu0 %4968
      %v4970 = vmax.f32 %v4680, %v4682
      %4971 = vmax.xlane.f32.xlu0 %v4970
      %v4972 = vpop.xlane.xlu0 %4971
      %v4973 = vmax.f32 %v4684, %v4686
      %4974 = vmax.xlane.f32.xlu0 %v4973
      %v4975 = vpop.xlane.xlu0 %4974
      %v4976 = vmax.f32 %v4690, %v4692
      %4977 = vmax.xlane.f32.xlu0 %v4976
      %v4978 = vpop.xlane.xlu0 %4977
      %v4979 = vmax.f32 %v4694, %v4696
      %4980 = vmax.xlane.f32.xlu0 %v4979
      %v4981 = vpop.xlane.xlu0 %4980
      %v4982 = vmax.f32 %v4700, %v4702
      %4983 = vmax.xlane.f32.xlu0 %v4982
      %v4984 = vpop.xlane.xlu0 %4983
      %v4985 = vmax.f32 %v4704, %v4706
      %4986 = vmax.xlane.f32.xlu0 %v4985
      %v4987 = vpop.xlane.xlu0 %4986
      %v4988 = vmax.f32 %v4710, %v4712
      %4989 = vmax.xlane.f32.xlu0 %v4988
      %v4990 = vpop.xlane.xlu0 %4989
      %v4991 = vmax.f32 %v4714, %v4716
      %4992 = vmax.xlane.f32.xlu0 %v4991
      %v4993 = vpop.xlane.xlu0 %4992
      %v4994 = vmax.f32 %v4720, %v4722
      %4995 = vmax.xlane.f32.xlu0 %v4994
      %v4996 = vpop.xlane.xlu0 %4995
      %v4997 = vmax.f32 %v4724, %v4726
      %4998 = vmax.xlane.f32.xlu0 %v4997
      %v4999 = vpop.xlane.xlu0 %4998
      %v5000 = vmax.f32 %v4730, %v4732
      %5001 = vmax.xlane.f32.xlu0 %v5000
      %v5002 = vpop.xlane.xlu0 %5001
      %v5003 = vmax.f32 %v4734, %v4736
      %5004 = vmax.xlane.f32.xlu0 %v5003
      %v5005 = vpop.xlane.xlu0 %5004
      %v5006 = vmax.f32 %v4740, %v4742
      %5007 = vmax.xlane.f32.xlu0 %v5006
      %v5008 = vpop.xlane.xlu0 %5007
      %v5009 = vmax.f32 %v4744, %v4746
      %5010 = vmax.xlane.f32.xlu0 %v5009
      %v5011 = vpop.xlane.xlu0 %5010
      %v5012 = vmax.f32 %v4750, %v4752
      %5013 = vmax.xlane.f32.xlu0 %v5012
      %v5014 = vpop.xlane.xlu0 %5013
      %v5015 = vmax.f32 %v4754, %v4756
      %5016 = vmax.xlane.f32.xlu0 %v5015
      %v5017 = vpop.xlane.xlu0 %5016
      %v5018 = vmax.f32 %v4760, %v4762
      %5019 = vmax.xlane.f32.xlu0 %v5018
      %v5020 = vpop.xlane.xlu0 %5019
      %v5021 = vmax.f32 %v4764, %v4766
      %5022 = vmax.xlane.f32.xlu0 %v5021
      %v5023 = vpop.xlane.xlu0 %5022
      %v5024 = vmax.f32 %v4770, %v4772
      %5025 = vmax.xlane.f32.xlu0 %v5024
      %v5026 = vpop.xlane.xlu0 %5025
      %v5027 = vmax.f32 %v4774, %v4776
      %5028 = vmax.xlane.f32.xlu0 %v5027
      %v5029 = vpop.xlane.xlu0 %5028
      %v5030 = vmax.f32 %v4780, %v4782
      %5031 = vmax.xlane.f32.xlu0 %v5030
      %v5032 = vpop.xlane.xlu0 %5031
      %v5033 = vmax.f32 %v4784, %v4786
      %5034 = vmax.xlane.f32.xlu0 %v5033
      %v5035 = vpop.xlane.xlu0 %5034
      %v5036 = vmax.f32 %v4790, %v4792
      %5037 = vmax.xlane.f32.xlu0 %v5036
      %v5038 = vpop.xlane.xlu0 %5037
      %v5039 = vmax.f32 %v4794, %v4796
      %5040 = vmax.xlane.f32.xlu0 %v5039
      %v5041 = vpop.xlane.xlu0 %5040
      %v5042 = vmax.f32 %v4800, %v4802
      %5043 = vmax.xlane.f32.xlu0 %v5042
      %v5044 = vpop.xlane.xlu0 %5043
      %v5045 = vmax.f32 %v4804, %v4806
      %5046 = vmax.xlane.f32.xlu0 %v5045
      %v5047 = vpop.xlane.xlu0 %5046
      %v5048 = vmax.f32 %v4810, %v4812
      %5049 = vmax.xlane.f32.xlu0 %v5048
      %v5050 = vpop.xlane.xlu0 %5049
      %v5051 = vmax.f32 %v4814, %v4816
      %5052 = vmax.xlane.f32.xlu0 %v5051
      %v5053 = vpop.xlane.xlu0 %5052
      %v5054 = vmax.f32 %v4820, %v4822
      %5055 = vmax.xlane.f32.xlu0 %v5054
      %v5056 = vpop.xlane.xlu0 %5055
      %v5057 = vmax.f32 %v4824, %v4826
      %5058 = vmax.xlane.f32.xlu0 %v5057
      %v5059 = vpop.xlane.xlu0 %5058
      %v5060 = vmax.f32 %v4830, %v4832
      %5061 = vmax.xlane.f32.xlu0 %v5060
      %v5062 = vpop.xlane.xlu0 %5061
      %v5063 = vmax.f32 %v4834, %v4836
      %5064 = vmax.xlane.f32.xlu0 %v5063
      %v5065 = vpop.xlane.xlu0 %5064
      %v5066 = vmax.f32 %v4840, %v4842
      %5067 = vmax.xlane.f32.xlu0 %v5066
      %v5068 = vpop.xlane.xlu0 %5067
      %v5069 = vmax.f32 %v4844, %v4846
      %5070 = vmax.xlane.f32.xlu0 %v5069
      %v5071 = vpop.xlane.xlu0 %5070
      %v5072 = vmax.f32 %v4850, %v4852
      %5073 = vmax.xlane.f32.xlu0 %v5072
      %v5074 = vpop.xlane.xlu0 %5073
      %v5075 = vmax.f32 %v4854, %v4856
      %5076 = vmax.xlane.f32.xlu0 %v5075
      %v5077 = vpop.xlane.xlu0 %5076
      %v5078 = vmax.f32 %v4860, %v4862
      %5079 = vmax.xlane.f32.xlu0 %v5078
      %v5080 = vpop.xlane.xlu0 %5079
      %v5081 = vmax.f32 %v4864, %v4866
      %5082 = vmax.xlane.f32.xlu0 %v5081
      %v5083 = vpop.xlane.xlu0 %5082
      %v5084 = vmax.f32 %v4870, %v4872
      %5085 = vmax.xlane.f32.xlu0 %v5084
      %v5086 = vpop.xlane.xlu0 %5085
      %v5087 = vmax.f32 %v4874, %v4876
      %5088 = vmax.xlane.f32.xlu0 %v5087
      %v5089 = vpop.xlane.xlu0 %5088
      %v5090 = vmax.f32 %v4880, %v4882
      %5091 = vmax.xlane.f32.xlu0 %v5090
      %v5092 = vpop.xlane.xlu0 %5091
      %v5093 = vmax.f32 %v4884, %v4886
      %5094 = vmax.xlane.f32.xlu0 %v5093
      %v5095 = vpop.xlane.xlu0 %5094
      %v5096 = vmax.f32 %v4890, %v4892
      %5097 = vmax.xlane.f32.xlu0 %v5096
      %v5098 = vpop.xlane.xlu0 %5097
      %v5099 = vmax.f32 %v4894, %v4896
      %5100 = vmax.xlane.f32.xlu0 %v5099
      %v5101 = vpop.xlane.xlu0 %5100
      %v5102 = vmax.f32 %v4900, %v4902
      %5103 = vmax.xlane.f32.xlu0 %v5102
      %v5104 = vpop.xlane.xlu0 %5103
      %v5105 = vmax.f32 %v4904, %v4906
      %5106 = vmax.xlane.f32.xlu0 %v5105
      %v5107 = vpop.xlane.xlu0 %5106
      %v5108 = vmax.f32 %v4910, %v4912
      %5109 = vmax.xlane.f32.xlu0 %v5108
      %v5110 = vpop.xlane.xlu0 %5109
      %v5111 = vmax.f32 %v4914, %v4916
      %5112 = vmax.xlane.f32.xlu0 %v5111
      %v5113 = vpop.xlane.xlu0 %5112
      %v5114 = vmax.f32 %v4920, %v4922
      %5115 = vmax.xlane.f32.xlu0 %v5114
      %v5116 = vpop.xlane.xlu0 %5115
      %v5117 = vmax.f32 %v4924, %v4926
      %5118 = vmax.xlane.f32.xlu0 %v5117
      %v5119 = vpop.xlane.xlu0 %5118
      %v5120 = vsub.f32 %v4610, %v4930
      %v5121 = vsub.f32 %v4612, %v4930
      %v5122 = vsub.f32 %v4614, %v4933
      %v5123 = vsub.f32 %v4616, %v4933
      %v5124 = vsub.f32 %v4620, %v4936
      %v5125 = vsub.f32 %v4622, %v4936
      %v5126 = vsub.f32 %v4624, %v4939
      %v5127 = vsub.f32 %v4626, %v4939
      %v5128 = vsub.f32 %v4630, %v4942
      %v5129 = vsub.f32 %v4632, %v4942
      %v5130 = vsub.f32 %v4634, %v4945
      %v5131 = vsub.f32 %v4636, %v4945
      %v5132 = vsub.f32 %v4640, %v4948
      %v5133 = vsub.f32 %v4642, %v4948
      %v5134 = vsub.f32 %v4644, %v4951
      %v5135 = vsub.f32 %v4646, %v4951
      %v5136 = vsub.f32 %v4650, %v4954
      %v5137 = vsub.f32 %v4652, %v4954
      %v5138 = vsub.f32 %v4654, %v4957
      %v5139 = vsub.f32 %v4656, %v4957
      %v5140 = vsub.f32 %v4660, %v4960
      %v5141 = vsub.f32 %v4662, %v4960
      %v5142 = vsub.f32 %v4664, %v4963
      %v5143 = vsub.f32 %v4666, %v4963
      %v5144 = vsub.f32 %v4670, %v4966
      %v5145 = vsub.f32 %v4672, %v4966
      %v5146 = vsub.f32 %v4674, %v4969
      %v5147 = vsub.f32 %v4676, %v4969
      %v5148 = vsub.f32 %v4680, %v4972
      %v5149 = vsub.f32 %v4682, %v4972
      %v5150 = vsub.f32 %v4684, %v4975
      %v5151 = vsub.f32 %v4686, %v4975
      %v5152 = vsub.f32 %v4690, %v4978
      %v5153 = vsub.f32 %v4692, %v4978
      %v5154 = vsub.f32 %v4694, %v4981
      %v5155 = vsub.f32 %v4696, %v4981
      %v5156 = vsub.f32 %v4700, %v4984
      %v5157 = vsub.f32 %v4702, %v4984
      %v5158 = vsub.f32 %v4704, %v4987
      %v5159 = vsub.f32 %v4706, %v4987
      %v5160 = vsub.f32 %v4710, %v4990
      %v5161 = vsub.f32 %v4712, %v4990
      %v5162 = vsub.f32 %v4714, %v4993
      %v5163 = vsub.f32 %v4716, %v4993
      %v5164 = vsub.f32 %v4720, %v4996
      %v5165 = vsub.f32 %v4722, %v4996
      %v5166 = vsub.f32 %v4724, %v4999
      %v5167 = vsub.f32 %v4726, %v4999
      %v5168 = vsub.f32 %v4730, %v5002
      %v5169 = vsub.f32 %v4732, %v5002
      %v5170 = vsub.f32 %v4734, %v5005
      %v5171 = vsub.f32 %v4736, %v5005
      %v5172 = vsub.f32 %v4740, %v5008
      %v5173 = vsub.f32 %v4742, %v5008
      %v5174 = vsub.f32 %v4744, %v5011
      %v5175 = vsub.f32 %v4746, %v5011
      %v5176 = vsub.f32 %v4750, %v5014
      %v5177 = vsub.f32 %v4752, %v5014
      %v5178 = vsub.f32 %v4754, %v5017
      %v5179 = vsub.f32 %v4756, %v5017
      %v5180 = vsub.f32 %v4760, %v5020
      %v5181 = vsub.f32 %v4762, %v5020
      %v5182 = vsub.f32 %v4764, %v5023
      %v5183 = vsub.f32 %v4766, %v5023
      %v5184 = vsub.f32 %v4770, %v5026
      %v5185 = vsub.f32 %v4772, %v5026
      %v5186 = vsub.f32 %v4774, %v5029
      %v5187 = vsub.f32 %v4776, %v5029
      %v5188 = vsub.f32 %v4780, %v5032
      %v5189 = vsub.f32 %v4782, %v5032
      %v5190 = vsub.f32 %v4784, %v5035
      %v5191 = vsub.f32 %v4786, %v5035
      %v5192 = vsub.f32 %v4790, %v5038
      %v5193 = vsub.f32 %v4792, %v5038
      %v5194 = vsub.f32 %v4794, %v5041
      %v5195 = vsub.f32 %v4796, %v5041
      %v5196 = vsub.f32 %v4800, %v5044
      %v5197 = vsub.f32 %v4802, %v5044
      %v5198 = vsub.f32 %v4804, %v5047
      %v5199 = vsub.f32 %v4806, %v5047
      %v5200 = vsub.f32 %v4810, %v5050
      %v5201 = vsub.f32 %v4812, %v5050
      %v5202 = vsub.f32 %v4814, %v5053
      %v5203 = vsub.f32 %v4816, %v5053
      %v5204 = vsub.f32 %v4820, %v5056
      %v5205 = vsub.f32 %v4822, %v5056
      %v5206 = vsub.f32 %v4824, %v5059
      %v5207 = vsub.f32 %v4826, %v5059
      %v5208 = vsub.f32 %v4830, %v5062
      %v5209 = vsub.f32 %v4832, %v5062
      %v5210 = vsub.f32 %v4834, %v5065
      %v5211 = vsub.f32 %v4836, %v5065
      %v5212 = vsub.f32 %v4840, %v5068
      %v5213 = vsub.f32 %v4842, %v5068
      %v5214 = vsub.f32 %v4844, %v5071
      %v5215 = vsub.f32 %v4846, %v5071
      %v5216 = vsub.f32 %v4850, %v5074
      %v5217 = vsub.f32 %v4852, %v5074
      %v5218 = vsub.f32 %v4854, %v5077
      %v5219 = vsub.f32 %v4856, %v5077
      %v5220 = vsub.f32 %v4860, %v5080
      %v5221 = vsub.f32 %v4862, %v5080
      %v5222 = vsub.f32 %v4864, %v5083
      %v5223 = vsub.f32 %v4866, %v5083
      %v5224 = vsub.f32 %v4870, %v5086
      %v5225 = vsub.f32 %v4872, %v5086
      %v5226 = vsub.f32 %v4874, %v5089
      %v5227 = vsub.f32 %v4876, %v5089
      %v5228 = vsub.f32 %v4880, %v5092
      %v5229 = vsub.f32 %v4882, %v5092
      %v5230 = vsub.f32 %v4884, %v5095
      %v5231 = vsub.f32 %v4886, %v5095
      %v5232 = vsub.f32 %v4890, %v5098
      %v5233 = vsub.f32 %v4892, %v5098
      %v5234 = vsub.f32 %v4894, %v5101
      %v5235 = vsub.f32 %v4896, %v5101
      %v5236 = vsub.f32 %v4900, %v5104
      %v5237 = vsub.f32 %v4902, %v5104
      %v5238 = vsub.f32 %v4904, %v5107
      %v5239 = vsub.f32 %v4906, %v5107
      %v5240 = vsub.f32 %v4910, %v5110
      %v5241 = vsub.f32 %v4912, %v5110
      %v5242 = vsub.f32 %v4914, %v5113
      %v5243 = vsub.f32 %v4916, %v5113
      %v5244 = vsub.f32 %v4920, %v5116
      %v5245 = vsub.f32 %v4922, %v5116
      %v5246 = vsub.f32 %v4924, %v5119
      %v5247 = vsub.f32 %v4926, %v5119
      %v5248 = vmul.f32 %v5120, 1.442695
      %v5249 = vpow.pop %v5248
      %v5250 = vmul.f32 %v5121, 1.442695
      %v5251 = vpow.pop %v5250
      %v5252 = vmul.f32 %v5122, 1.442695
      %v5253 = vpow.pop %v5252
      %v5254 = vmul.f32 %v5123, 1.442695
      %v5255 = vpow.pop %v5254
      %v5256 = vmul.f32 %v5124, 1.442695
      %v5257 = vpow.pop %v5256
      %v5258 = vmul.f32 %v5125, 1.442695
      %v5259 = vpow.pop %v5258
      %v5260 = vmul.f32 %v5126, 1.442695
      %v5261 = vpow.pop %v5260
      %v5262 = vmul.f32 %v5127, 1.442695
      %v5263 = vpow.pop %v5262
      %v5264 = vmul.f32 %v5128, 1.442695
      %v5265 = vpow.pop %v5264
      %v5266 = vmul.f32 %v5129, 1.442695
      %v5267 = vpow.pop %v5266
      %v5268 = vmul.f32 %v5130, 1.442695
      %v5269 = vpow.pop %v5268
      %v5270 = vmul.f32 %v5131, 1.442695
      %v5271 = vpow.pop %v5270
      %v5272 = vmul.f32 %v5132, 1.442695
      %v5273 = vpow.pop %v5272
      %v5274 = vmul.f32 %v5133, 1.442695
      %v5275 = vpow.pop %v5274
      %v5276 = vmul.f32 %v5134, 1.442695
      %v5277 = vpow.pop %v5276
      %v5278 = vmul.f32 %v5135, 1.442695
      %v5279 = vpow.pop %v5278
      %v5280 = vmul.f32 %v5136, 1.442695
      %v5281 = vpow.pop %v5280
      %v5282 = vmul.f32 %v5137, 1.442695
      %v5283 = vpow.pop %v5282
      %v5284 = vmul.f32 %v5138, 1.442695
      %v5285 = vpow.pop %v5284
      %v5286 = vmul.f32 %v5139, 1.442695
      %v5287 = vpow.pop %v5286
      %v5288 = vmul.f32 %v5140, 1.442695
      %v5289 = vpow.pop %v5288
      %v5290 = vmul.f32 %v5141, 1.442695
      %v5291 = vpow.pop %v5290
      %v5292 = vmul.f32 %v5142, 1.442695
      %v5293 = vpow.pop %v5292
      %v5294 = vmul.f32 %v5143, 1.442695
      %v5295 = vpow.pop %v5294
      %v5296 = vmul.f32 %v5144, 1.442695
      %v5297 = vpow.pop %v5296
      %v5298 = vmul.f32 %v5145, 1.442695
      %v5299 = vpow.pop %v5298
      %v5300 = vmul.f32 %v5146, 1.442695
      %v5301 = vpow.pop %v5300
      %v5302 = vmul.f32 %v5147, 1.442695
      %v5303 = vpow.pop %v5302
      %v5304 = vmul.f32 %v5148, 1.442695
      %v5305 = vpow.pop %v5304
      %v5306 = vmul.f32 %v5149, 1.442695
      %v5307 = vpow.pop %v5306
      %v5308 = vmul.f32 %v5150, 1.442695
      %v5309 = vpow.pop %v5308
      %v5310 = vmul.f32 %v5151, 1.442695
      %v5311 = vpow.pop %v5310
      %v5312 = vmul.f32 %v5152, 1.442695
      %v5313 = vpow.pop %v5312
      %v5314 = vmul.f32 %v5153, 1.442695
      %v5315 = vpow.pop %v5314
      %v5316 = vmul.f32 %v5154, 1.442695
      %v5317 = vpow.pop %v5316
      %v5318 = vmul.f32 %v5155, 1.442695
      %v5319 = vpow.pop %v5318
      %v5320 = vmul.f32 %v5156, 1.442695
      %v5321 = vpow.pop %v5320
      %v5322 = vmul.f32 %v5157, 1.442695
      %v5323 = vpow.pop %v5322
      %v5324 = vmul.f32 %v5158, 1.442695
      %v5325 = vpow.pop %v5324
      %v5326 = vmul.f32 %v5159, 1.442695
      %v5327 = vpow.pop %v5326
      %v5328 = vmul.f32 %v5160, 1.442695
      %v5329 = vpow.pop %v5328
      %v5330 = vmul.f32 %v5161, 1.442695
      %v5331 = vpow.pop %v5330
      %v5332 = vmul.f32 %v5162, 1.442695
      %v5333 = vpow.pop %v5332
      %v5334 = vmul.f32 %v5163, 1.442695
      %v5335 = vpow.pop %v5334
      %v5336 = vmul.f32 %v5164, 1.442695
      %v5337 = vpow.pop %v5336
      %v5338 = vmul.f32 %v5165, 1.442695
      %v5339 = vpow.pop %v5338
      %v5340 = vmul.f32 %v5166, 1.442695
      %v5341 = vpow.pop %v5340
      %v5342 = vmul.f32 %v5167, 1.442695
      %v5343 = vpow.pop %v5342
      %v5344 = vmul.f32 %v5168, 1.442695
      %v5345 = vpow.pop %v5344
      %v5346 = vmul.f32 %v5169, 1.442695
      %v5347 = vpow.pop %v5346
      %v5348 = vmul.f32 %v5170, 1.442695
      %v5349 = vpow.pop %v5348
      %v5350 = vmul.f32 %v5171, 1.442695
      %v5351 = vpow.pop %v5350
      %v5352 = vmul.f32 %v5172, 1.442695
      %v5353 = vpow.pop %v5352
      %v5354 = vmul.f32 %v5173, 1.442695
      %v5355 = vpow.pop %v5354
      %v5356 = vmul.f32 %v5174, 1.442695
      %v5357 = vpow.pop %v5356
      %v5358 = vmul.f32 %v5175, 1.442695
      %v5359 = vpow.pop %v5358
      %v5360 = vmul.f32 %v5176, 1.442695
      %v5361 = vpow.pop %v5360
      %v5362 = vmul.f32 %v5177, 1.442695
      %v5363 = vpow.pop %v5362
      %v5364 = vmul.f32 %v5178, 1.442695
      %v5365 = vpow.pop %v5364
      %v5366 = vmul.f32 %v5179, 1.442695
      %v5367 = vpow.pop %v5366
      %v5368 = vmul.f32 %v5180, 1.442695
      %v5369 = vpow.pop %v5368
      %v5370 = vmul.f32 %v5181, 1.442695
      %v5371 = vpow.pop %v5370
      %v5372 = vmul.f32 %v5182, 1.442695
      %v5373 = vpow.pop %v5372
      %v5374 = vmul.f32 %v5183, 1.442695
      %v5375 = vpow.pop %v5374
      %v5376 = vmul.f32 %v5184, 1.442695
      %v5377 = vpow.pop %v5376
      %v5378 = vmul.f32 %v5185, 1.442695
      %v5379 = vpow.pop %v5378
      %v5380 = vmul.f32 %v5186, 1.442695
      %v5381 = vpow.pop %v5380
      %v5382 = vmul.f32 %v5187, 1.442695
      %v5383 = vpow.pop %v5382
      %v5384 = vmul.f32 %v5188, 1.442695
      %v5385 = vpow.pop %v5384
      %v5386 = vmul.f32 %v5189, 1.442695
      %v5387 = vpow.pop %v5386
      %v5388 = vmul.f32 %v5190, 1.442695
      %v5389 = vpow.pop %v5388
      %v5390 = vmul.f32 %v5191, 1.442695
      %v5391 = vpow.pop %v5390
      %v5392 = vmul.f32 %v5192, 1.442695
      %v5393 = vpow.pop %v5392
      %v5394 = vmul.f32 %v5193, 1.442695
      %v5395 = vpow.pop %v5394
      %v5396 = vmul.f32 %v5194, 1.442695
      %v5397 = vpow.pop %v5396
      %v5398 = vmul.f32 %v5195, 1.442695
      %v5399 = vpow.pop %v5398
      %v5400 = vmul.f32 %v5196, 1.442695
      %v5401 = vpow.pop %v5400
      %v5402 = vmul.f32 %v5197, 1.442695
      %v5403 = vpow.pop %v5402
      %v5404 = vmul.f32 %v5198, 1.442695
      %v5405 = vpow.pop %v5404
      %v5406 = vmul.f32 %v5199, 1.442695
      %v5407 = vpow.pop %v5406
      %v5408 = vmul.f32 %v5200, 1.442695
      %v5409 = vpow.pop %v5408
      %v5410 = vmul.f32 %v5201, 1.442695
      %v5411 = vpow.pop %v5410
      %v5412 = vmul.f32 %v5202, 1.442695
      %v5413 = vpow.pop %v5412
      %v5414 = vmul.f32 %v5203, 1.442695
      %v5415 = vpow.pop %v5414
      %v5416 = vmul.f32 %v5204, 1.442695
      %v5417 = vpow.pop %v5416
      %v5418 = vmul.f32 %v5205, 1.442695
      %v5419 = vpow.pop %v5418
      %v5420 = vmul.f32 %v5206, 1.442695
      %v5421 = vpow.pop %v5420
      %v5422 = vmul.f32 %v5207, 1.442695
      %v5423 = vpow.pop %v5422
      %v5424 = vmul.f32 %v5208, 1.442695
      %v5425 = vpow.pop %v5424
      %v5426 = vmul.f32 %v5209, 1.442695
      %v5427 = vpow.pop %v5426
      %v5428 = vmul.f32 %v5210, 1.442695
      %v5429 = vpow.pop %v5428
      %v5430 = vmul.f32 %v5211, 1.442695
      %v5431 = vpow.pop %v5430
      %v5432 = vmul.f32 %v5212, 1.442695
      %v5433 = vpow.pop %v5432
      %v5434 = vmul.f32 %v5213, 1.442695
      %v5435 = vpow.pop %v5434
      %v5436 = vmul.f32 %v5214, 1.442695
      %v5437 = vpow.pop %v5436
      %v5438 = vmul.f32 %v5215, 1.442695
      %v5439 = vpow.pop %v5438
      %v5440 = vmul.f32 %v5216, 1.442695
      %v5441 = vpow.pop %v5440
      %v5442 = vmul.f32 %v5217, 1.442695
      %v5443 = vpow.pop %v5442
      %v5444 = vmul.f32 %v5218, 1.442695
      %v5445 = vpow.pop %v5444
      %v5446 = vmul.f32 %v5219, 1.442695
      %v5447 = vpow.pop %v5446
      %v5448 = vmul.f32 %v5220, 1.442695
      %v5449 = vpow.pop %v5448
      %v5450 = vmul.f32 %v5221, 1.442695
      %v5451 = vpow.pop %v5450
      %v5452 = vmul.f32 %v5222, 1.442695
      %v5453 = vpow.pop %v5452
      %v5454 = vmul.f32 %v5223, 1.442695
      %v5455 = vpow.pop %v5454
      %v5456 = vmul.f32 %v5224, 1.442695
      %v5457 = vpow.pop %v5456
      %v5458 = vmul.f32 %v5225, 1.442695
      %v5459 = vpow.pop %v5458
      %v5460 = vmul.f32 %v5226, 1.442695
      %v5461 = vpow.pop %v5460
      %v5462 = vmul.f32 %v5227, 1.442695
      %v5463 = vpow.pop %v5462
      %v5464 = vmul.f32 %v5228, 1.442695
      %v5465 = vpow.pop %v5464
      %v5466 = vmul.f32 %v5229, 1.442695
      %v5467 = vpow.pop %v5466
      %v5468 = vmul.f32 %v5230, 1.442695
      %v5469 = vpow.pop %v5468
      %v5470 = vmul.f32 %v5231, 1.442695
      %v5471 = vpow.pop %v5470
      %v5472 = vmul.f32 %v5232, 1.442695
      %v5473 = vpow.pop %v5472
      %v5474 = vmul.f32 %v5233, 1.442695
      %v5475 = vpow.pop %v5474
      %v5476 = vmul.f32 %v5234, 1.442695
      %v5477 = vpow.pop %v5476
      %v5478 = vmul.f32 %v5235, 1.442695
      %v5479 = vpow.pop %v5478
      %v5480 = vmul.f32 %v5236, 1.442695
      %v5481 = vpow.pop %v5480
      %v5482 = vmul.f32 %v5237, 1.442695
      %v5483 = vpow.pop %v5482
      %v5484 = vmul.f32 %v5238, 1.442695
      %v5485 = vpow.pop %v5484
      %v5486 = vmul.f32 %v5239, 1.442695
      %v5487 = vpow.pop %v5486
      %v5488 = vmul.f32 %v5240, 1.442695
      %v5489 = vpow.pop %v5488
      %v5490 = vmul.f32 %v5241, 1.442695
      %v5491 = vpow.pop %v5490
      %v5492 = vmul.f32 %v5242, 1.442695
      %v5493 = vpow.pop %v5492
      %v5494 = vmul.f32 %v5243, 1.442695
      %v5495 = vpow.pop %v5494
      %v5496 = vmul.f32 %v5244, 1.442695
      %v5497 = vpow.pop %v5496
      %v5498 = vmul.f32 %v5245, 1.442695
      %v5499 = vpow.pop %v5498
      %v5500 = vmul.f32 %v5246, 1.442695
      %v5501 = vpow.pop %v5500
      %v5502 = vmul.f32 %v5247, 1.442695
      %v5503 = vpow.pop %v5502
      %v5504 = vadd.f32 %v5249, %v5251
      %5505 = vadd.xlane.f32.xlu0 %v5504
      %v5506 = vpop.xlane.xlu0 %5505
      %v5507 = vadd.f32 %v5253, %v5255
      %5508 = vadd.xlane.f32.xlu0 %v5507
      %v5509 = vpop.xlane.xlu0 %5508
      %v5510 = vadd.f32 %v5257, %v5259
      %5511 = vadd.xlane.f32.xlu0 %v5510
      %v5512 = vpop.xlane.xlu0 %5511
      %v5513 = vadd.f32 %v5261, %v5263
      %5514 = vadd.xlane.f32.xlu0 %v5513
      %v5515 = vpop.xlane.xlu0 %5514
      %v5516 = vadd.f32 %v5265, %v5267
      %5517 = vadd.xlane.f32.xlu0 %v5516
      %v5518 = vpop.xlane.xlu0 %5517
      %v5519 = vadd.f32 %v5269, %v5271
      %5520 = vadd.xlane.f32.xlu0 %v5519
      %v5521 = vpop.xlane.xlu0 %5520
      %v5522 = vadd.f32 %v5273, %v5275
      %5523 = vadd.xlane.f32.xlu0 %v5522
      %v5524 = vpop.xlane.xlu0 %5523
      %v5525 = vadd.f32 %v5277, %v5279
      %5526 = vadd.xlane.f32.xlu0 %v5525
      %v5527 = vpop.xlane.xlu0 %5526
      %v5528 = vadd.f32 %v5281, %v5283
      %5529 = vadd.xlane.f32.xlu0 %v5528
      %v5530 = vpop.xlane.xlu0 %5529
      %v5531 = vadd.f32 %v5285, %v5287
      %5532 = vadd.xlane.f32.xlu0 %v5531
      %v5533 = vpop.xlane.xlu0 %5532
      %v5534 = vadd.f32 %v5289, %v5291
      %5535 = vadd.xlane.f32.xlu0 %v5534
      %v5536 = vpop.xlane.xlu0 %5535
      %v5537 = vadd.f32 %v5293, %v5295
      %5538 = vadd.xlane.f32.xlu0 %v5537
      %v5539 = vpop.xlane.xlu0 %5538
      %v5540 = vadd.f32 %v5297, %v5299
      %5541 = vadd.xlane.f32.xlu0 %v5540
      %v5542 = vpop.xlane.xlu0 %5541
      %v5543 = vadd.f32 %v5301, %v5303
      %5544 = vadd.xlane.f32.xlu0 %v5543
      %v5545 = vpop.xlane.xlu0 %5544
      %v5546 = vadd.f32 %v5305, %v5307
      %5547 = vadd.xlane.f32.xlu0 %v5546
      %v5548 = vpop.xlane.xlu0 %5547
      %v5549 = vadd.f32 %v5309, %v5311
      %5550 = vadd.xlane.f32.xlu0 %v5549
      %v5551 = vpop.xlane.xlu0 %5550
      %v5552 = vadd.f32 %v5313, %v5315
      %5553 = vadd.xlane.f32.xlu0 %v5552
      %v5554 = vpop.xlane.xlu0 %5553
      %v5555 = vadd.f32 %v5317, %v5319
      %5556 = vadd.xlane.f32.xlu0 %v5555
      %v5557 = vpop.xlane.xlu0 %5556
      %v5558 = vadd.f32 %v5321, %v5323
      %5559 = vadd.xlane.f32.xlu0 %v5558
      %v5560 = vpop.xlane.xlu0 %5559
      %v5561 = vadd.f32 %v5325, %v5327
      %5562 = vadd.xlane.f32.xlu0 %v5561
      %v5563 = vpop.xlane.xlu0 %5562
      %v5564 = vadd.f32 %v5329, %v5331
      %5565 = vadd.xlane.f32.xlu0 %v5564
      %v5566 = vpop.xlane.xlu0 %5565
      %v5567 = vadd.f32 %v5333, %v5335
      %5568 = vadd.xlane.f32.xlu0 %v5567
      %v5569 = vpop.xlane.xlu0 %5568
      %v5570 = vadd.f32 %v5337, %v5339
      %5571 = vadd.xlane.f32.xlu0 %v5570
      %v5572 = vpop.xlane.xlu0 %5571
      %v5573 = vadd.f32 %v5341, %v5343
      %5574 = vadd.xlane.f32.xlu0 %v5573
      %v5575 = vpop.xlane.xlu0 %5574
      %v5576 = vadd.f32 %v5345, %v5347
      %5577 = vadd.xlane.f32.xlu0 %v5576
      %v5578 = vpop.xlane.xlu0 %5577
      %v5579 = vadd.f32 %v5349, %v5351
      %5580 = vadd.xlane.f32.xlu0 %v5579
      %v5581 = vpop.xlane.xlu0 %5580
      %v5582 = vadd.f32 %v5353, %v5355
      %5583 = vadd.xlane.f32.xlu0 %v5582
      %v5584 = vpop.xlane.xlu0 %5583
      %v5585 = vadd.f32 %v5357, %v5359
      %5586 = vadd.xlane.f32.xlu0 %v5585
      %v5587 = vpop.xlane.xlu0 %5586
      %v5588 = vadd.f32 %v5361, %v5363
      %5589 = vadd.xlane.f32.xlu0 %v5588
      %v5590 = vpop.xlane.xlu0 %5589
      %v5591 = vadd.f32 %v5365, %v5367
      %5592 = vadd.xlane.f32.xlu0 %v5591
      %v5593 = vpop.xlane.xlu0 %5592
      %v5594 = vadd.f32 %v5369, %v5371
      %5595 = vadd.xlane.f32.xlu0 %v5594
      %v5596 = vpop.xlane.xlu0 %5595
      %v5597 = vadd.f32 %v5373, %v5375
      %5598 = vadd.xlane.f32.xlu0 %v5597
      %v5599 = vpop.xlane.xlu0 %5598
      %v5600 = vadd.f32 %v5377, %v5379
      %5601 = vadd.xlane.f32.xlu0 %v5600
      %v5602 = vpop.xlane.xlu0 %5601
      %v5603 = vadd.f32 %v5381, %v5383
      %5604 = vadd.xlane.f32.xlu0 %v5603
      %v5605 = vpop.xlane.xlu0 %5604
      %v5606 = vadd.f32 %v5385, %v5387
      %5607 = vadd.xlane.f32.xlu0 %v5606
      %v5608 = vpop.xlane.xlu0 %5607
      %v5609 = vadd.f32 %v5389, %v5391
      %5610 = vadd.xlane.f32.xlu0 %v5609
      %v5611 = vpop.xlane.xlu0 %5610
      %v5612 = vadd.f32 %v5393, %v5395
      %5613 = vadd.xlane.f32.xlu0 %v5612
      %v5614 = vpop.xlane.xlu0 %5613
      %v5615 = vadd.f32 %v5397, %v5399
      %5616 = vadd.xlane.f32.xlu0 %v5615
      %v5617 = vpop.xlane.xlu0 %5616
      %v5618 = vadd.f32 %v5401, %v5403
      %5619 = vadd.xlane.f32.xlu0 %v5618
      %v5620 = vpop.xlane.xlu0 %5619
      %v5621 = vadd.f32 %v5405, %v5407
      %5622 = vadd.xlane.f32.xlu0 %v5621
      %v5623 = vpop.xlane.xlu0 %5622
      %v5624 = vadd.f32 %v5409, %v5411
      %5625 = vadd.xlane.f32.xlu0 %v5624
      %v5626 = vpop.xlane.xlu0 %5625
      %v5627 = vadd.f32 %v5413, %v5415
      %5628 = vadd.xlane.f32.xlu0 %v5627
      %v5629 = vpop.xlane.xlu0 %5628
      %v5630 = vadd.f32 %v5417, %v5419
      %5631 = vadd.xlane.f32.xlu0 %v5630
      %v5632 = vpop.xlane.xlu0 %5631
      %v5633 = vadd.f32 %v5421, %v5423
      %5634 = vadd.xlane.f32.xlu0 %v5633
      %v5635 = vpop.xlane.xlu0 %5634
      %v5636 = vadd.f32 %v5425, %v5427
      %5637 = vadd.xlane.f32.xlu0 %v5636
      %v5638 = vpop.xlane.xlu0 %5637
      %v5639 = vadd.f32 %v5429, %v5431
      %5640 = vadd.xlane.f32.xlu0 %v5639
      %v5641 = vpop.xlane.xlu0 %5640
      %v5642 = vadd.f32 %v5433, %v5435
      %5643 = vadd.xlane.f32.xlu0 %v5642
      %v5644 = vpop.xlane.xlu0 %5643
      %v5645 = vadd.f32 %v5437, %v5439
      %5646 = vadd.xlane.f32.xlu0 %v5645
      %v5647 = vpop.xlane.xlu0 %5646
      %v5648 = vadd.f32 %v5441, %v5443
      %5649 = vadd.xlane.f32.xlu0 %v5648
      %v5650 = vpop.xlane.xlu0 %5649
      %v5651 = vadd.f32 %v5445, %v5447
      %5652 = vadd.xlane.f32.xlu0 %v5651
      %v5653 = vpop.xlane.xlu0 %5652
      %v5654 = vadd.f32 %v5449, %v5451
      %5655 = vadd.xlane.f32.xlu0 %v5654
      %v5656 = vpop.xlane.xlu0 %5655
      %v5657 = vadd.f32 %v5453, %v5455
      %5658 = vadd.xlane.f32.xlu0 %v5657
      %v5659 = vpop.xlane.xlu0 %5658
      %v5660 = vadd.f32 %v5457, %v5459
      %5661 = vadd.xlane.f32.xlu0 %v5660
      %v5662 = vpop.xlane.xlu0 %5661
      %v5663 = vadd.f32 %v5461, %v5463
      %5664 = vadd.xlane.f32.xlu0 %v5663
      %v5665 = vpop.xlane.xlu0 %5664
      %v5666 = vadd.f32 %v5465, %v5467
      %5667 = vadd.xlane.f32.xlu0 %v5666
      %v5668 = vpop.xlane.xlu0 %5667
      %v5669 = vadd.f32 %v5469, %v5471
      %5670 = vadd.xlane.f32.xlu0 %v5669
      %v5671 = vpop.xlane.xlu0 %5670
      %v5672 = vadd.f32 %v5473, %v5475
      %5673 = vadd.xlane.f32.xlu0 %v5672
      %v5674 = vpop.xlane.xlu0 %5673
      %v5675 = vadd.f32 %v5477, %v5479
      %5676 = vadd.xlane.f32.xlu0 %v5675
      %v5677 = vpop.xlane.xlu0 %5676
      %v5678 = vadd.f32 %v5481, %v5483
      %5679 = vadd.xlane.f32.xlu0 %v5678
      %v5680 = vpop.xlane.xlu0 %5679
      %v5681 = vadd.f32 %v5485, %v5487
      %5682 = vadd.xlane.f32.xlu0 %v5681
      %v5683 = vpop.xlane.xlu0 %5682
      %v5684 = vadd.f32 %v5489, %v5491
      %5685 = vadd.xlane.f32.xlu0 %v5684
      %v5686 = vpop.xlane.xlu0 %5685
      %v5687 = vadd.f32 %v5493, %v5495
      %5688 = vadd.xlane.f32.xlu0 %v5687
      %v5689 = vpop.xlane.xlu0 %5688
      %v5690 = vadd.f32 %v5497, %v5499
      %5691 = vadd.xlane.f32.xlu0 %v5690
      %v5692 = vpop.xlane.xlu0 %5691
      %v5693 = vadd.f32 %v5501, %v5503
      %5694 = vadd.xlane.f32.xlu0 %v5693
      %v5695 = vpop.xlane.xlu0 %5694
      %v5696 = vrcp.pop %v5506
      %v5697 = vrcp.pop %v5509
      %v5698 = vrcp.pop %v5512
      %v5699 = vrcp.pop %v5515
      %v5700 = vrcp.pop %v5518
      %v5701 = vrcp.pop %v5521
      %v5702 = vrcp.pop %v5524
      %v5703 = vrcp.pop %v5527
      %v5704 = vrcp.pop %v5530
      %v5705 = vrcp.pop %v5533
      %v5706 = vrcp.pop %v5536
      %v5707 = vrcp.pop %v5539
      %v5708 = vrcp.pop %v5542
      %v5709 = vrcp.pop %v5545
      %v5710 = vrcp.pop %v5548
      %v5711 = vrcp.pop %v5551
      %v5712 = vrcp.pop %v5554
      %v5713 = vrcp.pop %v5557
      %v5714 = vrcp.pop %v5560
      %v5715 = vrcp.pop %v5563
      %v5716 = vrcp.pop %v5566
      %v5717 = vrcp.pop %v5569
      %v5718 = vrcp.pop %v5572
      %v5719 = vrcp.pop %v5575
      %v5720 = vrcp.pop %v5578
      %v5721 = vrcp.pop %v5581
      %v5722 = vrcp.pop %v5584
      %v5723 = vrcp.pop %v5587
      %v5724 = vrcp.pop %v5590
      %v5725 = vrcp.pop %v5593
      %v5726 = vrcp.pop %v5596
      %v5727 = vrcp.pop %v5599
      %v5728 = vrcp.pop %v5602
      %v5729 = vrcp.pop %v5605
      %v5730 = vrcp.pop %v5608
      %v5731 = vrcp.pop %v5611
      %v5732 = vrcp.pop %v5614
      %v5733 = vrcp.pop %v5617
      %v5734 = vrcp.pop %v5620
      %v5735 = vrcp.pop %v5623
      %v5736 = vrcp.pop %v5626
      %v5737 = vrcp.pop %v5629
      %v5738 = vrcp.pop %v5632
      %v5739 = vrcp.pop %v5635
      %v5740 = vrcp.pop %v5638
      %v5741 = vrcp.pop %v5641
      %v5742 = vrcp.pop %v5644
      %v5743 = vrcp.pop %v5647
      %v5744 = vrcp.pop %v5650
      %v5745 = vrcp.pop %v5653
      %v5746 = vrcp.pop %v5656
      %v5747 = vrcp.pop %v5659
      %v5748 = vrcp.pop %v5662
      %v5749 = vrcp.pop %v5665
      %v5750 = vrcp.pop %v5668
      %v5751 = vrcp.pop %v5671
      %v5752 = vrcp.pop %v5674
      %v5753 = vrcp.pop %v5677
      %v5754 = vrcp.pop %v5680
      %v5755 = vrcp.pop %v5683
      %v5756 = vrcp.pop %v5686
      %v5757 = vrcp.pop %v5689
      %v5758 = vrcp.pop %v5692
      %v5759 = vrcp.pop %v5695
      %v5760 = vmul.f32 %v5249, %v5696
      %v5761 = vmul.f32 %v5251, %v5696
      %v5762 = vmul.f32 %v5253, %v5697
      %v5763 = vmul.f32 %v5255, %v5697
      %v5764 = vmul.f32 %v5257, %v5698
      %v5765 = vmul.f32 %v5259, %v5698
      %v5766 = vmul.f32 %v5261, %v5699
      %v5767 = vmul.f32 %v5263, %v5699
      %v5768 = vmul.f32 %v5265, %v5700
      %v5769 = vmul.f32 %v5267, %v5700
      %v5770 = vmul.f32 %v5269, %v5701
      %v5771 = vmul.f32 %v5271, %v5701
      %v5772 = vmul.f32 %v5273, %v5702
      %v5773 = vmul.f32 %v5275, %v5702
      %v5774 = vmul.f32 %v5277, %v5703
      %v5775 = vmul.f32 %v5279, %v5703
      %v5776 = vmul.f32 %v5281, %v5704
      %v5777 = vmul.f32 %v5283, %v5704
      %v5778 = vmul.f32 %v5285, %v5705
      %v5779 = vmul.f32 %v5287, %v5705
      %v5780 = vmul.f32 %v5289, %v5706
      %v5781 = vmul.f32 %v5291, %v5706
      %v5782 = vmul.f32 %v5293, %v5707
      %v5783 = vmul.f32 %v5295, %v5707
      %v5784 = vmul.f32 %v5297, %v5708
      %v5785 = vmul.f32 %v5299, %v5708
      %v5786 = vmul.f32 %v5301, %v5709
      %v5787 = vmul.f32 %v5303, %v5709
      %v5788 = vmul.f32 %v5305, %v5710
      %v5789 = vmul.f32 %v5307, %v5710
      %v5790 = vmul.f32 %v5309, %v5711
      %v5791 = vmul.f32 %v5311, %v5711
      %v5792 = vmul.f32 %v5313, %v5712
      %v5793 = vmul.f32 %v5315, %v5712
      %v5794 = vmul.f32 %v5317, %v5713
      %v5795 = vmul.f32 %v5319, %v5713
      %v5796 = vmul.f32 %v5321, %v5714
      %v5797 = vmul.f32 %v5323, %v5714
      %v5798 = vmul.f32 %v5325, %v5715
      %v5799 = vmul.f32 %v5327, %v5715
      %v5800 = vmul.f32 %v5329, %v5716
      %v5801 = vmul.f32 %v5331, %v5716
      %v5802 = vmul.f32 %v5333, %v5717
      %v5803 = vmul.f32 %v5335, %v5717
      %v5804 = vmul.f32 %v5337, %v5718
      %v5805 = vmul.f32 %v5339, %v5718
      %v5806 = vmul.f32 %v5341, %v5719
      %v5807 = vmul.f32 %v5343, %v5719
      %v5808 = vmul.f32 %v5345, %v5720
      %v5809 = vmul.f32 %v5347, %v5720
      %v5810 = vmul.f32 %v5349, %v5721
      %v5811 = vmul.f32 %v5351, %v5721
      %v5812 = vmul.f32 %v5353, %v5722
      %v5813 = vmul.f32 %v5355, %v5722
      %v5814 = vmul.f32 %v5357, %v5723
      %v5815 = vmul.f32 %v5359, %v5723
      %v5816 = vmul.f32 %v5361, %v5724
      %v5817 = vmul.f32 %v5363, %v5724
      %v5818 = vmul.f32 %v5365, %v5725
      %v5819 = vmul.f32 %v5367, %v5725
      %v5820 = vmul.f32 %v5369, %v5726
      %v5821 = vmul.f32 %v5371, %v5726
      %v5822 = vmul.f32 %v5373, %v5727
      %v5823 = vmul.f32 %v5375, %v5727
      %v5824 = vmul.f32 %v5377, %v5728
      %v5825 = vmul.f32 %v5379, %v5728
      %v5826 = vmul.f32 %v5381, %v5729
      %v5827 = vmul.f32 %v5383, %v5729
      %v5828 = vmul.f32 %v5385, %v5730
      %v5829 = vmul.f32 %v5387, %v5730
      %v5830 = vmul.f32 %v5389, %v5731
      %v5831 = vmul.f32 %v5391, %v5731
      %v5832 = vmul.f32 %v5393, %v5732
      %v5833 = vmul.f32 %v5395, %v5732
      %v5834 = vmul.f32 %v5397, %v5733
      %v5835 = vmul.f32 %v5399, %v5733
      %v5836 = vmul.f32 %v5401, %v5734
      %v5837 = vmul.f32 %v5403, %v5734
      %v5838 = vmul.f32 %v5405, %v5735
      %v5839 = vmul.f32 %v5407, %v5735
      %v5840 = vmul.f32 %v5409, %v5736
      %v5841 = vmul.f32 %v5411, %v5736
      %v5842 = vmul.f32 %v5413, %v5737
      %v5843 = vmul.f32 %v5415, %v5737
      %v5844 = vmul.f32 %v5417, %v5738
      %v5845 = vmul.f32 %v5419, %v5738
      %v5846 = vmul.f32 %v5421, %v5739
      %v5847 = vmul.f32 %v5423, %v5739
      %v5848 = vmul.f32 %v5425, %v5740
      %v5849 = vmul.f32 %v5427, %v5740
      %v5850 = vmul.f32 %v5429, %v5741
      %v5851 = vmul.f32 %v5431, %v5741
      %v5852 = vmul.f32 %v5433, %v5742
      %v5853 = vmul.f32 %v5435, %v5742
      %v5854 = vmul.f32 %v5437, %v5743
      %v5855 = vmul.f32 %v5439, %v5743
      %v5856 = vmul.f32 %v5441, %v5744
      %v5857 = vmul.f32 %v5443, %v5744
      %v5858 = vmul.f32 %v5445, %v5745
      %v5859 = vmul.f32 %v5447, %v5745
      %v5860 = vmul.f32 %v5449, %v5746
      %v5861 = vmul.f32 %v5451, %v5746
      %v5862 = vmul.f32 %v5453, %v5747
      %v5863 = vmul.f32 %v5455, %v5747
      %v5864 = vmul.f32 %v5457, %v5748
      %v5865 = vmul.f32 %v5459, %v5748
      %v5866 = vmul.f32 %v5461, %v5749
      %v5867 = vmul.f32 %v5463, %v5749
      %v5868 = vmul.f32 %v5465, %v5750
      %v5869 = vmul.f32 %v5467, %v5750
      %v5870 = vmul.f32 %v5469, %v5751
      %v5871 = vmul.f32 %v5471, %v5751
      %v5872 = vmul.f32 %v5473, %v5752
      %v5873 = vmul.f32 %v5475, %v5752
      %v5874 = vmul.f32 %v5477, %v5753
      %v5875 = vmul.f32 %v5479, %v5753
      %v5876 = vmul.f32 %v5481, %v5754
      %v5877 = vmul.f32 %v5483, %v5754
      %v5878 = vmul.f32 %v5485, %v5755
      %v5879 = vmul.f32 %v5487, %v5755
      %v5880 = vmul.f32 %v5489, %v5756
      %v5881 = vmul.f32 %v5491, %v5756
      %v5882 = vmul.f32 %v5493, %v5757
      %v5883 = vmul.f32 %v5495, %v5757
      %v5884 = vmul.f32 %v5497, %v5758
      %v5885 = vmul.f32 %v5499, %v5758
      %v5886 = vmul.f32 %v5501, %v5759
      %v5887 = vmul.f32 %v5503, %v5759
      %v5888 = vpack.c.bf16 %v5762, %v5760
      %v5889 = vpack.c.bf16 %v5763, %v5761
      %v5890 = vpack.c.bf16 %v5766, %v5764
      %v5891 = vpack.c.bf16 %v5767, %v5765
      %v5892 = vpack.c.bf16 %v5770, %v5768
      %v5893 = vpack.c.bf16 %v5771, %v5769
      %v5894 = vpack.c.bf16 %v5774, %v5772
      %v5895 = vpack.c.bf16 %v5775, %v5773
      %v5896 = vpack.c.bf16 %v5778, %v5776
      %v5897 = vpack.c.bf16 %v5779, %v5777
      %v5898 = vpack.c.bf16 %v5782, %v5780
      %v5899 = vpack.c.bf16 %v5783, %v5781
      %v5900 = vpack.c.bf16 %v5786, %v5784
      %v5901 = vpack.c.bf16 %v5787, %v5785
      %v5902 = vpack.c.bf16 %v5790, %v5788
      %v5903 = vpack.c.bf16 %v5791, %v5789
      %v5904 = vpack.c.bf16 %v5794, %v5792
      %v5905 = vpack.c.bf16 %v5795, %v5793
      %v5906 = vpack.c.bf16 %v5798, %v5796
      %v5907 = vpack.c.bf16 %v5799, %v5797
      %v5908 = vpack.c.bf16 %v5802, %v5800
      %v5909 = vpack.c.bf16 %v5803, %v5801
      %v5910 = vpack.c.bf16 %v5806, %v5804
      %v5911 = vpack.c.bf16 %v5807, %v5805
      %v5912 = vpack.c.bf16 %v5810, %v5808
      %v5913 = vpack.c.bf16 %v5811, %v5809
      %v5914 = vpack.c.bf16 %v5814, %v5812
      %v5915 = vpack.c.bf16 %v5815, %v5813
      %v5916 = vpack.c.bf16 %v5818, %v5816
      %v5917 = vpack.c.bf16 %v5819, %v5817
      %v5918 = vpack.c.bf16 %v5822, %v5820
      %v5919 = vpack.c.bf16 %v5823, %v5821
      %v5920 = vpack.c.bf16 %v5826, %v5824
      %v5921 = vpack.c.bf16 %v5827, %v5825
      %v5922 = vpack.c.bf16 %v5830, %v5828
      %v5923 = vpack.c.bf16 %v5831, %v5829
      %v5924 = vpack.c.bf16 %v5834, %v5832
      %v5925 = vpack.c.bf16 %v5835, %v5833
      %v5926 = vpack.c.bf16 %v5838, %v5836
      %v5927 = vpack.c.bf16 %v5839, %v5837
      %v5928 = vpack.c.bf16 %v5842, %v5840
      %v5929 = vpack.c.bf16 %v5843, %v5841
      %v5930 = vpack.c.bf16 %v5846, %v5844
      %v5931 = vpack.c.bf16 %v5847, %v5845
      %v5932 = vpack.c.bf16 %v5850, %v5848
      %v5933 = vpack.c.bf16 %v5851, %v5849
      %v5934 = vpack.c.bf16 %v5854, %v5852
      %v5935 = vpack.c.bf16 %v5855, %v5853
      %v5936 = vpack.c.bf16 %v5858, %v5856
      %v5937 = vpack.c.bf16 %v5859, %v5857
      %v5938 = vpack.c.bf16 %v5862, %v5860
      %v5939 = vpack.c.bf16 %v5863, %v5861
      %v5940 = vpack.c.bf16 %v5866, %v5864
      %v5941 = vpack.c.bf16 %v5867, %v5865
      %v5942 = vpack.c.bf16 %v5870, %v5868
      %v5943 = vpack.c.bf16 %v5871, %v5869
      %v5944 = vpack.c.bf16 %v5874, %v5872
      %v5945 = vpack.c.bf16 %v5875, %v5873
      %v5946 = vpack.c.bf16 %v5878, %v5876
      %v5947 = vpack.c.bf16 %v5879, %v5877
      %v5948 = vpack.c.bf16 %v5882, %v5880
      %v5949 = vpack.c.bf16 %v5883, %v5881
      %v5950 = vpack.c.bf16 %v5886, %v5884
      %v5951 = vpack.c.bf16 %v5887, %v5885
      %5952 = vrot.lane.b32.xlu0 %v2348, 88
      %v5953 = vpop.permute.xlu0 %5952
      %5954 = vrot.lane.b32.xlu0 %v2349, 88
      %v5955 = vpop.permute.xlu0 %5954
      %5956 = vrot.lane.b32.xlu0 %v2350, 88
      %v5957 = vpop.permute.xlu0 %5956
      %5958 = vrot.lane.b32.xlu0 %v2351, 88
      %v5959 = vpop.permute.xlu0 %5958
      %5960 = vrot.lane.b32.xlu0 %v2352, 88
      %v5961 = vpop.permute.xlu0 %5960
      %5962 = vrot.lane.b32.xlu0 %v2353, 88
      %v5963 = vpop.permute.xlu0 %5962
      %5964 = vrot.lane.b32.xlu0 %v2354, 88
      %v5965 = vpop.permute.xlu0 %5964
      %5966 = vrot.lane.b32.xlu0 %v2355, 88
      %v5967 = vpop.permute.xlu0 %5966
      %5968 = vrot.lane.b32.xlu0 %v2356, 88
      %v5969 = vpop.permute.xlu0 %5968
      %5970 = vrot.lane.b32.xlu0 %v2357, 88
      %v5971 = vpop.permute.xlu0 %5970
      %5972 = vrot.lane.b32.xlu0 %v2358, 88
      %v5973 = vpop.permute.xlu0 %5972
      %5974 = vrot.lane.b32.xlu0 %v2359, 88
      %v5975 = vpop.permute.xlu0 %5974
      %5976 = vrot.lane.b32.xlu0 %v2360, 88
      %v5977 = vpop.permute.xlu0 %5976
      %5978 = vrot.lane.b32.xlu0 %v2361, 88
      %v5979 = vpop.permute.xlu0 %5978
      %5980 = vrot.lane.b32.xlu0 %v2362, 88
      %v5981 = vpop.permute.xlu0 %5980
      %5982 = vrot.lane.b32.xlu0 %v2363, 88
      %v5983 = vpop.permute.xlu0 %5982
      %6000 = vmatprep.subr.bf16.mxu0 0
      %6001 = vmatpush1.bf16.msra.mxu0 %v5953
      %6002 = vmatprep.subr.bf16.mxu0 0
      %6003 = vmatpush1.bf16.msra.mxu0 %v5955
      %6004 = vmatprep.subr.bf16.mxu0 0
      %6005 = vmatpush1.bf16.msra.mxu0 %v5957
      %6006 = vmatprep.subr.bf16.mxu0 0
      %6007 = vmatpush1.bf16.msra.mxu0 %v5959
      %6008 = vmatprep.subr.bf16.mxu0 0
      %6009 = vmatpush1.bf16.msra.mxu0 %v5961
      %6010 = vmatprep.subr.bf16.mxu0 0
      %6011 = vmatpush1.bf16.msra.mxu0 %v5963
      %6012 = vmatprep.subr.bf16.mxu0 0
      %6013 = vmatpush1.bf16.msra.mxu0 %v5965
      %6014 = vmatprep.subr.bf16.mxu0 0
      %6015 = vmatpush1.bf16.msra.mxu0 %v5967
      %6016 = vmatprep.subr.bf16.mxu0 0
      %6017 = vmatpush1.bf16.msra.mxu0 %v5969
      %6018 = vmatprep.subr.bf16.mxu0 0
      %6019 = vmatpush1.bf16.msra.mxu0 %v5971
      %6020 = vmatprep.subr.bf16.mxu0 0
      %6021 = vmatpush1.bf16.msra.mxu0 %v5973
      %6022 = vmatprep.subr.bf16.mxu0 0
      %6023 = vmatpush1.bf16.msra.mxu0 %v5975
      %6024 = vmatprep.subr.bf16.mxu0 0
      %6025 = vmatpush1.bf16.msra.mxu0 %v5977
      %6026 = vmatprep.subr.bf16.mxu0 0
      %6027 = vmatpush1.bf16.msra.mxu0 %v5979
      %6028 = vmatprep.subr.bf16.mxu0 0
      %6029 = vmatpush1.bf16.msra.mxu0 %v5981
      %6030 = vmatprep.subr.bf16.mxu0 0
      %6031 = vmatpush1.bf16.msra.mxu0 %v5983
      %6032 = vmatprep.mubr.bf16.mxu0 %v5889
      %6033 = vmatmul.mubr.bf16.gmra.mrb[0].mxu0 %v5888
      %v6034 = vpop.f32.mrb[0].mxu0
      %v6035 = vadd.f32 0.0, %v6034
      %v6036 = vpop.f32.mrb[0].mxu0
      %v6037 = vpop.f32.mrb[0].mxu0
      %v6038 = vadd.f32 0.0, %v6037
      %v6039 = vpop.f32.mrb[0].mxu0
      %6040 = vmatprep.mubr.bf16.mxu0 %v5891
      %6041 = vmatmul.mubr.bf16.gmra.mrb[0].mxu0 %v5890
      %v6042 = vpop.f32.mrb[0].mxu0
      %v6043 = vadd.f32 0.0, %v6042
      %v6044 = vpop.f32.mrb[0].mxu0
      %v6045 = vpop.f32.mrb[0].mxu0
      %v6046 = vadd.f32 0.0, %v6045
      %v6047 = vpop.f32.mrb[0].mxu0
      %6048 = vmatprep.mubr.bf16.mxu0 %v5893
      %6049 = vmatmul.mubr.bf16.gmra.mrb[0].mxu0 %v5892
      %v6050 = vpop.f32.mrb[0].mxu0
      %v6051 = vadd.f32 0.0, %v6050
      %v6052 = vpop.f32.mrb[0].mxu0
      %v6053 = vpop.f32.mrb[0].mxu0
      %v6054 = vadd.f32 0.0, %v6053
      %v6055 = vpop.f32.mrb[0].mxu0
      %6056 = vmatprep.mubr.bf16.mxu0 %v5895
      %6057 = vmatmul.mubr.bf16.gmra.mrb[0].mxu0 %v5894
      %v6058 = vpop.f32.mrb[0].mxu0
      %v6059 = vadd.f32 0.0, %v6058
      %v6060 = vpop.f32.mrb[0].mxu0
      %v6061 = vpop.f32.mrb[0].mxu0
      %v6062 = vadd.f32 0.0, %v6061
      %v6063 = vpop.f32.mrb[0].mxu0
      %6064 = vmatprep.mubr.bf16.mxu0 %v5897
      %6065 = vmatmul.mubr.bf16.gmra.mrb[0].mxu0 %v5896
      %v6066 = vpop.f32.mrb[0].mxu0
      %v6067 = vadd.f32 0.0, %v6066
      %v6068 = vpop.f32.mrb[0].mxu0
      %v6069 = vpop.f32.mrb[0].mxu0
      %v6070 = vadd.f32 0.0, %v6069
      %v6071 = vpop.f32.mrb[0].mxu0
      %6072 = vmatprep.mubr.bf16.mxu0 %v5899
      %6073 = vmatmul.mubr.bf16.gmra.mrb[0].mxu0 %v5898
      %v6074 = vpop.f32.mrb[0].mxu0
      %v6075 = vadd.f32 0.0, %v6074
      %v6076 = vpop.f32.mrb[0].mxu0
      %v6077 = vpop.f32.mrb[0].mxu0
      %v6078 = vadd.f32 0.0, %v6077
      %v6079 = vpop.f32.mrb[0].mxu0
      %6080 = vmatprep.mubr.bf16.mxu0 %v5901
      %6081 = vmatmul.mubr.bf16.gmra.mrb[0].mxu0 %v5900
      %v6082 = vpop.f32.mrb[0].mxu0
      %v6083 = vadd.f32 0.0, %v6082
      %v6084 = vpop.f32.mrb[0].mxu0
      %v6085 = vpop.f32.mrb[0].mxu0
      %v6086 = vadd.f32 0.0, %v6085
      %v6087 = vpop.f32.mrb[0].mxu0
      %6088 = vmatprep.mubr.bf16.mxu0 %v5903
      %6089 = vmatmul.mubr.bf16.gmra.mrb[0].mxu0 %v5902
      %v6090 = vpop.f32.mrb[0].mxu0
      %v6091 = vadd.f32 0.0, %v6090
      %v6092 = vpop.f32.mrb[0].mxu0
      %v6093 = vpop.f32.mrb[0].mxu0
      %v6094 = vadd.f32 0.0, %v6093
      %v6095 = vpop.f32.mrb[0].mxu0
      %6096 = vmatprep.mubr.bf16.mxu0 %v5905
      %6097 = vmatmul.mubr.bf16.gmra.mrb[0].mxu0 %v5904
      %v6098 = vpop.f32.mrb[0].mxu0
      %v6099 = vadd.f32 0.0, %v6098
      %v6100 = vpop.f32.mrb[0].mxu0
      %v6101 = vpop.f32.mrb[0].mxu0
      %v6102 = vadd.f32 0.0, %v6101
      %v6103 = vpop.f32.mrb[0].mxu0
      %6104 = vmatprep.mubr.bf16.mxu0 %v5907
      %6105 = vmatmul.mubr.bf16.gmra.mrb[0].mxu0 %v5906
      %v6106 = vpop.f32.mrb[0].mxu0
      %v6107 = vadd.f32 0.0, %v6106
      %v6108 = vpop.f32.mrb[0].mxu0
      %v6109 = vpop.f32.mrb[0].mxu0
      %v6110 = vadd.f32 0.0, %v6109
      %v6111 = vpop.f32.mrb[0].mxu0
      %6112 = vmatprep.mubr.bf16.mxu0 %v5909
      %6113 = vmatmul.mubr.bf16.gmra.mrb[0].mxu0 %v5908
      %v6114 = vpop.f32.mrb[0].mxu0
      %v6115 = vadd.f32 0.0, %v6114
      %v6116 = vpop.f32.mrb[0].mxu0
      %v6117 = vpop.f32.mrb[0].mxu0
      %v6118 = vadd.f32 0.0, %v6117
      %v6119 = vpop.f32.mrb[0].mxu0
      %6120 = vmatprep.mubr.bf16.mxu0 %v5911
      %6121 = vmatmul.mubr.bf16.gmra.mrb[0].mxu0 %v5910
      %v6122 = vpop.f32.mrb[0].mxu0
      %v6123 = vadd.f32 0.0, %v6122
      %v6124 = vpop.f32.mrb[0].mxu0
      %v6125 = vpop.f32.mrb[0].mxu0
      %v6126 = vadd.f32 0.0, %v6125
      %v6127 = vpop.f32.mrb[0].mxu0
      %6128 = vmatprep.mubr.bf16.mxu0 %v5913
      %6129 = vmatmul.mubr.bf16.gmra.mrb[0].mxu0 %v5912
      %v6130 = vpop.f32.mrb[0].mxu0
      %v6131 = vadd.f32 0.0, %v6130
      %v6132 = vpop.f32.mrb[0].mxu0
      %v6133 = vpop.f32.mrb[0].mxu0
      %v6134 = vadd.f32 0.0, %v6133
      %v6135 = vpop.f32.mrb[0].mxu0
      %6136 = vmatprep.mubr.bf16.mxu0 %v5915
      %6137 = vmatmul.mubr.bf16.gmra.mrb[0].mxu0 %v5914
      %v6138 = vpop.f32.mrb[0].mxu0
      %v6139 = vadd.f32 0.0, %v6138
      %v6140 = vpop.f32.mrb[0].mxu0
      %v6141 = vpop.f32.mrb[0].mxu0
      %v6142 = vadd.f32 0.0, %v6141
      %v6143 = vpop.f32.mrb[0].mxu0
      %6144 = vmatprep.mubr.bf16.mxu0 %v5917
      %6145 = vmatmul.mubr.bf16.gmra.mrb[0].mxu0 %v5916
      %v6146 = vpop.f32.mrb[0].mxu0
      %v6147 = vadd.f32 0.0, %v6146
      %v6148 = vpop.f32.mrb[0].mxu0
      %v6149 = vpop.f32.mrb[0].mxu0
      %v6150 = vadd.f32 0.0, %v6149
      %v6151 = vpop.f32.mrb[0].mxu0
      %6152 = vmatprep.mubr.bf16.mxu0 %v5919
      %6153 = vmatmul.mubr.bf16.gmra.mrb[0].mxu0 %v5918
      %v6154 = vpop.f32.mrb[0].mxu0
      %v6155 = vadd.f32 0.0, %v6154
      %v6156 = vpop.f32.mrb[0].mxu0
      %v6157 = vpop.f32.mrb[0].mxu0
      %v6158 = vadd.f32 0.0, %v6157
      %v6159 = vpop.f32.mrb[0].mxu0
      %6160 = vmatprep.mubr.bf16.mxu0 %v5921
      %6161 = vmatmul.mubr.bf16.gmra.mrb[0].mxu0 %v5920
      %v6162 = vpop.f32.mrb[0].mxu0
      %v6163 = vadd.f32 0.0, %v6162
      %v6164 = vpop.f32.mrb[0].mxu0
      %v6165 = vpop.f32.mrb[0].mxu0
      %v6166 = vadd.f32 0.0, %v6165
      %v6167 = vpop.f32.mrb[0].mxu0
      %6168 = vmatprep.mubr.bf16.mxu0 %v5923
      %6169 = vmatmul.mubr.bf16.gmra.mrb[0].mxu0 %v5922
      %v6170 = vpop.f32.mrb[0].mxu0
      %v6171 = vadd.f32 0.0, %v6170
      %v6172 = vpop.f32.mrb[0].mxu0
      %v6173 = vpop.f32.mrb[0].mxu0
      %v6174 = vadd.f32 0.0, %v6173
      %v6175 = vpop.f32.mrb[0].mxu0
      %6176 = vmatprep.mubr.bf16.mxu0 %v5925
      %6177 = vmatmul.mubr.bf16.gmra.mrb[0].mxu0 %v5924
      %v6178 = vpop.f32.mrb[0].mxu0
      %v6179 = vadd.f32 0.0, %v6178
      %v6180 = vpop.f32.mrb[0].mxu0
      %v6181 = vpop.f32.mrb[0].mxu0
      %v6182 = vadd.f32 0.0, %v6181
      %v6183 = vpop.f32.mrb[0].mxu0
      %6184 = vmatprep.mubr.bf16.mxu0 %v5927
      %6185 = vmatmul.mubr.bf16.gmra.mrb[0].mxu0 %v5926
      %v6186 = vpop.f32.mrb[0].mxu0
      %v6187 = vadd.f32 0.0, %v6186
      %v6188 = vpop.f32.mrb[0].mxu0
      %v6189 = vpop.f32.mrb[0].mxu0
      %v6190 = vadd.f32 0.0, %v6189
      %v6191 = vpop.f32.mrb[0].mxu0
      %6192 = vmatprep.mubr.bf16.mxu0 %v5929
      %6193 = vmatmul.mubr.bf16.gmra.mrb[0].mxu0 %v5928
      %v6194 = vpop.f32.mrb[0].mxu0
      %v6195 = vadd.f32 0.0, %v6194
      %v6196 = vpop.f32.mrb[0].mxu0
      %v6197 = vpop.f32.mrb[0].mxu0
      %v6198 = vadd.f32 0.0, %v6197
      %v6199 = vpop.f32.mrb[0].mxu0
      %6200 = vmatprep.mubr.bf16.mxu0 %v5931
      %6201 = vmatmul.mubr.bf16.gmra.mrb[0].mxu0 %v5930
      %v6202 = vpop.f32.mrb[0].mxu0
      %v6203 = vadd.f32 0.0, %v6202
      %v6204 = vpop.f32.mrb[0].mxu0
      %v6205 = vpop.f32.mrb[0].mxu0
      %v6206 = vadd.f32 0.0, %v6205
      %v6207 = vpop.f32.mrb[0].mxu0
      %6208 = vmatprep.mubr.bf16.mxu0 %v5933
      %6209 = vmatmul.mubr.bf16.gmra.mrb[0].mxu0 %v5932
      %v6210 = vpop.f32.mrb[0].mxu0
      %v6211 = vadd.f32 0.0, %v6210
      %v6212 = vpop.f32.mrb[0].mxu0
      %v6213 = vpop.f32.mrb[0].mxu0
      %v6214 = vadd.f32 0.0, %v6213
      %v6215 = vpop.f32.mrb[0].mxu0
      %6216 = vmatprep.mubr.bf16.mxu0 %v5935
      %6217 = vmatmul.mubr.bf16.gmra.mrb[0].mxu0 %v5934
      %v6218 = vpop.f32.mrb[0].mxu0
      %v6219 = vadd.f32 0.0, %v6218
      %v6220 = vpop.f32.mrb[0].mxu0
      %v6221 = vpop.f32.mrb[0].mxu0
      %v6222 = vadd.f32 0.0, %v6221
      %v6223 = vpop.f32.mrb[0].mxu0
      %6224 = vmatprep.mubr.bf16.mxu0 %v5937
      %6225 = vmatmul.mubr.bf16.gmra.mrb[0].mxu0 %v5936
      %v6226 = vpop.f32.mrb[0].mxu0
      %v6227 = vadd.f32 0.0, %v6226
      %v6228 = vpop.f32.mrb[0].mxu0
      %v6229 = vpop.f32.mrb[0].mxu0
      %v6230 = vadd.f32 0.0, %v6229
      %v6231 = vpop.f32.mrb[0].mxu0
      %6232 = vmatprep.mubr.bf16.mxu0 %v5939
      %6233 = vmatmul.mubr.bf16.gmra.mrb[0].mxu0 %v5938
      %v6234 = vpop.f32.mrb[0].mxu0
      %v6235 = vadd.f32 0.0, %v6234
      %v6236 = vpop.f32.mrb[0].mxu0
      %v6237 = vpop.f32.mrb[0].mxu0
      %v6238 = vadd.f32 0.0, %v6237
      %v6239 = vpop.f32.mrb[0].mxu0
      %6240 = vmatprep.mubr.bf16.mxu0 %v5941
      %6241 = vmatmul.mubr.bf16.gmra.mrb[0].mxu0 %v5940
      %v6242 = vpop.f32.mrb[0].mxu0
      %v6243 = vadd.f32 0.0, %v6242
      %v6244 = vpop.f32.mrb[0].mxu0
      %v6245 = vpop.f32.mrb[0].mxu0
      %v6246 = vadd.f32 0.0, %v6245
      %v6247 = vpop.f32.mrb[0].mxu0
      %6248 = vmatprep.mubr.bf16.mxu0 %v5943
      %6249 = vmatmul.mubr.bf16.gmra.mrb[0].mxu0 %v5942
      %v6250 = vpop.f32.mrb[0].mxu0
      %v6251 = vadd.f32 0.0, %v6250
      %v6252 = vpop.f32.mrb[0].mxu0
      %v6253 = vpop.f32.mrb[0].mxu0
      %v6254 = vadd.f32 0.0, %v6253
      %v6255 = vpop.f32.mrb[0].mxu0
      %6256 = vmatprep.mubr.bf16.mxu0 %v5945
      %6257 = vmatmul.mubr.bf16.gmra.mrb[0].mxu0 %v5944
      %v6258 = vpop.f32.mrb[0].mxu0
      %v6259 = vadd.f32 0.0, %v6258
      %v6260 = vpop.f32.mrb[0].mxu0
      %v6261 = vpop.f32.mrb[0].mxu0
      %v6262 = vadd.f32 0.0, %v6261
      %v6263 = vpop.f32.mrb[0].mxu0
      %6264 = vmatprep.mubr.bf16.mxu0 %v5947
      %6265 = vmatmul.mubr.bf16.gmra.mrb[0].mxu0 %v5946
      %v6266 = vpop.f32.mrb[0].mxu0
      %v6267 = vadd.f32 0.0, %v6266
      %v6268 = vpop.f32.mrb[0].mxu0
      %v6269 = vpop.f32.mrb[0].mxu0
      %v6270 = vadd.f32 0.0, %v6269
      %v6271 = vpop.f32.mrb[0].mxu0
      %6272 = vmatprep.mubr.bf16.mxu0 %v5949
      %6273 = vmatmul.mubr.bf16.gmra.mrb[0].mxu0 %v5948
      %v6274 = vpop.f32.mrb[0].mxu0
      %v6275 = vadd.f32 0.0, %v6274
      %v6276 = vpop.f32.mrb[0].mxu0
      %v6277 = vpop.f32.mrb[0].mxu0
      %v6278 = vadd.f32 0.0, %v6277
      %v6279 = vpop.f32.mrb[0].mxu0
      %6280 = vmatprep.mubr.bf16.mxu0 %v5951
      %6281 = vmatmul.mubr.bf16.gmra.mrb[0].mxu0 %v5950
      %v6282 = vpop.f32.mrb[0].mxu0
      %v6283 = vadd.f32 0.0, %v6282
      %v6284 = vpop.f32.mrb[0].mxu0
      %v6285 = vpop.f32.mrb[0].mxu0
      %v6286 = vadd.f32 0.0, %v6285
      %v6287 = vpop.f32.mrb[0].mxu0
      %6288 = vdwg.mxu0
      %6353 = vrot.lane.b32.xlu0 %v6035, 8
      %v6354 = vpop.permute.xlu0 %6353
      %6355 = vrot.lane.b32.xlu0 %v6038, 8
      %v6356 = vpop.permute.xlu0 %6355
      %6357 = vrot.lane.b32.xlu0 %v6043, 8
      %v6358 = vpop.permute.xlu0 %6357
      %6359 = vrot.lane.b32.xlu0 %v6046, 8
      %v6360 = vpop.permute.xlu0 %6359
      %6361 = vrot.lane.b32.xlu0 %v6051, 8
      %v6362 = vpop.permute.xlu0 %6361
      %6363 = vrot.lane.b32.xlu0 %v6054, 8
      %v6364 = vpop.permute.xlu0 %6363
      %6365 = vrot.lane.b32.xlu0 %v6059, 8
      %v6366 = vpop.permute.xlu0 %6365
      %6367 = vrot.lane.b32.xlu0 %v6062, 8
      %v6368 = vpop.permute.xlu0 %6367
      %6369 = vrot.lane.b32.xlu0 %v6067, 8
      %v6370 = vpop.permute.xlu0 %6369
      %6371 = vrot.lane.b32.xlu0 %v6070, 8
      %v6372 = vpop.permute.xlu0 %6371
      %6373 = vrot.lane.b32.xlu0 %v6075, 8
      %v6374 = vpop.permute.xlu0 %6373
      %6375 = vrot.lane.b32.xlu0 %v6078, 8
      %v6376 = vpop.permute.xlu0 %6375
      %6377 = vrot.lane.b32.xlu0 %v6083, 8
      %v6378 = vpop.permute.xlu0 %6377
      %6379 = vrot.lane.b32.xlu0 %v6086, 8
      %v6380 = vpop.permute.xlu0 %6379
      %6381 = vrot.lane.b32.xlu0 %v6091, 8
      %v6382 = vpop.permute.xlu0 %6381
      %6383 = vrot.lane.b32.xlu0 %v6094, 8
      %v6384 = vpop.permute.xlu0 %6383
      %6385 = vrot.lane.b32.xlu0 %v6099, 8
      %v6386 = vpop.permute.xlu0 %6385
      %6387 = vrot.lane.b32.xlu0 %v6102, 8
      %v6388 = vpop.permute.xlu0 %6387
      %6389 = vrot.lane.b32.xlu0 %v6107, 8
      %v6390 = vpop.permute.xlu0 %6389
      %6391 = vrot.lane.b32.xlu0 %v6110, 8
      %v6392 = vpop.permute.xlu0 %6391
      %6393 = vrot.lane.b32.xlu0 %v6115, 8
      %v6394 = vpop.permute.xlu0 %6393
      %6395 = vrot.lane.b32.xlu0 %v6118, 8
      %v6396 = vpop.permute.xlu0 %6395
      %6397 = vrot.lane.b32.xlu0 %v6123, 8
      %v6398 = vpop.permute.xlu0 %6397
      %6399 = vrot.lane.b32.xlu0 %v6126, 8
      %v6400 = vpop.permute.xlu0 %6399
      %6401 = vrot.lane.b32.xlu0 %v6131, 8
      %v6402 = vpop.permute.xlu0 %6401
      %6403 = vrot.lane.b32.xlu0 %v6134, 8
      %v6404 = vpop.permute.xlu0 %6403
      %6405 = vrot.lane.b32.xlu0 %v6139, 8
      %v6406 = vpop.permute.xlu0 %6405
      %6407 = vrot.lane.b32.xlu0 %v6142, 8
      %v6408 = vpop.permute.xlu0 %6407
      %6409 = vrot.lane.b32.xlu0 %v6147, 8
      %v6410 = vpop.permute.xlu0 %6409
      %6411 = vrot.lane.b32.xlu0 %v6150, 8
      %v6412 = vpop.permute.xlu0 %6411
      %6413 = vrot.lane.b32.xlu0 %v6155, 8
      %v6414 = vpop.permute.xlu0 %6413
      %6415 = vrot.lane.b32.xlu0 %v6158, 8
      %v6416 = vpop.permute.xlu0 %6415
      %6417 = vrot.lane.b32.xlu0 %v6163, 8
      %v6418 = vpop.permute.xlu0 %6417
      %6419 = vrot.lane.b32.xlu0 %v6166, 8
      %v6420 = vpop.permute.xlu0 %6419
      %6421 = vrot.lane.b32.xlu0 %v6171, 8
      %v6422 = vpop.permute.xlu0 %6421
      %6423 = vrot.lane.b32.xlu0 %v6174, 8
      %v6424 = vpop.permute.xlu0 %6423
      %6425 = vrot.lane.b32.xlu0 %v6179, 8
      %v6426 = vpop.permute.xlu0 %6425
      %6427 = vrot.lane.b32.xlu0 %v6182, 8
      %v6428 = vpop.permute.xlu0 %6427
      %6429 = vrot.lane.b32.xlu0 %v6187, 8
      %v6430 = vpop.permute.xlu0 %6429
      %6431 = vrot.lane.b32.xlu0 %v6190, 8
      %v6432 = vpop.permute.xlu0 %6431
      %6433 = vrot.lane.b32.xlu0 %v6195, 8
      %v6434 = vpop.permute.xlu0 %6433
      %6435 = vrot.lane.b32.xlu0 %v6198, 8
      %v6436 = vpop.permute.xlu0 %6435
      %6437 = vrot.lane.b32.xlu0 %v6203, 8
      %v6438 = vpop.permute.xlu0 %6437
      %6439 = vrot.lane.b32.xlu0 %v6206, 8
      %v6440 = vpop.permute.xlu0 %6439
      %6441 = vrot.lane.b32.xlu0 %v6211, 8
      %v6442 = vpop.permute.xlu0 %6441
      %6443 = vrot.lane.b32.xlu0 %v6214, 8
      %v6444 = vpop.permute.xlu0 %6443
      %6445 = vrot.lane.b32.xlu0 %v6219, 8
      %v6446 = vpop.permute.xlu0 %6445
      %6447 = vrot.lane.b32.xlu0 %v6222, 8
      %v6448 = vpop.permute.xlu0 %6447
      %6449 = vrot.lane.b32.xlu0 %v6227, 8
      %v6450 = vpop.permute.xlu0 %6449
      %6451 = vrot.lane.b32.xlu0 %v6230, 8
      %v6452 = vpop.permute.xlu0 %6451
      %6453 = vrot.lane.b32.xlu0 %v6235, 8
      %v6454 = vpop.permute.xlu0 %6453
      %6455 = vrot.lane.b32.xlu0 %v6238, 8
      %v6456 = vpop.permute.xlu0 %6455
      %6457 = vrot.lane.b32.xlu0 %v6243, 8
      %v6458 = vpop.permute.xlu0 %6457
      %6459 = vrot.lane.b32.xlu0 %v6246, 8
      %v6460 = vpop.permute.xlu0 %6459
      %6461 = vrot.lane.b32.xlu0 %v6251, 8
      %v6462 = vpop.permute.xlu0 %6461
      %6463 = vrot.lane.b32.xlu0 %v6254, 8
      %v6464 = vpop.permute.xlu0 %6463
      %6465 = vrot.lane.b32.xlu0 %v6259, 8
      %v6466 = vpop.permute.xlu0 %6465
      %6467 = vrot.lane.b32.xlu0 %v6262, 8
      %v6468 = vpop.permute.xlu0 %6467
      %6469 = vrot.lane.b32.xlu0 %v6267, 8
      %v6470 = vpop.permute.xlu0 %6469
      %6471 = vrot.lane.b32.xlu0 %v6270, 8
      %v6472 = vpop.permute.xlu0 %6471
      %6473 = vrot.lane.b32.xlu0 %v6275, 8
      %v6474 = vpop.permute.xlu0 %6473
      %6475 = vrot.lane.b32.xlu0 %v6278, 8
      %v6476 = vpop.permute.xlu0 %6475
      %6477 = vrot.lane.b32.xlu0 %v6283, 8
      %v6478 = vpop.permute.xlu0 %6477
      %6479 = vrot.lane.b32.xlu0 %v6286, 8
      %v6480 = vpop.permute.xlu0 %6479
      %vm6545 = vcmask 130112
      %6546 = vst.msk [vmem:[#allocation3] sm:$0xff] %vm6545, %v6354
      %6547 = vst.msk [vmem:[#allocation3 + $0x8] sm:$0xff] %vm6545, %v6356
      %6548 = vst.msk [vmem:[#allocation3 + $0x10] sm:$0xff] %vm6545, %v6358
      %6549 = vst.msk [vmem:[#allocation3 + $0x18] sm:$0xff] %vm6545, %v6360
      %6550 = vst.msk [vmem:[#allocation3 + $0x20] sm:$0xff] %vm6545, %v6362
      %6551 = vst.msk [vmem:[#allocation3 + $0x28] sm:$0xff] %vm6545, %v6364
      %6552 = vst.msk [vmem:[#allocation3 + $0x30] sm:$0xff] %vm6545, %v6366
      %6553 = vst.msk [vmem:[#allocation3 + $0x38] sm:$0xff] %vm6545, %v6368
      %6554 = vst.msk [vmem:[#allocation3 + $0x40] sm:$0xff] %vm6545, %v6370
      %6555 = vst.msk [vmem:[#allocation3 + $0x48] sm:$0xff] %vm6545, %v6372
      %6556 = vst.msk [vmem:[#allocation3 + $0x50] sm:$0xff] %vm6545, %v6374
      %6557 = vst.msk [vmem:[#allocation3 + $0x58] sm:$0xff] %vm6545, %v6376
      %6558 = vst.msk [vmem:[#allocation3 + $0x60] sm:$0xff] %vm6545, %v6378
      %6559 = vst.msk [vmem:[#allocation3 + $0x68] sm:$0xff] %vm6545, %v6380
      %6560 = vst.msk [vmem:[#allocation3 + $0x70] sm:$0xff] %vm6545, %v6382
      %6561 = vst.msk [vmem:[#allocation3 + $0x78] sm:$0xff] %vm6545, %v6384
      %6562 = vst.msk [vmem:[#allocation3 + $0x80] sm:$0xff] %vm6545, %v6386
      %6563 = vst.msk [vmem:[#allocation3 + $0x88] sm:$0xff] %vm6545, %v6388
      %6564 = vst.msk [vmem:[#allocation3 + $0x90] sm:$0xff] %vm6545, %v6390
      %6565 = vst.msk [vmem:[#allocation3 + $0x98] sm:$0xff] %vm6545, %v6392
      %6566 = vst.msk [vmem:[#allocation3 + $0xa0] sm:$0xff] %vm6545, %v6394
      %6567 = vst.msk [vmem:[#allocation3 + $0xa8] sm:$0xff] %vm6545, %v6396
      %6568 = vst.msk [vmem:[#allocation3 + $0xb0] sm:$0xff] %vm6545, %v6398
      %6569 = vst.msk [vmem:[#allocation3 + $0xb8] sm:$0xff] %vm6545, %v6400
      %6570 = vst.msk [vmem:[#allocation3 + $0xc0] sm:$0xff] %vm6545, %v6402
      %6571 = vst.msk [vmem:[#allocation3 + $0xc8] sm:$0xff] %vm6545, %v6404
      %6572 = vst.msk [vmem:[#allocation3 + $0xd0] sm:$0xff] %vm6545, %v6406
      %6573 = vst.msk [vmem:[#allocation3 + $0xd8] sm:$0xff] %vm6545, %v6408
      %6574 = vst.msk [vmem:[#allocation3 + $0xe0] sm:$0xff] %vm6545, %v6410
      %6575 = vst.msk [vmem:[#allocation3 + $0xe8] sm:$0xff] %vm6545, %v6412
      %6576 = vst.msk [vmem:[#allocation3 + $0xf0] sm:$0xff] %vm6545, %v6414
      %6577 = vst.msk [vmem:[#allocation3 + $0xf8] sm:$0xff] %vm6545, %v6416
      %6578 = vst.msk [vmem:[#allocation3 + $0x100] sm:$0xff] %vm6545, %v6418
      %6579 = vst.msk [vmem:[#allocation3 + $0x108] sm:$0xff] %vm6545, %v6420
      %6580 = vst.msk [vmem:[#allocation3 + $0x110] sm:$0xff] %vm6545, %v6422
      %6581 = vst.msk [vmem:[#allocation3 + $0x118] sm:$0xff] %vm6545, %v6424
      %6582 = vst.msk [vmem:[#allocation3 + $0x120] sm:$0xff] %vm6545, %v6426
      %6583 = vst.msk [vmem:[#allocation3 + $0x128] sm:$0xff] %vm6545, %v6428
      %6584 = vst.msk [vmem:[#allocation3 + $0x130] sm:$0xff] %vm6545, %v6430
      %6585 = vst.msk [vmem:[#allocation3 + $0x138] sm:$0xff] %vm6545, %v6432
      %6586 = vst.msk [vmem:[#allocation3 + $0x140] sm:$0xff] %vm6545, %v6434
      %6587 = vst.msk [vmem:[#allocation3 + $0x148] sm:$0xff] %vm6545, %v6436
      %6588 = vst.msk [vmem:[#allocation3 + $0x150] sm:$0xff] %vm6545, %v6438
      %6589 = vst.msk [vmem:[#allocation3 + $0x158] sm:$0xff] %vm6545, %v6440
      %6590 = vst.msk [vmem:[#allocation3 + $0x160] sm:$0xff] %vm6545, %v6442
      %6591 = vst.msk [vmem:[#allocation3 + $0x168] sm:$0xff] %vm6545, %v6444
      %6592 = vst.msk [vmem:[#allocation3 + $0x170] sm:$0xff] %vm6545, %v6446
      %6593 = vst.msk [vmem:[#allocation3 + $0x178] sm:$0xff] %vm6545, %v6448
      %6594 = vst.msk [vmem:[#allocation3 + $0x180] sm:$0xff] %vm6545, %v6450
      %6595 = vst.msk [vmem:[#allocation3 + $0x188] sm:$0xff] %vm6545, %v6452
      %6596 = vst.msk [vmem:[#allocation3 + $0x190] sm:$0xff] %vm6545, %v6454
      %6597 = vst.msk [vmem:[#allocation3 + $0x198] sm:$0xff] %vm6545, %v6456
      %6598 = vst.msk [vmem:[#allocation3 + $0x1a0] sm:$0xff] %vm6545, %v6458
      %6599 = vst.msk [vmem:[#allocation3 + $0x1a8] sm:$0xff] %vm6545, %v6460
      %6600 = vst.msk [vmem:[#allocation3 + $0x1b0] sm:$0xff] %vm6545, %v6462
      %6601 = vst.msk [vmem:[#allocation3 + $0x1b8] sm:$0xff] %vm6545, %v6464
      %6602 = vst.msk [vmem:[#allocation3 + $0x1c0] sm:$0xff] %vm6545, %v6466
      %6603 = vst.msk [vmem:[#allocation3 + $0x1c8] sm:$0xff] %vm6545, %v6468
      %6604 = vst.msk [vmem:[#allocation3 + $0x1d0] sm:$0xff] %vm6545, %v6470
      %6605 = vst.msk [vmem:[#allocation3 + $0x1d8] sm:$0xff] %vm6545, %v6472
      %6606 = vst.msk [vmem:[#allocation3 + $0x1e0] sm:$0xff] %vm6545, %v6474
      %6607 = vst.msk [vmem:[#allocation3 + $0x1e8] sm:$0xff] %vm6545, %v6476
      %6608 = vst.msk [vmem:[#allocation3 + $0x1f0] sm:$0xff] %vm6545, %v6478
      %6609 = vst.msk [vmem:[#allocation3 + $0x1f8] sm:$0xff] %vm6545, %v6480
      %6610 = vrot.lane.b32.xlu0 %v2316, 112
      %v6611 = vpop.permute.xlu0 %6610
      %6612 = vrot.lane.b32.xlu0 %v2317, 112
      %v6613 = vpop.permute.xlu0 %6612
      %6614 = vrot.lane.b32.xlu0 %v2318, 112
      %v6615 = vpop.permute.xlu0 %6614
      %6616 = vrot.lane.b32.xlu0 %v2319, 112
      %v6617 = vpop.permute.xlu0 %6616
      %6618 = vrot.lane.b32.xlu0 %v2320, 112
      %v6619 = vpop.permute.xlu0 %6618
      %6620 = vrot.lane.b32.xlu0 %v2321, 112
      %v6621 = vpop.permute.xlu0 %6620
      %6622 = vrot.lane.b32.xlu0 %v2322, 112
      %v6623 = vpop.permute.xlu0 %6622
      %6624 = vrot.lane.b32.xlu0 %v2323, 112
      %v6625 = vpop.permute.xlu0 %6624
      %6626 = vrot.lane.b32.xlu0 %v2324, 112
      %v6627 = vpop.permute.xlu0 %6626
      %6628 = vrot.lane.b32.xlu0 %v2325, 112
      %v6629 = vpop.permute.xlu0 %6628
      %6630 = vrot.lane.b32.xlu0 %v2326, 112
      %v6631 = vpop.permute.xlu0 %6630
      %6632 = vrot.lane.b32.xlu0 %v2327, 112
      %v6633 = vpop.permute.xlu0 %6632
      %6634 = vrot.lane.b32.xlu0 %v2328, 112
      %v6635 = vpop.permute.xlu0 %6634
      %6636 = vrot.lane.b32.xlu0 %v2329, 112
      %v6637 = vpop.permute.xlu0 %6636
      %6638 = vrot.lane.b32.xlu0 %v2330, 112
      %v6639 = vpop.permute.xlu0 %6638
      %6640 = vrot.lane.b32.xlu0 %v2331, 112
      %v6641 = vpop.permute.xlu0 %6640
      %6642 = vrot.lane.b32.xlu0 %v2332, 112
      %v6643 = vpop.permute.xlu0 %6642
      %6644 = vrot.lane.b32.xlu0 %v2333, 112
      %v6645 = vpop.permute.xlu0 %6644
      %6646 = vrot.lane.b32.xlu0 %v2334, 112
      %v6647 = vpop.permute.xlu0 %6646
      %6648 = vrot.lane.b32.xlu0 %v2335, 112
      %v6649 = vpop.permute.xlu0 %6648
      %6650 = vrot.lane.b32.xlu0 %v2336, 112
      %v6651 = vpop.permute.xlu0 %6650
      %6652 = vrot.lane.b32.xlu0 %v2337, 112
      %v6653 = vpop.permute.xlu0 %6652
      %6654 = vrot.lane.b32.xlu0 %v2338, 112
      %v6655 = vpop.permute.xlu0 %6654
      %6656 = vrot.lane.b32.xlu0 %v2339, 112
      %v6657 = vpop.permute.xlu0 %6656
      %6658 = vrot.lane.b32.xlu0 %v2340, 112
      %v6659 = vpop.permute.xlu0 %6658
      %6660 = vrot.lane.b32.xlu0 %v2341, 112
      %v6661 = vpop.permute.xlu0 %6660
      %6662 = vrot.lane.b32.xlu0 %v2342, 112
      %v6663 = vpop.permute.xlu0 %6662
      %6664 = vrot.lane.b32.xlu0 %v2343, 112
      %v6665 = vpop.permute.xlu0 %6664
      %6666 = vrot.lane.b32.xlu0 %v2344, 112
      %v6667 = vpop.permute.xlu0 %6666
      %6668 = vrot.lane.b32.xlu0 %v2345, 112
      %v6669 = vpop.permute.xlu0 %6668
      %6670 = vrot.lane.b32.xlu0 %v2346, 112
      %v6671 = vpop.permute.xlu0 %6670
      %6672 = vrot.lane.b32.xlu0 %v2347, 112
      %v6673 = vpop.permute.xlu0 %6672
      %6674 = vrot.lane.b32.xlu0 %v2348, 112
      %v6675 = vpop.permute.xlu0 %6674
      %6676 = vrot.lane.b32.xlu0 %v2349, 112
      %v6677 = vpop.permute.xlu0 %6676
      %6678 = vrot.lane.b32.xlu0 %v2350, 112
      %v6679 = vpop.permute.xlu0 %6678
      %6680 = vrot.lane.b32.xlu0 %v2351, 112
      %v6681 = vpop.permute.xlu0 %6680
      %6682 = vrot.lane.b32.xlu0 %v2352, 112
      %v6683 = vpop.permute.xlu0 %6682
      %6684 = vrot.lane.b32.xlu0 %v2353, 112
      %v6685 = vpop.permute.xlu0 %6684
      %6686 = vrot.lane.b32.xlu0 %v2354, 112
      %v6687 = vpop.permute.xlu0 %6686
      %6688 = vrot.lane.b32.xlu0 %v2355, 112
      %v6689 = vpop.permute.xlu0 %6688
      %6690 = vrot.lane.b32.xlu0 %v2356, 112
      %v6691 = vpop.permute.xlu0 %6690
      %6692 = vrot.lane.b32.xlu0 %v2357, 112
      %v6693 = vpop.permute.xlu0 %6692
      %6694 = vrot.lane.b32.xlu0 %v2358, 112
      %v6695 = vpop.permute.xlu0 %6694
      %6696 = vrot.lane.b32.xlu0 %v2359, 112
      %v6697 = vpop.permute.xlu0 %6696
      %6698 = vrot.lane.b32.xlu0 %v2360, 112
      %v6699 = vpop.permute.xlu0 %6698
      %6700 = vrot.lane.b32.xlu0 %v2361, 112
      %v6701 = vpop.permute.xlu0 %6700
      %6702 = vrot.lane.b32.xlu0 %v2362, 112
      %v6703 = vpop.permute.xlu0 %6702
      %6704 = vrot.lane.b32.xlu0 %v2363, 112
      %v6705 = vpop.permute.xlu0 %6704
      %v6707 = vsel %vm2364, %v6611, 0
      %v6710 = vsel %vm2364, %v6613, 0
      %v6713 = vsel %vm2364, %v6615, 0
      %v6716 = vsel %vm2364, %v6617, 0
      %v6719 = vsel %vm2364, %v6619, 0
      %v6722 = vsel %vm2364, %v6621, 0
      %v6725 = vsel %vm2364, %v6623, 0
      %v6728 = vsel %vm2364, %v6625, 0
      %v6731 = vsel %vm2364, %v6627, 0
      %v6734 = vsel %vm2364, %v6629, 0
      %v6737 = vsel %vm2364, %v6631, 0
      %v6740 = vsel %vm2364, %v6633, 0
      %v6743 = vsel %vm2364, %v6635, 0
      %v6746 = vsel %vm2364, %v6637, 0
      %v6749 = vsel %vm2364, %v6639, 0
      %v6752 = vsel %vm2364, %v6641, 0
      %v6755 = vsel %vm2364, %v6643, 0
      %v6758 = vsel %vm2364, %v6645, 0
      %v6761 = vsel %vm2364, %v6647, 0
      %v6764 = vsel %vm2364, %v6649, 0
      %v6767 = vsel %vm2364, %v6651, 0
      %v6770 = vsel %vm2364, %v6653, 0
      %v6773 = vsel %vm2364, %v6655, 0
      %v6776 = vsel %vm2364, %v6657, 0
      %v6779 = vsel %vm2364, %v6659, 0
      %v6782 = vsel %vm2364, %v6661, 0
      %v6785 = vsel %vm2364, %v6663, 0
      %v6788 = vsel %vm2364, %v6665, 0
      %v6791 = vsel %vm2364, %v6667, 0
      %v6794 = vsel %vm2364, %v6669, 0
      %v6797 = vsel %vm2364, %v6671, 0
      %v6800 = vsel %vm2364, %v6673, 0
      %v6803 = vsel %vm2364, %v6675, 0
      %v6806 = vsel %vm2364, %v6677, 0
      %v6809 = vsel %vm2364, %v6679, 0
      %v6812 = vsel %vm2364, %v6681, 0
      %v6815 = vsel %vm2364, %v6683, 0
      %v6818 = vsel %vm2364, %v6685, 0
      %v6821 = vsel %vm2364, %v6687, 0
      %v6824 = vsel %vm2364, %v6689, 0
      %v6827 = vsel %vm2364, %v6691, 0
      %v6830 = vsel %vm2364, %v6693, 0
      %v6833 = vsel %vm2364, %v6695, 0
      %v6836 = vsel %vm2364, %v6697, 0
      %v6839 = vsel %vm2364, %v6699, 0
      %v6842 = vsel %vm2364, %v6701, 0
      %v6845 = vsel %vm2364, %v6703, 0
      %v6848 = vsel %vm2364, %v6705, 0
      %6850 = vmatprep.subr.bf16.mxu0 0
      %6851 = vmatpush1.bf16.xpose.msra.mxu0 %v6803
      %6852 = vmatprep.subr.bf16.mxu0 0
      %6853 = vmatpush1.bf16.xpose.msra.mxu0 %v6806
      %6854 = vmatprep.subr.bf16.mxu0 0
      %6855 = vmatpush1.bf16.xpose.msra.mxu0 %v6809
      %6856 = vmatprep.subr.bf16.mxu0 0
      %6857 = vmatpush1.bf16.xpose.msra.mxu0 %v6812
      %6858 = vmatprep.subr.bf16.mxu0 0
      %6859 = vmatpush1.bf16.xpose.msra.mxu0 %v6815
      %6860 = vmatprep.subr.bf16.mxu0 0
      %6861 = vmatpush1.bf16.xpose.msra.mxu0 %v6818
      %6862 = vmatprep.subr.bf16.mxu0 0
      %6863 = vmatpush1.bf16.xpose.msra.mxu0 %v6821
      %6864 = vmatprep.subr.bf16.mxu0 0
      %6865 = vmatpush1.bf16.xpose.msra.mxu0 %v6824
      %6866 = vmatprep.subr.bf16.mxu0 0
      %6867 = vmatpush1.bf16.xpose.msra.mxu0 %v6827
      %6868 = vmatprep.subr.bf16.mxu0 0
      %6869 = vmatpush1.bf16.xpose.msra.mxu0 %v6830
      %6870 = vmatprep.subr.bf16.mxu0 0
      %6871 = vmatpush1.bf16.xpose.msra.mxu0 %v6833
      %6872 = vmatprep.subr.bf16.mxu0 0
      %6873 = vmatpush1.bf16.xpose.msra.mxu0 %v6836
      %6874 = vmatprep.subr.bf16.mxu0 0
      %6875 = vmatpush1.bf16.xpose.msra.mxu0 %v6839
      %6876 = vmatprep.subr.bf16.mxu0 0
      %6877 = vmatpush1.bf16.xpose.msra.mxu0 %v6842
      %6878 = vmatprep.subr.bf16.mxu0 0
      %6879 = vmatpush1.bf16.xpose.msra.mxu0 %v6845
      %6880 = vmatprep.subr.bf16.mxu0 0
      %6881 = vmatpush1.bf16.xpose.msra.mxu0 %v6848
      %6882 = vmatprep.mubr.bf16.mxu0 0
      %6883 = vmatmul.mubr.bf16.gmra.mrb[0].mxu0 %v6707
      %v6884 = vpop.f32.mrb[0].mxu0
      %v6885 = vadd.f32 0.0, %v6884
      %v6886 = vpop.f32.mrb[0].mxu0
      %v6887 = vadd.f32 0.0, %v6886
      %v6888 = vpop.f32.mrb[0].mxu0
      %v6889 = vadd.f32 0.0, %v6888
      %v6890 = vpop.f32.mrb[0].mxu0
      %v6891 = vadd.f32 0.0, %v6890
      %6892 = vmatprep.mubr.bf16.mxu0 0
      %6893 = vmatmul.mubr.bf16.gmra.mrb[0].mxu0 %v6710
      %v6894 = vpop.f32.mrb[0].mxu0
      %v6895 = vadd.f32 0.0, %v6894
      %v6896 = vpop.f32.mrb[0].mxu0
      %v6897 = vadd.f32 0.0, %v6896
      %v6898 = vpop.f32.mrb[0].mxu0
      %v6899 = vadd.f32 0.0, %v6898
      %v6900 = vpop.f32.mrb[0].mxu0
      %v6901 = vadd.f32 0.0, %v6900
      %6902 = vmatprep.mubr.bf16.mxu0 0
      %6903 = vmatmul.mubr.bf16.gmra.mrb[0].mxu0 %v6713
      %v6904 = vpop.f32.mrb[0].mxu0
      %v6905 = vadd.f32 0.0, %v6904
      %v6906 = vpop.f32.mrb[0].mxu0
      %v6907 = vadd.f32 0.0, %v6906
      %v6908 = vpop.f32.mrb[0].mxu0
      %v6909 = vadd.f32 0.0, %v6908
      %v6910 = vpop.f32.mrb[0].mxu0
      %v6911 = vadd.f32 0.0, %v6910
      %6912 = vmatprep.mubr.bf16.mxu0 0
      %6913 = vmatmul.mubr.bf16.gmra.mrb[0].mxu0 %v6716
      %v6914 = vpop.f32.mrb[0].mxu0
      %v6915 = vadd.f32 0.0, %v6914
      %v6916 = vpop.f32.mrb[0].mxu0
      %v6917 = vadd.f32 0.0, %v6916
      %v6918 = vpop.f32.mrb[0].mxu0
      %v6919 = vadd.f32 0.0, %v6918
      %v6920 = vpop.f32.mrb[0].mxu0
      %v6921 = vadd.f32 0.0, %v6920
      %6922 = vmatprep.mubr.bf16.mxu0 0
      %6923 = vmatmul.mubr.bf16.gmra.mrb[0].mxu0 %v6719
      %v6924 = vpop.f32.mrb[0].mxu0
      %v6925 = vadd.f32 0.0, %v6924
      %v6926 = vpop.f32.mrb[0].mxu0
      %v6927 = vadd.f32 0.0, %v6926
      %v6928 = vpop.f32.mrb[0].mxu0
      %v6929 = vadd.f32 0.0, %v6928
      %v6930 = vpop.f32.mrb[0].mxu0
      %v6931 = vadd.f32 0.0, %v6930
      %6932 = vmatprep.mubr.bf16.mxu0 0
      %6933 = vmatmul.mubr.bf16.gmra.mrb[0].mxu0 %v6722
      %v6934 = vpop.f32.mrb[0].mxu0
      %v6935 = vadd.f32 0.0, %v6934
      %v6936 = vpop.f32.mrb[0].mxu0
      %v6937 = vadd.f32 0.0, %v6936
      %v6938 = vpop.f32.mrb[0].mxu0
      %v6939 = vadd.f32 0.0, %v6938
      %v6940 = vpop.f32.mrb[0].mxu0
      %v6941 = vadd.f32 0.0, %v6940
      %6942 = vmatprep.mubr.bf16.mxu0 0
      %6943 = vmatmul.mubr.bf16.gmra.mrb[0].mxu0 %v6725
      %v6944 = vpop.f32.mrb[0].mxu0
      %v6945 = vadd.f32 0.0, %v6944
      %v6946 = vpop.f32.mrb[0].mxu0
      %v6947 = vadd.f32 0.0, %v6946
      %v6948 = vpop.f32.mrb[0].mxu0
      %v6949 = vadd.f32 0.0, %v6948
      %v6950 = vpop.f32.mrb[0].mxu0
      %v6951 = vadd.f32 0.0, %v6950
      %6952 = vmatprep.mubr.bf16.mxu0 0
      %6953 = vmatmul.mubr.bf16.gmra.mrb[0].mxu0 %v6728
      %v6954 = vpop.f32.mrb[0].mxu0
      %v6955 = vadd.f32 0.0, %v6954
      %v6956 = vpop.f32.mrb[0].mxu0
      %v6957 = vadd.f32 0.0, %v6956
      %v6958 = vpop.f32.mrb[0].mxu0
      %v6959 = vadd.f32 0.0, %v6958
      %v6960 = vpop.f32.mrb[0].mxu0
      %v6961 = vadd.f32 0.0, %v6960
      %6962 = vmatprep.mubr.bf16.mxu0 0
      %6963 = vmatmul.mubr.bf16.gmra.mrb[0].mxu0 %v6731
      %v6964 = vpop.f32.mrb[0].mxu0
      %v6965 = vadd.f32 0.0, %v6964
      %v6966 = vpop.f32.mrb[0].mxu0
      %v6967 = vadd.f32 0.0, %v6966
      %v6968 = vpop.f32.mrb[0].mxu0
      %v6969 = vadd.f32 0.0, %v6968
      %v6970 = vpop.f32.mrb[0].mxu0
      %v6971 = vadd.f32 0.0, %v6970
      %6972 = vmatprep.mubr.bf16.mxu0 0
      %6973 = vmatmul.mubr.bf16.gmra.mrb[0].mxu0 %v6734
      %v6974 = vpop.f32.mrb[0].mxu0
      %v6975 = vadd.f32 0.0, %v6974
      %v6976 = vpop.f32.mrb[0].mxu0
      %v6977 = vadd.f32 0.0, %v6976
      %v6978 = vpop.f32.mrb[0].mxu0
      %v6979 = vadd.f32 0.0, %v6978
      %v6980 = vpop.f32.mrb[0].mxu0
      %v6981 = vadd.f32 0.0, %v6980
      %6982 = vmatprep.mubr.bf16.mxu0 0
      %6983 = vmatmul.mubr.bf16.gmra.mrb[0].mxu0 %v6737
      %v6984 = vpop.f32.mrb[0].mxu0
      %v6985 = vadd.f32 0.0, %v6984
      %v6986 = vpop.f32.mrb[0].mxu0
      %v6987 = vadd.f32 0.0, %v6986
      %v6988 = vpop.f32.mrb[0].mxu0
      %v6989 = vadd.f32 0.0, %v6988
      %v6990 = vpop.f32.mrb[0].mxu0
      %v6991 = vadd.f32 0.0, %v6990
      %6992 = vmatprep.mubr.bf16.mxu0 0
      %6993 = vmatmul.mubr.bf16.gmra.mrb[0].mxu0 %v6740
      %v6994 = vpop.f32.mrb[0].mxu0
      %v6995 = vadd.f32 0.0, %v6994
      %v6996 = vpop.f32.mrb[0].mxu0
      %v6997 = vadd.f32 0.0, %v6996
      %v6998 = vpop.f32.mrb[0].mxu0
      %v6999 = vadd.f32 0.0, %v6998
      %v7000 = vpop.f32.mrb[0].mxu0
      %v7001 = vadd.f32 0.0, %v7000
      %7002 = vmatprep.mubr.bf16.mxu0 0
      %7003 = vmatmul.mubr.bf16.gmra.mrb[0].mxu0 %v6743
      %v7004 = vpop.f32.mrb[0].mxu0
      %v7005 = vadd.f32 0.0, %v7004
      %v7006 = vpop.f32.mrb[0].mxu0
      %v7007 = vadd.f32 0.0, %v7006
      %v7008 = vpop.f32.mrb[0].mxu0
      %v7009 = vadd.f32 0.0, %v7008
      %v7010 = vpop.f32.mrb[0].mxu0
      %v7011 = vadd.f32 0.0, %v7010
      %7012 = vmatprep.mubr.bf16.mxu0 0
      %7013 = vmatmul.mubr.bf16.gmra.mrb[0].mxu0 %v6746
      %v7014 = vpop.f32.mrb[0].mxu0
      %v7015 = vadd.f32 0.0, %v7014
      %v7016 = vpop.f32.mrb[0].mxu0
      %v7017 = vadd.f32 0.0, %v7016
      %v7018 = vpop.f32.mrb[0].mxu0
      %v7019 = vadd.f32 0.0, %v7018
      %v7020 = vpop.f32.mrb[0].mxu0
      %v7021 = vadd.f32 0.0, %v7020
      %7022 = vmatprep.mubr.bf16.mxu0 0
      %7023 = vmatmul.mubr.bf16.gmra.mrb[0].mxu0 %v6749
      %v7024 = vpop.f32.mrb[0].mxu0
      %v7025 = vadd.f32 0.0, %v7024
      %v7026 = vpop.f32.mrb[0].mxu0
      %v7027 = vadd.f32 0.0, %v7026
      %v7028 = vpop.f32.mrb[0].mxu0
      %v7029 = vadd.f32 0.0, %v7028
      %v7030 = vpop.f32.mrb[0].mxu0
      %v7031 = vadd.f32 0.0, %v7030
      %7032 = vmatprep.mubr.bf16.mxu0 0
      %7033 = vmatmul.mubr.bf16.gmra.mrb[0].mxu0 %v6752
      %v7034 = vpop.f32.mrb[0].mxu0
      %v7035 = vadd.f32 0.0, %v7034
      %v7036 = vpop.f32.mrb[0].mxu0
      %v7037 = vadd.f32 0.0, %v7036
      %v7038 = vpop.f32.mrb[0].mxu0
      %v7039 = vadd.f32 0.0, %v7038
      %v7040 = vpop.f32.mrb[0].mxu0
      %v7041 = vadd.f32 0.0, %v7040
      %7042 = vmatprep.mubr.bf16.mxu0 0
      %7043 = vmatmul.mubr.bf16.gmra.mrb[0].mxu0 %v6755
      %v7044 = vpop.f32.mrb[0].mxu0
      %v7045 = vadd.f32 0.0, %v7044
      %v7046 = vpop.f32.mrb[0].mxu0
      %v7047 = vadd.f32 0.0, %v7046
      %v7048 = vpop.f32.mrb[0].mxu0
      %v7049 = vadd.f32 0.0, %v7048
      %v7050 = vpop.f32.mrb[0].mxu0
      %v7051 = vadd.f32 0.0, %v7050
      %7052 = vmatprep.mubr.bf16.mxu0 0
      %7053 = vmatmul.mubr.bf16.gmra.mrb[0].mxu0 %v6758
      %v7054 = vpop.f32.mrb[0].mxu0
      %v7055 = vadd.f32 0.0, %v7054
      %v7056 = vpop.f32.mrb[0].mxu0
      %v7057 = vadd.f32 0.0, %v7056
      %v7058 = vpop.f32.mrb[0].mxu0
      %v7059 = vadd.f32 0.0, %v7058
      %v7060 = vpop.f32.mrb[0].mxu0
      %v7061 = vadd.f32 0.0, %v7060
      %7062 = vmatprep.mubr.bf16.mxu0 0
      %7063 = vmatmul.mubr.bf16.gmra.mrb[0].mxu0 %v6761
      %v7064 = vpop.f32.mrb[0].mxu0
      %v7065 = vadd.f32 0.0, %v7064
      %v7066 = vpop.f32.mrb[0].mxu0
      %v7067 = vadd.f32 0.0, %v7066
      %v7068 = vpop.f32.mrb[0].mxu0
      %v7069 = vadd.f32 0.0, %v7068
      %v7070 = vpop.f32.mrb[0].mxu0
      %v7071 = vadd.f32 0.0, %v7070
      %7072 = vmatprep.mubr.bf16.mxu0 0
      %7073 = vmatmul.mubr.bf16.gmra.mrb[0].mxu0 %v6764
      %v7074 = vpop.f32.mrb[0].mxu0
      %v7075 = vadd.f32 0.0, %v7074
      %v7076 = vpop.f32.mrb[0].mxu0
      %v7077 = vadd.f32 0.0, %v7076
      %v7078 = vpop.f32.mrb[0].mxu0
      %v7079 = vadd.f32 0.0, %v7078
      %v7080 = vpop.f32.mrb[0].mxu0
      %v7081 = vadd.f32 0.0, %v7080
      %7082 = vmatprep.mubr.bf16.mxu0 0
      %7083 = vmatmul.mubr.bf16.gmra.mrb[0].mxu0 %v6767
      %v7084 = vpop.f32.mrb[0].mxu0
      %v7085 = vadd.f32 0.0, %v7084
      %v7086 = vpop.f32.mrb[0].mxu0
      %v7087 = vadd.f32 0.0, %v7086
      %v7088 = vpop.f32.mrb[0].mxu0
      %v7089 = vadd.f32 0.0, %v7088
      %v7090 = vpop.f32.mrb[0].mxu0
      %v7091 = vadd.f32 0.0, %v7090
      %7092 = vmatprep.mubr.bf16.mxu0 0
      %7093 = vmatmul.mubr.bf16.gmra.mrb[0].mxu0 %v6770
      %v7094 = vpop.f32.mrb[0].mxu0
      %v7095 = vadd.f32 0.0, %v7094
      %v7096 = vpop.f32.mrb[0].mxu0
      %v7097 = vadd.f32 0.0, %v7096
      %v7098 = vpop.f32.mrb[0].mxu0
      %v7099 = vadd.f32 0.0, %v7098
      %v7100 = vpop.f32.mrb[0].mxu0
      %v7101 = vadd.f32 0.0, %v7100
      %7102 = vmatprep.mubr.bf16.mxu0 0
      %7103 = vmatmul.mubr.bf16.gmra.mrb[0].mxu0 %v6773
      %v7104 = vpop.f32.mrb[0].mxu0
      %v7105 = vadd.f32 0.0, %v7104
      %v7106 = vpop.f32.mrb[0].mxu0
      %v7107 = vadd.f32 0.0, %v7106
      %v7108 = vpop.f32.mrb[0].mxu0
      %v7109 = vadd.f32 0.0, %v7108
      %v7110 = vpop.f32.mrb[0].mxu0
      %v7111 = vadd.f32 0.0, %v7110
      %7112 = vmatprep.mubr.bf16.mxu0 0
      %7113 = vmatmul.mubr.bf16.gmra.mrb[0].mxu0 %v6776
      %v7114 = vpop.f32.mrb[0].mxu0
      %v7115 = vadd.f32 0.0, %v7114
      %v7116 = vpop.f32.mrb[0].mxu0
      %v7117 = vadd.f32 0.0, %v7116
      %v7118 = vpop.f32.mrb[0].mxu0
      %v7119 = vadd.f32 0.0, %v7118
      %v7120 = vpop.f32.mrb[0].mxu0
      %v7121 = vadd.f32 0.0, %v7120
      %7122 = vmatprep.mubr.bf16.mxu0 0
      %7123 = vmatmul.mubr.bf16.gmra.mrb[0].mxu0 %v6779
      %v7124 = vpop.f32.mrb[0].mxu0
      %v7125 = vadd.f32 0.0, %v7124
      %v7126 = vpop.f32.mrb[0].mxu0
      %v7127 = vadd.f32 0.0, %v7126
      %v7128 = vpop.f32.mrb[0].mxu0
      %v7129 = vadd.f32 0.0, %v7128
      %v7130 = vpop.f32.mrb[0].mxu0
      %v7131 = vadd.f32 0.0, %v7130
      %7132 = vmatprep.mubr.bf16.mxu0 0
      %7133 = vmatmul.mubr.bf16.gmra.mrb[0].mxu0 %v6782
      %v7134 = vpop.f32.mrb[0].mxu0
      %v7135 = vadd.f32 0.0, %v7134
      %v7136 = vpop.f32.mrb[0].mxu0
      %v7137 = vadd.f32 0.0, %v7136
      %v7138 = vpop.f32.mrb[0].mxu0
      %v7139 = vadd.f32 0.0, %v7138
      %v7140 = vpop.f32.mrb[0].mxu0
      %v7141 = vadd.f32 0.0, %v7140
      %7142 = vmatprep.mubr.bf16.mxu0 0
      %7143 = vmatmul.mubr.bf16.gmra.mrb[0].mxu0 %v6785
      %v7144 = vpop.f32.mrb[0].mxu0
      %v7145 = vadd.f32 0.0, %v7144
      %v7146 = vpop.f32.mrb[0].mxu0
      %v7147 = vadd.f32 0.0, %v7146
      %v7148 = vpop.f32.mrb[0].mxu0
      %v7149 = vadd.f32 0.0, %v7148
      %v7150 = vpop.f32.mrb[0].mxu0
      %v7151 = vadd.f32 0.0, %v7150
      %7152 = vmatprep.mubr.bf16.mxu0 0
      %7153 = vmatmul.mubr.bf16.gmra.mrb[0].mxu0 %v6788
      %v7154 = vpop.f32.mrb[0].mxu0
      %v7155 = vadd.f32 0.0, %v7154
      %v7156 = vpop.f32.mrb[0].mxu0
      %v7157 = vadd.f32 0.0, %v7156
      %v7158 = vpop.f32.mrb[0].mxu0
      %v7159 = vadd.f32 0.0, %v7158
      %v7160 = vpop.f32.mrb[0].mxu0
      %v7161 = vadd.f32 0.0, %v7160
      %7162 = vmatprep.mubr.bf16.mxu0 0
      %7163 = vmatmul.mubr.bf16.gmra.mrb[0].mxu0 %v6791
      %v7164 = vpop.f32.mrb[0].mxu0
      %v7165 = vadd.f32 0.0, %v7164
      %v7166 = vpop.f32.mrb[0].mxu0
      %v7167 = vadd.f32 0.0, %v7166
      %v7168 = vpop.f32.mrb[0].mxu0
      %v7169 = vadd.f32 0.0, %v7168
      %v7170 = vpop.f32.mrb[0].mxu0
      %v7171 = vadd.f32 0.0, %v7170
      %7172 = vmatprep.mubr.bf16.mxu0 0
      %7173 = vmatmul.mubr.bf16.gmra.mrb[0].mxu0 %v6794
      %v7174 = vpop.f32.mrb[0].mxu0
      %v7175 = vadd.f32 0.0, %v7174
      %v7176 = vpop.f32.mrb[0].mxu0
      %v7177 = vadd.f32 0.0, %v7176
      %v7178 = vpop.f32.mrb[0].mxu0
      %v7179 = vadd.f32 0.0, %v7178
      %v7180 = vpop.f32.mrb[0].mxu0
      %v7181 = vadd.f32 0.0, %v7180
      %7182 = vmatprep.mubr.bf16.mxu0 0
      %7183 = vmatmul.mubr.bf16.gmra.mrb[0].mxu0 %v6797
      %v7184 = vpop.f32.mrb[0].mxu0
      %v7185 = vadd.f32 0.0, %v7184
      %v7186 = vpop.f32.mrb[0].mxu0
      %v7187 = vadd.f32 0.0, %v7186
      %v7188 = vpop.f32.mrb[0].mxu0
      %v7189 = vadd.f32 0.0, %v7188
      %v7190 = vpop.f32.mrb[0].mxu0
      %v7191 = vadd.f32 0.0, %v7190
      %7192 = vmatprep.mubr.bf16.mxu0 0
      %7193 = vmatmul.mubr.bf16.gmra.mrb[0].mxu0 %v6800
      %v7194 = vpop.f32.mrb[0].mxu0
      %v7195 = vadd.f32 0.0, %v7194
      %v7196 = vpop.f32.mrb[0].mxu0
      %v7197 = vadd.f32 0.0, %v7196
      %v7198 = vpop.f32.mrb[0].mxu0
      %v7199 = vadd.f32 0.0, %v7198
      %v7200 = vpop.f32.mrb[0].mxu0
      %v7201 = vadd.f32 0.0, %v7200
      %7202 = vdwg.mxu0
      %v7203 = vmax.f32 %v6885, %v6887
      %7204 = vmax.xlane.f32.xlu0 %v7203
      %v7205 = vpop.xlane.xlu0 %7204
      %v7206 = vmax.f32 %v6889, %v6891
      %7207 = vmax.xlane.f32.xlu0 %v7206
      %v7208 = vpop.xlane.xlu0 %7207
      %v7209 = vmax.f32 %v6895, %v6897
      %7210 = vmax.xlane.f32.xlu0 %v7209
      %v7211 = vpop.xlane.xlu0 %7210
      %v7212 = vmax.f32 %v6899, %v6901
      %7213 = vmax.xlane.f32.xlu0 %v7212
      %v7214 = vpop.xlane.xlu0 %7213
      %v7215 = vmax.f32 %v6905, %v6907
      %7216 = vmax.xlane.f32.xlu0 %v7215
      %v7217 = vpop.xlane.xlu0 %7216
      %v7218 = vmax.f32 %v6909, %v6911
      %7219 = vmax.xlane.f32.xlu0 %v7218
      %v7220 = vpop.xlane.xlu0 %7219
      %v7221 = vmax.f32 %v6915, %v6917
      %7222 = vmax.xlane.f32.xlu0 %v7221
      %v7223 = vpop.xlane.xlu0 %7222
      %v7224 = vmax.f32 %v6919, %v6921
      %7225 = vmax.xlane.f32.xlu0 %v7224
      %v7226 = vpop.xlane.xlu0 %7225
      %v7227 = vmax.f32 %v6925, %v6927
      %7228 = vmax.xlane.f32.xlu0 %v7227
      %v7229 = vpop.xlane.xlu0 %7228
      %v7230 = vmax.f32 %v6929, %v6931
      %7231 = vmax.xlane.f32.xlu0 %v7230
      %v7232 = vpop.xlane.xlu0 %7231
      %v7233 = vmax.f32 %v6935, %v6937
      %7234 = vmax.xlane.f32.xlu0 %v7233
      %v7235 = vpop.xlane.xlu0 %7234
      %v7236 = vmax.f32 %v6939, %v6941
      %7237 = vmax.xlane.f32.xlu0 %v7236
      %v7238 = vpop.xlane.xlu0 %7237
      %v7239 = vmax.f32 %v6945, %v6947
      %7240 = vmax.xlane.f32.xlu0 %v7239
      %v7241 = vpop.xlane.xlu0 %7240
      %v7242 = vmax.f32 %v6949, %v6951
      %7243 = vmax.xlane.f32.xlu0 %v7242
      %v7244 = vpop.xlane.xlu0 %7243
      %v7245 = vmax.f32 %v6955, %v6957
      %7246 = vmax.xlane.f32.xlu0 %v7245
      %v7247 = vpop.xlane.xlu0 %7246
      %v7248 = vmax.f32 %v6959, %v6961
      %7249 = vmax.xlane.f32.xlu0 %v7248
      %v7250 = vpop.xlane.xlu0 %7249
      %v7251 = vmax.f32 %v6965, %v6967
      %7252 = vmax.xlane.f32.xlu0 %v7251
      %v7253 = vpop.xlane.xlu0 %7252
      %v7254 = vmax.f32 %v6969, %v6971
      %7255 = vmax.xlane.f32.xlu0 %v7254
      %v7256 = vpop.xlane.xlu0 %7255
      %v7257 = vmax.f32 %v6975, %v6977
      %7258 = vmax.xlane.f32.xlu0 %v7257
      %v7259 = vpop.xlane.xlu0 %7258
      %v7260 = vmax.f32 %v6979, %v6981
      %7261 = vmax.xlane.f32.xlu0 %v7260
      %v7262 = vpop.xlane.xlu0 %7261
      %v7263 = vmax.f32 %v6985, %v6987
      %7264 = vmax.xlane.f32.xlu0 %v7263
      %v7265 = vpop.xlane.xlu0 %7264
      %v7266 = vmax.f32 %v6989, %v6991
      %7267 = vmax.xlane.f32.xlu0 %v7266
      %v7268 = vpop.xlane.xlu0 %7267
      %v7269 = vmax.f32 %v6995, %v6997
      %7270 = vmax.xlane.f32.xlu0 %v7269
      %v7271 = vpop.xlane.xlu0 %7270
      %v7272 = vmax.f32 %v6999, %v7001
      %7273 = vmax.xlane.f32.xlu0 %v7272
      %v7274 = vpop.xlane.xlu0 %7273
      %v7275 = vmax.f32 %v7005, %v7007
      %7276 = vmax.xlane.f32.xlu0 %v7275
      %v7277 = vpop.xlane.xlu0 %7276
      %v7278 = vmax.f32 %v7009, %v7011
      %7279 = vmax.xlane.f32.xlu0 %v7278
      %v7280 = vpop.xlane.xlu0 %7279
      %v7281 = vmax.f32 %v7015, %v7017
      %7282 = vmax.xlane.f32.xlu0 %v7281
      %v7283 = vpop.xlane.xlu0 %7282
      %v7284 = vmax.f32 %v7019, %v7021
      %7285 = vmax.xlane.f32.xlu0 %v7284
      %v7286 = vpop.xlane.xlu0 %7285
      %v7287 = vmax.f32 %v7025, %v7027
      %7288 = vmax.xlane.f32.xlu0 %v7287
      %v7289 = vpop.xlane.xlu0 %7288
      %v7290 = vmax.f32 %v7029, %v7031
      %7291 = vmax.xlane.f32.xlu0 %v7290
      %v7292 = vpop.xlane.xlu0 %7291
      %v7293 = vmax.f32 %v7035, %v7037
      %7294 = vmax.xlane.f32.xlu0 %v7293
      %v7295 = vpop.xlane.xlu0 %7294
      %v7296 = vmax.f32 %v7039, %v7041
      %7297 = vmax.xlane.f32.xlu0 %v7296
      %v7298 = vpop.xlane.xlu0 %7297
      %v7299 = vmax.f32 %v7045, %v7047
      %7300 = vmax.xlane.f32.xlu0 %v7299
      %v7301 = vpop.xlane.xlu0 %7300
      %v7302 = vmax.f32 %v7049, %v7051
      %7303 = vmax.xlane.f32.xlu0 %v7302
      %v7304 = vpop.xlane.xlu0 %7303
      %v7305 = vmax.f32 %v7055, %v7057
      %7306 = vmax.xlane.f32.xlu0 %v7305
      %v7307 = vpop.xlane.xlu0 %7306
      %v7308 = vmax.f32 %v7059, %v7061
      %7309 = vmax.xlane.f32.xlu0 %v7308
      %v7310 = vpop.xlane.xlu0 %7309
      %v7311 = vmax.f32 %v7065, %v7067
      %7312 = vmax.xlane.f32.xlu0 %v7311
      %v7313 = vpop.xlane.xlu0 %7312
      %v7314 = vmax.f32 %v7069, %v7071
      %7315 = vmax.xlane.f32.xlu0 %v7314
      %v7316 = vpop.xlane.xlu0 %7315
      %v7317 = vmax.f32 %v7075, %v7077
      %7318 = vmax.xlane.f32.xlu0 %v7317
      %v7319 = vpop.xlane.xlu0 %7318
      %v7320 = vmax.f32 %v7079, %v7081
      %7321 = vmax.xlane.f32.xlu0 %v7320
      %v7322 = vpop.xlane.xlu0 %7321
      %v7323 = vmax.f32 %v7085, %v7087
      %7324 = vmax.xlane.f32.xlu0 %v7323
      %v7325 = vpop.xlane.xlu0 %7324
      %v7326 = vmax.f32 %v7089, %v7091
      %7327 = vmax.xlane.f32.xlu0 %v7326
      %v7328 = vpop.xlane.xlu0 %7327
      %v7329 = vmax.f32 %v7095, %v7097
      %7330 = vmax.xlane.f32.xlu0 %v7329
      %v7331 = vpop.xlane.xlu0 %7330
      %v7332 = vmax.f32 %v7099, %v7101
      %7333 = vmax.xlane.f32.xlu0 %v7332
      %v7334 = vpop.xlane.xlu0 %7333
      %v7335 = vmax.f32 %v7105, %v7107
      %7336 = vmax.xlane.f32.xlu0 %v7335
      %v7337 = vpop.xlane.xlu0 %7336
      %v7338 = vmax.f32 %v7109, %v7111
      %7339 = vmax.xlane.f32.xlu0 %v7338
      %v7340 = vpop.xlane.xlu0 %7339
      %v7341 = vmax.f32 %v7115, %v7117
      %7342 = vmax.xlane.f32.xlu0 %v7341
      %v7343 = vpop.xlane.xlu0 %7342
      %v7344 = vmax.f32 %v7119, %v7121
      %7345 = vmax.xlane.f32.xlu0 %v7344
      %v7346 = vpop.xlane.xlu0 %7345
      %v7347 = vmax.f32 %v7125, %v7127
      %7348 = vmax.xlane.f32.xlu0 %v7347
      %v7349 = vpop.xlane.xlu0 %7348
      %v7350 = vmax.f32 %v7129, %v7131
      %7351 = vmax.xlane.f32.xlu0 %v7350
      %v7352 = vpop.xlane.xlu0 %7351
      %v7353 = vmax.f32 %v7135, %v7137
      %7354 = vmax.xlane.f32.xlu0 %v7353
      %v7355 = vpop.xlane.xlu0 %7354
      %v7356 = vmax.f32 %v7139, %v7141
      %7357 = vmax.xlane.f32.xlu0 %v7356
      %v7358 = vpop.xlane.xlu0 %7357
      %v7359 = vmax.f32 %v7145, %v7147
      %7360 = vmax.xlane.f32.xlu0 %v7359
      %v7361 = vpop.xlane.xlu0 %7360
      %v7362 = vmax.f32 %v7149, %v7151
      %7363 = vmax.xlane.f32.xlu0 %v7362
      %v7364 = vpop.xlane.xlu0 %7363
      %v7365 = vmax.f32 %v7155, %v7157
      %7366 = vmax.xlane.f32.xlu0 %v7365
      %v7367 = vpop.xlane.xlu0 %7366
      %v7368 = vmax.f32 %v7159, %v7161
      %7369 = vmax.xlane.f32.xlu0 %v7368
      %v7370 = vpop.xlane.xlu0 %7369
      %v7371 = vmax.f32 %v7165, %v7167
      %7372 = vmax.xlane.f32.xlu0 %v7371
      %v7373 = vpop.xlane.xlu0 %7372
      %v7374 = vmax.f32 %v7169, %v7171
      %7375 = vmax.xlane.f32.xlu0 %v7374
      %v7376 = vpop.xlane.xlu0 %7375
      %v7377 = vmax.f32 %v7175, %v7177
      %7378 = vmax.xlane.f32.xlu0 %v7377
      %v7379 = vpop.xlane.xlu0 %7378
      %v7380 = vmax.f32 %v7179, %v7181
      %7381 = vmax.xlane.f32.xlu0 %v7380
      %v7382 = vpop.xlane.xlu0 %7381
      %v7383 = vmax.f32 %v7185, %v7187
      %7384 = vmax.xlane.f32.xlu0 %v7383
      %v7385 = vpop.xlane.xlu0 %7384
      %v7386 = vmax.f32 %v7189, %v7191
      %7387 = vmax.xlane.f32.xlu0 %v7386
      %v7388 = vpop.xlane.xlu0 %7387
      %v7389 = vmax.f32 %v7195, %v7197
      %7390 = vmax.xlane.f32.xlu0 %v7389
      %v7391 = vpop.xlane.xlu0 %7390
      %v7392 = vmax.f32 %v7199, %v7201
      %7393 = vmax.xlane.f32.xlu0 %v7392
      %v7394 = vpop.xlane.xlu0 %7393
      %v7395 = vsub.f32 %v6885, %v7205
      %v7396 = vsub.f32 %v6887, %v7205
      %v7397 = vsub.f32 %v6889, %v7208
      %v7398 = vsub.f32 %v6891, %v7208
      %v7399 = vsub.f32 %v6895, %v7211
      %v7400 = vsub.f32 %v6897, %v7211
      %v7401 = vsub.f32 %v6899, %v7214
      %v7402 = vsub.f32 %v6901, %v7214
      %v7403 = vsub.f32 %v6905, %v7217
      %v7404 = vsub.f32 %v6907, %v7217
      %v7405 = vsub.f32 %v6909, %v7220
      %v7406 = vsub.f32 %v6911, %v7220
      %v7407 = vsub.f32 %v6915, %v7223
      %v7408 = vsub.f32 %v6917, %v7223
      %v7409 = vsub.f32 %v6919, %v7226
      %v7410 = vsub.f32 %v6921, %v7226
      %v7411 = vsub.f32 %v6925, %v7229
      %v7412 = vsub.f32 %v6927, %v7229
      %v7413 = vsub.f32 %v6929, %v7232
      %v7414 = vsub.f32 %v6931, %v7232
      %v7415 = vsub.f32 %v6935, %v7235
      %v7416 = vsub.f32 %v6937, %v7235
      %v7417 = vsub.f32 %v6939, %v7238
      %v7418 = vsub.f32 %v6941, %v7238
      %v7419 = vsub.f32 %v6945, %v7241
      %v7420 = vsub.f32 %v6947, %v7241
      %v7421 = vsub.f32 %v6949, %v7244
      %v7422 = vsub.f32 %v6951, %v7244
      %v7423 = vsub.f32 %v6955, %v7247
      %v7424 = vsub.f32 %v6957, %v7247
      %v7425 = vsub.f32 %v6959, %v7250
      %v7426 = vsub.f32 %v6961, %v7250
      %v7427 = vsub.f32 %v6965, %v7253
      %v7428 = vsub.f32 %v6967, %v7253
      %v7429 = vsub.f32 %v6969, %v7256
      %v7430 = vsub.f32 %v6971, %v7256
      %v7431 = vsub.f32 %v6975, %v7259
      %v7432 = vsub.f32 %v6977, %v7259
      %v7433 = vsub.f32 %v6979, %v7262
      %v7434 = vsub.f32 %v6981, %v7262
      %v7435 = vsub.f32 %v6985, %v7265
      %v7436 = vsub.f32 %v6987, %v7265
      %v7437 = vsub.f32 %v6989, %v7268
      %v7438 = vsub.f32 %v6991, %v7268
      %v7439 = vsub.f32 %v6995, %v7271
      %v7440 = vsub.f32 %v6997, %v7271
      %v7441 = vsub.f32 %v6999, %v7274
      %v7442 = vsub.f32 %v7001, %v7274
      %v7443 = vsub.f32 %v7005, %v7277
      %v7444 = vsub.f32 %v7007, %v7277
      %v7445 = vsub.f32 %v7009, %v7280
      %v7446 = vsub.f32 %v7011, %v7280
      %v7447 = vsub.f32 %v7015, %v7283
      %v7448 = vsub.f32 %v7017, %v7283
      %v7449 = vsub.f32 %v7019, %v7286
      %v7450 = vsub.f32 %v7021, %v7286
      %v7451 = vsub.f32 %v7025, %v7289
      %v7452 = vsub.f32 %v7027, %v7289
      %v7453 = vsub.f32 %v7029, %v7292
      %v7454 = vsub.f32 %v7031, %v7292
      %v7455 = vsub.f32 %v7035, %v7295
      %v7456 = vsub.f32 %v7037, %v7295
      %v7457 = vsub.f32 %v7039, %v7298
      %v7458 = vsub.f32 %v7041, %v7298
      %v7459 = vsub.f32 %v7045, %v7301
      %v7460 = vsub.f32 %v7047, %v7301
      %v7461 = vsub.f32 %v7049, %v7304
      %v7462 = vsub.f32 %v7051, %v7304
      %v7463 = vsub.f32 %v7055, %v7307
      %v7464 = vsub.f32 %v7057, %v7307
      %v7465 = vsub.f32 %v7059, %v7310
      %v7466 = vsub.f32 %v7061, %v7310
      %v7467 = vsub.f32 %v7065, %v7313
      %v7468 = vsub.f32 %v7067, %v7313
      %v7469 = vsub.f32 %v7069, %v7316
      %v7470 = vsub.f32 %v7071, %v7316
      %v7471 = vsub.f32 %v7075, %v7319
      %v7472 = vsub.f32 %v7077, %v7319
      %v7473 = vsub.f32 %v7079, %v7322
      %v7474 = vsub.f32 %v7081, %v7322
      %v7475 = vsub.f32 %v7085, %v7325
      %v7476 = vsub.f32 %v7087, %v7325
      %v7477 = vsub.f32 %v7089, %v7328
      %v7478 = vsub.f32 %v7091, %v7328
      %v7479 = vsub.f32 %v7095, %v7331
      %v7480 = vsub.f32 %v7097, %v7331
      %v7481 = vsub.f32 %v7099, %v7334
      %v7482 = vsub.f32 %v7101, %v7334
      %v7483 = vsub.f32 %v7105, %v7337
      %v7484 = vsub.f32 %v7107, %v7337
      %v7485 = vsub.f32 %v7109, %v7340
      %v7486 = vsub.f32 %v7111, %v7340
      %v7487 = vsub.f32 %v7115, %v7343
      %v7488 = vsub.f32 %v7117, %v7343
      %v7489 = vsub.f32 %v7119, %v7346
      %v7490 = vsub.f32 %v7121, %v7346
      %v7491 = vsub.f32 %v7125, %v7349
      %v7492 = vsub.f32 %v7127, %v7349
      %v7493 = vsub.f32 %v7129, %v7352
      %v7494 = vsub.f32 %v7131, %v7352
      %v7495 = vsub.f32 %v7135, %v7355
      %v7496 = vsub.f32 %v7137, %v7355
      %v7497 = vsub.f32 %v7139, %v7358
      %v7498 = vsub.f32 %v7141, %v7358
      %v7499 = vsub.f32 %v7145, %v7361
      %v7500 = vsub.f32 %v7147, %v7361
      %v7501 = vsub.f32 %v7149, %v7364
      %v7502 = vsub.f32 %v7151, %v7364
      %v7503 = vsub.f32 %v7155, %v7367
      %v7504 = vsub.f32 %v7157, %v7367
      %v7505 = vsub.f32 %v7159, %v7370
      %v7506 = vsub.f32 %v7161, %v7370
      %v7507 = vsub.f32 %v7165, %v7373
      %v7508 = vsub.f32 %v7167, %v7373
      %v7509 = vsub.f32 %v7169, %v7376
      %v7510 = vsub.f32 %v7171, %v7376
      %v7511 = vsub.f32 %v7175, %v7379
      %v7512 = vsub.f32 %v7177, %v7379
      %v7513 = vsub.f32 %v7179, %v7382
      %v7514 = vsub.f32 %v7181, %v7382
      %v7515 = vsub.f32 %v7185, %v7385
      %v7516 = vsub.f32 %v7187, %v7385
      %v7517 = vsub.f32 %v7189, %v7388
      %v7518 = vsub.f32 %v7191, %v7388
      %v7519 = vsub.f32 %v7195, %v7391
      %v7520 = vsub.f32 %v7197, %v7391
      %v7521 = vsub.f32 %v7199, %v7394
      %v7522 = vsub.f32 %v7201, %v7394
      %v7523 = vmul.f32 %v7395, 1.442695
      %v7524 = vpow.pop %v7523
      %v7525 = vmul.f32 %v7396, 1.442695
      %v7526 = vpow.pop %v7525
      %v7527 = vmul.f32 %v7397, 1.442695
      %v7528 = vpow.pop %v7527
      %v7529 = vmul.f32 %v7398, 1.442695
      %v7530 = vpow.pop %v7529
      %v7531 = vmul.f32 %v7399, 1.442695
      %v7532 = vpow.pop %v7531
      %v7533 = vmul.f32 %v7400, 1.442695
      %v7534 = vpow.pop %v7533
      %v7535 = vmul.f32 %v7401, 1.442695
      %v7536 = vpow.pop %v7535
      %v7537 = vmul.f32 %v7402, 1.442695
      %v7538 = vpow.pop %v7537
      %v7539 = vmul.f32 %v7403, 1.442695
      %v7540 = vpow.pop %v7539
      %v7541 = vmul.f32 %v7404, 1.442695
      %v7542 = vpow.pop %v7541
      %v7543 = vmul.f32 %v7405, 1.442695
      %v7544 = vpow.pop %v7543
      %v7545 = vmul.f32 %v7406, 1.442695
      %v7546 = vpow.pop %v7545
      %v7547 = vmul.f32 %v7407, 1.442695
      %v7548 = vpow.pop %v7547
      %v7549 = vmul.f32 %v7408, 1.442695
      %v7550 = vpow.pop %v7549
      %v7551 = vmul.f32 %v7409, 1.442695
      %v7552 = vpow.pop %v7551
      %v7553 = vmul.f32 %v7410, 1.442695
      %v7554 = vpow.pop %v7553
      %v7555 = vmul.f32 %v7411, 1.442695
      %v7556 = vpow.pop %v7555
      %v7557 = vmul.f32 %v7412, 1.442695
      %v7558 = vpow.pop %v7557
      %v7559 = vmul.f32 %v7413, 1.442695
      %v7560 = vpow.pop %v7559
      %v7561 = vmul.f32 %v7414, 1.442695
      %v7562 = vpow.pop %v7561
      %v7563 = vmul.f32 %v7415, 1.442695
      %v7564 = vpow.pop %v7563
      %v7565 = vmul.f32 %v7416, 1.442695
      %v7566 = vpow.pop %v7565
      %v7567 = vmul.f32 %v7417, 1.442695
      %v7568 = vpow.pop %v7567
      %v7569 = vmul.f32 %v7418, 1.442695
      %v7570 = vpow.pop %v7569
      %v7571 = vmul.f32 %v7419, 1.442695
      %v7572 = vpow.pop %v7571
      %v7573 = vmul.f32 %v7420, 1.442695
      %v7574 = vpow.pop %v7573
      %v7575 = vmul.f32 %v7421, 1.442695
      %v7576 = vpow.pop %v7575
      %v7577 = vmul.f32 %v7422, 1.442695
      %v7578 = vpow.pop %v7577
      %v7579 = vmul.f32 %v7423, 1.442695
      %v7580 = vpow.pop %v7579
      %v7581 = vmul.f32 %v7424, 1.442695
      %v7582 = vpow.pop %v7581
      %v7583 = vmul.f32 %v7425, 1.442695
      %v7584 = vpow.pop %v7583
      %v7585 = vmul.f32 %v7426, 1.442695
      %v7586 = vpow.pop %v7585
      %v7587 = vmul.f32 %v7427, 1.442695
      %v7588 = vpow.pop %v7587
      %v7589 = vmul.f32 %v7428, 1.442695
      %v7590 = vpow.pop %v7589
      %v7591 = vmul.f32 %v7429, 1.442695
      %v7592 = vpow.pop %v7591
      %v7593 = vmul.f32 %v7430, 1.442695
      %v7594 = vpow.pop %v7593
      %v7595 = vmul.f32 %v7431, 1.442695
      %v7596 = vpow.pop %v7595
      %v7597 = vmul.f32 %v7432, 1.442695
      %v7598 = vpow.pop %v7597
      %v7599 = vmul.f32 %v7433, 1.442695
      %v7600 = vpow.pop %v7599
      %v7601 = vmul.f32 %v7434, 1.442695
      %v7602 = vpow.pop %v7601
      %v7603 = vmul.f32 %v7435, 1.442695
      %v7604 = vpow.pop %v7603
      %v7605 = vmul.f32 %v7436, 1.442695
      %v7606 = vpow.pop %v7605
      %v7607 = vmul.f32 %v7437, 1.442695
      %v7608 = vpow.pop %v7607
      %v7609 = vmul.f32 %v7438, 1.442695
      %v7610 = vpow.pop %v7609
      %v7611 = vmul.f32 %v7439, 1.442695
      %v7612 = vpow.pop %v7611
      %v7613 = vmul.f32 %v7440, 1.442695
      %v7614 = vpow.pop %v7613
      %v7615 = vmul.f32 %v7441, 1.442695
      %v7616 = vpow.pop %v7615
      %v7617 = vmul.f32 %v7442, 1.442695
      %v7618 = vpow.pop %v7617
      %v7619 = vmul.f32 %v7443, 1.442695
      %v7620 = vpow.pop %v7619
      %v7621 = vmul.f32 %v7444, 1.442695
      %v7622 = vpow.pop %v7621
      %v7623 = vmul.f32 %v7445, 1.442695
      %v7624 = vpow.pop %v7623
      %v7625 = vmul.f32 %v7446, 1.442695
      %v7626 = vpow.pop %v7625
      %v7627 = vmul.f32 %v7447, 1.442695
      %v7628 = vpow.pop %v7627
      %v7629 = vmul.f32 %v7448, 1.442695
      %v7630 = vpow.pop %v7629
      %v7631 = vmul.f32 %v7449, 1.442695
      %v7632 = vpow.pop %v7631
      %v7633 = vmul.f32 %v7450, 1.442695
      %v7634 = vpow.pop %v7633
      %v7635 = vmul.f32 %v7451, 1.442695
      %v7636 = vpow.pop %v7635
      %v7637 = vmul.f32 %v7452, 1.442695
      %v7638 = vpow.pop %v7637
      %v7639 = vmul.f32 %v7453, 1.442695
      %v7640 = vpow.pop %v7639
      %v7641 = vmul.f32 %v7454, 1.442695
      %v7642 = vpow.pop %v7641
      %v7643 = vmul.f32 %v7455, 1.442695
      %v7644 = vpow.pop %v7643
      %v7645 = vmul.f32 %v7456, 1.442695
      %v7646 = vpow.pop %v7645
      %v7647 = vmul.f32 %v7457, 1.442695
      %v7648 = vpow.pop %v7647
      %v7649 = vmul.f32 %v7458, 1.442695
      %v7650 = vpow.pop %v7649
      %v7651 = vmul.f32 %v7459, 1.442695
      %v7652 = vpow.pop %v7651
      %v7653 = vmul.f32 %v7460, 1.442695
      %v7654 = vpow.pop %v7653
      %v7655 = vmul.f32 %v7461, 1.442695
      %v7656 = vpow.pop %v7655
      %v7657 = vmul.f32 %v7462, 1.442695
      %v7658 = vpow.pop %v7657
      %v7659 = vmul.f32 %v7463, 1.442695
      %v7660 = vpow.pop %v7659
      %v7661 = vmul.f32 %v7464, 1.442695
      %v7662 = vpow.pop %v7661
      %v7663 = vmul.f32 %v7465, 1.442695
      %v7664 = vpow.pop %v7663
      %v7665 = vmul.f32 %v7466, 1.442695
      %v7666 = vpow.pop %v7665
      %v7667 = vmul.f32 %v7467, 1.442695
      %v7668 = vpow.pop %v7667
      %v7669 = vmul.f32 %v7468, 1.442695
      %v7670 = vpow.pop %v7669
      %v7671 = vmul.f32 %v7469, 1.442695
      %v7672 = vpow.pop %v7671
      %v7673 = vmul.f32 %v7470, 1.442695
      %v7674 = vpow.pop %v7673
      %v7675 = vmul.f32 %v7471, 1.442695
      %v7676 = vpow.pop %v7675
      %v7677 = vmul.f32 %v7472, 1.442695
      %v7678 = vpow.pop %v7677
      %v7679 = vmul.f32 %v7473, 1.442695
      %v7680 = vpow.pop %v7679
      %v7681 = vmul.f32 %v7474, 1.442695
      %v7682 = vpow.pop %v7681
      %v7683 = vmul.f32 %v7475, 1.442695
      %v7684 = vpow.pop %v7683
      %v7685 = vmul.f32 %v7476, 1.442695
      %v7686 = vpow.pop %v7685
      %v7687 = vmul.f32 %v7477, 1.442695
      %v7688 = vpow.pop %v7687
      %v7689 = vmul.f32 %v7478, 1.442695
      %v7690 = vpow.pop %v7689
      %v7691 = vmul.f32 %v7479, 1.442695
      %v7692 = vpow.pop %v7691
      %v7693 = vmul.f32 %v7480, 1.442695
      %v7694 = vpow.pop %v7693
      %v7695 = vmul.f32 %v7481, 1.442695
      %v7696 = vpow.pop %v7695
      %v7697 = vmul.f32 %v7482, 1.442695
      %v7698 = vpow.pop %v7697
      %v7699 = vmul.f32 %v7483, 1.442695
      %v7700 = vpow.pop %v7699
      %v7701 = vmul.f32 %v7484, 1.442695
      %v7702 = vpow.pop %v7701
      %v7703 = vmul.f32 %v7485, 1.442695
      %v7704 = vpow.pop %v7703
      %v7705 = vmul.f32 %v7486, 1.442695
      %v7706 = vpow.pop %v7705
      %v7707 = vmul.f32 %v7487, 1.442695
      %v7708 = vpow.pop %v7707
      %v7709 = vmul.f32 %v7488, 1.442695
      %v7710 = vpow.pop %v7709
      %v7711 = vmul.f32 %v7489, 1.442695
      %v7712 = vpow.pop %v7711
      %v7713 = vmul.f32 %v7490, 1.442695
      %v7714 = vpow.pop %v7713
      %v7715 = vmul.f32 %v7491, 1.442695
      %v7716 = vpow.pop %v7715
      %v7717 = vmul.f32 %v7492, 1.442695
      %v7718 = vpow.pop %v7717
      %v7719 = vmul.f32 %v7493, 1.442695
      %v7720 = vpow.pop %v7719
      %v7721 = vmul.f32 %v7494, 1.442695
      %v7722 = vpow.pop %v7721
      %v7723 = vmul.f32 %v7495, 1.442695
      %v7724 = vpow.pop %v7723
      %v7725 = vmul.f32 %v7496, 1.442695
      %v7726 = vpow.pop %v7725
      %v7727 = vmul.f32 %v7497, 1.442695
      %v7728 = vpow.pop %v7727
      %v7729 = vmul.f32 %v7498, 1.442695
      %v7730 = vpow.pop %v7729
      %v7731 = vmul.f32 %v7499, 1.442695
      %v7732 = vpow.pop %v7731
      %v7733 = vmul.f32 %v7500, 1.442695
      %v7734 = vpow.pop %v7733
      %v7735 = vmul.f32 %v7501, 1.442695
      %v7736 = vpow.pop %v7735
      %v7737 = vmul.f32 %v7502, 1.442695
      %v7738 = vpow.pop %v7737
      %v7739 = vmul.f32 %v7503, 1.442695
      %v7740 = vpow.pop %v7739
      %v7741 = vmul.f32 %v7504, 1.442695
      %v7742 = vpow.pop %v7741
      %v7743 = vmul.f32 %v7505, 1.442695
      %v7744 = vpow.pop %v7743
      %v7745 = vmul.f32 %v7506, 1.442695
      %v7746 = vpow.pop %v7745
      %v7747 = vmul.f32 %v7507, 1.442695
      %v7748 = vpow.pop %v7747
      %v7749 = vmul.f32 %v7508, 1.442695
      %v7750 = vpow.pop %v7749
      %v7751 = vmul.f32 %v7509, 1.442695
      %v7752 = vpow.pop %v7751
      %v7753 = vmul.f32 %v7510, 1.442695
      %v7754 = vpow.pop %v7753
      %v7755 = vmul.f32 %v7511, 1.442695
      %v7756 = vpow.pop %v7755
      %v7757 = vmul.f32 %v7512, 1.442695
      %v7758 = vpow.pop %v7757
      %v7759 = vmul.f32 %v7513, 1.442695
      %v7760 = vpow.pop %v7759
      %v7761 = vmul.f32 %v7514, 1.442695
      %v7762 = vpow.pop %v7761
      %v7763 = vmul.f32 %v7515, 1.442695
      %v7764 = vpow.pop %v7763
      %v7765 = vmul.f32 %v7516, 1.442695
      %v7766 = vpow.pop %v7765
      %v7767 = vmul.f32 %v7517, 1.442695
      %v7768 = vpow.pop %v7767
      %v7769 = vmul.f32 %v7518, 1.442695
      %v7770 = vpow.pop %v7769
      %v7771 = vmul.f32 %v7519, 1.442695
      %v7772 = vpow.pop %v7771
      %v7773 = vmul.f32 %v7520, 1.442695
      %v7774 = vpow.pop %v7773
      %v7775 = vmul.f32 %v7521, 1.442695
      %v7776 = vpow.pop %v7775
      %v7777 = vmul.f32 %v7522, 1.442695
      %v7778 = vpow.pop %v7777
      %v7779 = vadd.f32 %v7524, %v7526
      %7780 = vadd.xlane.f32.xlu0 %v7779
      %v7781 = vpop.xlane.xlu0 %7780
      %v7782 = vadd.f32 %v7528, %v7530
      %7783 = vadd.xlane.f32.xlu0 %v7782
      %v7784 = vpop.xlane.xlu0 %7783
      %v7785 = vadd.f32 %v7532, %v7534
      %7786 = vadd.xlane.f32.xlu0 %v7785
      %v7787 = vpop.xlane.xlu0 %7786
      %v7788 = vadd.f32 %v7536, %v7538
      %7789 = vadd.xlane.f32.xlu0 %v7788
      %v7790 = vpop.xlane.xlu0 %7789
      %v7791 = vadd.f32 %v7540, %v7542
      %7792 = vadd.xlane.f32.xlu0 %v7791
      %v7793 = vpop.xlane.xlu0 %7792
      %v7794 = vadd.f32 %v7544, %v7546
      %7795 = vadd.xlane.f32.xlu0 %v7794
      %v7796 = vpop.xlane.xlu0 %7795
      %v7797 = vadd.f32 %v7548, %v7550
      %7798 = vadd.xlane.f32.xlu0 %v7797
      %v7799 = vpop.xlane.xlu0 %7798
      %v7800 = vadd.f32 %v7552, %v7554
      %7801 = vadd.xlane.f32.xlu0 %v7800
      %v7802 = vpop.xlane.xlu0 %7801
      %v7803 = vadd.f32 %v7556, %v7558
      %7804 = vadd.xlane.f32.xlu0 %v7803
      %v7805 = vpop.xlane.xlu0 %7804
      %v7806 = vadd.f32 %v7560, %v7562
      %7807 = vadd.xlane.f32.xlu0 %v7806
      %v7808 = vpop.xlane.xlu0 %7807
      %v7809 = vadd.f32 %v7564, %v7566
      %7810 = vadd.xlane.f32.xlu0 %v7809
      %v7811 = vpop.xlane.xlu0 %7810
      %v7812 = vadd.f32 %v7568, %v7570
      %7813 = vadd.xlane.f32.xlu0 %v7812
      %v7814 = vpop.xlane.xlu0 %7813
      %v7815 = vadd.f32 %v7572, %v7574
      %7816 = vadd.xlane.f32.xlu0 %v7815
      %v7817 = vpop.xlane.xlu0 %7816
      %v7818 = vadd.f32 %v7576, %v7578
      %7819 = vadd.xlane.f32.xlu0 %v7818
      %v7820 = vpop.xlane.xlu0 %7819
      %v7821 = vadd.f32 %v7580, %v7582
      %7822 = vadd.xlane.f32.xlu0 %v7821
      %v7823 = vpop.xlane.xlu0 %7822
      %v7824 = vadd.f32 %v7584, %v7586
      %7825 = vadd.xlane.f32.xlu0 %v7824
      %v7826 = vpop.xlane.xlu0 %7825
      %v7827 = vadd.f32 %v7588, %v7590
      %7828 = vadd.xlane.f32.xlu0 %v7827
      %v7829 = vpop.xlane.xlu0 %7828
      %v7830 = vadd.f32 %v7592, %v7594
      %7831 = vadd.xlane.f32.xlu0 %v7830
      %v7832 = vpop.xlane.xlu0 %7831
      %v7833 = vadd.f32 %v7596, %v7598
      %7834 = vadd.xlane.f32.xlu0 %v7833
      %v7835 = vpop.xlane.xlu0 %7834
      %v7836 = vadd.f32 %v7600, %v7602
      %7837 = vadd.xlane.f32.xlu0 %v7836
      %v7838 = vpop.xlane.xlu0 %7837
      %v7839 = vadd.f32 %v7604, %v7606
      %7840 = vadd.xlane.f32.xlu0 %v7839
      %v7841 = vpop.xlane.xlu0 %7840
      %v7842 = vadd.f32 %v7608, %v7610
      %7843 = vadd.xlane.f32.xlu0 %v7842
      %v7844 = vpop.xlane.xlu0 %7843
      %v7845 = vadd.f32 %v7612, %v7614
      %7846 = vadd.xlane.f32.xlu0 %v7845
      %v7847 = vpop.xlane.xlu0 %7846
      %v7848 = vadd.f32 %v7616, %v7618
      %7849 = vadd.xlane.f32.xlu0 %v7848
      %v7850 = vpop.xlane.xlu0 %7849
      %v7851 = vadd.f32 %v7620, %v7622
      %7852 = vadd.xlane.f32.xlu0 %v7851
      %v7853 = vpop.xlane.xlu0 %7852
      %v7854 = vadd.f32 %v7624, %v7626
      %7855 = vadd.xlane.f32.xlu0 %v7854
      %v7856 = vpop.xlane.xlu0 %7855
      %v7857 = vadd.f32 %v7628, %v7630
      %7858 = vadd.xlane.f32.xlu0 %v7857
      %v7859 = vpop.xlane.xlu0 %7858
      %v7860 = vadd.f32 %v7632, %v7634
      %7861 = vadd.xlane.f32.xlu0 %v7860
      %v7862 = vpop.xlane.xlu0 %7861
      %v7863 = vadd.f32 %v7636, %v7638
      %7864 = vadd.xlane.f32.xlu0 %v7863
      %v7865 = vpop.xlane.xlu0 %7864
      %v7866 = vadd.f32 %v7640, %v7642
      %7867 = vadd.xlane.f32.xlu0 %v7866
      %v7868 = vpop.xlane.xlu0 %7867
      %v7869 = vadd.f32 %v7644, %v7646
      %7870 = vadd.xlane.f32.xlu0 %v7869
      %v7871 = vpop.xlane.xlu0 %7870
      %v7872 = vadd.f32 %v7648, %v7650
      %7873 = vadd.xlane.f32.xlu0 %v7872
      %v7874 = vpop.xlane.xlu0 %7873
      %v7875 = vadd.f32 %v7652, %v7654
      %7876 = vadd.xlane.f32.xlu0 %v7875
      %v7877 = vpop.xlane.xlu0 %7876
      %v7878 = vadd.f32 %v7656, %v7658
      %7879 = vadd.xlane.f32.xlu0 %v7878
      %v7880 = vpop.xlane.xlu0 %7879
      %v7881 = vadd.f32 %v7660, %v7662
      %7882 = vadd.xlane.f32.xlu0 %v7881
      %v7883 = vpop.xlane.xlu0 %7882
      %v7884 = vadd.f32 %v7664, %v7666
      %7885 = vadd.xlane.f32.xlu0 %v7884
      %v7886 = vpop.xlane.xlu0 %7885
      %v7887 = vadd.f32 %v7668, %v7670
      %7888 = vadd.xlane.f32.xlu0 %v7887
      %v7889 = vpop.xlane.xlu0 %7888
      %v7890 = vadd.f32 %v7672, %v7674
      %7891 = vadd.xlane.f32.xlu0 %v7890
      %v7892 = vpop.xlane.xlu0 %7891
      %v7893 = vadd.f32 %v7676, %v7678
      %7894 = vadd.xlane.f32.xlu0 %v7893
      %v7895 = vpop.xlane.xlu0 %7894
      %v7896 = vadd.f32 %v7680, %v7682
      %7897 = vadd.xlane.f32.xlu0 %v7896
      %v7898 = vpop.xlane.xlu0 %7897
      %v7899 = vadd.f32 %v7684, %v7686
      %7900 = vadd.xlane.f32.xlu0 %v7899
      %v7901 = vpop.xlane.xlu0 %7900
      %v7902 = vadd.f32 %v7688, %v7690
      %7903 = vadd.xlane.f32.xlu0 %v7902
      %v7904 = vpop.xlane.xlu0 %7903
      %v7905 = vadd.f32 %v7692, %v7694
      %7906 = vadd.xlane.f32.xlu0 %v7905
      %v7907 = vpop.xlane.xlu0 %7906
      %v7908 = vadd.f32 %v7696, %v7698
      %7909 = vadd.xlane.f32.xlu0 %v7908
      %v7910 = vpop.xlane.xlu0 %7909
      %v7911 = vadd.f32 %v7700, %v7702
      %7912 = vadd.xlane.f32.xlu0 %v7911
      %v7913 = vpop.xlane.xlu0 %7912
      %v7914 = vadd.f32 %v7704, %v7706
      %7915 = vadd.xlane.f32.xlu0 %v7914
      %v7916 = vpop.xlane.xlu0 %7915
      %v7917 = vadd.f32 %v7708, %v7710
      %7918 = vadd.xlane.f32.xlu0 %v7917
      %v7919 = vpop.xlane.xlu0 %7918
      %v7920 = vadd.f32 %v7712, %v7714
      %7921 = vadd.xlane.f32.xlu0 %v7920
      %v7922 = vpop.xlane.xlu0 %7921
      %v7923 = vadd.f32 %v7716, %v7718
      %7924 = vadd.xlane.f32.xlu0 %v7923
      %v7925 = vpop.xlane.xlu0 %7924
      %v7926 = vadd.f32 %v7720, %v7722
      %7927 = vadd.xlane.f32.xlu0 %v7926
      %v7928 = vpop.xlane.xlu0 %7927
      %v7929 = vadd.f32 %v7724, %v7726
      %7930 = vadd.xlane.f32.xlu0 %v7929
      %v7931 = vpop.xlane.xlu0 %7930
      %v7932 = vadd.f32 %v7728, %v7730
      %7933 = vadd.xlane.f32.xlu0 %v7932
      %v7934 = vpop.xlane.xlu0 %7933
      %v7935 = vadd.f32 %v7732, %v7734
      %7936 = vadd.xlane.f32.xlu0 %v7935
      %v7937 = vpop.xlane.xlu0 %7936
      %v7938 = vadd.f32 %v7736, %v7738
      %7939 = vadd.xlane.f32.xlu0 %v7938
      %v7940 = vpop.xlane.xlu0 %7939
      %v7941 = vadd.f32 %v7740, %v7742
      %7942 = vadd.xlane.f32.xlu0 %v7941
      %v7943 = vpop.xlane.xlu0 %7942
      %v7944 = vadd.f32 %v7744, %v7746
      %7945 = vadd.xlane.f32.xlu0 %v7944
      %v7946 = vpop.xlane.xlu0 %7945
      %v7947 = vadd.f32 %v7748, %v7750
      %7948 = vadd.xlane.f32.xlu0 %v7947
      %v7949 = vpop.xlane.xlu0 %7948
      %v7950 = vadd.f32 %v7752, %v7754
      %7951 = vadd.xlane.f32.xlu0 %v7950
      %v7952 = vpop.xlane.xlu0 %7951
      %v7953 = vadd.f32 %v7756, %v7758
      %7954 = vadd.xlane.f32.xlu0 %v7953
      %v7955 = vpop.xlane.xlu0 %7954
      %v7956 = vadd.f32 %v7760, %v7762
      %7957 = vadd.xlane.f32.xlu0 %v7956
      %v7958 = vpop.xlane.xlu0 %7957
      %v7959 = vadd.f32 %v7764, %v7766
      %7960 = vadd.xlane.f32.xlu0 %v7959
      %v7961 = vpop.xlane.xlu0 %7960
      %v7962 = vadd.f32 %v7768, %v7770
      %7963 = vadd.xlane.f32.xlu0 %v7962
      %v7964 = vpop.xlane.xlu0 %7963
      %v7965 = vadd.f32 %v7772, %v7774
      %7966 = vadd.xlane.f32.xlu0 %v7965
      %v7967 = vpop.xlane.xlu0 %7966
      %v7968 = vadd.f32 %v7776, %v7778
      %7969 = vadd.xlane.f32.xlu0 %v7968
      %v7970 = vpop.xlane.xlu0 %7969
      %v7971 = vrcp.pop %v7781
      %v7972 = vrcp.pop %v7784
      %v7973 = vrcp.pop %v7787
      %v7974 = vrcp.pop %v7790
      %v7975 = vrcp.pop %v7793
      %v7976 = vrcp.pop %v7796
      %v7977 = vrcp.pop %v7799
      %v7978 = vrcp.pop %v7802
      %v7979 = vrcp.pop %v7805
      %v7980 = vrcp.pop %v7808
      %v7981 = vrcp.pop %v7811
      %v7982 = vrcp.pop %v7814
      %v7983 = vrcp.pop %v7817
      %v7984 = vrcp.pop %v7820
      %v7985 = vrcp.pop %v7823
      %v7986 = vrcp.pop %v7826
      %v7987 = vrcp.pop %v7829
      %v7988 = vrcp.pop %v7832
      %v7989 = vrcp.pop %v7835
      %v7990 = vrcp.pop %v7838
      %v7991 = vrcp.pop %v7841
      %v7992 = vrcp.pop %v7844
      %v7993 = vrcp.pop %v7847
      %v7994 = vrcp.pop %v7850
      %v7995 = vrcp.pop %v7853
      %v7996 = vrcp.pop %v7856
      %v7997 = vrcp.pop %v7859
      %v7998 = vrcp.pop %v7862
      %v7999 = vrcp.pop %v7865
      %v8000 = vrcp.pop %v7868
      %v8001 = vrcp.pop %v7871
      %v8002 = vrcp.pop %v7874
      %v8003 = vrcp.pop %v7877
      %v8004 = vrcp.pop %v7880
      %v8005 = vrcp.pop %v7883
      %v8006 = vrcp.pop %v7886
      %v8007 = vrcp.pop %v7889
      %v8008 = vrcp.pop %v7892
      %v8009 = vrcp.pop %v7895
      %v8010 = vrcp.pop %v7898
      %v8011 = vrcp.pop %v7901
      %v8012 = vrcp.pop %v7904
      %v8013 = vrcp.pop %v7907
      %v8014 = vrcp.pop %v7910
      %v8015 = vrcp.pop %v7913
      %v8016 = vrcp.pop %v7916
      %v8017 = vrcp.pop %v7919
      %v8018 = vrcp.pop %v7922
      %v8019 = vrcp.pop %v7925
      %v8020 = vrcp.pop %v7928
      %v8021 = vrcp.pop %v7931
      %v8022 = vrcp.pop %v7934
      %v8023 = vrcp.pop %v7937
      %v8024 = vrcp.pop %v7940
      %v8025 = vrcp.pop %v7943
      %v8026 = vrcp.pop %v7946
      %v8027 = vrcp.pop %v7949
      %v8028 = vrcp.pop %v7952
      %v8029 = vrcp.pop %v7955
      %v8030 = vrcp.pop %v7958
      %v8031 = vrcp.pop %v7961
      %v8032 = vrcp.pop %v7964
      %v8033 = vrcp.pop %v7967
      %v8034 = vrcp.pop %v7970
      %v8035 = vmul.f32 %v7524, %v7971
      %v8036 = vmul.f32 %v7526, %v7971
      %v8037 = vmul.f32 %v7528, %v7972
      %v8038 = vmul.f32 %v7530, %v7972
      %v8039 = vmul.f32 %v7532, %v7973
      %v8040 = vmul.f32 %v7534, %v7973
      %v8041 = vmul.f32 %v7536, %v7974
      %v8042 = vmul.f32 %v7538, %v7974
      %v8043 = vmul.f32 %v7540, %v7975
      %v8044 = vmul.f32 %v7542, %v7975
      %v8045 = vmul.f32 %v7544, %v7976
      %v8046 = vmul.f32 %v7546, %v7976
      %v8047 = vmul.f32 %v7548, %v7977
      %v8048 = vmul.f32 %v7550, %v7977
      %v8049 = vmul.f32 %v7552, %v7978
      %v8050 = vmul.f32 %v7554, %v7978
      %v8051 = vmul.f32 %v7556, %v7979
      %v8052 = vmul.f32 %v7558, %v7979
      %v8053 = vmul.f32 %v7560, %v7980
      %v8054 = vmul.f32 %v7562, %v7980
      %v8055 = vmul.f32 %v7564, %v7981
      %v8056 = vmul.f32 %v7566, %v7981
      %v8057 = vmul.f32 %v7568, %v7982
      %v8058 = vmul.f32 %v7570, %v7982
      %v8059 = vmul.f32 %v7572, %v7983
      %v8060 = vmul.f32 %v7574, %v7983
      %v8061 = vmul.f32 %v7576, %v7984
      %v8062 = vmul.f32 %v7578, %v7984
      %v8063 = vmul.f32 %v7580, %v7985
      %v8064 = vmul.f32 %v7582, %v7985
      %v8065 = vmul.f32 %v7584, %v7986
      %v8066 = vmul.f32 %v7586, %v7986
      %v8067 = vmul.f32 %v7588, %v7987
      %v8068 = vmul.f32 %v7590, %v7987
      %v8069 = vmul.f32 %v7592, %v7988
      %v8070 = vmul.f32 %v7594, %v7988
      %v8071 = vmul.f32 %v7596, %v7989
      %v8072 = vmul.f32 %v7598, %v7989
      %v8073 = vmul.f32 %v7600, %v7990
      %v8074 = vmul.f32 %v7602, %v7990
      %v8075 = vmul.f32 %v7604, %v7991
      %v8076 = vmul.f32 %v7606, %v7991
      %v8077 = vmul.f32 %v7608, %v7992
      %v8078 = vmul.f32 %v7610, %v7992
      %v8079 = vmul.f32 %v7612, %v7993
      %v8080 = vmul.f32 %v7614, %v7993
      %v8081 = vmul.f32 %v7616, %v7994
      %v8082 = vmul.f32 %v7618, %v7994
      %v8083 = vmul.f32 %v7620, %v7995
      %v8084 = vmul.f32 %v7622, %v7995
      %v8085 = vmul.f32 %v7624, %v7996
      %v8086 = vmul.f32 %v7626, %v7996
      %v8087 = vmul.f32 %v7628, %v7997
      %v8088 = vmul.f32 %v7630, %v7997
      %v8089 = vmul.f32 %v7632, %v7998
      %v8090 = vmul.f32 %v7634, %v7998
      %v8091 = vmul.f32 %v7636, %v7999
      %v8092 = vmul.f32 %v7638, %v7999
      %v8093 = vmul.f32 %v7640, %v8000
      %v8094 = vmul.f32 %v7642, %v8000
      %v8095 = vmul.f32 %v7644, %v8001
      %v8096 = vmul.f32 %v7646, %v8001
      %v8097 = vmul.f32 %v7648, %v8002
      %v8098 = vmul.f32 %v7650, %v8002
      %v8099 = vmul.f32 %v7652, %v8003
      %v8100 = vmul.f32 %v7654, %v8003
      %v8101 = vmul.f32 %v7656, %v8004
      %v8102 = vmul.f32 %v7658, %v8004
      %v8103 = vmul.f32 %v7660, %v8005
      %v8104 = vmul.f32 %v7662, %v8005
      %v8105 = vmul.f32 %v7664, %v8006
      %v8106 = vmul.f32 %v7666, %v8006
      %v8107 = vmul.f32 %v7668, %v8007
      %v8108 = vmul.f32 %v7670, %v8007
      %v8109 = vmul.f32 %v7672, %v8008
      %v8110 = vmul.f32 %v7674, %v8008
      %v8111 = vmul.f32 %v7676, %v8009
      %v8112 = vmul.f32 %v7678, %v8009
      %v8113 = vmul.f32 %v7680, %v8010
      %v8114 = vmul.f32 %v7682, %v8010
      %v8115 = vmul.f32 %v7684, %v8011
      %v8116 = vmul.f32 %v7686, %v8011
      %v8117 = vmul.f32 %v7688, %v8012
      %v8118 = vmul.f32 %v7690, %v8012
      %v8119 = vmul.f32 %v7692, %v8013
      %v8120 = vmul.f32 %v7694, %v8013
      %v8121 = vmul.f32 %v7696, %v8014
      %v8122 = vmul.f32 %v7698, %v8014
      %v8123 = vmul.f32 %v7700, %v8015
      %v8124 = vmul.f32 %v7702, %v8015
      %v8125 = vmul.f32 %v7704, %v8016
      %v8126 = vmul.f32 %v7706, %v8016
      %v8127 = vmul.f32 %v7708, %v8017
      %v8128 = vmul.f32 %v7710, %v8017
      %v8129 = vmul.f32 %v7712, %v8018
      %v8130 = vmul.f32 %v7714, %v8018
      %v8131 = vmul.f32 %v7716, %v8019
      %v8132 = vmul.f32 %v7718, %v8019
      %v8133 = vmul.f32 %v7720, %v8020
      %v8134 = vmul.f32 %v7722, %v8020
      %v8135 = vmul.f32 %v7724, %v8021
      %v8136 = vmul.f32 %v7726, %v8021
      %v8137 = vmul.f32 %v7728, %v8022
      %v8138 = vmul.f32 %v7730, %v8022
      %v8139 = vmul.f32 %v7732, %v8023
      %v8140 = vmul.f32 %v7734, %v8023
      %v8141 = vmul.f32 %v7736, %v8024
      %v8142 = vmul.f32 %v7738, %v8024
      %v8143 = vmul.f32 %v7740, %v8025
      %v8144 = vmul.f32 %v7742, %v8025
      %v8145 = vmul.f32 %v7744, %v8026
      %v8146 = vmul.f32 %v7746, %v8026
      %v8147 = vmul.f32 %v7748, %v8027
      %v8148 = vmul.f32 %v7750, %v8027
      %v8149 = vmul.f32 %v7752, %v8028
      %v8150 = vmul.f32 %v7754, %v8028
      %v8151 = vmul.f32 %v7756, %v8029
      %v8152 = vmul.f32 %v7758, %v8029
      %v8153 = vmul.f32 %v7760, %v8030
      %v8154 = vmul.f32 %v7762, %v8030
      %v8155 = vmul.f32 %v7764, %v8031
      %v8156 = vmul.f32 %v7766, %v8031
      %v8157 = vmul.f32 %v7768, %v8032
      %v8158 = vmul.f32 %v7770, %v8032
      %v8159 = vmul.f32 %v7772, %v8033
      %v8160 = vmul.f32 %v7774, %v8033
      %v8161 = vmul.f32 %v7776, %v8034
      %v8162 = vmul.f32 %v7778, %v8034
      %v8163 = vpack.c.bf16 %v8037, %v8035
      %v8164 = vpack.c.bf16 %v8038, %v8036
      %v8165 = vpack.c.bf16 %v8041, %v8039
      %v8166 = vpack.c.bf16 %v8042, %v8040
      %v8167 = vpack.c.bf16 %v8045, %v8043
      %v8168 = vpack.c.bf16 %v8046, %v8044
      %v8169 = vpack.c.bf16 %v8049, %v8047
      %v8170 = vpack.c.bf16 %v8050, %v8048
      %v8171 = vpack.c.bf16 %v8053, %v8051
      %v8172 = vpack.c.bf16 %v8054, %v8052
      %v8173 = vpack.c.bf16 %v8057, %v8055
      %v8174 = vpack.c.bf16 %v8058, %v8056
      %v8175 = vpack.c.bf16 %v8061, %v8059
      %v8176 = vpack.c.bf16 %v8062, %v8060
      %v8177 = vpack.c.bf16 %v8065, %v8063
      %v8178 = vpack.c.bf16 %v8066, %v8064
      %v8179 = vpack.c.bf16 %v8069, %v8067
      %v8180 = vpack.c.bf16 %v8070, %v8068
      %v8181 = vpack.c.bf16 %v8073, %v8071
      %v8182 = vpack.c.bf16 %v8074, %v8072
      %v8183 = vpack.c.bf16 %v8077, %v8075
      %v8184 = vpack.c.bf16 %v8078, %v8076
      %v8185 = vpack.c.bf16 %v8081, %v8079
      %v8186 = vpack.c.bf16 %v8082, %v8080
      %v8187 = vpack.c.bf16 %v8085, %v8083
      %v8188 = vpack.c.bf16 %v8086, %v8084
      %v8189 = vpack.c.bf16 %v8089, %v8087
      %v8190 = vpack.c.bf16 %v8090, %v8088
      %v8191 = vpack.c.bf16 %v8093, %v8091
      %v8192 = vpack.c.bf16 %v8094, %v8092
      %v8193 = vpack.c.bf16 %v8097, %v8095
      %v8194 = vpack.c.bf16 %v8098, %v8096
      %v8195 = vpack.c.bf16 %v8101, %v8099
      %v8196 = vpack.c.bf16 %v8102, %v8100
      %v8197 = vpack.c.bf16 %v8105, %v8103
      %v8198 = vpack.c.bf16 %v8106, %v8104
      %v8199 = vpack.c.bf16 %v8109, %v8107
      %v8200 = vpack.c.bf16 %v8110, %v8108
      %v8201 = vpack.c.bf16 %v8113, %v8111
      %v8202 = vpack.c.bf16 %v8114, %v8112
      %v8203 = vpack.c.bf16 %v8117, %v8115
      %v8204 = vpack.c.bf16 %v8118, %v8116
      %v8205 = vpack.c.bf16 %v8121, %v8119
      %v8206 = vpack.c.bf16 %v8122, %v8120
      %v8207 = vpack.c.bf16 %v8125, %v8123
      %v8208 = vpack.c.bf16 %v8126, %v8124
      %v8209 = vpack.c.bf16 %v8129, %v8127
      %v8210 = vpack.c.bf16 %v8130, %v8128
      %v8211 = vpack.c.bf16 %v8133, %v8131
      %v8212 = vpack.c.bf16 %v8134, %v8132
      %v8213 = vpack.c.bf16 %v8137, %v8135
      %v8214 = vpack.c.bf16 %v8138, %v8136
      %v8215 = vpack.c.bf16 %v8141, %v8139
      %v8216 = vpack.c.bf16 %v8142, %v8140
      %v8217 = vpack.c.bf16 %v8145, %v8143
      %v8218 = vpack.c.bf16 %v8146, %v8144
      %v8219 = vpack.c.bf16 %v8149, %v8147
      %v8220 = vpack.c.bf16 %v8150, %v8148
      %v8221 = vpack.c.bf16 %v8153, %v8151
      %v8222 = vpack.c.bf16 %v8154, %v8152
      %v8223 = vpack.c.bf16 %v8157, %v8155
      %v8224 = vpack.c.bf16 %v8158, %v8156
      %v8225 = vpack.c.bf16 %v8161, %v8159
      %v8226 = vpack.c.bf16 %v8162, %v8160
      %8227 = vrot.lane.b32.xlu0 %v2348, 80
      %v8228 = vpop.permute.xlu0 %8227
      %8229 = vrot.lane.b32.xlu0 %v2349, 80
      %v8230 = vpop.permute.xlu0 %8229
      %8231 = vrot.lane.b32.xlu0 %v2350, 80
      %v8232 = vpop.permute.xlu0 %8231
      %8233 = vrot.lane.b32.xlu0 %v2351, 80
      %v8234 = vpop.permute.xlu0 %8233
      %8235 = vrot.lane.b32.xlu0 %v2352, 80
      %v8236 = vpop.permute.xlu0 %8235
      %8237 = vrot.lane.b32.xlu0 %v2353, 80
      %v8238 = vpop.permute.xlu0 %8237
      %8239 = vrot.lane.b32.xlu0 %v2354, 80
      %v8240 = vpop.permute.xlu0 %8239
      %8241 = vrot.lane.b32.xlu0 %v2355, 80
      %v8242 = vpop.permute.xlu0 %8241
      %8243 = vrot.lane.b32.xlu0 %v2356, 80
      %v8244 = vpop.permute.xlu0 %8243
      %8245 = vrot.lane.b32.xlu0 %v2357, 80
      %v8246 = vpop.permute.xlu0 %8245
      %8247 = vrot.lane.b32.xlu0 %v2358, 80
      %v8248 = vpop.permute.xlu0 %8247
      %8249 = vrot.lane.b32.xlu0 %v2359, 80
      %v8250 = vpop.permute.xlu0 %8249
      %8251 = vrot.lane.b32.xlu0 %v2360, 80
      %v8252 = vpop.permute.xlu0 %8251
      %8253 = vrot.lane.b32.xlu0 %v2361, 80
      %v8254 = vpop.permute.xlu0 %8253
      %8255 = vrot.lane.b32.xlu0 %v2362, 80
      %v8256 = vpop.permute.xlu0 %8255
      %8257 = vrot.lane.b32.xlu0 %v2363, 80
      %v8258 = vpop.permute.xlu0 %8257
      %8275 = vmatprep.subr.bf16.mxu0 0
      %8276 = vmatpush1.bf16.msra.mxu0 %v8228
      %8277 = vmatprep.subr.bf16.mxu0 0
      %8278 = vmatpush1.bf16.msra.mxu0 %v8230
      %8279 = vmatprep.subr.bf16.mxu0 0
      %8280 = vmatpush1.bf16.msra.mxu0 %v8232
      %8281 = vmatprep.subr.bf16.mxu0 0
      %8282 = vmatpush1.bf16.msra.mxu0 %v8234
      %8283 = vmatprep.subr.bf16.mxu0 0
      %8284 = vmatpush1.bf16.msra.mxu0 %v8236
      %8285 = vmatprep.subr.bf16.mxu0 0
      %8286 = vmatpush1.bf16.msra.mxu0 %v8238
      %8287 = vmatprep.subr.bf16.mxu0 0
      %8288 = vmatpush1.bf16.msra.mxu0 %v8240
      %8289 = vmatprep.subr.bf16.mxu0 0
      %8290 = vmatpush1.bf16.msra.mxu0 %v8242
      %8291 = vmatprep.subr.bf16.mxu0 0
      %8292 = vmatpush1.bf16.msra.mxu0 %v8244
      %8293 = vmatprep.subr.bf16.mxu0 0
      %8294 = vmatpush1.bf16.msra.mxu0 %v8246
      %8295 = vmatprep.subr.bf16.mxu0 0
      %8296 = vmatpush1.bf16.msra.mxu0 %v8248
      %8297 = vmatprep.subr.bf16.mxu0 0
      %8298 = vmatpush1.bf16.msra.mxu0 %v8250
      %8299 = vmatprep.subr.bf16.mxu0 0
      %8300 = vmatpush1.bf16.msra.mxu0 %v8252
      %8301 = vmatprep.subr.bf16.mxu0 0
      %8302 = vmatpush1.bf16.msra.mxu0 %v8254
      %8303 = vmatprep.subr.bf16.mxu0 0
      %8304 = vmatpush1.bf16.msra.mxu0 %v8256
      %8305 = vmatprep.subr.bf16.mxu0 0
      %8306 = vmatpush1.bf16.msra.mxu0 %v8258
      %8307 = vmatprep.mubr.bf16.mxu0 %v8164
      %8308 = vmatmul.mubr.bf16.gmra.mrb[0].mxu0 %v8163
      %v8309 = vpop.f32.mrb[0].mxu0
      %v8310 = vadd.f32 0.0, %v8309
      %v8311 = vpop.f32.mrb[0].mxu0
      %v8312 = vpop.f32.mrb[0].mxu0
      %v8313 = vadd.f32 0.0, %v8312
      %v8314 = vpop.f32.mrb[0].mxu0
      %8315 = vmatprep.mubr.bf16.mxu0 %v8166
      %8316 = vmatmul.mubr.bf16.gmra.mrb[0].mxu0 %v8165
      %v8317 = vpop.f32.mrb[0].mxu0
      %v8318 = vadd.f32 0.0, %v8317
      %v8319 = vpop.f32.mrb[0].mxu0
      %v8320 = vpop.f32.mrb[0].mxu0
      %v8321 = vadd.f32 0.0, %v8320
      %v8322 = vpop.f32.mrb[0].mxu0
      %8323 = vmatprep.mubr.bf16.mxu0 %v8168
      %8324 = vmatmul.mubr.bf16.gmra.mrb[0].mxu0 %v8167
      %v8325 = vpop.f32.mrb[0].mxu0
      %v8326 = vadd.f32 0.0, %v8325
      %v8327 = vpop.f32.mrb[0].mxu0
      %v8328 = vpop.f32.mrb[0].mxu0
      %v8329 = vadd.f32 0.0, %v8328
      %v8330 = vpop.f32.mrb[0].mxu0
      %8331 = vmatprep.mubr.bf16.mxu0 %v8170
      %8332 = vmatmul.mubr.bf16.gmra.mrb[0].mxu0 %v8169
      %v8333 = vpop.f32.mrb[0].mxu0
      %v8334 = vadd.f32 0.0, %v8333
      %v8335 = vpop.f32.mrb[0].mxu0
      %v8336 = vpop.f32.mrb[0].mxu0
      %v8337 = vadd.f32 0.0, %v8336
      %v8338 = vpop.f32.mrb[0].mxu0
      %8339 = vmatprep.mubr.bf16.mxu0 %v8172
      %8340 = vmatmul.mubr.bf16.gmra.mrb[0].mxu0 %v8171
      %v8341 = vpop.f32.mrb[0].mxu0
      %v8342 = vadd.f32 0.0, %v8341
      %v8343 = vpop.f32.mrb[0].mxu0
      %v8344 = vpop.f32.mrb[0].mxu0
      %v8345 = vadd.f32 0.0, %v8344
      %v8346 = vpop.f32.mrb[0].mxu0
      %8347 = vmatprep.mubr.bf16.mxu0 %v8174
      %8348 = vmatmul.mubr.bf16.gmra.mrb[0].mxu0 %v8173
      %v8349 = vpop.f32.mrb[0].mxu0
      %v8350 = vadd.f32 0.0, %v8349
      %v8351 = vpop.f32.mrb[0].mxu0
      %v8352 = vpop.f32.mrb[0].mxu0
      %v8353 = vadd.f32 0.0, %v8352
      %v8354 = vpop.f32.mrb[0].mxu0
      %8355 = vmatprep.mubr.bf16.mxu0 %v8176
      %8356 = vmatmul.mubr.bf16.gmra.mrb[0].mxu0 %v8175
      %v8357 = vpop.f32.mrb[0].mxu0
      %v8358 = vadd.f32 0.0, %v8357
      %v8359 = vpop.f32.mrb[0].mxu0
      %v8360 = vpop.f32.mrb[0].mxu0
      %v8361 = vadd.f32 0.0, %v8360
      %v8362 = vpop.f32.mrb[0].mxu0
      %8363 = vmatprep.mubr.bf16.mxu0 %v8178
      %8364 = vmatmul.mubr.bf16.gmra.mrb[0].mxu0 %v8177
      %v8365 = vpop.f32.mrb[0].mxu0
      %v8366 = vadd.f32 0.0, %v8365
      %v8367 = vpop.f32.mrb[0].mxu0
      %v8368 = vpop.f32.mrb[0].mxu0
      %v8369 = vadd.f32 0.0, %v8368
      %v8370 = vpop.f32.mrb[0].mxu0
      %8371 = vmatprep.mubr.bf16.mxu0 %v8180
      %8372 = vmatmul.mubr.bf16.gmra.mrb[0].mxu0 %v8179
      %v8373 = vpop.f32.mrb[0].mxu0
      %v8374 = vadd.f32 0.0, %v8373
      %v8375 = vpop.f32.mrb[0].mxu0
      %v8376 = vpop.f32.mrb[0].mxu0
      %v8377 = vadd.f32 0.0, %v8376
      %v8378 = vpop.f32.mrb[0].mxu0
      %8379 = vmatprep.mubr.bf16.mxu0 %v8182
      %8380 = vmatmul.mubr.bf16.gmra.mrb[0].mxu0 %v8181
      %v8381 = vpop.f32.mrb[0].mxu0
      %v8382 = vadd.f32 0.0, %v8381
      %v8383 = vpop.f32.mrb[0].mxu0
      %v8384 = vpop.f32.mrb[0].mxu0
      %v8385 = vadd.f32 0.0, %v8384
      %v8386 = vpop.f32.mrb[0].mxu0
      %8387 = vmatprep.mubr.bf16.mxu0 %v8184
      %8388 = vmatmul.mubr.bf16.gmra.mrb[0].mxu0 %v8183
      %v8389 = vpop.f32.mrb[0].mxu0
      %v8390 = vadd.f32 0.0, %v8389
      %v8391 = vpop.f32.mrb[0].mxu0
      %v8392 = vpop.f32.mrb[0].mxu0
      %v8393 = vadd.f32 0.0, %v8392
      %v8394 = vpop.f32.mrb[0].mxu0
      %8395 = vmatprep.mubr.bf16.mxu0 %v8186
      %8396 = vmatmul.mubr.bf16.gmra.mrb[0].mxu0 %v8185
      %v8397 = vpop.f32.mrb[0].mxu0
      %v8398 = vadd.f32 0.0, %v8397
      %v8399 = vpop.f32.mrb[0].mxu0
      %v8400 = vpop.f32.mrb[0].mxu0
      %v8401 = vadd.f32 0.0, %v8400
      %v8402 = vpop.f32.mrb[0].mxu0
      %8403 = vmatprep.mubr.bf16.mxu0 %v8188
      %8404 = vmatmul.mubr.bf16.gmra.mrb[0].mxu0 %v8187
      %v8405 = vpop.f32.mrb[0].mxu0
      %v8406 = vadd.f32 0.0, %v8405
      %v8407 = vpop.f32.mrb[0].mxu0
      %v8408 = vpop.f32.mrb[0].mxu0
      %v8409 = vadd.f32 0.0, %v8408
      %v8410 = vpop.f32.mrb[0].mxu0
      %8411 = vmatprep.mubr.bf16.mxu0 %v8190
      %8412 = vmatmul.mubr.bf16.gmra.mrb[0].mxu0 %v8189
      %v8413 = vpop.f32.mrb[0].mxu0
      %v8414 = vadd.f32 0.0, %v8413
      %v8415 = vpop.f32.mrb[0].mxu0
      %v8416 = vpop.f32.mrb[0].mxu0
      %v8417 = vadd.f32 0.0, %v8416
      %v8418 = vpop.f32.mrb[0].mxu0
      %8419 = vmatprep.mubr.bf16.mxu0 %v8192
      %8420 = vmatmul.mubr.bf16.gmra.mrb[0].mxu0 %v8191
      %v8421 = vpop.f32.mrb[0].mxu0
      %v8422 = vadd.f32 0.0, %v8421
      %v8423 = vpop.f32.mrb[0].mxu0
      %v8424 = vpop.f32.mrb[0].mxu0
      %v8425 = vadd.f32 0.0, %v8424
      %v8426 = vpop.f32.mrb[0].mxu0
      %8427 = vmatprep.mubr.bf16.mxu0 %v8194
      %8428 = vmatmul.mubr.bf16.gmra.mrb[0].mxu0 %v8193
      %v8429 = vpop.f32.mrb[0].mxu0
      %v8430 = vadd.f32 0.0, %v8429
      %v8431 = vpop.f32.mrb[0].mxu0
      %v8432 = vpop.f32.mrb[0].mxu0
      %v8433 = vadd.f32 0.0, %v8432
      %v8434 = vpop.f32.mrb[0].mxu0
      %8435 = vmatprep.mubr.bf16.mxu0 %v8196
      %8436 = vmatmul.mubr.bf16.gmra.mrb[0].mxu0 %v8195
      %v8437 = vpop.f32.mrb[0].mxu0
      %v8438 = vadd.f32 0.0, %v8437
      %v8439 = vpop.f32.mrb[0].mxu0
      %v8440 = vpop.f32.mrb[0].mxu0
      %v8441 = vadd.f32 0.0, %v8440
      %v8442 = vpop.f32.mrb[0].mxu0
      %8443 = vmatprep.mubr.bf16.mxu0 %v8198
      %8444 = vmatmul.mubr.bf16.gmra.mrb[0].mxu0 %v8197
      %v8445 = vpop.f32.mrb[0].mxu0
      %v8446 = vadd.f32 0.0, %v8445
      %v8447 = vpop.f32.mrb[0].mxu0
      %v8448 = vpop.f32.mrb[0].mxu0
      %v8449 = vadd.f32 0.0, %v8448
      %v8450 = vpop.f32.mrb[0].mxu0
      %8451 = vmatprep.mubr.bf16.mxu0 %v8200
      %8452 = vmatmul.mubr.bf16.gmra.mrb[0].mxu0 %v8199
      %v8453 = vpop.f32.mrb[0].mxu0
      %v8454 = vadd.f32 0.0, %v8453
      %v8455 = vpop.f32.mrb[0].mxu0
      %v8456 = vpop.f32.mrb[0].mxu0
      %v8457 = vadd.f32 0.0, %v8456
      %v8458 = vpop.f32.mrb[0].mxu0
      %8459 = vmatprep.mubr.bf16.mxu0 %v8202
      %8460 = vmatmul.mubr.bf16.gmra.mrb[0].mxu0 %v8201
      %v8461 = vpop.f32.mrb[0].mxu0
      %v8462 = vadd.f32 0.0, %v8461
      %v8463 = vpop.f32.mrb[0].mxu0
      %v8464 = vpop.f32.mrb[0].mxu0
      %v8465 = vadd.f32 0.0, %v8464
      %v8466 = vpop.f32.mrb[0].mxu0
      %8467 = vmatprep.mubr.bf16.mxu0 %v8204
      %8468 = vmatmul.mubr.bf16.gmra.mrb[0].mxu0 %v8203
      %v8469 = vpop.f32.mrb[0].mxu0
      %v8470 = vadd.f32 0.0, %v8469
      %v8471 = vpop.f32.mrb[0].mxu0
      %v8472 = vpop.f32.mrb[0].mxu0
      %v8473 = vadd.f32 0.0, %v8472
      %v8474 = vpop.f32.mrb[0].mxu0
      %8475 = vmatprep.mubr.bf16.mxu0 %v8206
      %8476 = vmatmul.mubr.bf16.gmra.mrb[0].mxu0 %v8205
      %v8477 = vpop.f32.mrb[0].mxu0
      %v8478 = vadd.f32 0.0, %v8477
      %v8479 = vpop.f32.mrb[0].mxu0
      %v8480 = vpop.f32.mrb[0].mxu0
      %v8481 = vadd.f32 0.0, %v8480
      %v8482 = vpop.f32.mrb[0].mxu0
      %8483 = vmatprep.mubr.bf16.mxu0 %v8208
      %8484 = vmatmul.mubr.bf16.gmra.mrb[0].mxu0 %v8207
      %v8485 = vpop.f32.mrb[0].mxu0
      %v8486 = vadd.f32 0.0, %v8485
      %v8487 = vpop.f32.mrb[0].mxu0
      %v8488 = vpop.f32.mrb[0].mxu0
      %v8489 = vadd.f32 0.0, %v8488
      %v8490 = vpop.f32.mrb[0].mxu0
      %8491 = vmatprep.mubr.bf16.mxu0 %v8210
      %8492 = vmatmul.mubr.bf16.gmra.mrb[0].mxu0 %v8209
      %v8493 = vpop.f32.mrb[0].mxu0
      %v8494 = vadd.f32 0.0, %v8493
      %v8495 = vpop.f32.mrb[0].mxu0
      %v8496 = vpop.f32.mrb[0].mxu0
      %v8497 = vadd.f32 0.0, %v8496
      %v8498 = vpop.f32.mrb[0].mxu0
      %8499 = vmatprep.mubr.bf16.mxu0 %v8212
      %8500 = vmatmul.mubr.bf16.gmra.mrb[0].mxu0 %v8211
      %v8501 = vpop.f32.mrb[0].mxu0
      %v8502 = vadd.f32 0.0, %v8501
      %v8503 = vpop.f32.mrb[0].mxu0
      %v8504 = vpop.f32.mrb[0].mxu0
      %v8505 = vadd.f32 0.0, %v8504
      %v8506 = vpop.f32.mrb[0].mxu0
      %8507 = vmatprep.mubr.bf16.mxu0 %v8214
      %8508 = vmatmul.mubr.bf16.gmra.mrb[0].mxu0 %v8213
      %v8509 = vpop.f32.mrb[0].mxu0
      %v8510 = vadd.f32 0.0, %v8509
      %v8511 = vpop.f32.mrb[0].mxu0
      %v8512 = vpop.f32.mrb[0].mxu0
      %v8513 = vadd.f32 0.0, %v8512
      %v8514 = vpop.f32.mrb[0].mxu0
      %8515 = vmatprep.mubr.bf16.mxu0 %v8216
      %8516 = vmatmul.mubr.bf16.gmra.mrb[0].mxu0 %v8215
      %v8517 = vpop.f32.mrb[0].mxu0
      %v8518 = vadd.f32 0.0, %v8517
      %v8519 = vpop.f32.mrb[0].mxu0
      %v8520 = vpop.f32.mrb[0].mxu0
      %v8521 = vadd.f32 0.0, %v8520
      %v8522 = vpop.f32.mrb[0].mxu0
      %8523 = vmatprep.mubr.bf16.mxu0 %v8218
      %8524 = vmatmul.mubr.bf16.gmra.mrb[0].mxu0 %v8217
      %v8525 = vpop.f32.mrb[0].mxu0
      %v8526 = vadd.f32 0.0, %v8525
      %v8527 = vpop.f32.mrb[0].mxu0
      %v8528 = vpop.f32.mrb[0].mxu0
      %v8529 = vadd.f32 0.0, %v8528
      %v8530 = vpop.f32.mrb[0].mxu0
      %8531 = vmatprep.mubr.bf16.mxu0 %v8220
      %8532 = vmatmul.mubr.bf16.gmra.mrb[0].mxu0 %v8219
      %v8533 = vpop.f32.mrb[0].mxu0
      %v8534 = vadd.f32 0.0, %v8533
      %v8535 = vpop.f32.mrb[0].mxu0
      %v8536 = vpop.f32.mrb[0].mxu0
      %v8537 = vadd.f32 0.0, %v8536
      %v8538 = vpop.f32.mrb[0].mxu0
      %8539 = vmatprep.mubr.bf16.mxu0 %v8222
      %8540 = vmatmul.mubr.bf16.gmra.mrb[0].mxu0 %v8221
      %v8541 = vpop.f32.mrb[0].mxu0
      %v8542 = vadd.f32 0.0, %v8541
      %v8543 = vpop.f32.mrb[0].mxu0
      %v8544 = vpop.f32.mrb[0].mxu0
      %v8545 = vadd.f32 0.0, %v8544
      %v8546 = vpop.f32.mrb[0].mxu0
      %8547 = vmatprep.mubr.bf16.mxu0 %v8224
      %8548 = vmatmul.mubr.bf16.gmra.mrb[0].mxu0 %v8223
      %v8549 = vpop.f32.mrb[0].mxu0
      %v8550 = vadd.f32 0.0, %v8549
      %v8551 = vpop.f32.mrb[0].mxu0
      %v8552 = vpop.f32.mrb[0].mxu0
      %v8553 = vadd.f32 0.0, %v8552
      %v8554 = vpop.f32.mrb[0].mxu0
      %8555 = vmatprep.mubr.bf16.mxu0 %v8226
      %8556 = vmatmul.mubr.bf16.gmra.mrb[0].mxu0 %v8225
      %v8557 = vpop.f32.mrb[0].mxu0
      %v8558 = vadd.f32 0.0, %v8557
      %v8559 = vpop.f32.mrb[0].mxu0
      %v8560 = vpop.f32.mrb[0].mxu0
      %v8561 = vadd.f32 0.0, %v8560
      %v8562 = vpop.f32.mrb[0].mxu0
      %8563 = vdwg.mxu0
      %8628 = vrot.lane.b32.xlu0 %v8310, 16
      %v8629 = vpop.permute.xlu0 %8628
      %8630 = vrot.lane.b32.xlu0 %v8313, 16
      %v8631 = vpop.permute.xlu0 %8630
      %8632 = vrot.lane.b32.xlu0 %v8318, 16
      %v8633 = vpop.permute.xlu0 %8632
      %8634 = vrot.lane.b32.xlu0 %v8321, 16
      %v8635 = vpop.permute.xlu0 %8634
      %8636 = vrot.lane.b32.xlu0 %v8326, 16
      %v8637 = vpop.permute.xlu0 %8636
      %8638 = vrot.lane.b32.xlu0 %v8329, 16
      %v8639 = vpop.permute.xlu0 %8638
      %8640 = vrot.lane.b32.xlu0 %v8334, 16
      %v8641 = vpop.permute.xlu0 %8640
      %8642 = vrot.lane.b32.xlu0 %v8337, 16
      %v8643 = vpop.permute.xlu0 %8642
      %8644 = vrot.lane.b32.xlu0 %v8342, 16
      %v8645 = vpop.permute.xlu0 %8644
      %8646 = vrot.lane.b32.xlu0 %v8345, 16
      %v8647 = vpop.permute.xlu0 %8646
      %8648 = vrot.lane.b32.xlu0 %v8350, 16
      %v8649 = vpop.permute.xlu0 %8648
      %8650 = vrot.lane.b32.xlu0 %v8353, 16
      %v8651 = vpop.permute.xlu0 %8650
      %8652 = vrot.lane.b32.xlu0 %v8358, 16
      %v8653 = vpop.permute.xlu0 %8652
      %8654 = vrot.lane.b32.xlu0 %v8361, 16
      %v8655 = vpop.permute.xlu0 %8654
      %8656 = vrot.lane.b32.xlu0 %v8366, 16
      %v8657 = vpop.permute.xlu0 %8656
      %8658 = vrot.lane.b32.xlu0 %v8369, 16
      %v8659 = vpop.permute.xlu0 %8658
      %8660 = vrot.lane.b32.xlu0 %v8374, 16
      %v8661 = vpop.permute.xlu0 %8660
      %8662 = vrot.lane.b32.xlu0 %v8377, 16
      %v8663 = vpop.permute.xlu0 %8662
      %8664 = vrot.lane.b32.xlu0 %v8382, 16
      %v8665 = vpop.permute.xlu0 %8664
      %8666 = vrot.lane.b32.xlu0 %v8385, 16
      %v8667 = vpop.permute.xlu0 %8666
      %8668 = vrot.lane.b32.xlu0 %v8390, 16
      %v8669 = vpop.permute.xlu0 %8668
      %8670 = vrot.lane.b32.xlu0 %v8393, 16
      %v8671 = vpop.permute.xlu0 %8670
      %8672 = vrot.lane.b32.xlu0 %v8398, 16
      %v8673 = vpop.permute.xlu0 %8672
      %8674 = vrot.lane.b32.xlu0 %v8401, 16
      %v8675 = vpop.permute.xlu0 %8674
      %8676 = vrot.lane.b32.xlu0 %v8406, 16
      %v8677 = vpop.permute.xlu0 %8676
      %8678 = vrot.lane.b32.xlu0 %v8409, 16
      %v8679 = vpop.permute.xlu0 %8678
      %8680 = vrot.lane.b32.xlu0 %v8414, 16
      %v8681 = vpop.permute.xlu0 %8680
      %8682 = vrot.lane.b32.xlu0 %v8417, 16
      %v8683 = vpop.permute.xlu0 %8682
      %8684 = vrot.lane.b32.xlu0 %v8422, 16
      %v8685 = vpop.permute.xlu0 %8684
      %8686 = vrot.lane.b32.xlu0 %v8425, 16
      %v8687 = vpop.permute.xlu0 %8686
      %8688 = vrot.lane.b32.xlu0 %v8430, 16
      %v8689 = vpop.permute.xlu0 %8688
      %8690 = vrot.lane.b32.xlu0 %v8433, 16
      %v8691 = vpop.permute.xlu0 %8690
      %8692 = vrot.lane.b32.xlu0 %v8438, 16
      %v8693 = vpop.permute.xlu0 %8692
      %8694 = vrot.lane.b32.xlu0 %v8441, 16
      %v8695 = vpop.permute.xlu0 %8694
      %8696 = vrot.lane.b32.xlu0 %v8446, 16
      %v8697 = vpop.permute.xlu0 %8696
      %8698 = vrot.lane.b32.xlu0 %v8449, 16
      %v8699 = vpop.permute.xlu0 %8698
      %8700 = vrot.lane.b32.xlu0 %v8454, 16
      %v8701 = vpop.permute.xlu0 %8700
      %8702 = vrot.lane.b32.xlu0 %v8457, 16
      %v8703 = vpop.permute.xlu0 %8702
      %8704 = vrot.lane.b32.xlu0 %v8462, 16
      %v8705 = vpop.permute.xlu0 %8704
      %8706 = vrot.lane.b32.xlu0 %v8465, 16
      %v8707 = vpop.permute.xlu0 %8706
      %8708 = vrot.lane.b32.xlu0 %v8470, 16
      %v8709 = vpop.permute.xlu0 %8708
      %8710 = vrot.lane.b32.xlu0 %v8473, 16
      %v8711 = vpop.permute.xlu0 %8710
      %8712 = vrot.lane.b32.xlu0 %v8478, 16
      %v8713 = vpop.permute.xlu0 %8712
      %8714 = vrot.lane.b32.xlu0 %v8481, 16
      %v8715 = vpop.permute.xlu0 %8714
      %8716 = vrot.lane.b32.xlu0 %v8486, 16
      %v8717 = vpop.permute.xlu0 %8716
      %8718 = vrot.lane.b32.xlu0 %v8489, 16
      %v8719 = vpop.permute.xlu0 %8718
      %8720 = vrot.lane.b32.xlu0 %v8494, 16
      %v8721 = vpop.permute.xlu0 %8720
      %8722 = vrot.lane.b32.xlu0 %v8497, 16
      %v8723 = vpop.permute.xlu0 %8722
      %8724 = vrot.lane.b32.xlu0 %v8502, 16
      %v8725 = vpop.permute.xlu0 %8724
      %8726 = vrot.lane.b32.xlu0 %v8505, 16
      %v8727 = vpop.permute.xlu0 %8726
      %8728 = vrot.lane.b32.xlu0 %v8510, 16
      %v8729 = vpop.permute.xlu0 %8728
      %8730 = vrot.lane.b32.xlu0 %v8513, 16
      %v8731 = vpop.permute.xlu0 %8730
      %8732 = vrot.lane.b32.xlu0 %v8518, 16
      %v8733 = vpop.permute.xlu0 %8732
      %8734 = vrot.lane.b32.xlu0 %v8521, 16
      %v8735 = vpop.permute.xlu0 %8734
      %8736 = vrot.lane.b32.xlu0 %v8526, 16
      %v8737 = vpop.permute.xlu0 %8736
      %8738 = vrot.lane.b32.xlu0 %v8529, 16
      %v8739 = vpop.permute.xlu0 %8738
      %8740 = vrot.lane.b32.xlu0 %v8534, 16
      %v8741 = vpop.permute.xlu0 %8740
      %8742 = vrot.lane.b32.xlu0 %v8537, 16
      %v8743 = vpop.permute.xlu0 %8742
      %8744 = vrot.lane.b32.xlu0 %v8542, 16
      %v8745 = vpop.permute.xlu0 %8744
      %8746 = vrot.lane.b32.xlu0 %v8545, 16
      %v8747 = vpop.permute.xlu0 %8746
      %8748 = vrot.lane.b32.xlu0 %v8550, 16
      %v8749 = vpop.permute.xlu0 %8748
      %8750 = vrot.lane.b32.xlu0 %v8553, 16
      %v8751 = vpop.permute.xlu0 %8750
      %8752 = vrot.lane.b32.xlu0 %v8558, 16
      %v8753 = vpop.permute.xlu0 %8752
      %8754 = vrot.lane.b32.xlu0 %v8561, 16
      %v8755 = vpop.permute.xlu0 %8754
      %vm8820 = vcmask 195712
      %8821 = vst.msk [vmem:[#allocation3] sm:$0xff] %vm8820, %v8629
      %8822 = vst.msk [vmem:[#allocation3 + $0x8] sm:$0xff] %vm8820, %v8631
      %8823 = vst.msk [vmem:[#allocation3 + $0x10] sm:$0xff] %vm8820, %v8633
      %8824 = vst.msk [vmem:[#allocation3 + $0x18] sm:$0xff] %vm8820, %v8635
      %8825 = vst.msk [vmem:[#allocation3 + $0x20] sm:$0xff] %vm8820, %v8637
      %8826 = vst.msk [vmem:[#allocation3 + $0x28] sm:$0xff] %vm8820, %v8639
      %8827 = vst.msk [vmem:[#allocation3 + $0x30] sm:$0xff] %vm8820, %v8641
      %8828 = vst.msk [vmem:[#allocation3 + $0x38] sm:$0xff] %vm8820, %v8643
      %8829 = vst.msk [vmem:[#allocation3 + $0x40] sm:$0xff] %vm8820, %v8645
      %8830 = vst.msk [vmem:[#allocation3 + $0x48] sm:$0xff] %vm8820, %v8647
      %8831 = vst.msk [vmem:[#allocation3 + $0x50] sm:$0xff] %vm8820, %v8649
      %8832 = vst.msk [vmem:[#allocation3 + $0x58] sm:$0xff] %vm8820, %v8651
      %8833 = vst.msk [vmem:[#allocation3 + $0x60] sm:$0xff] %vm8820, %v8653
      %8834 = vst.msk [vmem:[#allocation3 + $0x68] sm:$0xff] %vm8820, %v8655
      %8835 = vst.msk [vmem:[#allocation3 + $0x70] sm:$0xff] %vm8820, %v8657
      %8836 = vst.msk [vmem:[#allocation3 + $0x78] sm:$0xff] %vm8820, %v8659
      %8837 = vst.msk [vmem:[#allocation3 + $0x80] sm:$0xff] %vm8820, %v8661
      %8838 = vst.msk [vmem:[#allocation3 + $0x88] sm:$0xff] %vm8820, %v8663
      %8839 = vst.msk [vmem:[#allocation3 + $0x90] sm:$0xff] %vm8820, %v8665
      %8840 = vst.msk [vmem:[#allocation3 + $0x98] sm:$0xff] %vm8820, %v8667
      %8841 = vst.msk [vmem:[#allocation3 + $0xa0] sm:$0xff] %vm8820, %v8669
      %8842 = vst.msk [vmem:[#allocation3 + $0xa8] sm:$0xff] %vm8820, %v8671
      %8843 = vst.msk [vmem:[#allocation3 + $0xb0] sm:$0xff] %vm8820, %v8673
      %8844 = vst.msk [vmem:[#allocation3 + $0xb8] sm:$0xff] %vm8820, %v8675
      %8845 = vst.msk [vmem:[#allocation3 + $0xc0] sm:$0xff] %vm8820, %v8677
      %8846 = vst.msk [vmem:[#allocation3 + $0xc8] sm:$0xff] %vm8820, %v8679
      %8847 = vst.msk [vmem:[#allocation3 + $0xd0] sm:$0xff] %vm8820, %v8681
      %8848 = vst.msk [vmem:[#allocation3 + $0xd8] sm:$0xff] %vm8820, %v8683
      %8849 = vst.msk [vmem:[#allocation3 + $0xe0] sm:$0xff] %vm8820, %v8685
      %8850 = vst.msk [vmem:[#allocation3 + $0xe8] sm:$0xff] %vm8820, %v8687
      %8851 = vst.msk [vmem:[#allocation3 + $0xf0] sm:$0xff] %vm8820, %v8689
      %8852 = vst.msk [vmem:[#allocation3 + $0xf8] sm:$0xff] %vm8820, %v8691
      %8853 = vst.msk [vmem:[#allocation3 + $0x100] sm:$0xff] %vm8820, %v8693
      %8854 = vst.msk [vmem:[#allocation3 + $0x108] sm:$0xff] %vm8820, %v8695
      %8855 = vst.msk [vmem:[#allocation3 + $0x110] sm:$0xff] %vm8820, %v8697
      %8856 = vst.msk [vmem:[#allocation3 + $0x118] sm:$0xff] %vm8820, %v8699
      %8857 = vst.msk [vmem:[#allocation3 + $0x120] sm:$0xff] %vm8820, %v8701
      %8858 = vst.msk [vmem:[#allocation3 + $0x128] sm:$0xff] %vm8820, %v8703
      %8859 = vst.msk [vmem:[#allocation3 + $0x130] sm:$0xff] %vm8820, %v8705
      %8860 = vst.msk [vmem:[#allocation3 + $0x138] sm:$0xff] %vm8820, %v8707
      %8861 = vst.msk [vmem:[#allocation3 + $0x140] sm:$0xff] %vm8820, %v8709
      %8862 = vst.msk [vmem:[#allocation3 + $0x148] sm:$0xff] %vm8820, %v8711
      %8863 = vst.msk [vmem:[#allocation3 + $0x150] sm:$0xff] %vm8820, %v8713
      %8864 = vst.msk [vmem:[#allocation3 + $0x158] sm:$0xff] %vm8820, %v8715
      %8865 = vst.msk [vmem:[#allocation3 + $0x160] sm:$0xff] %vm8820, %v8717
      %8866 = vst.msk [vmem:[#allocation3 + $0x168] sm:$0xff] %vm8820, %v8719
      %8867 = vst.msk [vmem:[#allocation3 + $0x170] sm:$0xff] %vm8820, %v8721
      %8868 = vst.msk [vmem:[#allocation3 + $0x178] sm:$0xff] %vm8820, %v8723
      %8869 = vst.msk [vmem:[#allocation3 + $0x180] sm:$0xff] %vm8820, %v8725
      %8870 = vst.msk [vmem:[#allocation3 + $0x188] sm:$0xff] %vm8820, %v8727
      %8871 = vst.msk [vmem:[#allocation3 + $0x190] sm:$0xff] %vm8820, %v8729
      %8872 = vst.msk [vmem:[#allocation3 + $0x198] sm:$0xff] %vm8820, %v8731
      %8873 = vst.msk [vmem:[#allocation3 + $0x1a0] sm:$0xff] %vm8820, %v8733
      %8874 = vst.msk [vmem:[#allocation3 + $0x1a8] sm:$0xff] %vm8820, %v8735
      %8875 = vst.msk [vmem:[#allocation3 + $0x1b0] sm:$0xff] %vm8820, %v8737
      %8876 = vst.msk [vmem:[#allocation3 + $0x1b8] sm:$0xff] %vm8820, %v8739
      %8877 = vst.msk [vmem:[#allocation3 + $0x1c0] sm:$0xff] %vm8820, %v8741
      %8878 = vst.msk [vmem:[#allocation3 + $0x1c8] sm:$0xff] %vm8820, %v8743
      %8879 = vst.msk [vmem:[#allocation3 + $0x1d0] sm:$0xff] %vm8820, %v8745
      %8880 = vst.msk [vmem:[#allocation3 + $0x1d8] sm:$0xff] %vm8820, %v8747
      %8881 = vst.msk [vmem:[#allocation3 + $0x1e0] sm:$0xff] %vm8820, %v8749
      %8882 = vst.msk [vmem:[#allocation3 + $0x1e8] sm:$0xff] %vm8820, %v8751
      %8883 = vst.msk [vmem:[#allocation3 + $0x1f0] sm:$0xff] %vm8820, %v8753
      %8884 = vst.msk [vmem:[#allocation3 + $0x1f8] sm:$0xff] %vm8820, %v8755
      %8885 = vrot.lane.b32.xlu0 %v2316, 104
      %v8886 = vpop.permute.xlu0 %8885
      %8887 = vrot.lane.b32.xlu0 %v2317, 104
      %v8888 = vpop.permute.xlu0 %8887
      %8889 = vrot.lane.b32.xlu0 %v2318, 104
      %v8890 = vpop.permute.xlu0 %8889
      %8891 = vrot.lane.b32.xlu0 %v2319, 104
      %v8892 = vpop.permute.xlu0 %8891
      %8893 = vrot.lane.b32.xlu0 %v2320, 104
      %v8894 = vpop.permute.xlu0 %8893
      %8895 = vrot.lane.b32.xlu0 %v2321, 104
      %v8896 = vpop.permute.xlu0 %8895
      %8897 = vrot.lane.b32.xlu0 %v2322, 104
      %v8898 = vpop.permute.xlu0 %8897
      %8899 = vrot.lane.b32.xlu0 %v2323, 104
      %v8900 = vpop.permute.xlu0 %8899
      %8901 = vrot.lane.b32.xlu0 %v2324, 104
      %v8902 = vpop.permute.xlu0 %8901
      %8903 = vrot.lane.b32.xlu0 %v2325, 104
      %v8904 = vpop.permute.xlu0 %8903
      %8905 = vrot.lane.b32.xlu0 %v2326, 104
      %v8906 = vpop.permute.xlu0 %8905
      %8907 = vrot.lane.b32.xlu0 %v2327, 104
      %v8908 = vpop.permute.xlu0 %8907
      %8909 = vrot.lane.b32.xlu0 %v2328, 104
      %v8910 = vpop.permute.xlu0 %8909
      %8911 = vrot.lane.b32.xlu0 %v2329, 104
      %v8912 = vpop.permute.xlu0 %8911
      %8913 = vrot.lane.b32.xlu0 %v2330, 104
      %v8914 = vpop.permute.xlu0 %8913
      %8915 = vrot.lane.b32.xlu0 %v2331, 104
      %v8916 = vpop.permute.xlu0 %8915
      %8917 = vrot.lane.b32.xlu0 %v2332, 104
      %v8918 = vpop.permute.xlu0 %8917
      %8919 = vrot.lane.b32.xlu0 %v2333, 104
      %v8920 = vpop.permute.xlu0 %8919
      %8921 = vrot.lane.b32.xlu0 %v2334, 104
      %v8922 = vpop.permute.xlu0 %8921
      %8923 = vrot.lane.b32.xlu0 %v2335, 104
      %v8924 = vpop.permute.xlu0 %8923
      %8925 = vrot.lane.b32.xlu0 %v2336, 104
      %v8926 = vpop.permute.xlu0 %8925
      %8927 = vrot.lane.b32.xlu0 %v2337, 104
      %v8928 = vpop.permute.xlu0 %8927
      %8929 = vrot.lane.b32.xlu0 %v2338, 104
      %v8930 = vpop.permute.xlu0 %8929
      %8931 = vrot.lane.b32.xlu0 %v2339, 104
      %v8932 = vpop.permute.xlu0 %8931
      %8933 = vrot.lane.b32.xlu0 %v2340, 104
      %v8934 = vpop.permute.xlu0 %8933
      %8935 = vrot.lane.b32.xlu0 %v2341, 104
      %v8936 = vpop.permute.xlu0 %8935
      %8937 = vrot.lane.b32.xlu0 %v2342, 104
      %v8938 = vpop.permute.xlu0 %8937
      %8939 = vrot.lane.b32.xlu0 %v2343, 104
      %v8940 = vpop.permute.xlu0 %8939
      %8941 = vrot.lane.b32.xlu0 %v2344, 104
      %v8942 = vpop.permute.xlu0 %8941
      %8943 = vrot.lane.b32.xlu0 %v2345, 104
      %v8944 = vpop.permute.xlu0 %8943
      %8945 = vrot.lane.b32.xlu0 %v2346, 104
      %v8946 = vpop.permute.xlu0 %8945
      %8947 = vrot.lane.b32.xlu0 %v2347, 104
      %v8948 = vpop.permute.xlu0 %8947
      %8949 = vrot.lane.b32.xlu0 %v2348, 104
      %v8950 = vpop.permute.xlu0 %8949
      %8951 = vrot.lane.b32.xlu0 %v2349, 104
      %v8952 = vpop.permute.xlu0 %8951
      %8953 = vrot.lane.b32.xlu0 %v2350, 104
      %v8954 = vpop.permute.xlu0 %8953
      %8955 = vrot.lane.b32.xlu0 %v2351, 104
      %v8956 = vpop.permute.xlu0 %8955
      %8957 = vrot.lane.b32.xlu0 %v2352, 104
      %v8958 = vpop.permute.xlu0 %8957
      %8959 = vrot.lane.b32.xlu0 %v2353, 104
      %v8960 = vpop.permute.xlu0 %8959
      %8961 = vrot.lane.b32.xlu0 %v2354, 104
      %v8962 = vpop.permute.xlu0 %8961
      %8963 = vrot.lane.b32.xlu0 %v2355, 104
      %v8964 = vpop.permute.xlu0 %8963
      %8965 = vrot.lane.b32.xlu0 %v2356, 104
      %v8966 = vpop.permute.xlu0 %8965
      %8967 = vrot.lane.b32.xlu0 %v2357, 104
      %v8968 = vpop.permute.xlu0 %8967
      %8969 = vrot.lane.b32.xlu0 %v2358, 104
      %v8970 = vpop.permute.xlu0 %8969
      %8971 = vrot.lane.b32.xlu0 %v2359, 104
      %v8972 = vpop.permute.xlu0 %8971
      %8973 = vrot.lane.b32.xlu0 %v2360, 104
      %v8974 = vpop.permute.xlu0 %8973
      %8975 = vrot.lane.b32.xlu0 %v2361, 104
      %v8976 = vpop.permute.xlu0 %8975
      %8977 = vrot.lane.b32.xlu0 %v2362, 104
      %v8978 = vpop.permute.xlu0 %8977
      %8979 = vrot.lane.b32.xlu0 %v2363, 104
      %v8980 = vpop.permute.xlu0 %8979
      %v8982 = vsel %vm2364, %v8886, 0
      %v8985 = vsel %vm2364, %v8888, 0
      %v8988 = vsel %vm2364, %v8890, 0
      %v8991 = vsel %vm2364, %v8892, 0
      %v8994 = vsel %vm2364, %v8894, 0
      %v8997 = vsel %vm2364, %v8896, 0
      %v9000 = vsel %vm2364, %v8898, 0
      %v9003 = vsel %vm2364, %v8900, 0
      %v9006 = vsel %vm2364, %v8902, 0
      %v9009 = vsel %vm2364, %v8904, 0
      %v9012 = vsel %vm2364, %v8906, 0
      %v9015 = vsel %vm2364, %v8908, 0
      %v9018 = vsel %vm2364, %v8910, 0
      %v9021 = vsel %vm2364, %v8912, 0
      %v9024 = vsel %vm2364, %v8914, 0
      %v9027 = vsel %vm2364, %v8916, 0
      %v9030 = vsel %vm2364, %v8918, 0
      %v9033 = vsel %vm2364, %v8920, 0
      %v9036 = vsel %vm2364, %v8922, 0
      %v9039 = vsel %vm2364, %v8924, 0
      %v9042 = vsel %vm2364, %v8926, 0
      %v9045 = vsel %vm2364, %v8928, 0
      %v9048 = vsel %vm2364, %v8930, 0
      %v9051 = vsel %vm2364, %v8932, 0
      %v9054 = vsel %vm2364, %v8934, 0
      %v9057 = vsel %vm2364, %v8936, 0
      %v9060 = vsel %vm2364, %v8938, 0
      %v9063 = vsel %vm2364, %v8940, 0
      %v9066 = vsel %vm2364, %v8942, 0
      %v9069 = vsel %vm2364, %v8944, 0
      %v9072 = vsel %vm2364, %v8946, 0
      %v9075 = vsel %vm2364, %v8948, 0
      %v9078 = vsel %vm2364, %v8950, 0
      %v9081 = vsel %vm2364, %v8952, 0
      %v9084 = vsel %vm2364, %v8954, 0
      %v9087 = vsel %vm2364, %v8956, 0
      %v9090 = vsel %vm2364, %v8958, 0
      %v9093 = vsel %vm2364, %v8960, 0
      %v9096 = vsel %vm2364, %v8962, 0
      %v9099 = vsel %vm2364, %v8964, 0
      %v9102 = vsel %vm2364, %v8966, 0
      %v9105 = vsel %vm2364, %v8968, 0
      %v9108 = vsel %vm2364, %v8970, 0
      %v9111 = vsel %vm2364, %v8972, 0
      %v9114 = vsel %vm2364, %v8974, 0
      %v9117 = vsel %vm2364, %v8976, 0
      %v9120 = vsel %vm2364, %v8978, 0
      %v9123 = vsel %vm2364, %v8980, 0
      %9125 = vmatprep.subr.bf16.mxu0 0
      %9126 = vmatpush1.bf16.xpose.msra.mxu0 %v9078
      %9127 = vmatprep.subr.bf16.mxu0 0
      %9128 = vmatpush1.bf16.xpose.msra.mxu0 %v9081
      %9129 = vmatprep.subr.bf16.mxu0 0
      %9130 = vmatpush1.bf16.xpose.msra.mxu0 %v9084
      %9131 = vmatprep.subr.bf16.mxu0 0
      %9132 = vmatpush1.bf16.xpose.msra.mxu0 %v9087
      %9133 = vmatprep.subr.bf16.mxu0 0
      %9134 = vmatpush1.bf16.xpose.msra.mxu0 %v9090
      %9135 = vmatprep.subr.bf16.mxu0 0
      %9136 = vmatpush1.bf16.xpose.msra.mxu0 %v9093
      %9137 = vmatprep.subr.bf16.mxu0 0
      %9138 = vmatpush1.bf16.xpose.msra.mxu0 %v9096
      %9139 = vmatprep.subr.bf16.mxu0 0
      %9140 = vmatpush1.bf16.xpose.msra.mxu0 %v9099
      %9141 = vmatprep.subr.bf16.mxu0 0
      %9142 = vmatpush1.bf16.xpose.msra.mxu0 %v9102
      %9143 = vmatprep.subr.bf16.mxu0 0
      %9144 = vmatpush1.bf16.xpose.msra.mxu0 %v9105
      %9145 = vmatprep.subr.bf16.mxu0 0
      %9146 = vmatpush1.bf16.xpose.msra.mxu0 %v9108
      %9147 = vmatprep.subr.bf16.mxu0 0
      %9148 = vmatpush1.bf16.xpose.msra.mxu0 %v9111
      %9149 = vmatprep.subr.bf16.mxu0 0
      %9150 = vmatpush1.bf16.xpose.msra.mxu0 %v9114
      %9151 = vmatprep.subr.bf16.mxu0 0
      %9152 = vmatpush1.bf16.xpose.msra.mxu0 %v9117
      %9153 = vmatprep.subr.bf16.mxu0 0
      %9154 = vmatpush1.bf16.xpose.msra.mxu0 %v9120
      %9155 = vmatprep.subr.bf16.mxu0 0
      %9156 = vmatpush1.bf16.xpose.msra.mxu0 %v9123
      %9157 = vmatprep.mubr.bf16.mxu0 0
      %9158 = vmatmul.mubr.bf16.gmra.mrb[0].mxu0 %v8982
      %v9159 = vpop.f32.mrb[0].mxu0
      %v9160 = vadd.f32 0.0, %v9159
      %v9161 = vpop.f32.mrb[0].mxu0
      %v9162 = vadd.f32 0.0, %v9161
      %v9163 = vpop.f32.mrb[0].mxu0
      %v9164 = vadd.f32 0.0, %v9163
      %v9165 = vpop.f32.mrb[0].mxu0
      %v9166 = vadd.f32 0.0, %v9165
      %9167 = vmatprep.mubr.bf16.mxu0 0
      %9168 = vmatmul.mubr.bf16.gmra.mrb[0].mxu0 %v8985
      %v9169 = vpop.f32.mrb[0].mxu0
      %v9170 = vadd.f32 0.0, %v9169
      %v9171 = vpop.f32.mrb[0].mxu0
      %v9172 = vadd.f32 0.0, %v9171
      %v9173 = vpop.f32.mrb[0].mxu0
      %v9174 = vadd.f32 0.0, %v9173
      %v9175 = vpop.f32.mrb[0].mxu0
      %v9176 = vadd.f32 0.0, %v9175
      %9177 = vmatprep.mubr.bf16.mxu0 0
      %9178 = vmatmul.mubr.bf16.gmra.mrb[0].mxu0 %v8988
      %v9179 = vpop.f32.mrb[0].mxu0
      %v9180 = vadd.f32 0.0, %v9179
      %v9181 = vpop.f32.mrb[0].mxu0
      %v9182 = vadd.f32 0.0, %v9181
      %v9183 = vpop.f32.mrb[0].mxu0
      %v9184 = vadd.f32 0.0, %v9183
      %v9185 = vpop.f32.mrb[0].mxu0
      %v9186 = vadd.f32 0.0, %v9185
      %9187 = vmatprep.mubr.bf16.mxu0 0
      %9188 = vmatmul.mubr.bf16.gmra.mrb[0].mxu0 %v8991
      %v9189 = vpop.f32.mrb[0].mxu0
      %v9190 = vadd.f32 0.0, %v9189
      %v9191 = vpop.f32.mrb[0].mxu0
      %v9192 = vadd.f32 0.0, %v9191
      %v9193 = vpop.f32.mrb[0].mxu0
      %v9194 = vadd.f32 0.0, %v9193
      %v9195 = vpop.f32.mrb[0].mxu0
      %v9196 = vadd.f32 0.0, %v9195
      %9197 = vmatprep.mubr.bf16.mxu0 0
      %9198 = vmatmul.mubr.bf16.gmra.mrb[0].mxu0 %v8994
      %v9199 = vpop.f32.mrb[0].mxu0
      %v9200 = vadd.f32 0.0, %v9199
      %v9201 = vpop.f32.mrb[0].mxu0
      %v9202 = vadd.f32 0.0, %v9201
      %v9203 = vpop.f32.mrb[0].mxu0
      %v9204 = vadd.f32 0.0, %v9203
      %v9205 = vpop.f32.mrb[0].mxu0
      %v9206 = vadd.f32 0.0, %v9205
      %9207 = vmatprep.mubr.bf16.mxu0 0
      %9208 = vmatmul.mubr.bf16.gmra.mrb[0].mxu0 %v8997
      %v9209 = vpop.f32.mrb[0].mxu0
      %v9210 = vadd.f32 0.0, %v9209
      %v9211 = vpop.f32.mrb[0].mxu0
      %v9212 = vadd.f32 0.0, %v9211
      %v9213 = vpop.f32.mrb[0].mxu0
      %v9214 = vadd.f32 0.0, %v9213
      %v9215 = vpop.f32.mrb[0].mxu0
      %v9216 = vadd.f32 0.0, %v9215
      %9217 = vmatprep.mubr.bf16.mxu0 0
      %9218 = vmatmul.mubr.bf16.gmra.mrb[0].mxu0 %v9000
      %v9219 = vpop.f32.mrb[0].mxu0
      %v9220 = vadd.f32 0.0, %v9219
      %v9221 = vpop.f32.mrb[0].mxu0
      %v9222 = vadd.f32 0.0, %v9221
      %v9223 = vpop.f32.mrb[0].mxu0
      %v9224 = vadd.f32 0.0, %v9223
      %v9225 = vpop.f32.mrb[0].mxu0
      %v9226 = vadd.f32 0.0, %v9225
      %9227 = vmatprep.mubr.bf16.mxu0 0
      %9228 = vmatmul.mubr.bf16.gmra.mrb[0].mxu0 %v9003
      %v9229 = vpop.f32.mrb[0].mxu0
      %v9230 = vadd.f32 0.0, %v9229
      %v9231 = vpop.f32.mrb[0].mxu0
      %v9232 = vadd.f32 0.0, %v9231
      %v9233 = vpop.f32.mrb[0].mxu0
      %v9234 = vadd.f32 0.0, %v9233
      %v9235 = vpop.f32.mrb[0].mxu0
      %v9236 = vadd.f32 0.0, %v9235
      %9237 = vmatprep.mubr.bf16.mxu0 0
      %9238 = vmatmul.mubr.bf16.gmra.mrb[0].mxu0 %v9006
      %v9239 = vpop.f32.mrb[0].mxu0
      %v9240 = vadd.f32 0.0, %v9239
      %v9241 = vpop.f32.mrb[0].mxu0
      %v9242 = vadd.f32 0.0, %v9241
      %v9243 = vpop.f32.mrb[0].mxu0
      %v9244 = vadd.f32 0.0, %v9243
      %v9245 = vpop.f32.mrb[0].mxu0
      %v9246 = vadd.f32 0.0, %v9245
      %9247 = vmatprep.mubr.bf16.mxu0 0
      %9248 = vmatmul.mubr.bf16.gmra.mrb[0].mxu0 %v9009
      %v9249 = vpop.f32.mrb[0].mxu0
      %v9250 = vadd.f32 0.0, %v9249
      %v9251 = vpop.f32.mrb[0].mxu0
      %v9252 = vadd.f32 0.0, %v9251
      %v9253 = vpop.f32.mrb[0].mxu0
      %v9254 = vadd.f32 0.0, %v9253
      %v9255 = vpop.f32.mrb[0].mxu0
      %v9256 = vadd.f32 0.0, %v9255
      %9257 = vmatprep.mubr.bf16.mxu0 0
      %9258 = vmatmul.mubr.bf16.gmra.mrb[0].mxu0 %v9012
      %v9259 = vpop.f32.mrb[0].mxu0
      %v9260 = vadd.f32 0.0, %v9259
      %v9261 = vpop.f32.mrb[0].mxu0
      %v9262 = vadd.f32 0.0, %v9261
      %v9263 = vpop.f32.mrb[0].mxu0
      %v9264 = vadd.f32 0.0, %v9263
      %v9265 = vpop.f32.mrb[0].mxu0
      %v9266 = vadd.f32 0.0, %v9265
      %9267 = vmatprep.mubr.bf16.mxu0 0
      %9268 = vmatmul.mubr.bf16.gmra.mrb[0].mxu0 %v9015
      %v9269 = vpop.f32.mrb[0].mxu0
      %v9270 = vadd.f32 0.0, %v9269
      %v9271 = vpop.f32.mrb[0].mxu0
      %v9272 = vadd.f32 0.0, %v9271
      %v9273 = vpop.f32.mrb[0].mxu0
      %v9274 = vadd.f32 0.0, %v9273
      %v9275 = vpop.f32.mrb[0].mxu0
      %v9276 = vadd.f32 0.0, %v9275
      %9277 = vmatprep.mubr.bf16.mxu0 0
      %9278 = vmatmul.mubr.bf16.gmra.mrb[0].mxu0 %v9018
      %v9279 = vpop.f32.mrb[0].mxu0
      %v9280 = vadd.f32 0.0, %v9279
      %v9281 = vpop.f32.mrb[0].mxu0
      %v9282 = vadd.f32 0.0, %v9281
      %v9283 = vpop.f32.mrb[0].mxu0
      %v9284 = vadd.f32 0.0, %v9283
      %v9285 = vpop.f32.mrb[0].mxu0
      %v9286 = vadd.f32 0.0, %v9285
      %9287 = vmatprep.mubr.bf16.mxu0 0
      %9288 = vmatmul.mubr.bf16.gmra.mrb[0].mxu0 %v9021
      %v9289 = vpop.f32.mrb[0].mxu0
      %v9290 = vadd.f32 0.0, %v9289
      %v9291 = vpop.f32.mrb[0].mxu0
      %v9292 = vadd.f32 0.0, %v9291
      %v9293 = vpop.f32.mrb[0].mxu0
      %v9294 = vadd.f32 0.0, %v9293
      %v9295 = vpop.f32.mrb[0].mxu0
      %v9296 = vadd.f32 0.0, %v9295
      %9297 = vmatprep.mubr.bf16.mxu0 0
      %9298 = vmatmul.mubr.bf16.gmra.mrb[0].mxu0 %v9024
      %v9299 = vpop.f32.mrb[0].mxu0
      %v9300 = vadd.f32 0.0, %v9299
      %v9301 = vpop.f32.mrb[0].mxu0
      %v9302 = vadd.f32 0.0, %v9301
      %v9303 = vpop.f32.mrb[0].mxu0
      %v9304 = vadd.f32 0.0, %v9303
      %v9305 = vpop.f32.mrb[0].mxu0
      %v9306 = vadd.f32 0.0, %v9305
      %9307 = vmatprep.mubr.bf16.mxu0 0
      %9308 = vmatmul.mubr.bf16.gmra.mrb[0].mxu0 %v9027
      %v9309 = vpop.f32.mrb[0].mxu0
      %v9310 = vadd.f32 0.0, %v9309
      %v9311 = vpop.f32.mrb[0].mxu0
      %v9312 = vadd.f32 0.0, %v9311
      %v9313 = vpop.f32.mrb[0].mxu0
      %v9314 = vadd.f32 0.0, %v9313
      %v9315 = vpop.f32.mrb[0].mxu0
      %v9316 = vadd.f32 0.0, %v9315
      %9317 = vmatprep.mubr.bf16.mxu0 0
      %9318 = vmatmul.mubr.bf16.gmra.mrb[0].mxu0 %v9030
      %v9319 = vpop.f32.mrb[0].mxu0
      %v9320 = vadd.f32 0.0, %v9319
      %v9321 = vpop.f32.mrb[0].mxu0
      %v9322 = vadd.f32 0.0, %v9321
      %v9323 = vpop.f32.mrb[0].mxu0
      %v9324 = vadd.f32 0.0, %v9323
      %v9325 = vpop.f32.mrb[0].mxu0
      %v9326 = vadd.f32 0.0, %v9325
      %9327 = vmatprep.mubr.bf16.mxu0 0
      %9328 = vmatmul.mubr.bf16.gmra.mrb[0].mxu0 %v9033
      %v9329 = vpop.f32.mrb[0].mxu0
      %v9330 = vadd.f32 0.0, %v9329
      %v9331 = vpop.f32.mrb[0].mxu0
      %v9332 = vadd.f32 0.0, %v9331
      %v9333 = vpop.f32.mrb[0].mxu0
      %v9334 = vadd.f32 0.0, %v9333
      %v9335 = vpop.f32.mrb[0].mxu0
      %v9336 = vadd.f32 0.0, %v9335
      %9337 = vmatprep.mubr.bf16.mxu0 0
      %9338 = vmatmul.mubr.bf16.gmra.mrb[0].mxu0 %v9036
      %v9339 = vpop.f32.mrb[0].mxu0
      %v9340 = vadd.f32 0.0, %v9339
      %v9341 = vpop.f32.mrb[0].mxu0
      %v9342 = vadd.f32 0.0, %v9341
      %v9343 = vpop.f32.mrb[0].mxu0
      %v9344 = vadd.f32 0.0, %v9343
      %v9345 = vpop.f32.mrb[0].mxu0
      %v9346 = vadd.f32 0.0, %v9345
      %9347 = vmatprep.mubr.bf16.mxu0 0
      %9348 = vmatmul.mubr.bf16.gmra.mrb[0].mxu0 %v9039
      %v9349 = vpop.f32.mrb[0].mxu0
      %v9350 = vadd.f32 0.0, %v9349
      %v9351 = vpop.f32.mrb[0].mxu0
      %v9352 = vadd.f32 0.0, %v9351
      %v9353 = vpop.f32.mrb[0].mxu0
      %v9354 = vadd.f32 0.0, %v9353
      %v9355 = vpop.f32.mrb[0].mxu0
      %v9356 = vadd.f32 0.0, %v9355
      %9357 = vmatprep.mubr.bf16.mxu0 0
      %9358 = vmatmul.mubr.bf16.gmra.mrb[0].mxu0 %v9042
      %v9359 = vpop.f32.mrb[0].mxu0
      %v9360 = vadd.f32 0.0, %v9359
      %v9361 = vpop.f32.mrb[0].mxu0
      %v9362 = vadd.f32 0.0, %v9361
      %v9363 = vpop.f32.mrb[0].mxu0
      %v9364 = vadd.f32 0.0, %v9363
      %v9365 = vpop.f32.mrb[0].mxu0
      %v9366 = vadd.f32 0.0, %v9365
      %9367 = vmatprep.mubr.bf16.mxu0 0
      %9368 = vmatmul.mubr.bf16.gmra.mrb[0].mxu0 %v9045
      %v9369 = vpop.f32.mrb[0].mxu0
      %v9370 = vadd.f32 0.0, %v9369
      %v9371 = vpop.f32.mrb[0].mxu0
      %v9372 = vadd.f32 0.0, %v9371
      %v9373 = vpop.f32.mrb[0].mxu0
      %v9374 = vadd.f32 0.0, %v9373
      %v9375 = vpop.f32.mrb[0].mxu0
      %v9376 = vadd.f32 0.0, %v9375
      %9377 = vmatprep.mubr.bf16.mxu0 0
      %9378 = vmatmul.mubr.bf16.gmra.mrb[0].mxu0 %v9048
      %v9379 = vpop.f32.mrb[0].mxu0
      %v9380 = vadd.f32 0.0, %v9379
      %v9381 = vpop.f32.mrb[0].mxu0
      %v9382 = vadd.f32 0.0, %v9381
      %v9383 = vpop.f32.mrb[0].mxu0
      %v9384 = vadd.f32 0.0, %v9383
      %v9385 = vpop.f32.mrb[0].mxu0
      %v9386 = vadd.f32 0.0, %v9385
      %9387 = vmatprep.mubr.bf16.mxu0 0
      %9388 = vmatmul.mubr.bf16.gmra.mrb[0].mxu0 %v9051
      %v9389 = vpop.f32.mrb[0].mxu0
      %v9390 = vadd.f32 0.0, %v9389
      %v9391 = vpop.f32.mrb[0].mxu0
      %v9392 = vadd.f32 0.0, %v9391
      %v9393 = vpop.f32.mrb[0].mxu0
      %v9394 = vadd.f32 0.0, %v9393
      %v9395 = vpop.f32.mrb[0].mxu0
      %v9396 = vadd.f32 0.0, %v9395
      %9397 = vmatprep.mubr.bf16.mxu0 0
      %9398 = vmatmul.mubr.bf16.gmra.mrb[0].mxu0 %v9054
      %v9399 = vpop.f32.mrb[0].mxu0
      %v9400 = vadd.f32 0.0, %v9399
      %v9401 = vpop.f32.mrb[0].mxu0
      %v9402 = vadd.f32 0.0, %v9401
      %v9403 = vpop.f32.mrb[0].mxu0
      %v9404 = vadd.f32 0.0, %v9403
      %v9405 = vpop.f32.mrb[0].mxu0
      %v9406 = vadd.f32 0.0, %v9405
      %9407 = vmatprep.mubr.bf16.mxu0 0
      %9408 = vmatmul.mubr.bf16.gmra.mrb[0].mxu0 %v9057
      %v9409 = vpop.f32.mrb[0].mxu0
      %v9410 = vadd.f32 0.0, %v9409
      %v9411 = vpop.f32.mrb[0].mxu0
      %v9412 = vadd.f32 0.0, %v9411
      %v9413 = vpop.f32.mrb[0].mxu0
      %v9414 = vadd.f32 0.0, %v9413
      %v9415 = vpop.f32.mrb[0].mxu0
      %v9416 = vadd.f32 0.0, %v9415
      %9417 = vmatprep.mubr.bf16.mxu0 0
      %9418 = vmatmul.mubr.bf16.gmra.mrb[0].mxu0 %v9060
      %v9419 = vpop.f32.mrb[0].mxu0
      %v9420 = vadd.f32 0.0, %v9419
      %v9421 = vpop.f32.mrb[0].mxu0
      %v9422 = vadd.f32 0.0, %v9421
      %v9423 = vpop.f32.mrb[0].mxu0
      %v9424 = vadd.f32 0.0, %v9423
      %v9425 = vpop.f32.mrb[0].mxu0
      %v9426 = vadd.f32 0.0, %v9425
      %9427 = vmatprep.mubr.bf16.mxu0 0
      %9428 = vmatmul.mubr.bf16.gmra.mrb[0].mxu0 %v9063
      %v9429 = vpop.f32.mrb[0].mxu0
      %v9430 = vadd.f32 0.0, %v9429
      %v9431 = vpop.f32.mrb[0].mxu0
      %v9432 = vadd.f32 0.0, %v9431
      %v9433 = vpop.f32.mrb[0].mxu0
      %v9434 = vadd.f32 0.0, %v9433
      %v9435 = vpop.f32.mrb[0].mxu0
      %v9436 = vadd.f32 0.0, %v9435
      %9437 = vmatprep.mubr.bf16.mxu0 0
      %9438 = vmatmul.mubr.bf16.gmra.mrb[0].mxu0 %v9066
      %v9439 = vpop.f32.mrb[0].mxu0
      %v9440 = vadd.f32 0.0, %v9439
      %v9441 = vpop.f32.mrb[0].mxu0
      %v9442 = vadd.f32 0.0, %v9441
      %v9443 = vpop.f32.mrb[0].mxu0
      %v9444 = vadd.f32 0.0, %v9443
      %v9445 = vpop.f32.mrb[0].mxu0
      %v9446 = vadd.f32 0.0, %v9445
      %9447 = vmatprep.mubr.bf16.mxu0 0
      %9448 = vmatmul.mubr.bf16.gmra.mrb[0].mxu0 %v9069
      %v9449 = vpop.f32.mrb[0].mxu0
      %v9450 = vadd.f32 0.0, %v9449
      %v9451 = vpop.f32.mrb[0].mxu0
      %v9452 = vadd.f32 0.0, %v9451
      %v9453 = vpop.f32.mrb[0].mxu0
      %v9454 = vadd.f32 0.0, %v9453
      %v9455 = vpop.f32.mrb[0].mxu0
      %v9456 = vadd.f32 0.0, %v9455
      %9457 = vmatprep.mubr.bf16.mxu0 0
      %9458 = vmatmul.mubr.bf16.gmra.mrb[0].mxu0 %v9072
      %v9459 = vpop.f32.mrb[0].mxu0
      %v9460 = vadd.f32 0.0, %v9459
      %v9461 = vpop.f32.mrb[0].mxu0
      %v9462 = vadd.f32 0.0, %v9461
      %v9463 = vpop.f32.mrb[0].mxu0
      %v9464 = vadd.f32 0.0, %v9463
      %v9465 = vpop.f32.mrb[0].mxu0
      %v9466 = vadd.f32 0.0, %v9465
      %9467 = vmatprep.mubr.bf16.mxu0 0
      %9468 = vmatmul.mubr.bf16.gmra.mrb[0].mxu0 %v9075
      %v9469 = vpop.f32.mrb[0].mxu0
      %v9470 = vadd.f32 0.0, %v9469
      %v9471 = vpop.f32.mrb[0].mxu0
      %v9472 = vadd.f32 0.0, %v9471
      %v9473 = vpop.f32.mrb[0].mxu0
      %v9474 = vadd.f32 0.0, %v9473
      %v9475 = vpop.f32.mrb[0].mxu0
      %v9476 = vadd.f32 0.0, %v9475
      %9477 = vdwg.mxu0
      %v9478 = vmax.f32 %v9160, %v9162
      %9479 = vmax.xlane.f32.xlu0 %v9478
      %v9480 = vpop.xlane.xlu0 %9479
      %v9481 = vmax.f32 %v9164, %v9166
      %9482 = vmax.xlane.f32.xlu0 %v9481
      %v9483 = vpop.xlane.xlu0 %9482
      %v9484 = vmax.f32 %v9170, %v9172
      %9485 = vmax.xlane.f32.xlu0 %v9484
      %v9486 = vpop.xlane.xlu0 %9485
      %v9487 = vmax.f32 %v9174, %v9176
      %9488 = vmax.xlane.f32.xlu0 %v9487
      %v9489 = vpop.xlane.xlu0 %9488
      %v9490 = vmax.f32 %v9180, %v9182
      %9491 = vmax.xlane.f32.xlu0 %v9490
      %v9492 = vpop.xlane.xlu0 %9491
      %v9493 = vmax.f32 %v9184, %v9186
      %9494 = vmax.xlane.f32.xlu0 %v9493
      %v9495 = vpop.xlane.xlu0 %9494
      %v9496 = vmax.f32 %v9190, %v9192
      %9497 = vmax.xlane.f32.xlu0 %v9496
      %v9498 = vpop.xlane.xlu0 %9497
      %v9499 = vmax.f32 %v9194, %v9196
      %9500 = vmax.xlane.f32.xlu0 %v9499
      %v9501 = vpop.xlane.xlu0 %9500
      %v9502 = vmax.f32 %v9200, %v9202
      %9503 = vmax.xlane.f32.xlu0 %v9502
      %v9504 = vpop.xlane.xlu0 %9503
      %v9505 = vmax.f32 %v9204, %v9206
      %9506 = vmax.xlane.f32.xlu0 %v9505
      %v9507 = vpop.xlane.xlu0 %9506
      %v9508 = vmax.f32 %v9210, %v9212
      %9509 = vmax.xlane.f32.xlu0 %v9508
      %v9510 = vpop.xlane.xlu0 %9509
      %v9511 = vmax.f32 %v9214, %v9216
      %9512 = vmax.xlane.f32.xlu0 %v9511
      %v9513 = vpop.xlane.xlu0 %9512
      %v9514 = vmax.f32 %v9220, %v9222
      %9515 = vmax.xlane.f32.xlu0 %v9514
      %v9516 = vpop.xlane.xlu0 %9515
      %v9517 = vmax.f32 %v9224, %v9226
      %9518 = vmax.xlane.f32.xlu0 %v9517
      %v9519 = vpop.xlane.xlu0 %9518
      %v9520 = vmax.f32 %v9230, %v9232
      %9521 = vmax.xlane.f32.xlu0 %v9520
      %v9522 = vpop.xlane.xlu0 %9521
      %v9523 = vmax.f32 %v9234, %v9236
      %9524 = vmax.xlane.f32.xlu0 %v9523
      %v9525 = vpop.xlane.xlu0 %9524
      %v9526 = vmax.f32 %v9240, %v9242
      %9527 = vmax.xlane.f32.xlu0 %v9526
      %v9528 = vpop.xlane.xlu0 %9527
      %v9529 = vmax.f32 %v9244, %v9246
      %9530 = vmax.xlane.f32.xlu0 %v9529
      %v9531 = vpop.xlane.xlu0 %9530
      %v9532 = vmax.f32 %v9250, %v9252
      %9533 = vmax.xlane.f32.xlu0 %v9532
      %v9534 = vpop.xlane.xlu0 %9533
      %v9535 = vmax.f32 %v9254, %v9256
      %9536 = vmax.xlane.f32.xlu0 %v9535
      %v9537 = vpop.xlane.xlu0 %9536
      %v9538 = vmax.f32 %v9260, %v9262
      %9539 = vmax.xlane.f32.xlu0 %v9538
      %v9540 = vpop.xlane.xlu0 %9539
      %v9541 = vmax.f32 %v9264, %v9266
      %9542 = vmax.xlane.f32.xlu0 %v9541
      %v9543 = vpop.xlane.xlu0 %9542
      %v9544 = vmax.f32 %v9270, %v9272
      %9545 = vmax.xlane.f32.xlu0 %v9544
      %v9546 = vpop.xlane.xlu0 %9545
      %v9547 = vmax.f32 %v9274, %v9276
      %9548 = vmax.xlane.f32.xlu0 %v9547
      %v9549 = vpop.xlane.xlu0 %9548
      %v9550 = vmax.f32 %v9280, %v9282
      %9551 = vmax.xlane.f32.xlu0 %v9550
      %v9552 = vpop.xlane.xlu0 %9551
      %v9553 = vmax.f32 %v9284, %v9286
      %9554 = vmax.xlane.f32.xlu0 %v9553
      %v9555 = vpop.xlane.xlu0 %9554
      %v9556 = vmax.f32 %v9290, %v9292
      %9557 = vmax.xlane.f32.xlu0 %v9556
      %v9558 = vpop.xlane.xlu0 %9557
      %v9559 = vmax.f32 %v9294, %v9296
      %9560 = vmax.xlane.f32.xlu0 %v9559
      %v9561 = vpop.xlane.xlu0 %9560
      %v9562 = vmax.f32 %v9300, %v9302
      %9563 = vmax.xlane.f32.xlu0 %v9562
      %v9564 = vpop.xlane.xlu0 %9563
      %v9565 = vmax.f32 %v9304, %v9306
      %9566 = vmax.xlane.f32.xlu0 %v9565
      %v9567 = vpop.xlane.xlu0 %9566
      %v9568 = vmax.f32 %v9310, %v9312
      %9569 = vmax.xlane.f32.xlu0 %v9568
      %v9570 = vpop.xlane.xlu0 %9569
      %v9571 = vmax.f32 %v9314, %v9316
      %9572 = vmax.xlane.f32.xlu0 %v9571
      %v9573 = vpop.xlane.xlu0 %9572
      %v9574 = vmax.f32 %v9320, %v9322
      %9575 = vmax.xlane.f32.xlu0 %v9574
      %v9576 = vpop.xlane.xlu0 %9575
      %v9577 = vmax.f32 %v9324, %v9326
      %9578 = vmax.xlane.f32.xlu0 %v9577
      %v9579 = vpop.xlane.xlu0 %9578
      %v9580 = vmax.f32 %v9330, %v9332
      %9581 = vmax.xlane.f32.xlu0 %v9580
      %v9582 = vpop.xlane.xlu0 %9581
      %v9583 = vmax.f32 %v9334, %v9336
      %9584 = vmax.xlane.f32.xlu0 %v9583
      %v9585 = vpop.xlane.xlu0 %9584
      %v9586 = vmax.f32 %v9340, %v9342
      %9587 = vmax.xlane.f32.xlu0 %v9586
      %v9588 = vpop.xlane.xlu0 %9587
      %v9589 = vmax.f32 %v9344, %v9346
      %9590 = vmax.xlane.f32.xlu0 %v9589
      %v9591 = vpop.xlane.xlu0 %9590
      %v9592 = vmax.f32 %v9350, %v9352
      %9593 = vmax.xlane.f32.xlu0 %v9592
      %v9594 = vpop.xlane.xlu0 %9593
      %v9595 = vmax.f32 %v9354, %v9356
      %9596 = vmax.xlane.f32.xlu0 %v9595
      %v9597 = vpop.xlane.xlu0 %9596
      %v9598 = vmax.f32 %v9360, %v9362
      %9599 = vmax.xlane.f32.xlu0 %v9598
      %v9600 = vpop.xlane.xlu0 %9599
      %v9601 = vmax.f32 %v9364, %v9366
      %9602 = vmax.xlane.f32.xlu0 %v9601
      %v9603 = vpop.xlane.xlu0 %9602
      %v9604 = vmax.f32 %v9370, %v9372
      %9605 = vmax.xlane.f32.xlu0 %v9604
      %v9606 = vpop.xlane.xlu0 %9605
      %v9607 = vmax.f32 %v9374, %v9376
      %9608 = vmax.xlane.f32.xlu0 %v9607
      %v9609 = vpop.xlane.xlu0 %9608
      %v9610 = vmax.f32 %v9380, %v9382
      %9611 = vmax.xlane.f32.xlu0 %v9610
      %v9612 = vpop.xlane.xlu0 %9611
      %v9613 = vmax.f32 %v9384, %v9386
      %9614 = vmax.xlane.f32.xlu0 %v9613
      %v9615 = vpop.xlane.xlu0 %9614
      %v9616 = vmax.f32 %v9390, %v9392
      %9617 = vmax.xlane.f32.xlu0 %v9616
      %v9618 = vpop.xlane.xlu0 %9617
      %v9619 = vmax.f32 %v9394, %v9396
      %9620 = vmax.xlane.f32.xlu0 %v9619
      %v9621 = vpop.xlane.xlu0 %9620
      %v9622 = vmax.f32 %v9400, %v9402
      %9623 = vmax.xlane.f32.xlu0 %v9622
      %v9624 = vpop.xlane.xlu0 %9623
      %v9625 = vmax.f32 %v9404, %v9406
      %9626 = vmax.xlane.f32.xlu0 %v9625
      %v9627 = vpop.xlane.xlu0 %9626
      %v9628 = vmax.f32 %v9410, %v9412
      %9629 = vmax.xlane.f32.xlu0 %v9628
      %v9630 = vpop.xlane.xlu0 %9629
      %v9631 = vmax.f32 %v9414, %v9416
      %9632 = vmax.xlane.f32.xlu0 %v9631
      %v9633 = vpop.xlane.xlu0 %9632
      %v9634 = vmax.f32 %v9420, %v9422
      %9635 = vmax.xlane.f32.xlu0 %v9634
      %v9636 = vpop.xlane.xlu0 %9635
      %v9637 = vmax.f32 %v9424, %v9426
      %9638 = vmax.xlane.f32.xlu0 %v9637
      %v9639 = vpop.xlane.xlu0 %9638
      %v9640 = vmax.f32 %v9430, %v9432
      %9641 = vmax.xlane.f32.xlu0 %v9640
      %v9642 = vpop.xlane.xlu0 %9641
      %v9643 = vmax.f32 %v9434, %v9436
      %9644 = vmax.xlane.f32.xlu0 %v9643
      %v9645 = vpop.xlane.xlu0 %9644
      %v9646 = vmax.f32 %v9440, %v9442
      %9647 = vmax.xlane.f32.xlu0 %v9646
      %v9648 = vpop.xlane.xlu0 %9647
      %v9649 = vmax.f32 %v9444, %v9446
      %9650 = vmax.xlane.f32.xlu0 %v9649
      %v9651 = vpop.xlane.xlu0 %9650
      %v9652 = vmax.f32 %v9450, %v9452
      %9653 = vmax.xlane.f32.xlu0 %v9652
      %v9654 = vpop.xlane.xlu0 %9653
      %v9655 = vmax.f32 %v9454, %v9456
      %9656 = vmax.xlane.f32.xlu0 %v9655
      %v9657 = vpop.xlane.xlu0 %9656
      %v9658 = vmax.f32 %v9460, %v9462
      %9659 = vmax.xlane.f32.xlu0 %v9658
      %v9660 = vpop.xlane.xlu0 %9659
      %v9661 = vmax.f32 %v9464, %v9466
      %9662 = vmax.xlane.f32.xlu0 %v9661
      %v9663 = vpop.xlane.xlu0 %9662
      %v9664 = vmax.f32 %v9470, %v9472
      %9665 = vmax.xlane.f32.xlu0 %v9664
      %v9666 = vpop.xlane.xlu0 %9665
      %v9667 = vmax.f32 %v9474, %v9476
      %9668 = vmax.xlane.f32.xlu0 %v9667
      %v9669 = vpop.xlane.xlu0 %9668
      %v9670 = vsub.f32 %v9160, %v9480
      %v9671 = vsub.f32 %v9162, %v9480
      %v9672 = vsub.f32 %v9164, %v9483
      %v9673 = vsub.f32 %v9166, %v9483
      %v9674 = vsub.f32 %v9170, %v9486
      %v9675 = vsub.f32 %v9172, %v9486
      %v9676 = vsub.f32 %v9174, %v9489
      %v9677 = vsub.f32 %v9176, %v9489
      %v9678 = vsub.f32 %v9180, %v9492
      %v9679 = vsub.f32 %v9182, %v9492
      %v9680 = vsub.f32 %v9184, %v9495
      %v9681 = vsub.f32 %v9186, %v9495
      %v9682 = vsub.f32 %v9190, %v9498
      %v9683 = vsub.f32 %v9192, %v9498
      %v9684 = vsub.f32 %v9194, %v9501
      %v9685 = vsub.f32 %v9196, %v9501
      %v9686 = vsub.f32 %v9200, %v9504
      %v9687 = vsub.f32 %v9202, %v9504
      %v9688 = vsub.f32 %v9204, %v9507
      %v9689 = vsub.f32 %v9206, %v9507
      %v9690 = vsub.f32 %v9210, %v9510
      %v9691 = vsub.f32 %v9212, %v9510
      %v9692 = vsub.f32 %v9214, %v9513
      %v9693 = vsub.f32 %v9216, %v9513
      %v9694 = vsub.f32 %v9220, %v9516
      %v9695 = vsub.f32 %v9222, %v9516
      %v9696 = vsub.f32 %v9224, %v9519
      %v9697 = vsub.f32 %v9226, %v9519
      %v9698 = vsub.f32 %v9230, %v9522
      %v9699 = vsub.f32 %v9232, %v9522
      %v9700 = vsub.f32 %v9234, %v9525
      %v9701 = vsub.f32 %v9236, %v9525
      %v9702 = vsub.f32 %v9240, %v9528
      %v9703 = vsub.f32 %v9242, %v9528
      %v9704 = vsub.f32 %v9244, %v9531
      %v9705 = vsub.f32 %v9246, %v9531
      %v9706 = vsub.f32 %v9250, %v9534
      %v9707 = vsub.f32 %v9252, %v9534
      %v9708 = vsub.f32 %v9254, %v9537
      %v9709 = vsub.f32 %v9256, %v9537
      %v9710 = vsub.f32 %v9260, %v9540
      %v9711 = vsub.f32 %v9262, %v9540
      %v9712 = vsub.f32 %v9264, %v9543
      %v9713 = vsub.f32 %v9266, %v9543
      %v9714 = vsub.f32 %v9270, %v9546
      %v9715 = vsub.f32 %v9272, %v9546
      %v9716 = vsub.f32 %v9274, %v9549
      %v9717 = vsub.f32 %v9276, %v9549
      %v9718 = vsub.f32 %v9280, %v9552
      %v9719 = vsub.f32 %v9282, %v9552
      %v9720 = vsub.f32 %v9284, %v9555
      %v9721 = vsub.f32 %v9286, %v9555
      %v9722 = vsub.f32 %v9290, %v9558
      %v9723 = vsub.f32 %v9292, %v9558
      %v9724 = vsub.f32 %v9294, %v9561
      %v9725 = vsub.f32 %v9296, %v9561
      %v9726 = vsub.f32 %v9300, %v9564
      %v9727 = vsub.f32 %v9302, %v9564
      %v9728 = vsub.f32 %v9304, %v9567
      %v9729 = vsub.f32 %v9306, %v9567
      %v9730 = vsub.f32 %v9310, %v9570
      %v9731 = vsub.f32 %v9312, %v9570
      %v9732 = vsub.f32 %v9314, %v9573
      %v9733 = vsub.f32 %v9316, %v9573
      %v9734 = vsub.f32 %v9320, %v9576
      %v9735 = vsub.f32 %v9322, %v9576
      %v9736 = vsub.f32 %v9324, %v9579
      %v9737 = vsub.f32 %v9326, %v9579
      %v9738 = vsub.f32 %v9330, %v9582
      %v9739 = vsub.f32 %v9332, %v9582
      %v9740 = vsub.f32 %v9334, %v9585
      %v9741 = vsub.f32 %v9336, %v9585
      %v9742 = vsub.f32 %v9340, %v9588
      %v9743 = vsub.f32 %v9342, %v9588
      %v9744 = vsub.f32 %v9344, %v9591
      %v9745 = vsub.f32 %v9346, %v9591
      %v9746 = vsub.f32 %v9350, %v9594
      %v9747 = vsub.f32 %v9352, %v9594
      %v9748 = vsub.f32 %v9354, %v9597
      %v9749 = vsub.f32 %v9356, %v9597
      %v9750 = vsub.f32 %v9360, %v9600
      %v9751 = vsub.f32 %v9362, %v9600
      %v9752 = vsub.f32 %v9364, %v9603
      %v9753 = vsub.f32 %v9366, %v9603
      %v9754 = vsub.f32 %v9370, %v9606
      %v9755 = vsub.f32 %v9372, %v9606
      %v9756 = vsub.f32 %v9374, %v9609
      %v9757 = vsub.f32 %v9376, %v9609
      %v9758 = vsub.f32 %v9380, %v9612
      %v9759 = vsub.f32 %v9382, %v9612
      %v9760 = vsub.f32 %v9384, %v9615
      %v9761 = vsub.f32 %v9386, %v9615
      %v9762 = vsub.f32 %v9390, %v9618
      %v9763 = vsub.f32 %v9392, %v9618
      %v9764 = vsub.f32 %v9394, %v9621
      %v9765 = vsub.f32 %v9396, %v9621
      %v9766 = vsub.f32 %v9400, %v9624
      %v9767 = vsub.f32 %v9402, %v9624
      %v9768 = vsub.f32 %v9404, %v9627
      %v9769 = vsub.f32 %v9406, %v9627
      %v9770 = vsub.f32 %v9410, %v9630
      %v9771 = vsub.f32 %v9412, %v9630
      %v9772 = vsub.f32 %v9414, %v9633
      %v9773 = vsub.f32 %v9416, %v9633
      %v9774 = vsub.f32 %v9420, %v9636
      %v9775 = vsub.f32 %v9422, %v9636
      %v9776 = vsub.f32 %v9424, %v9639
      %v9777 = vsub.f32 %v9426, %v9639
      %v9778 = vsub.f32 %v9430, %v9642
      %v9779 = vsub.f32 %v9432, %v9642
      %v9780 = vsub.f32 %v9434, %v9645
      %v9781 = vsub.f32 %v9436, %v9645
      %v9782 = vsub.f32 %v9440, %v9648
      %v9783 = vsub.f32 %v9442, %v9648
      %v9784 = vsub.f32 %v9444, %v9651
      %v9785 = vsub.f32 %v9446, %v9651
      %v9786 = vsub.f32 %v9450, %v9654
      %v9787 = vsub.f32 %v9452, %v9654
      %v9788 = vsub.f32 %v9454, %v9657
      %v9789 = vsub.f32 %v9456, %v9657
      %v9790 = vsub.f32 %v9460, %v9660
      %v9791 = vsub.f32 %v9462, %v9660
      %v9792 = vsub.f32 %v9464, %v9663
      %v9793 = vsub.f32 %v9466, %v9663
      %v9794 = vsub.f32 %v9470, %v9666
      %v9795 = vsub.f32 %v9472, %v9666
      %v9796 = vsub.f32 %v9474, %v9669
      %v9797 = vsub.f32 %v9476, %v9669
      %v9798 = vmul.f32 %v9670, 1.442695
      %v9799 = vpow.pop %v9798
      %v9800 = vmul.f32 %v9671, 1.442695
      %v9801 = vpow.pop %v9800
      %v9802 = vmul.f32 %v9672, 1.442695
      %v9803 = vpow.pop %v9802
      %v9804 = vmul.f32 %v9673, 1.442695
      %v9805 = vpow.pop %v9804
      %v9806 = vmul.f32 %v9674, 1.442695
      %v9807 = vpow.pop %v9806
      %v9808 = vmul.f32 %v9675, 1.442695
      %v9809 = vpow.pop %v9808
      %v9810 = vmul.f32 %v9676, 1.442695
      %v9811 = vpow.pop %v9810
      %v9812 = vmul.f32 %v9677, 1.442695
      %v9813 = vpow.pop %v9812
      %v9814 = vmul.f32 %v9678, 1.442695
      %v9815 = vpow.pop %v9814
      %v9816 = vmul.f32 %v9679, 1.442695
      %v9817 = vpow.pop %v9816
      %v9818 = vmul.f32 %v9680, 1.442695
      %v9819 = vpow.pop %v9818
      %v9820 = vmul.f32 %v9681, 1.442695
      %v9821 = vpow.pop %v9820
      %v9822 = vmul.f32 %v9682, 1.442695
      %v9823 = vpow.pop %v9822
      %v9824 = vmul.f32 %v9683, 1.442695
      %v9825 = vpow.pop %v9824
      %v9826 = vmul.f32 %v9684, 1.442695
      %v9827 = vpow.pop %v9826
      %v9828 = vmul.f32 %v9685, 1.442695
      %v9829 = vpow.pop %v9828
      %v9830 = vmul.f32 %v9686, 1.442695
      %v9831 = vpow.pop %v9830
      %v9832 = vmul.f32 %v9687, 1.442695
      %v9833 = vpow.pop %v9832
      %v9834 = vmul.f32 %v9688, 1.442695
      %v9835 = vpow.pop %v9834
      %v9836 = vmul.f32 %v9689, 1.442695
      %v9837 = vpow.pop %v9836
      %v9838 = vmul.f32 %v9690, 1.442695
      %v9839 = vpow.pop %v9838
      %v9840 = vmul.f32 %v9691, 1.442695
      %v9841 = vpow.pop %v9840
      %v9842 = vmul.f32 %v9692, 1.442695
      %v9843 = vpow.pop %v9842
      %v9844 = vmul.f32 %v9693, 1.442695
      %v9845 = vpow.pop %v9844
      %v9846 = vmul.f32 %v9694, 1.442695
      %v9847 = vpow.pop %v9846
      %v9848 = vmul.f32 %v9695, 1.442695
      %v9849 = vpow.pop %v9848
      %v9850 = vmul.f32 %v9696, 1.442695
      %v9851 = vpow.pop %v9850
      %v9852 = vmul.f32 %v9697, 1.442695
      %v9853 = vpow.pop %v9852
      %v9854 = vmul.f32 %v9698, 1.442695
      %v9855 = vpow.pop %v9854
      %v9856 = vmul.f32 %v9699, 1.442695
      %v9857 = vpow.pop %v9856
      %v9858 = vmul.f32 %v9700, 1.442695
      %v9859 = vpow.pop %v9858
      %v9860 = vmul.f32 %v9701, 1.442695
      %v9861 = vpow.pop %v9860
      %v9862 = vmul.f32 %v9702, 1.442695
      %v9863 = vpow.pop %v9862
      %v9864 = vmul.f32 %v9703, 1.442695
      %v9865 = vpow.pop %v9864
      %v9866 = vmul.f32 %v9704, 1.442695
      %v9867 = vpow.pop %v9866
      %v9868 = vmul.f32 %v9705, 1.442695
      %v9869 = vpow.pop %v9868
      %v9870 = vmul.f32 %v9706, 1.442695
      %v9871 = vpow.pop %v9870
      %v9872 = vmul.f32 %v9707, 1.442695
      %v9873 = vpow.pop %v9872
      %v9874 = vmul.f32 %v9708, 1.442695
      %v9875 = vpow.pop %v9874
      %v9876 = vmul.f32 %v9709, 1.442695
      %v9877 = vpow.pop %v9876
      %v9878 = vmul.f32 %v9710, 1.442695
      %v9879 = vpow.pop %v9878
      %v9880 = vmul.f32 %v9711, 1.442695
      %v9881 = vpow.pop %v9880
      %v9882 = vmul.f32 %v9712, 1.442695
      %v9883 = vpow.pop %v9882
      %v9884 = vmul.f32 %v9713, 1.442695
      %v9885 = vpow.pop %v9884
      %v9886 = vmul.f32 %v9714, 1.442695
      %v9887 = vpow.pop %v9886
      %v9888 = vmul.f32 %v9715, 1.442695
      %v9889 = vpow.pop %v9888
      %v9890 = vmul.f32 %v9716, 1.442695
      %v9891 = vpow.pop %v9890
      %v9892 = vmul.f32 %v9717, 1.442695
      %v9893 = vpow.pop %v9892
      %v9894 = vmul.f32 %v9718, 1.442695
      %v9895 = vpow.pop %v9894
      %v9896 = vmul.f32 %v9719, 1.442695
      %v9897 = vpow.pop %v9896
      %v9898 = vmul.f32 %v9720, 1.442695
      %v9899 = vpow.pop %v9898
      %v9900 = vmul.f32 %v9721, 1.442695
      %v9901 = vpow.pop %v9900
      %v9902 = vmul.f32 %v9722, 1.442695
      %v9903 = vpow.pop %v9902
      %v9904 = vmul.f32 %v9723, 1.442695
      %v9905 = vpow.pop %v9904
      %v9906 = vmul.f32 %v9724, 1.442695
      %v9907 = vpow.pop %v9906
      %v9908 = vmul.f32 %v9725, 1.442695
      %v9909 = vpow.pop %v9908
      %v9910 = vmul.f32 %v9726, 1.442695
      %v9911 = vpow.pop %v9910
      %v9912 = vmul.f32 %v9727, 1.442695
      %v9913 = vpow.pop %v9912
      %v9914 = vmul.f32 %v9728, 1.442695
      %v9915 = vpow.pop %v9914
      %v9916 = vmul.f32 %v9729, 1.442695
      %v9917 = vpow.pop %v9916
      %v9918 = vmul.f32 %v9730, 1.442695
      %v9919 = vpow.pop %v9918
      %v9920 = vmul.f32 %v9731, 1.442695
      %v9921 = vpow.pop %v9920
      %v9922 = vmul.f32 %v9732, 1.442695
      %v9923 = vpow.pop %v9922
      %v9924 = vmul.f32 %v9733, 1.442695
      %v9925 = vpow.pop %v9924
      %v9926 = vmul.f32 %v9734, 1.442695
      %v9927 = vpow.pop %v9926
      %v9928 = vmul.f32 %v9735, 1.442695
      %v9929 = vpow.pop %v9928
      %v9930 = vmul.f32 %v9736, 1.442695
      %v9931 = vpow.pop %v9930
      %v9932 = vmul.f32 %v9737, 1.442695
      %v9933 = vpow.pop %v9932
      %v9934 = vmul.f32 %v9738, 1.442695
      %v9935 = vpow.pop %v9934
      %v9936 = vmul.f32 %v9739, 1.442695
      %v9937 = vpow.pop %v9936
      %v9938 = vmul.f32 %v9740, 1.442695
      %v9939 = vpow.pop %v9938
      %v9940 = vmul.f32 %v9741, 1.442695
      %v9941 = vpow.pop %v9940
      %v9942 = vmul.f32 %v9742, 1.442695
      %v9943 = vpow.pop %v9942
      %v9944 = vmul.f32 %v9743, 1.442695
      %v9945 = vpow.pop %v9944
      %v9946 = vmul.f32 %v9744, 1.442695
      %v9947 = vpow.pop %v9946
      %v9948 = vmul.f32 %v9745, 1.442695
      %v9949 = vpow.pop %v9948
      %v9950 = vmul.f32 %v9746, 1.442695
      %v9951 = vpow.pop %v9950
      %v9952 = vmul.f32 %v9747, 1.442695
      %v9953 = vpow.pop %v9952
      %v9954 = vmul.f32 %v9748, 1.442695
      %v9955 = vpow.pop %v9954
      %v9956 = vmul.f32 %v9749, 1.442695
      %v9957 = vpow.pop %v9956
      %v9958 = vmul.f32 %v9750, 1.442695
      %v9959 = vpow.pop %v9958
      %v9960 = vmul.f32 %v9751, 1.442695
      %v9961 = vpow.pop %v9960
      %v9962 = vmul.f32 %v9752, 1.442695
      %v9963 = vpow.pop %v9962
      %v9964 = vmul.f32 %v9753, 1.442695
      %v9965 = vpow.pop %v9964
      %v9966 = vmul.f32 %v9754, 1.442695
      %v9967 = vpow.pop %v9966
      %v9968 = vmul.f32 %v9755, 1.442695
      %v9969 = vpow.pop %v9968
      %v9970 = vmul.f32 %v9756, 1.442695
      %v9971 = vpow.pop %v9970
      %v9972 = vmul.f32 %v9757, 1.442695
      %v9973 = vpow.pop %v9972
      %v9974 = vmul.f32 %v9758, 1.442695
      %v9975 = vpow.pop %v9974
      %v9976 = vmul.f32 %v9759, 1.442695
      %v9977 = vpow.pop %v9976
      %v9978 = vmul.f32 %v9760, 1.442695
      %v9979 = vpow.pop %v9978
      %v9980 = vmul.f32 %v9761, 1.442695
      %v9981 = vpow.pop %v9980
      %v9982 = vmul.f32 %v9762, 1.442695
      %v9983 = vpow.pop %v9982
      %v9984 = vmul.f32 %v9763, 1.442695
      %v9985 = vpow.pop %v9984
      %v9986 = vmul.f32 %v9764, 1.442695
      %v9987 = vpow.pop %v9986
      %v9988 = vmul.f32 %v9765, 1.442695
      %v9989 = vpow.pop %v9988
      %v9990 = vmul.f32 %v9766, 1.442695
      %v9991 = vpow.pop %v9990
      %v9992 = vmul.f32 %v9767, 1.442695
      %v9993 = vpow.pop %v9992
      %v9994 = vmul.f32 %v9768, 1.442695
      %v9995 = vpow.pop %v9994
      %v9996 = vmul.f32 %v9769, 1.442695
      %v9997 = vpow.pop %v9996
      %v9998 = vmul.f32 %v9770, 1.442695
      %v9999 = vpow.pop %v9998
      %v10000 = vmul.f32 %v9771, 1.442695
      %v10001 = vpow.pop %v10000
      %v10002 = vmul.f32 %v9772, 1.442695
      %v10003 = vpow.pop %v10002
      %v10004 = vmul.f32 %v9773, 1.442695
      %v10005 = vpow.pop %v10004
      %v10006 = vmul.f32 %v9774, 1.442695
      %v10007 = vpow.pop %v10006
      %v10008 = vmul.f32 %v9775, 1.442695
      %v10009 = vpow.pop %v10008
      %v10010 = vmul.f32 %v9776, 1.442695
      %v10011 = vpow.pop %v10010
      %v10012 = vmul.f32 %v9777, 1.442695
      %v10013 = vpow.pop %v10012
      %v10014 = vmul.f32 %v9778, 1.442695
      %v10015 = vpow.pop %v10014
      %v10016 = vmul.f32 %v9779, 1.442695
      %v10017 = vpow.pop %v10016
      %v10018 = vmul.f32 %v9780, 1.442695
      %v10019 = vpow.pop %v10018
      %v10020 = vmul.f32 %v9781, 1.442695
      %v10021 = vpow.pop %v10020
      %v10022 = vmul.f32 %v9782, 1.442695
      %v10023 = vpow.pop %v10022
      %v10024 = vmul.f32 %v9783, 1.442695
      %v10025 = vpow.pop %v10024
      %v10026 = vmul.f32 %v9784, 1.442695
      %v10027 = vpow.pop %v10026
      %v10028 = vmul.f32 %v9785, 1.442695
      %v10029 = vpow.pop %v10028
      %v10030 = vmul.f32 %v9786, 1.442695
      %v10031 = vpow.pop %v10030
      %v10032 = vmul.f32 %v9787, 1.442695
      %v10033 = vpow.pop %v10032
      %v10034 = vmul.f32 %v9788, 1.442695
      %v10035 = vpow.pop %v10034
      %v10036 = vmul.f32 %v9789, 1.442695
      %v10037 = vpow.pop %v10036
      %v10038 = vmul.f32 %v9790, 1.442695
      %v10039 = vpow.pop %v10038
      %v10040 = vmul.f32 %v9791, 1.442695
      %v10041 = vpow.pop %v10040
      %v10042 = vmul.f32 %v9792, 1.442695
      %v10043 = vpow.pop %v10042
      %v10044 = vmul.f32 %v9793, 1.442695
      %v10045 = vpow.pop %v10044
      %v10046 = vmul.f32 %v9794, 1.442695
      %v10047 = vpow.pop %v10046
      %v10048 = vmul.f32 %v9795, 1.442695
      %v10049 = vpow.pop %v10048
      %v10050 = vmul.f32 %v9796, 1.442695
      %v10051 = vpow.pop %v10050
      %v10052 = vmul.f32 %v9797, 1.442695
      %v10053 = vpow.pop %v10052
      %v10054 = vadd.f32 %v9799, %v9801
      %10055 = vadd.xlane.f32.xlu0 %v10054
      %v10056 = vpop.xlane.xlu0 %10055
      %v10057 = vadd.f32 %v9803, %v9805
      %10058 = vadd.xlane.f32.xlu0 %v10057
      %v10059 = vpop.xlane.xlu0 %10058
      %v10060 = vadd.f32 %v9807, %v9809
      %10061 = vadd.xlane.f32.xlu0 %v10060
      %v10062 = vpop.xlane.xlu0 %10061
      %v10063 = vadd.f32 %v9811, %v9813
      %10064 = vadd.xlane.f32.xlu0 %v10063
      %v10065 = vpop.xlane.xlu0 %10064
      %v10066 = vadd.f32 %v9815, %v9817
      %10067 = vadd.xlane.f32.xlu0 %v10066
      %v10068 = vpop.xlane.xlu0 %10067
      %v10069 = vadd.f32 %v9819, %v9821
      %10070 = vadd.xlane.f32.xlu0 %v10069
      %v10071 = vpop.xlane.xlu0 %10070
      %v10072 = vadd.f32 %v9823, %v9825
      %10073 = vadd.xlane.f32.xlu0 %v10072
      %v10074 = vpop.xlane.xlu0 %10073
      %v10075 = vadd.f32 %v9827, %v9829
      %10076 = vadd.xlane.f32.xlu0 %v10075
      %v10077 = vpop.xlane.xlu0 %10076
      %v10078 = vadd.f32 %v9831, %v9833
      %10079 = vadd.xlane.f32.xlu0 %v10078
      %v10080 = vpop.xlane.xlu0 %10079
      %v10081 = vadd.f32 %v9835, %v9837
      %10082 = vadd.xlane.f32.xlu0 %v10081
      %v10083 = vpop.xlane.xlu0 %10082
      %v10084 = vadd.f32 %v9839, %v9841
      %10085 = vadd.xlane.f32.xlu0 %v10084
      %v10086 = vpop.xlane.xlu0 %10085
      %v10087 = vadd.f32 %v9843, %v9845
      %10088 = vadd.xlane.f32.xlu0 %v10087
      %v10089 = vpop.xlane.xlu0 %10088
      %v10090 = vadd.f32 %v9847, %v9849
      %10091 = vadd.xlane.f32.xlu0 %v10090
      %v10092 = vpop.xlane.xlu0 %10091
      %v10093 = vadd.f32 %v9851, %v9853
      %10094 = vadd.xlane.f32.xlu0 %v10093
      %v10095 = vpop.xlane.xlu0 %10094
      %v10096 = vadd.f32 %v9855, %v9857
      %10097 = vadd.xlane.f32.xlu0 %v10096
      %v10098 = vpop.xlane.xlu0 %10097
      %v10099 = vadd.f32 %v9859, %v9861
      %10100 = vadd.xlane.f32.xlu0 %v10099
      %v10101 = vpop.xlane.xlu0 %10100
      %v10102 = vadd.f32 %v9863, %v9865
      %10103 = vadd.xlane.f32.xlu0 %v10102
      %v10104 = vpop.xlane.xlu0 %10103
      %v10105 = vadd.f32 %v9867, %v9869
      %10106 = vadd.xlane.f32.xlu0 %v10105
      %v10107 = vpop.xlane.xlu0 %10106
      %v10108 = vadd.f32 %v9871, %v9873
      %10109 = vadd.xlane.f32.xlu0 %v10108
      %v10110 = vpop.xlane.xlu0 %10109
      %v10111 = vadd.f32 %v9875, %v9877
      %10112 = vadd.xlane.f32.xlu0 %v10111
      %v10113 = vpop.xlane.xlu0 %10112
      %v10114 = vadd.f32 %v9879, %v9881
      %10115 = vadd.xlane.f32.xlu0 %v10114
      %v10116 = vpop.xlane.xlu0 %10115
      %v10117 = vadd.f32 %v9883, %v9885
      %10118 = vadd.xlane.f32.xlu0 %v10117
      %v10119 = vpop.xlane.xlu0 %10118
      %v10120 = vadd.f32 %v9887, %v9889
      %10121 = vadd.xlane.f32.xlu0 %v10120
      %v10122 = vpop.xlane.xlu0 %10121
      %v10123 = vadd.f32 %v9891, %v9893
      %10124 = vadd.xlane.f32.xlu0 %v10123
      %v10125 = vpop.xlane.xlu0 %10124
      %v10126 = vadd.f32 %v9895, %v9897
      %10127 = vadd.xlane.f32.xlu0 %v10126
      %v10128 = vpop.xlane.xlu0 %10127
      %v10129 = vadd.f32 %v9899, %v9901
      %10130 = vadd.xlane.f32.xlu0 %v10129
      %v10131 = vpop.xlane.xlu0 %10130
      %v10132 = vadd.f32 %v9903, %v9905
      %10133 = vadd.xlane.f32.xlu0 %v10132
      %v10134 = vpop.xlane.xlu0 %10133
      %v10135 = vadd.f32 %v9907, %v9909
      %10136 = vadd.xlane.f32.xlu0 %v10135
      %v10137 = vpop.xlane.xlu0 %10136
      %v10138 = vadd.f32 %v9911, %v9913
      %10139 = vadd.xlane.f32.xlu0 %v10138
      %v10140 = vpop.xlane.xlu0 %10139
      %v10141 = vadd.f32 %v9915, %v9917
      %10142 = vadd.xlane.f32.xlu0 %v10141
      %v10143 = vpop.xlane.xlu0 %10142
      %v10144 = vadd.f32 %v9919, %v9921
      %10145 = vadd.xlane.f32.xlu0 %v10144
      %v10146 = vpop.xlane.xlu0 %10145
      %v10147 = vadd.f32 %v9923, %v9925
      %10148 = vadd.xlane.f32.xlu0 %v10147
      %v10149 = vpop.xlane.xlu0 %10148
      %v10150 = vadd.f32 %v9927, %v9929
      %10151 = vadd.xlane.f32.xlu0 %v10150
      %v10152 = vpop.xlane.xlu0 %10151
      %v10153 = vadd.f32 %v9931, %v9933
      %10154 = vadd.xlane.f32.xlu0 %v10153
      %v10155 = vpop.xlane.xlu0 %10154
      %v10156 = vadd.f32 %v9935, %v9937
      %10157 = vadd.xlane.f32.xlu0 %v10156
      %v10158 = vpop.xlane.xlu0 %10157
      %v10159 = vadd.f32 %v9939, %v9941
      %10160 = vadd.xlane.f32.xlu0 %v10159
      %v10161 = vpop.xlane.xlu0 %10160
      %v10162 = vadd.f32 %v9943, %v9945
      %10163 = vadd.xlane.f32.xlu0 %v10162
      %v10164 = vpop.xlane.xlu0 %10163
      %v10165 = vadd.f32 %v9947, %v9949
      %10166 = vadd.xlane.f32.xlu0 %v10165
      %v10167 = vpop.xlane.xlu0 %10166
      %v10168 = vadd.f32 %v9951, %v9953
      %10169 = vadd.xlane.f32.xlu0 %v10168
      %v10170 = vpop.xlane.xlu0 %10169
      %v10171 = vadd.f32 %v9955, %v9957
      %10172 = vadd.xlane.f32.xlu0 %v10171
      %v10173 = vpop.xlane.xlu0 %10172
      %v10174 = vadd.f32 %v9959, %v9961
      %10175 = vadd.xlane.f32.xlu0 %v10174
      %v10176 = vpop.xlane.xlu0 %10175
      %v10177 = vadd.f32 %v9963, %v9965
      %10178 = vadd.xlane.f32.xlu0 %v10177
      %v10179 = vpop.xlane.xlu0 %10178
      %v10180 = vadd.f32 %v9967, %v9969
      %10181 = vadd.xlane.f32.xlu0 %v10180
      %v10182 = vpop.xlane.xlu0 %10181
      %v10183 = vadd.f32 %v9971, %v9973
      %10184 = vadd.xlane.f32.xlu0 %v10183
      %v10185 = vpop.xlane.xlu0 %10184
      %v10186 = vadd.f32 %v9975, %v9977
      %10187 = vadd.xlane.f32.xlu0 %v10186
      %v10188 = vpop.xlane.xlu0 %10187
      %v10189 = vadd.f32 %v9979, %v9981
      %10190 = vadd.xlane.f32.xlu0 %v10189
      %v10191 = vpop.xlane.xlu0 %10190
      %v10192 = vadd.f32 %v9983, %v9985
      %10193 = vadd.xlane.f32.xlu0 %v10192
      %v10194 = vpop.xlane.xlu0 %10193
      %v10195 = vadd.f32 %v9987, %v9989
      %10196 = vadd.xlane.f32.xlu0 %v10195
      %v10197 = vpop.xlane.xlu0 %10196
      %v10198 = vadd.f32 %v9991, %v9993
      %10199 = vadd.xlane.f32.xlu0 %v10198
      %v10200 = vpop.xlane.xlu0 %10199
      %v10201 = vadd.f32 %v9995, %v9997
      %10202 = vadd.xlane.f32.xlu0 %v10201
      %v10203 = vpop.xlane.xlu0 %10202
      %v10204 = vadd.f32 %v9999, %v10001
      %10205 = vadd.xlane.f32.xlu0 %v10204
      %v10206 = vpop.xlane.xlu0 %10205
      %v10207 = vadd.f32 %v10003, %v10005
      %10208 = vadd.xlane.f32.xlu0 %v10207
      %v10209 = vpop.xlane.xlu0 %10208
      %v10210 = vadd.f32 %v10007, %v10009
      %10211 = vadd.xlane.f32.xlu0 %v10210
      %v10212 = vpop.xlane.xlu0 %10211
      %v10213 = vadd.f32 %v10011, %v10013
      %10214 = vadd.xlane.f32.xlu0 %v10213
      %v10215 = vpop.xlane.xlu0 %10214
      %v10216 = vadd.f32 %v10015, %v10017
      %10217 = vadd.xlane.f32.xlu0 %v10216
      %v10218 = vpop.xlane.xlu0 %10217
      %v10219 = vadd.f32 %v10019, %v10021
      %10220 = vadd.xlane.f32.xlu0 %v10219
      %v10221 = vpop.xlane.xlu0 %10220
      %v10222 = vadd.f32 %v10023, %v10025
      %10223 = vadd.xlane.f32.xlu0 %v10222
      %v10224 = vpop.xlane.xlu0 %10223
      %v10225 = vadd.f32 %v10027, %v10029
      %10226 = vadd.xlane.f32.xlu0 %v10225
      %v10227 = vpop.xlane.xlu0 %10226
      %v10228 = vadd.f32 %v10031, %v10033
      %10229 = vadd.xlane.f32.xlu0 %v10228
      %v10230 = vpop.xlane.xlu0 %10229
      %v10231 = vadd.f32 %v10035, %v10037
      %10232 = vadd.xlane.f32.xlu0 %v10231
      %v10233 = vpop.xlane.xlu0 %10232
      %v10234 = vadd.f32 %v10039, %v10041
      %10235 = vadd.xlane.f32.xlu0 %v10234
      %v10236 = vpop.xlane.xlu0 %10235
      %v10237 = vadd.f32 %v10043, %v10045
      %10238 = vadd.xlane.f32.xlu0 %v10237
      %v10239 = vpop.xlane.xlu0 %10238
      %v10240 = vadd.f32 %v10047, %v10049
      %10241 = vadd.xlane.f32.xlu0 %v10240
      %v10242 = vpop.xlane.xlu0 %10241
      %v10243 = vadd.f32 %v10051, %v10053
      %10244 = vadd.xlane.f32.xlu0 %v10243
      %v10245 = vpop.xlane.xlu0 %10244
      %v10246 = vrcp.pop %v10056
      %v10247 = vrcp.pop %v10059
      %v10248 = vrcp.pop %v10062
      %v10249 = vrcp.pop %v10065
      %v10250 = vrcp.pop %v10068
      %v10251 = vrcp.pop %v10071
      %v10252 = vrcp.pop %v10074
      %v10253 = vrcp.pop %v10077
      %v10254 = vrcp.pop %v10080
      %v10255 = vrcp.pop %v10083
      %v10256 = vrcp.pop %v10086
      %v10257 = vrcp.pop %v10089
      %v10258 = vrcp.pop %v10092
      %v10259 = vrcp.pop %v10095
      %v10260 = vrcp.pop %v10098
      %v10261 = vrcp.pop %v10101
      %v10262 = vrcp.pop %v10104
      %v10263 = vrcp.pop %v10107
      %v10264 = vrcp.pop %v10110
      %v10265 = vrcp.pop %v10113
      %v10266 = vrcp.pop %v10116
      %v10267 = vrcp.pop %v10119
      %v10268 = vrcp.pop %v10122
      %v10269 = vrcp.pop %v10125
      %v10270 = vrcp.pop %v10128
      %v10271 = vrcp.pop %v10131
      %v10272 = vrcp.pop %v10134
      %v10273 = vrcp.pop %v10137
      %v10274 = vrcp.pop %v10140
      %v10275 = vrcp.pop %v10143
      %v10276 = vrcp.pop %v10146
      %v10277 = vrcp.pop %v10149
      %v10278 = vrcp.pop %v10152
      %v10279 = vrcp.pop %v10155
      %v10280 = vrcp.pop %v10158
      %v10281 = vrcp.pop %v10161
      %v10282 = vrcp.pop %v10164
      %v10283 = vrcp.pop %v10167
      %v10284 = vrcp.pop %v10170
      %v10285 = vrcp.pop %v10173
      %v10286 = vrcp.pop %v10176
      %v10287 = vrcp.pop %v10179
      %v10288 = vrcp.pop %v10182
      %v10289 = vrcp.pop %v10185
      %v10290 = vrcp.pop %v10188
      %v10291 = vrcp.pop %v10191
      %v10292 = vrcp.pop %v10194
      %v10293 = vrcp.pop %v10197
      %v10294 = vrcp.pop %v10200
      %v10295 = vrcp.pop %v10203
      %v10296 = vrcp.pop %v10206
      %v10297 = vrcp.pop %v10209
      %v10298 = vrcp.pop %v10212
      %v10299 = vrcp.pop %v10215
      %v10300 = vrcp.pop %v10218
      %v10301 = vrcp.pop %v10221
      %v10302 = vrcp.pop %v10224
      %v10303 = vrcp.pop %v10227
      %v10304 = vrcp.pop %v10230
      %v10305 = vrcp.pop %v10233
      %v10306 = vrcp.pop %v10236
      %v10307 = vrcp.pop %v10239
      %v10308 = vrcp.pop %v10242
      %v10309 = vrcp.pop %v10245
      %v10310 = vmul.f32 %v9799, %v10246
      %v10311 = vmul.f32 %v9801, %v10246
      %v10312 = vmul.f32 %v9803, %v10247
      %v10313 = vmul.f32 %v9805, %v10247
      %v10314 = vmul.f32 %v9807, %v10248
      %v10315 = vmul.f32 %v9809, %v10248
      %v10316 = vmul.f32 %v9811, %v10249
      %v10317 = vmul.f32 %v9813, %v10249
      %v10318 = vmul.f32 %v9815, %v10250
      %v10319 = vmul.f32 %v9817, %v10250
      %v10320 = vmul.f32 %v9819, %v10251
      %v10321 = vmul.f32 %v9821, %v10251
      %v10322 = vmul.f32 %v9823, %v10252
      %v10323 = vmul.f32 %v9825, %v10252
      %v10324 = vmul.f32 %v9827, %v10253
      %v10325 = vmul.f32 %v9829, %v10253
      %v10326 = vmul.f32 %v9831, %v10254
      %v10327 = vmul.f32 %v9833, %v10254
      %v10328 = vmul.f32 %v9835, %v10255
      %v10329 = vmul.f32 %v9837, %v10255
      %v10330 = vmul.f32 %v9839, %v10256
      %v10331 = vmul.f32 %v9841, %v10256
      %v10332 = vmul.f32 %v9843, %v10257
      %v10333 = vmul.f32 %v9845, %v10257
      %v10334 = vmul.f32 %v9847, %v10258
      %v10335 = vmul.f32 %v9849, %v10258
      %v10336 = vmul.f32 %v9851, %v10259
      %v10337 = vmul.f32 %v9853, %v10259
      %v10338 = vmul.f32 %v9855, %v10260
      %v10339 = vmul.f32 %v9857, %v10260
      %v10340 = vmul.f32 %v9859, %v10261
      %v10341 = vmul.f32 %v9861, %v10261
      %v10342 = vmul.f32 %v9863, %v10262
      %v10343 = vmul.f32 %v9865, %v10262
      %v10344 = vmul.f32 %v9867, %v10263
      %v10345 = vmul.f32 %v9869, %v10263
      %v10346 = vmul.f32 %v9871, %v10264
      %v10347 = vmul.f32 %v9873, %v10264
      %v10348 = vmul.f32 %v9875, %v10265
      %v10349 = vmul.f32 %v9877, %v10265
      %v10350 = vmul.f32 %v9879, %v10266
      %v10351 = vmul.f32 %v9881, %v10266
      %v10352 = vmul.f32 %v9883, %v10267
      %v10353 = vmul.f32 %v9885, %v10267
      %v10354 = vmul.f32 %v9887, %v10268
      %v10355 = vmul.f32 %v9889, %v10268
      %v10356 = vmul.f32 %v9891, %v10269
      %v10357 = vmul.f32 %v9893, %v10269
      %v10358 = vmul.f32 %v9895, %v10270
      %v10359 = vmul.f32 %v9897, %v10270
      %v10360 = vmul.f32 %v9899, %v10271
      %v10361 = vmul.f32 %v9901, %v10271
      %v10362 = vmul.f32 %v9903, %v10272
      %v10363 = vmul.f32 %v9905, %v10272
      %v10364 = vmul.f32 %v9907, %v10273
      %v10365 = vmul.f32 %v9909, %v10273
      %v10366 = vmul.f32 %v9911, %v10274
      %v10367 = vmul.f32 %v9913, %v10274
      %v10368 = vmul.f32 %v9915, %v10275
      %v10369 = vmul.f32 %v9917, %v10275
      %v10370 = vmul.f32 %v9919, %v10276
      %v10371 = vmul.f32 %v9921, %v10276
      %v10372 = vmul.f32 %v9923, %v10277
      %v10373 = vmul.f32 %v9925, %v10277
      %v10374 = vmul.f32 %v9927, %v10278
      %v10375 = vmul.f32 %v9929, %v10278
      %v10376 = vmul.f32 %v9931, %v10279
      %v10377 = vmul.f32 %v9933, %v10279
      %v10378 = vmul.f32 %v9935, %v10280
      %v10379 = vmul.f32 %v9937, %v10280
      %v10380 = vmul.f32 %v9939, %v10281
      %v10381 = vmul.f32 %v9941, %v10281
      %v10382 = vmul.f32 %v9943, %v10282
      %v10383 = vmul.f32 %v9945, %v10282
      %v10384 = vmul.f32 %v9947, %v10283
      %v10385 = vmul.f32 %v9949, %v10283
      %v10386 = vmul.f32 %v9951, %v10284
      %v10387 = vmul.f32 %v9953, %v10284
      %v10388 = vmul.f32 %v9955, %v10285
      %v10389 = vmul.f32 %v9957, %v10285
      %v10390 = vmul.f32 %v9959, %v10286
      %v10391 = vmul.f32 %v9961, %v10286
      %v10392 = vmul.f32 %v9963, %v10287
      %v10393 = vmul.f32 %v9965, %v10287
      %v10394 = vmul.f32 %v9967, %v10288
      %v10395 = vmul.f32 %v9969, %v10288
      %v10396 = vmul.f32 %v9971, %v10289
      %v10397 = vmul.f32 %v9973, %v10289
      %v10398 = vmul.f32 %v9975, %v10290
      %v10399 = vmul.f32 %v9977, %v10290
      %v10400 = vmul.f32 %v9979, %v10291
      %v10401 = vmul.f32 %v9981, %v10291
      %v10402 = vmul.f32 %v9983, %v10292
      %v10403 = vmul.f32 %v9985, %v10292
      %v10404 = vmul.f32 %v9987, %v10293
      %v10405 = vmul.f32 %v9989, %v10293
      %v10406 = vmul.f32 %v9991, %v10294
      %v10407 = vmul.f32 %v9993, %v10294
      %v10408 = vmul.f32 %v9995, %v10295
      %v10409 = vmul.f32 %v9997, %v10295
      %v10410 = vmul.f32 %v9999, %v10296
      %v10411 = vmul.f32 %v10001, %v10296
      %v10412 = vmul.f32 %v10003, %v10297
      %v10413 = vmul.f32 %v10005, %v10297
      %v10414 = vmul.f32 %v10007, %v10298
      %v10415 = vmul.f32 %v10009, %v10298
      %v10416 = vmul.f32 %v10011, %v10299
      %v10417 = vmul.f32 %v10013, %v10299
      %v10418 = vmul.f32 %v10015, %v10300
      %v10419 = vmul.f32 %v10017, %v10300
      %v10420 = vmul.f32 %v10019, %v10301
      %v10421 = vmul.f32 %v10021, %v10301
      %v10422 = vmul.f32 %v10023, %v10302
      %v10423 = vmul.f32 %v10025, %v10302
      %v10424 = vmul.f32 %v10027, %v10303
      %v10425 = vmul.f32 %v10029, %v10303
      %v10426 = vmul.f32 %v10031, %v10304
      %v10427 = vmul.f32 %v10033, %v10304
      %v10428 = vmul.f32 %v10035, %v10305
      %v10429 = vmul.f32 %v10037, %v10305
      %v10430 = vmul.f32 %v10039, %v10306
      %v10431 = vmul.f32 %v10041, %v10306
      %v10432 = vmul.f32 %v10043, %v10307
      %v10433 = vmul.f32 %v10045, %v10307
      %v10434 = vmul.f32 %v10047, %v10308
      %v10435 = vmul.f32 %v10049, %v10308
      %v10436 = vmul.f32 %v10051, %v10309
      %v10437 = vmul.f32 %v10053, %v10309
      %v10438 = vpack.c.bf16 %v10312, %v10310
      %v10439 = vpack.c.bf16 %v10313, %v10311
      %v10440 = vpack.c.bf16 %v10316, %v10314
      %v10441 = vpack.c.bf16 %v10317, %v10315
      %v10442 = vpack.c.bf16 %v10320, %v10318
      %v10443 = vpack.c.bf16 %v10321, %v10319
      %v10444 = vpack.c.bf16 %v10324, %v10322
      %v10445 = vpack.c.bf16 %v10325, %v10323
      %v10446 = vpack.c.bf16 %v10328, %v10326
      %v10447 = vpack.c.bf16 %v10329, %v10327
      %v10448 = vpack.c.bf16 %v10332, %v10330
      %v10449 = vpack.c.bf16 %v10333, %v10331
      %v10450 = vpack.c.bf16 %v10336, %v10334
      %v10451 = vpack.c.bf16 %v10337, %v10335
      %v10452 = vpack.c.bf16 %v10340, %v10338
      %v10453 = vpack.c.bf16 %v10341, %v10339
      %v10454 = vpack.c.bf16 %v10344, %v10342
      %v10455 = vpack.c.bf16 %v10345, %v10343
      %v10456 = vpack.c.bf16 %v10348, %v10346
      %v10457 = vpack.c.bf16 %v10349, %v10347
      %v10458 = vpack.c.bf16 %v10352, %v10350
      %v10459 = vpack.c.bf16 %v10353, %v10351
      %v10460 = vpack.c.bf16 %v10356, %v10354
      %v10461 = vpack.c.bf16 %v10357, %v10355
      %v10462 = vpack.c.bf16 %v10360, %v10358
      %v10463 = vpack.c.bf16 %v10361, %v10359
      %v10464 = vpack.c.bf16 %v10364, %v10362
      %v10465 = vpack.c.bf16 %v10365, %v10363
      %v10466 = vpack.c.bf16 %v10368, %v10366
      %v10467 = vpack.c.bf16 %v10369, %v10367
      %v10468 = vpack.c.bf16 %v10372, %v10370
      %v10469 = vpack.c.bf16 %v10373, %v10371
      %v10470 = vpack.c.bf16 %v10376, %v10374
      %v10471 = vpack.c.bf16 %v10377, %v10375
      %v10472 = vpack.c.bf16 %v10380, %v10378
      %v10473 = vpack.c.bf16 %v10381, %v10379
      %v10474 = vpack.c.bf16 %v10384, %v10382
      %v10475 = vpack.c.bf16 %v10385, %v10383
      %v10476 = vpack.c.bf16 %v10388, %v10386
      %v10477 = vpack.c.bf16 %v10389, %v10387
      %v10478 = vpack.c.bf16 %v10392, %v10390
      %v10479 = vpack.c.bf16 %v10393, %v10391
      %v10480 = vpack.c.bf16 %v10396, %v10394
      %v10481 = vpack.c.bf16 %v10397, %v10395
      %v10482 = vpack.c.bf16 %v10400, %v10398
      %v10483 = vpack.c.bf16 %v10401, %v10399
      %v10484 = vpack.c.bf16 %v10404, %v10402
      %v10485 = vpack.c.bf16 %v10405, %v10403
      %v10486 = vpack.c.bf16 %v10408, %v10406
      %v10487 = vpack.c.bf16 %v10409, %v10407
      %v10488 = vpack.c.bf16 %v10412, %v10410
      %v10489 = vpack.c.bf16 %v10413, %v10411
      %v10490 = vpack.c.bf16 %v10416, %v10414
      %v10491 = vpack.c.bf16 %v10417, %v10415
      %v10492 = vpack.c.bf16 %v10420, %v10418
      %v10493 = vpack.c.bf16 %v10421, %v10419
      %v10494 = vpack.c.bf16 %v10424, %v10422
      %v10495 = vpack.c.bf16 %v10425, %v10423
      %v10496 = vpack.c.bf16 %v10428, %v10426
      %v10497 = vpack.c.bf16 %v10429, %v10427
      %v10498 = vpack.c.bf16 %v10432, %v10430
      %v10499 = vpack.c.bf16 %v10433, %v10431
      %v10500 = vpack.c.bf16 %v10436, %v10434
      %v10501 = vpack.c.bf16 %v10437, %v10435
      %10502 = vrot.lane.b32.xlu0 %v2348, 72
      %v10503 = vpop.permute.xlu0 %10502
      %10504 = vrot.lane.b32.xlu0 %v2349, 72
      %v10505 = vpop.permute.xlu0 %10504
      %10506 = vrot.lane.b32.xlu0 %v2350, 72
      %v10507 = vpop.permute.xlu0 %10506
      %10508 = vrot.lane.b32.xlu0 %v2351, 72
      %v10509 = vpop.permute.xlu0 %10508
      %10510 = vrot.lane.b32.xlu0 %v2352, 72
      %v10511 = vpop.permute.xlu0 %10510
      %10512 = vrot.lane.b32.xlu0 %v2353, 72
      %v10513 = vpop.permute.xlu0 %10512
      %10514 = vrot.lane.b32.xlu0 %v2354, 72
      %v10515 = vpop.permute.xlu0 %10514
      %10516 = vrot.lane.b32.xlu0 %v2355, 72
      %v10517 = vpop.permute.xlu0 %10516
      %10518 = vrot.lane.b32.xlu0 %v2356, 72
      %v10519 = vpop.permute.xlu0 %10518
      %10520 = vrot.lane.b32.xlu0 %v2357, 72
      %v10521 = vpop.permute.xlu0 %10520
      %10522 = vrot.lane.b32.xlu0 %v2358, 72
      %v10523 = vpop.permute.xlu0 %10522
      %10524 = vrot.lane.b32.xlu0 %v2359, 72
      %v10525 = vpop.permute.xlu0 %10524
      %10526 = vrot.lane.b32.xlu0 %v2360, 72
      %v10527 = vpop.permute.xlu0 %10526
      %10528 = vrot.lane.b32.xlu0 %v2361, 72
      %v10529 = vpop.permute.xlu0 %10528
      %10530 = vrot.lane.b32.xlu0 %v2362, 72
      %v10531 = vpop.permute.xlu0 %10530
      %10532 = vrot.lane.b32.xlu0 %v2363, 72
      %v10533 = vpop.permute.xlu0 %10532
      %10550 = vmatprep.subr.bf16.mxu0 0
      %10551 = vmatpush1.bf16.msra.mxu0 %v10503
      %10552 = vmatprep.subr.bf16.mxu0 0
      %10553 = vmatpush1.bf16.msra.mxu0 %v10505
      %10554 = vmatprep.subr.bf16.mxu0 0
      %10555 = vmatpush1.bf16.msra.mxu0 %v10507
      %10556 = vmatprep.subr.bf16.mxu0 0
      %10557 = vmatpush1.bf16.msra.mxu0 %v10509
      %10558 = vmatprep.subr.bf16.mxu0 0
      %10559 = vmatpush1.bf16.msra.mxu0 %v10511
      %10560 = vmatprep.subr.bf16.mxu0 0
      %10561 = vmatpush1.bf16.msra.mxu0 %v10513
      %10562 = vmatprep.subr.bf16.mxu0 0
      %10563 = vmatpush1.bf16.msra.mxu0 %v10515
      %10564 = vmatprep.subr.bf16.mxu0 0
      %10565 = vmatpush1.bf16.msra.mxu0 %v10517
      %10566 = vmatprep.subr.bf16.mxu0 0
      %10567 = vmatpush1.bf16.msra.mxu0 %v10519
      %10568 = vmatprep.subr.bf16.mxu0 0
      %10569 = vmatpush1.bf16.msra.mxu0 %v10521
      %10570 = vmatprep.subr.bf16.mxu0 0
      %10571 = vmatpush1.bf16.msra.mxu0 %v10523
      %10572 = vmatprep.subr.bf16.mxu0 0
      %10573 = vmatpush1.bf16.msra.mxu0 %v10525
      %10574 = vmatprep.subr.bf16.mxu0 0
      %10575 = vmatpush1.bf16.msra.mxu0 %v10527
      %10576 = vmatprep.subr.bf16.mxu0 0
      %10577 = vmatpush1.bf16.msra.mxu0 %v10529
      %10578 = vmatprep.subr.bf16.mxu0 0
      %10579 = vmatpush1.bf16.msra.mxu0 %v10531
      %10580 = vmatprep.subr.bf16.mxu0 0
      %10581 = vmatpush1.bf16.msra.mxu0 %v10533
      %10582 = vmatprep.mubr.bf16.mxu0 %v10439
      %10583 = vmatmul.mubr.bf16.gmra.mrb[0].mxu0 %v10438
      %v10584 = vpop.f32.mrb[0].mxu0
      %v10585 = vadd.f32 0.0, %v10584
      %v10586 = vpop.f32.mrb[0].mxu0
      %v10587 = vpop.f32.mrb[0].mxu0
      %v10588 = vadd.f32 0.0, %v10587
      %v10589 = vpop.f32.mrb[0].mxu0
      %10590 = vmatprep.mubr.bf16.mxu0 %v10441
      %10591 = vmatmul.mubr.bf16.gmra.mrb[0].mxu0 %v10440
      %v10592 = vpop.f32.mrb[0].mxu0
      %v10593 = vadd.f32 0.0, %v10592
      %v10594 = vpop.f32.mrb[0].mxu0
      %v10595 = vpop.f32.mrb[0].mxu0
      %v10596 = vadd.f32 0.0, %v10595
      %v10597 = vpop.f32.mrb[0].mxu0
      %10598 = vmatprep.mubr.bf16.mxu0 %v10443
      %10599 = vmatmul.mubr.bf16.gmra.mrb[0].mxu0 %v10442
      %v10600 = vpop.f32.mrb[0].mxu0
      %v10601 = vadd.f32 0.0, %v10600
      %v10602 = vpop.f32.mrb[0].mxu0
      %v10603 = vpop.f32.mrb[0].mxu0
      %v10604 = vadd.f32 0.0, %v10603
      %v10605 = vpop.f32.mrb[0].mxu0
      %10606 = vmatprep.mubr.bf16.mxu0 %v10445
      %10607 = vmatmul.mubr.bf16.gmra.mrb[0].mxu0 %v10444
      %v10608 = vpop.f32.mrb[0].mxu0
      %v10609 = vadd.f32 0.0, %v10608
      %v10610 = vpop.f32.mrb[0].mxu0
      %v10611 = vpop.f32.mrb[0].mxu0
      %v10612 = vadd.f32 0.0, %v10611
      %v10613 = vpop.f32.mrb[0].mxu0
      %10614 = vmatprep.mubr.bf16.mxu0 %v10447
      %10615 = vmatmul.mubr.bf16.gmra.mrb[0].mxu0 %v10446
      %v10616 = vpop.f32.mrb[0].mxu0
      %v10617 = vadd.f32 0.0, %v10616
      %v10618 = vpop.f32.mrb[0].mxu0
      %v10619 = vpop.f32.mrb[0].mxu0
      %v10620 = vadd.f32 0.0, %v10619
      %v10621 = vpop.f32.mrb[0].mxu0
      %10622 = vmatprep.mubr.bf16.mxu0 %v10449
      %10623 = vmatmul.mubr.bf16.gmra.mrb[0].mxu0 %v10448
      %v10624 = vpop.f32.mrb[0].mxu0
      %v10625 = vadd.f32 0.0, %v10624
      %v10626 = vpop.f32.mrb[0].mxu0
      %v10627 = vpop.f32.mrb[0].mxu0
      %v10628 = vadd.f32 0.0, %v10627
      %v10629 = vpop.f32.mrb[0].mxu0
      %10630 = vmatprep.mubr.bf16.mxu0 %v10451
      %10631 = vmatmul.mubr.bf16.gmra.mrb[0].mxu0 %v10450
      %v10632 = vpop.f32.mrb[0].mxu0
      %v10633 = vadd.f32 0.0, %v10632
      %v10634 = vpop.f32.mrb[0].mxu0
      %v10635 = vpop.f32.mrb[0].mxu0
      %v10636 = vadd.f32 0.0, %v10635
      %v10637 = vpop.f32.mrb[0].mxu0
      %10638 = vmatprep.mubr.bf16.mxu0 %v10453
      %10639 = vmatmul.mubr.bf16.gmra.mrb[0].mxu0 %v10452
      %v10640 = vpop.f32.mrb[0].mxu0
      %v10641 = vadd.f32 0.0, %v10640
      %v10642 = vpop.f32.mrb[0].mxu0
      %v10643 = vpop.f32.mrb[0].mxu0
      %v10644 = vadd.f32 0.0, %v10643
      %v10645 = vpop.f32.mrb[0].mxu0
      %10646 = vmatprep.mubr.bf16.mxu0 %v10455
      %10647 = vmatmul.mubr.bf16.gmra.mrb[0].mxu0 %v10454
      %v10648 = vpop.f32.mrb[0].mxu0
      %v10649 = vadd.f32 0.0, %v10648
      %v10650 = vpop.f32.mrb[0].mxu0
      %v10651 = vpop.f32.mrb[0].mxu0
      %v10652 = vadd.f32 0.0, %v10651
      %v10653 = vpop.f32.mrb[0].mxu0
      %10654 = vmatprep.mubr.bf16.mxu0 %v10457
      %10655 = vmatmul.mubr.bf16.gmra.mrb[0].mxu0 %v10456
      %v10656 = vpop.f32.mrb[0].mxu0
      %v10657 = vadd.f32 0.0, %v10656
      %v10658 = vpop.f32.mrb[0].mxu0
      %v10659 = vpop.f32.mrb[0].mxu0
      %v10660 = vadd.f32 0.0, %v10659
      %v10661 = vpop.f32.mrb[0].mxu0
      %10662 = vmatprep.mubr.bf16.mxu0 %v10459
      %10663 = vmatmul.mubr.bf16.gmra.mrb[0].mxu0 %v10458
      %v10664 = vpop.f32.mrb[0].mxu0
      %v10665 = vadd.f32 0.0, %v10664
      %v10666 = vpop.f32.mrb[0].mxu0
      %v10667 = vpop.f32.mrb[0].mxu0
      %v10668 = vadd.f32 0.0, %v10667
      %v10669 = vpop.f32.mrb[0].mxu0
      %10670 = vmatprep.mubr.bf16.mxu0 %v10461
      %10671 = vmatmul.mubr.bf16.gmra.mrb[0].mxu0 %v10460
      %v10672 = vpop.f32.mrb[0].mxu0
      %v10673 = vadd.f32 0.0, %v10672
      %v10674 = vpop.f32.mrb[0].mxu0
      %v10675 = vpop.f32.mrb[0].mxu0
      %v10676 = vadd.f32 0.0, %v10675
      %v10677 = vpop.f32.mrb[0].mxu0
      %10678 = vmatprep.mubr.bf16.mxu0 %v10463
      %10679 = vmatmul.mubr.bf16.gmra.mrb[0].mxu0 %v10462
      %v10680 = vpop.f32.mrb[0].mxu0
      %v10681 = vadd.f32 0.0, %v10680
      %v10682 = vpop.f32.mrb[0].mxu0
      %v10683 = vpop.f32.mrb[0].mxu0
      %v10684 = vadd.f32 0.0, %v10683
      %v10685 = vpop.f32.mrb[0].mxu0
      %10686 = vmatprep.mubr.bf16.mxu0 %v10465
      %10687 = vmatmul.mubr.bf16.gmra.mrb[0].mxu0 %v10464
      %v10688 = vpop.f32.mrb[0].mxu0
      %v10689 = vadd.f32 0.0, %v10688
      %v10690 = vpop.f32.mrb[0].mxu0
      %v10691 = vpop.f32.mrb[0].mxu0
      %v10692 = vadd.f32 0.0, %v10691
      %v10693 = vpop.f32.mrb[0].mxu0
      %10694 = vmatprep.mubr.bf16.mxu0 %v10467
      %10695 = vmatmul.mubr.bf16.gmra.mrb[0].mxu0 %v10466
      %v10696 = vpop.f32.mrb[0].mxu0
      %v10697 = vadd.f32 0.0, %v10696
      %v10698 = vpop.f32.mrb[0].mxu0
      %v10699 = vpop.f32.mrb[0].mxu0
      %v10700 = vadd.f32 0.0, %v10699
      %v10701 = vpop.f32.mrb[0].mxu0
      %10702 = vmatprep.mubr.bf16.mxu0 %v10469
      %10703 = vmatmul.mubr.bf16.gmra.mrb[0].mxu0 %v10468
      %v10704 = vpop.f32.mrb[0].mxu0
      %v10705 = vadd.f32 0.0, %v10704
      %v10706 = vpop.f32.mrb[0].mxu0
      %v10707 = vpop.f32.mrb[0].mxu0
      %v10708 = vadd.f32 0.0, %v10707
      %v10709 = vpop.f32.mrb[0].mxu0
      %10710 = vmatprep.mubr.bf16.mxu0 %v10471
      %10711 = vmatmul.mubr.bf16.gmra.mrb[0].mxu0 %v10470
      %v10712 = vpop.f32.mrb[0].mxu0
      %v10713 = vadd.f32 0.0, %v10712
      %v10714 = vpop.f32.mrb[0].mxu0
      %v10715 = vpop.f32.mrb[0].mxu0
      %v10716 = vadd.f32 0.0, %v10715
      %v10717 = vpop.f32.mrb[0].mxu0
      %10718 = vmatprep.mubr.bf16.mxu0 %v10473
      %10719 = vmatmul.mubr.bf16.gmra.mrb[0].mxu0 %v10472
      %v10720 = vpop.f32.mrb[0].mxu0
      %v10721 = vadd.f32 0.0, %v10720
      %v10722 = vpop.f32.mrb[0].mxu0
      %v10723 = vpop.f32.mrb[0].mxu0
      %v10724 = vadd.f32 0.0, %v10723
      %v10725 = vpop.f32.mrb[0].mxu0
      %10726 = vmatprep.mubr.bf16.mxu0 %v10475
      %10727 = vmatmul.mubr.bf16.gmra.mrb[0].mxu0 %v10474
      %v10728 = vpop.f32.mrb[0].mxu0
      %v10729 = vadd.f32 0.0, %v10728
      %v10730 = vpop.f32.mrb[0].mxu0
      %v10731 = vpop.f32.mrb[0].mxu0
      %v10732 = vadd.f32 0.0, %v10731
      %v10733 = vpop.f32.mrb[0].mxu0
      %10734 = vmatprep.mubr.bf16.mxu0 %v10477
      %10735 = vmatmul.mubr.bf16.gmra.mrb[0].mxu0 %v10476
      %v10736 = vpop.f32.mrb[0].mxu0
      %v10737 = vadd.f32 0.0, %v10736
      %v10738 = vpop.f32.mrb[0].mxu0
      %v10739 = vpop.f32.mrb[0].mxu0
      %v10740 = vadd.f32 0.0, %v10739
      %v10741 = vpop.f32.mrb[0].mxu0
      %10742 = vmatprep.mubr.bf16.mxu0 %v10479
      %10743 = vmatmul.mubr.bf16.gmra.mrb[0].mxu0 %v10478
      %v10744 = vpop.f32.mrb[0].mxu0
      %v10745 = vadd.f32 0.0, %v10744
      %v10746 = vpop.f32.mrb[0].mxu0
      %v10747 = vpop.f32.mrb[0].mxu0
      %v10748 = vadd.f32 0.0, %v10747
      %v10749 = vpop.f32.mrb[0].mxu0
      %10750 = vmatprep.mubr.bf16.mxu0 %v10481
      %10751 = vmatmul.mubr.bf16.gmra.mrb[0].mxu0 %v10480
      %v10752 = vpop.f32.mrb[0].mxu0
      %v10753 = vadd.f32 0.0, %v10752
      %v10754 = vpop.f32.mrb[0].mxu0
      %v10755 = vpop.f32.mrb[0].mxu0
      %v10756 = vadd.f32 0.0, %v10755
      %v10757 = vpop.f32.mrb[0].mxu0
      %10758 = vmatprep.mubr.bf16.mxu0 %v10483
      %10759 = vmatmul.mubr.bf16.gmra.mrb[0].mxu0 %v10482
      %v10760 = vpop.f32.mrb[0].mxu0
      %v10761 = vadd.f32 0.0, %v10760
      %v10762 = vpop.f32.mrb[0].mxu0
      %v10763 = vpop.f32.mrb[0].mxu0
      %v10764 = vadd.f32 0.0, %v10763
      %v10765 = vpop.f32.mrb[0].mxu0
      %10766 = vmatprep.mubr.bf16.mxu0 %v10485
      %10767 = vmatmul.mubr.bf16.gmra.mrb[0].mxu0 %v10484
      %v10768 = vpop.f32.mrb[0].mxu0
      %v10769 = vadd.f32 0.0, %v10768
      %v10770 = vpop.f32.mrb[0].mxu0
      %v10771 = vpop.f32.mrb[0].mxu0
      %v10772 = vadd.f32 0.0, %v10771
      %v10773 = vpop.f32.mrb[0].mxu0
      %10774 = vmatprep.mubr.bf16.mxu0 %v10487
      %10775 = vmatmul.mubr.bf16.gmra.mrb[0].mxu0 %v10486
      %v10776 = vpop.f32.mrb[0].mxu0
      %v10777 = vadd.f32 0.0, %v10776
      %v10778 = vpop.f32.mrb[0].mxu0
      %v10779 = vpop.f32.mrb[0].mxu0
      %v10780 = vadd.f32 0.0, %v10779
      %v10781 = vpop.f32.mrb[0].mxu0
      %10782 = vmatprep.mubr.bf16.mxu0 %v10489
      %10783 = vmatmul.mubr.bf16.gmra.mrb[0].mxu0 %v10488
      %v10784 = vpop.f32.mrb[0].mxu0
      %v10785 = vadd.f32 0.0, %v10784
      %v10786 = vpop.f32.mrb[0].mxu0
      %v10787 = vpop.f32.mrb[0].mxu0
      %v10788 = vadd.f32 0.0, %v10787
      %v10789 = vpop.f32.mrb[0].mxu0
      %10790 = vmatprep.mubr.bf16.mxu0 %v10491
      %10791 = vmatmul.mubr.bf16.gmra.mrb[0].mxu0 %v10490
      %v10792 = vpop.f32.mrb[0].mxu0
      %v10793 = vadd.f32 0.0, %v10792
      %v10794 = vpop.f32.mrb[0].mxu0
      %v10795 = vpop.f32.mrb[0].mxu0
      %v10796 = vadd.f32 0.0, %v10795
      %v10797 = vpop.f32.mrb[0].mxu0
      %10798 = vmatprep.mubr.bf16.mxu0 %v10493
      %10799 = vmatmul.mubr.bf16.gmra.mrb[0].mxu0 %v10492
      %v10800 = vpop.f32.mrb[0].mxu0
      %v10801 = vadd.f32 0.0, %v10800
      %v10802 = vpop.f32.mrb[0].mxu0
      %v10803 = vpop.f32.mrb[0].mxu0
      %v10804 = vadd.f32 0.0, %v10803
      %v10805 = vpop.f32.mrb[0].mxu0
      %10806 = vmatprep.mubr.bf16.mxu0 %v10495
      %10807 = vmatmul.mubr.bf16.gmra.mrb[0].mxu0 %v10494
      %v10808 = vpop.f32.mrb[0].mxu0
      %v10809 = vadd.f32 0.0, %v10808
      %v10810 = vpop.f32.mrb[0].mxu0
      %v10811 = vpop.f32.mrb[0].mxu0
      %v10812 = vadd.f32 0.0, %v10811
      %v10813 = vpop.f32.mrb[0].mxu0
      %10814 = vmatprep.mubr.bf16.mxu0 %v10497
      %10815 = vmatmul.mubr.bf16.gmra.mrb[0].mxu0 %v10496
      %v10816 = vpop.f32.mrb[0].mxu0
      %v10817 = vadd.f32 0.0, %v10816
      %v10818 = vpop.f32.mrb[0].mxu0
      %v10819 = vpop.f32.mrb[0].mxu0
      %v10820 = vadd.f32 0.0, %v10819
      %v10821 = vpop.f32.mrb[0].mxu0
      %10822 = vmatprep.mubr.bf16.mxu0 %v10499
      %10823 = vmatmul.mubr.bf16.gmra.mrb[0].mxu0 %v10498
      %v10824 = vpop.f32.mrb[0].mxu0
      %v10825 = vadd.f32 0.0, %v10824
      %v10826 = vpop.f32.mrb[0].mxu0
      %v10827 = vpop.f32.mrb[0].mxu0
      %v10828 = vadd.f32 0.0, %v10827
      %v10829 = vpop.f32.mrb[0].mxu0
      %10830 = vmatprep.mubr.bf16.mxu0 %v10501
      %10831 = vmatmul.mubr.bf16.gmra.mrb[0].mxu0 %v10500
      %v10832 = vpop.f32.mrb[0].mxu0
      %v10833 = vadd.f32 0.0, %v10832
      %v10834 = vpop.f32.mrb[0].mxu0
      %v10835 = vpop.f32.mrb[0].mxu0
      %v10836 = vadd.f32 0.0, %v10835
      %v10837 = vpop.f32.mrb[0].mxu0
      %10838 = vdwg.mxu0
      %10903 = vrot.lane.b32.xlu0 %v10585, 24
      %v10904 = vpop.permute.xlu0 %10903
      %10905 = vrot.lane.b32.xlu0 %v10588, 24
      %v10906 = vpop.permute.xlu0 %10905
      %10907 = vrot.lane.b32.xlu0 %v10593, 24
      %v10908 = vpop.permute.xlu0 %10907
      %10909 = vrot.lane.b32.xlu0 %v10596, 24
      %v10910 = vpop.permute.xlu0 %10909
      %10911 = vrot.lane.b32.xlu0 %v10601, 24
      %v10912 = vpop.permute.xlu0 %10911
      %10913 = vrot.lane.b32.xlu0 %v10604, 24
      %v10914 = vpop.permute.xlu0 %10913
      %10915 = vrot.lane.b32.xlu0 %v10609, 24
      %v10916 = vpop.permute.xlu0 %10915
      %10917 = vrot.lane.b32.xlu0 %v10612, 24
      %v10918 = vpop.permute.xlu0 %10917
      %10919 = vrot.lane.b32.xlu0 %v10617, 24
      %v10920 = vpop.permute.xlu0 %10919
      %10921 = vrot.lane.b32.xlu0 %v10620, 24
      %v10922 = vpop.permute.xlu0 %10921
      %10923 = vrot.lane.b32.xlu0 %v10625, 24
      %v10924 = vpop.permute.xlu0 %10923
      %10925 = vrot.lane.b32.xlu0 %v10628, 24
      %v10926 = vpop.permute.xlu0 %10925
      %10927 = vrot.lane.b32.xlu0 %v10633, 24
      %v10928 = vpop.permute.xlu0 %10927
      %10929 = vrot.lane.b32.xlu0 %v10636, 24
      %v10930 = vpop.permute.xlu0 %10929
      %10931 = vrot.lane.b32.xlu0 %v10641, 24
      %v10932 = vpop.permute.xlu0 %10931
      %10933 = vrot.lane.b32.xlu0 %v10644, 24
      %v10934 = vpop.permute.xlu0 %10933
      %10935 = vrot.lane.b32.xlu0 %v10649, 24
      %v10936 = vpop.permute.xlu0 %10935
      %10937 = vrot.lane.b32.xlu0 %v10652, 24
      %v10938 = vpop.permute.xlu0 %10937
      %10939 = vrot.lane.b32.xlu0 %v10657, 24
      %v10940 = vpop.permute.xlu0 %10939
      %10941 = vrot.lane.b32.xlu0 %v10660, 24
      %v10942 = vpop.permute.xlu0 %10941
      %10943 = vrot.lane.b32.xlu0 %v10665, 24
      %v10944 = vpop.permute.xlu0 %10943
      %10945 = vrot.lane.b32.xlu0 %v10668, 24
      %v10946 = vpop.permute.xlu0 %10945
      %10947 = vrot.lane.b32.xlu0 %v10673, 24
      %v10948 = vpop.permute.xlu0 %10947
      %10949 = vrot.lane.b32.xlu0 %v10676, 24
      %v10950 = vpop.permute.xlu0 %10949
      %10951 = vrot.lane.b32.xlu0 %v10681, 24
      %v10952 = vpop.permute.xlu0 %10951
      %10953 = vrot.lane.b32.xlu0 %v10684, 24
      %v10954 = vpop.permute.xlu0 %10953
      %10955 = vrot.lane.b32.xlu0 %v10689, 24
      %v10956 = vpop.permute.xlu0 %10955
      %10957 = vrot.lane.b32.xlu0 %v10692, 24
      %v10958 = vpop.permute.xlu0 %10957
      %10959 = vrot.lane.b32.xlu0 %v10697, 24
      %v10960 = vpop.permute.xlu0 %10959
      %10961 = vrot.lane.b32.xlu0 %v10700, 24
      %v10962 = vpop.permute.xlu0 %10961
      %10963 = vrot.lane.b32.xlu0 %v10705, 24
      %v10964 = vpop.permute.xlu0 %10963
      %10965 = vrot.lane.b32.xlu0 %v10708, 24
      %v10966 = vpop.permute.xlu0 %10965
      %10967 = vrot.lane.b32.xlu0 %v10713, 24
      %v10968 = vpop.permute.xlu0 %10967
      %10969 = vrot.lane.b32.xlu0 %v10716, 24
      %v10970 = vpop.permute.xlu0 %10969
      %10971 = vrot.lane.b32.xlu0 %v10721, 24
      %v10972 = vpop.permute.xlu0 %10971
      %10973 = vrot.lane.b32.xlu0 %v10724, 24
      %v10974 = vpop.permute.xlu0 %10973
      %10975 = vrot.lane.b32.xlu0 %v10729, 24
      %v10976 = vpop.permute.xlu0 %10975
      %10977 = vrot.lane.b32.xlu0 %v10732, 24
      %v10978 = vpop.permute.xlu0 %10977
      %10979 = vrot.lane.b32.xlu0 %v10737, 24
      %v10980 = vpop.permute.xlu0 %10979
      %10981 = vrot.lane.b32.xlu0 %v10740, 24
      %v10982 = vpop.permute.xlu0 %10981
      %10983 = vrot.lane.b32.xlu0 %v10745, 24
      %v10984 = vpop.permute.xlu0 %10983
      %10985 = vrot.lane.b32.xlu0 %v10748, 24
      %v10986 = vpop.permute.xlu0 %10985
      %10987 = vrot.lane.b32.xlu0 %v10753, 24
      %v10988 = vpop.permute.xlu0 %10987
      %10989 = vrot.lane.b32.xlu0 %v10756, 24
      %v10990 = vpop.permute.xlu0 %10989
      %10991 = vrot.lane.b32.xlu0 %v10761, 24
      %v10992 = vpop.permute.xlu0 %10991
      %10993 = vrot.lane.b32.xlu0 %v10764, 24
      %v10994 = vpop.permute.xlu0 %10993
      %10995 = vrot.lane.b32.xlu0 %v10769, 24
      %v10996 = vpop.permute.xlu0 %10995
      %10997 = vrot.lane.b32.xlu0 %v10772, 24
      %v10998 = vpop.permute.xlu0 %10997
      %10999 = vrot.lane.b32.xlu0 %v10777, 24
      %v11000 = vpop.permute.xlu0 %10999
      %11001 = vrot.lane.b32.xlu0 %v10780, 24
      %v11002 = vpop.permute.xlu0 %11001
      %11003 = vrot.lane.b32.xlu0 %v10785, 24
      %v11004 = vpop.permute.xlu0 %11003
      %11005 = vrot.lane.b32.xlu0 %v10788, 24
      %v11006 = vpop.permute.xlu0 %11005
      %11007 = vrot.lane.b32.xlu0 %v10793, 24
      %v11008 = vpop.permute.xlu0 %11007
      %11009 = vrot.lane.b32.xlu0 %v10796, 24
      %v11010 = vpop.permute.xlu0 %11009
      %11011 = vrot.lane.b32.xlu0 %v10801, 24
      %v11012 = vpop.permute.xlu0 %11011
      %11013 = vrot.lane.b32.xlu0 %v10804, 24
      %v11014 = vpop.permute.xlu0 %11013
      %11015 = vrot.lane.b32.xlu0 %v10809, 24
      %v11016 = vpop.permute.xlu0 %11015
      %11017 = vrot.lane.b32.xlu0 %v10812, 24
      %v11018 = vpop.permute.xlu0 %11017
      %11019 = vrot.lane.b32.xlu0 %v10817, 24
      %v11020 = vpop.permute.xlu0 %11019
      %11021 = vrot.lane.b32.xlu0 %v10820, 24
      %v11022 = vpop.permute.xlu0 %11021
      %11023 = vrot.lane.b32.xlu0 %v10825, 24
      %v11024 = vpop.permute.xlu0 %11023
      %11025 = vrot.lane.b32.xlu0 %v10828, 24
      %v11026 = vpop.permute.xlu0 %11025
      %11027 = vrot.lane.b32.xlu0 %v10833, 24
      %v11028 = vpop.permute.xlu0 %11027
      %11029 = vrot.lane.b32.xlu0 %v10836, 24
      %v11030 = vpop.permute.xlu0 %11029
      %vm11095 = vcmask 261312
      %11096 = vst.msk [vmem:[#allocation3] sm:$0xff] %vm11095, %v10904
      %11097 = vst.msk [vmem:[#allocation3 + $0x8] sm:$0xff] %vm11095, %v10906
      %11098 = vst.msk [vmem:[#allocation3 + $0x10] sm:$0xff] %vm11095, %v10908
      %11099 = vst.msk [vmem:[#allocation3 + $0x18] sm:$0xff] %vm11095, %v10910
      %11100 = vst.msk [vmem:[#allocation3 + $0x20] sm:$0xff] %vm11095, %v10912
      %11101 = vst.msk [vmem:[#allocation3 + $0x28] sm:$0xff] %vm11095, %v10914
      %11102 = vst.msk [vmem:[#allocation3 + $0x30] sm:$0xff] %vm11095, %v10916
      %11103 = vst.msk [vmem:[#allocation3 + $0x38] sm:$0xff] %vm11095, %v10918
      %11104 = vst.msk [vmem:[#allocation3 + $0x40] sm:$0xff] %vm11095, %v10920
      %11105 = vst.msk [vmem:[#allocation3 + $0x48] sm:$0xff] %vm11095, %v10922
      %11106 = vst.msk [vmem:[#allocation3 + $0x50] sm:$0xff] %vm11095, %v10924
      %11107 = vst.msk [vmem:[#allocation3 + $0x58] sm:$0xff] %vm11095, %v10926
      %11108 = vst.msk [vmem:[#allocation3 + $0x60] sm:$0xff] %vm11095, %v10928
      %11109 = vst.msk [vmem:[#allocation3 + $0x68] sm:$0xff] %vm11095, %v10930
      %11110 = vst.msk [vmem:[#allocation3 + $0x70] sm:$0xff] %vm11095, %v10932
      %11111 = vst.msk [vmem:[#allocation3 + $0x78] sm:$0xff] %vm11095, %v10934
      %11112 = vst.msk [vmem:[#allocation3 + $0x80] sm:$0xff] %vm11095, %v10936
      %11113 = vst.msk [vmem:[#allocation3 + $0x88] sm:$0xff] %vm11095, %v10938
      %11114 = vst.msk [vmem:[#allocation3 + $0x90] sm:$0xff] %vm11095, %v10940
      %11115 = vst.msk [vmem:[#allocation3 + $0x98] sm:$0xff] %vm11095, %v10942
      %11116 = vst.msk [vmem:[#allocation3 + $0xa0] sm:$0xff] %vm11095, %v10944
      %11117 = vst.msk [vmem:[#allocation3 + $0xa8] sm:$0xff] %vm11095, %v10946
      %11118 = vst.msk [vmem:[#allocation3 + $0xb0] sm:$0xff] %vm11095, %v10948
      %11119 = vst.msk [vmem:[#allocation3 + $0xb8] sm:$0xff] %vm11095, %v10950
      %11120 = vst.msk [vmem:[#allocation3 + $0xc0] sm:$0xff] %vm11095, %v10952
      %11121 = vst.msk [vmem:[#allocation3 + $0xc8] sm:$0xff] %vm11095, %v10954
      %11122 = vst.msk [vmem:[#allocation3 + $0xd0] sm:$0xff] %vm11095, %v10956
      %11123 = vst.msk [vmem:[#allocation3 + $0xd8] sm:$0xff] %vm11095, %v10958
      %11124 = vst.msk [vmem:[#allocation3 + $0xe0] sm:$0xff] %vm11095, %v10960
      %11125 = vst.msk [vmem:[#allocation3 + $0xe8] sm:$0xff] %vm11095, %v10962
      %11126 = vst.msk [vmem:[#allocation3 + $0xf0] sm:$0xff] %vm11095, %v10964
      %11127 = vst.msk [vmem:[#allocation3 + $0xf8] sm:$0xff] %vm11095, %v10966
      %11128 = vst.msk [vmem:[#allocation3 + $0x100] sm:$0xff] %vm11095, %v10968
      %11129 = vst.msk [vmem:[#allocation3 + $0x108] sm:$0xff] %vm11095, %v10970
      %11130 = vst.msk [vmem:[#allocation3 + $0x110] sm:$0xff] %vm11095, %v10972
      %11131 = vst.msk [vmem:[#allocation3 + $0x118] sm:$0xff] %vm11095, %v10974
      %11132 = vst.msk [vmem:[#allocation3 + $0x120] sm:$0xff] %vm11095, %v10976
      %11133 = vst.msk [vmem:[#allocation3 + $0x128] sm:$0xff] %vm11095, %v10978
      %11134 = vst.msk [vmem:[#allocation3 + $0x130] sm:$0xff] %vm11095, %v10980
      %11135 = vst.msk [vmem:[#allocation3 + $0x138] sm:$0xff] %vm11095, %v10982
      %11136 = vst.msk [vmem:[#allocation3 + $0x140] sm:$0xff] %vm11095, %v10984
      %11137 = vst.msk [vmem:[#allocation3 + $0x148] sm:$0xff] %vm11095, %v10986
      %11138 = vst.msk [vmem:[#allocation3 + $0x150] sm:$0xff] %vm11095, %v10988
      %11139 = vst.msk [vmem:[#allocation3 + $0x158] sm:$0xff] %vm11095, %v10990
      %11140 = vst.msk [vmem:[#allocation3 + $0x160] sm:$0xff] %vm11095, %v10992
      %11141 = vst.msk [vmem:[#allocation3 + $0x168] sm:$0xff] %vm11095, %v10994
      %11142 = vst.msk [vmem:[#allocation3 + $0x170] sm:$0xff] %vm11095, %v10996
      %11143 = vst.msk [vmem:[#allocation3 + $0x178] sm:$0xff] %vm11095, %v10998
      %11144 = vst.msk [vmem:[#allocation3 + $0x180] sm:$0xff] %vm11095, %v11000
      %11145 = vst.msk [vmem:[#allocation3 + $0x188] sm:$0xff] %vm11095, %v11002
      %11146 = vst.msk [vmem:[#allocation3 + $0x190] sm:$0xff] %vm11095, %v11004
      %11147 = vst.msk [vmem:[#allocation3 + $0x198] sm:$0xff] %vm11095, %v11006
      %11148 = vst.msk [vmem:[#allocation3 + $0x1a0] sm:$0xff] %vm11095, %v11008
      %11149 = vst.msk [vmem:[#allocation3 + $0x1a8] sm:$0xff] %vm11095, %v11010
      %11150 = vst.msk [vmem:[#allocation3 + $0x1b0] sm:$0xff] %vm11095, %v11012
      %11151 = vst.msk [vmem:[#allocation3 + $0x1b8] sm:$0xff] %vm11095, %v11014
      %11152 = vst.msk [vmem:[#allocation3 + $0x1c0] sm:$0xff] %vm11095, %v11016
      %11153 = vst.msk [vmem:[#allocation3 + $0x1c8] sm:$0xff] %vm11095, %v11018
      %11154 = vst.msk [vmem:[#allocation3 + $0x1d0] sm:$0xff] %vm11095, %v11020
      %11155 = vst.msk [vmem:[#allocation3 + $0x1d8] sm:$0xff] %vm11095, %v11022
      %11156 = vst.msk [vmem:[#allocation3 + $0x1e0] sm:$0xff] %vm11095, %v11024
      %11157 = vst.msk [vmem:[#allocation3 + $0x1e8] sm:$0xff] %vm11095, %v11026
      %11158 = vst.msk [vmem:[#allocation3 + $0x1f0] sm:$0xff] %vm11095, %v11028
      %11159 = vst.msk [vmem:[#allocation3 + $0x1f8] sm:$0xff] %vm11095, %v11030
      %v11160 = vld [vmem:[#allocation3] sm:$0xff]
      %v11161 = vld [vmem:[#allocation3 + $0x8] sm:$0xff]
      %v11162 = vld [vmem:[#allocation3 + $0x10] sm:$0xff]
      %v11163 = vld [vmem:[#allocation3 + $0x18] sm:$0xff]
      %v11164 = vld [vmem:[#allocation3 + $0x20] sm:$0xff]
      %v11165 = vld [vmem:[#allocation3 + $0x28] sm:$0xff]
      %v11166 = vld [vmem:[#allocation3 + $0x30] sm:$0xff]
      %v11167 = vld [vmem:[#allocation3 + $0x38] sm:$0xff]
      %v11168 = vld [vmem:[#allocation3 + $0x40] sm:$0xff]
      %v11169 = vld [vmem:[#allocation3 + $0x48] sm:$0xff]
      %v11170 = vld [vmem:[#allocation3 + $0x50] sm:$0xff]
      %v11171 = vld [vmem:[#allocation3 + $0x58] sm:$0xff]
      %v11172 = vld [vmem:[#allocation3 + $0x60] sm:$0xff]
      %v11173 = vld [vmem:[#allocation3 + $0x68] sm:$0xff]
      %v11174 = vld [vmem:[#allocation3 + $0x70] sm:$0xff]
      %v11175 = vld [vmem:[#allocation3 + $0x78] sm:$0xff]
      %v11176 = vld [vmem:[#allocation3 + $0x80] sm:$0xff]
      %v11177 = vld [vmem:[#allocation3 + $0x88] sm:$0xff]
      %v11178 = vld [vmem:[#allocation3 + $0x90] sm:$0xff]
      %v11179 = vld [vmem:[#allocation3 + $0x98] sm:$0xff]
      %v11180 = vld [vmem:[#allocation3 + $0xa0] sm:$0xff]
      %v11181 = vld [vmem:[#allocation3 + $0xa8] sm:$0xff]
      %v11182 = vld [vmem:[#allocation3 + $0xb0] sm:$0xff]
      %v11183 = vld [vmem:[#allocation3 + $0xb8] sm:$0xff]
      %v11184 = vld [vmem:[#allocation3 + $0xc0] sm:$0xff]
      %v11185 = vld [vmem:[#allocation3 + $0xc8] sm:$0xff]
      %v11186 = vld [vmem:[#allocation3 + $0xd0] sm:$0xff]
      %v11187 = vld [vmem:[#allocation3 + $0xd8] sm:$0xff]
      %v11188 = vld [vmem:[#allocation3 + $0xe0] sm:$0xff]
      %v11189 = vld [vmem:[#allocation3 + $0xe8] sm:$0xff]
      %v11190 = vld [vmem:[#allocation3 + $0xf0] sm:$0xff]
      %v11191 = vld [vmem:[#allocation3 + $0xf8] sm:$0xff]
      %v11192 = vld [vmem:[#allocation3 + $0x100] sm:$0xff]
      %v11193 = vld [vmem:[#allocation3 + $0x108] sm:$0xff]
      %v11194 = vld [vmem:[#allocation3 + $0x110] sm:$0xff]
      %v11195 = vld [vmem:[#allocation3 + $0x118] sm:$0xff]
      %v11196 = vld [vmem:[#allocation3 + $0x120] sm:$0xff]
      %v11197 = vld [vmem:[#allocation3 + $0x128] sm:$0xff]
      %v11198 = vld [vmem:[#allocation3 + $0x130] sm:$0xff]
      %v11199 = vld [vmem:[#allocation3 + $0x138] sm:$0xff]
      %v11200 = vld [vmem:[#allocation3 + $0x140] sm:$0xff]
      %v11201 = vld [vmem:[#allocation3 + $0x148] sm:$0xff]
      %v11202 = vld [vmem:[#allocation3 + $0x150] sm:$0xff]
      %v11203 = vld [vmem:[#allocation3 + $0x158] sm:$0xff]
      %v11204 = vld [vmem:[#allocation3 + $0x160] sm:$0xff]
      %v11205 = vld [vmem:[#allocation3 + $0x168] sm:$0xff]
      %v11206 = vld [vmem:[#allocation3 + $0x170] sm:$0xff]
      %v11207 = vld [vmem:[#allocation3 + $0x178] sm:$0xff]
      %v11208 = vld [vmem:[#allocation3 + $0x180] sm:$0xff]
      %v11209 = vld [vmem:[#allocation3 + $0x188] sm:$0xff]
      %v11210 = vld [vmem:[#allocation3 + $0x190] sm:$0xff]
      %v11211 = vld [vmem:[#allocation3 + $0x198] sm:$0xff]
      %v11212 = vld [vmem:[#allocation3 + $0x1a0] sm:$0xff]
      %v11213 = vld [vmem:[#allocation3 + $0x1a8] sm:$0xff]
      %v11214 = vld [vmem:[#allocation3 + $0x1b0] sm:$0xff]
      %v11215 = vld [vmem:[#allocation3 + $0x1b8] sm:$0xff]
      %v11216 = vld [vmem:[#allocation3 + $0x1c0] sm:$0xff]
      %v11217 = vld [vmem:[#allocation3 + $0x1c8] sm:$0xff]
      %v11218 = vld [vmem:[#allocation3 + $0x1d0] sm:$0xff]
      %v11219 = vld [vmem:[#allocation3 + $0x1d8] sm:$0xff]
      %v11220 = vld [vmem:[#allocation3 + $0x1e0] sm:$0xff]
      %v11221 = vld [vmem:[#allocation3 + $0x1e8] sm:$0xff]
      %v11222 = vld [vmem:[#allocation3 + $0x1f0] sm:$0xff]
      %v11223 = vld [vmem:[#allocation3 + $0x1f8] sm:$0xff]
      %v11224 = vpack.c.bf16 %v11161, %v11160
      %v11225 = vpack.c.bf16 %v11163, %v11162
      %v11226 = vpack.c.bf16 %v11165, %v11164
      %v11227 = vpack.c.bf16 %v11167, %v11166
      %v11228 = vpack.c.bf16 %v11169, %v11168
      %v11229 = vpack.c.bf16 %v11171, %v11170
      %v11230 = vpack.c.bf16 %v11173, %v11172
      %v11231 = vpack.c.bf16 %v11175, %v11174
      %v11232 = vpack.c.bf16 %v11177, %v11176
      %v11233 = vpack.c.bf16 %v11179, %v11178
      %v11234 = vpack.c.bf16 %v11181, %v11180
      %v11235 = vpack.c.bf16 %v11183, %v11182
      %v11236 = vpack.c.bf16 %v11185, %v11184
      %v11237 = vpack.c.bf16 %v11187, %v11186
      %v11238 = vpack.c.bf16 %v11189, %v11188
      %v11239 = vpack.c.bf16 %v11191, %v11190
      %v11240 = vpack.c.bf16 %v11193, %v11192
      %v11241 = vpack.c.bf16 %v11195, %v11194
      %v11242 = vpack.c.bf16 %v11197, %v11196
      %v11243 = vpack.c.bf16 %v11199, %v11198
      %v11244 = vpack.c.bf16 %v11201, %v11200
      %v11245 = vpack.c.bf16 %v11203, %v11202
      %v11246 = vpack.c.bf16 %v11205, %v11204
      %v11247 = vpack.c.bf16 %v11207, %v11206
      %v11248 = vpack.c.bf16 %v11209, %v11208
      %v11249 = vpack.c.bf16 %v11211, %v11210
      %v11250 = vpack.c.bf16 %v11213, %v11212
      %v11251 = vpack.c.bf16 %v11215, %v11214
      %v11252 = vpack.c.bf16 %v11217, %v11216
      %v11253 = vpack.c.bf16 %v11219, %v11218
      %v11254 = vpack.c.bf16 %v11221, %v11220
      %v11255 = vpack.c.bf16 %v11223, %v11222
      %v11256 = vld [vmem:[%s8] sm:$0xf]
      %v11257 = vld [vmem:[%s8 + $0x4] sm:$0xf]
      %v11258 = vld [vmem:[%s8 + $0x8] sm:$0xf]
      %v11259 = vld [vmem:[%s8 + $0xc] sm:$0xf]
      %v11260 = vld [vmem:[%s9] sm:$0x1]
      %v11262 = vlaneseq
      %v11263 = vshrl.u32 %v11262, 7
      %v11264 = vsub.s32 0, %v11263
      %v11265 = vrot.slane %v11260, %v11264
      %v11271 = vunpack.c.l.b16 %v11256
      %v11272 = vunpack.c.l.b16 %v11257
      %v11273 = vunpack.c.l.b16 %v11258
      %v11274 = vunpack.c.l.b16 %v11259
      %v11275 = vpack.c.b16 %v11272, %v11271
      %v11276 = vpack.c.b16 %v11274, %v11273
      %v11280 = vsel %vm1930, %v11224, 0
      %v11283 = vsel %vm1930, %v11225, 0
      %v11286 = vsel %vm1930, %v11226, 0
      %v11289 = vsel %vm1930, %v11227, 0
      %v11292 = vsel %vm1930, %v11228, 0
      %v11295 = vsel %vm1930, %v11229, 0
      %v11298 = vsel %vm1930, %v11230, 0
      %v11301 = vsel %vm1930, %v11231, 0
      %v11304 = vsel %vm1930, %v11232, 0
      %v11307 = vsel %vm1930, %v11233, 0
      %v11310 = vsel %vm1930, %v11234, 0
      %v11313 = vsel %vm1930, %v11235, 0
      %v11316 = vsel %vm1930, %v11236, 0
      %v11319 = vsel %vm1930, %v11237, 0
      %v11322 = vsel %vm1930, %v11238, 0
      %v11325 = vsel %vm1930, %v11239, 0
      %v11328 = vsel %vm1930, %v11240, 0
      %v11331 = vsel %vm1930, %v11241, 0
      %v11334 = vsel %vm1930, %v11242, 0
      %v11337 = vsel %vm1930, %v11243, 0
      %v11340 = vsel %vm1930, %v11244, 0
      %v11343 = vsel %vm1930, %v11245, 0
      %v11346 = vsel %vm1930, %v11246, 0
      %v11349 = vsel %vm1930, %v11247, 0
      %v11352 = vsel %vm1930, %v11248, 0
      %v11355 = vsel %vm1930, %v11249, 0
      %v11358 = vsel %vm1930, %v11250, 0
      %v11361 = vsel %vm1930, %v11251, 0
      %v11364 = vsel %vm1930, %v11252, 0
      %v11367 = vsel %vm1930, %v11253, 0
      %v11370 = vsel %vm1930, %v11254, 0
      %v11373 = vsel %vm1930, %v11255, 0
      %11375 = vmatprep.subr.bf16.mxu0 0
      %11376 = vmatpush1.bf16.msra.mxu0 %v11275
      %11377 = vmatprep.subr.bf16.mxu0 0
      %11378 = vmatpush1.bf16.msra.mxu0 %v11276
      %11379 = vmatprep.subr.bf16.mxu0 0
      %11380 = vmatpush1.bf16.msra.mxu0 0
      %11381 = vmatprep.subr.bf16.mxu0 0
      %11382 = vmatpush1.bf16.msra.mxu0 0
      %11383 = vmatprep.subr.bf16.mxu0 0
      %11384 = vmatpush1.bf16.msra.mxu0 0
      %11385 = vmatprep.subr.bf16.mxu0 0
      %11386 = vmatpush1.bf16.msra.mxu0 0
      %11387 = vmatprep.subr.bf16.mxu0 0
      %11388 = vmatpush1.bf16.msra.mxu0 0
      %11389 = vmatprep.subr.bf16.mxu0 0
      %11390 = vmatpush1.bf16.msra.mxu0 0
      %11391 = vmatprep.subr.bf16.mxu0 0
      %11392 = vmatpush1.bf16.msra.mxu0 0
      %11393 = vmatprep.subr.bf16.mxu0 0
      %11394 = vmatpush1.bf16.msra.mxu0 0
      %11395 = vmatprep.subr.bf16.mxu0 0
      %11396 = vmatpush1.bf16.msra.mxu0 0
      %11397 = vmatprep.subr.bf16.mxu0 0
      %11398 = vmatpush1.bf16.msra.mxu0 0
      %11399 = vmatprep.subr.bf16.mxu0 0
      %11400 = vmatpush1.bf16.msra.mxu0 0
      %11401 = vmatprep.subr.bf16.mxu0 0
      %11402 = vmatpush1.bf16.msra.mxu0 0
      %11403 = vmatprep.subr.bf16.mxu0 0
      %11404 = vmatpush1.bf16.msra.mxu0 0
      %11405 = vmatprep.subr.bf16.mxu0 0
      %11406 = vmatpush1.bf16.msra.mxu0 0
      %11407 = vmatprep.mubr.bf16.mxu0 0
      %11408 = vmatmul.mubr.bf16.gmra.mrb[0].mxu0 %v11280
      %v11409 = vpop.f32.mrb[0].mxu0
      %v11410 = vadd.f32 %v11265, %v11409
      %v11411 = vpop.f32.mrb[0].mxu0
      %v11412 = vpop.f32.mrb[0].mxu0
      %v11413 = vadd.f32 %v11265, %v11412
      %v11414 = vpop.f32.mrb[0].mxu0
      %11415 = vmatprep.mubr.bf16.mxu0 0
      %11416 = vmatmul.mubr.bf16.gmra.mrb[0].mxu0 %v11283
      %v11417 = vpop.f32.mrb[0].mxu0
      %v11418 = vadd.f32 %v11265, %v11417
      %v11419 = vpop.f32.mrb[0].mxu0
      %v11420 = vpop.f32.mrb[0].mxu0
      %v11421 = vadd.f32 %v11265, %v11420
      %v11422 = vpop.f32.mrb[0].mxu0
      %11423 = vmatprep.mubr.bf16.mxu0 0
      %11424 = vmatmul.mubr.bf16.gmra.mrb[0].mxu0 %v11286
      %v11425 = vpop.f32.mrb[0].mxu0
      %v11426 = vadd.f32 %v11265, %v11425
      %v11427 = vpop.f32.mrb[0].mxu0
      %v11428 = vpop.f32.mrb[0].mxu0
      %v11429 = vadd.f32 %v11265, %v11428
      %v11430 = vpop.f32.mrb[0].mxu0
      %11431 = vmatprep.mubr.bf16.mxu0 0
      %11432 = vmatmul.mubr.bf16.gmra.mrb[0].mxu0 %v11289
      %v11433 = vpop.f32.mrb[0].mxu0
      %v11434 = vadd.f32 %v11265, %v11433
      %v11435 = vpop.f32.mrb[0].mxu0
      %v11436 = vpop.f32.mrb[0].mxu0
      %v11437 = vadd.f32 %v11265, %v11436
      %v11438 = vpop.f32.mrb[0].mxu0
      %11439 = vmatprep.mubr.bf16.mxu0 0
      %11440 = vmatmul.mubr.bf16.gmra.mrb[0].mxu0 %v11292
      %v11441 = vpop.f32.mrb[0].mxu0
      %v11442 = vadd.f32 %v11265, %v11441
      %v11443 = vpop.f32.mrb[0].mxu0
      %v11444 = vpop.f32.mrb[0].mxu0
      %v11445 = vadd.f32 %v11265, %v11444
      %v11446 = vpop.f32.mrb[0].mxu0
      %11447 = vmatprep.mubr.bf16.mxu0 0
      %11448 = vmatmul.mubr.bf16.gmra.mrb[0].mxu0 %v11295
      %v11449 = vpop.f32.mrb[0].mxu0
      %v11450 = vadd.f32 %v11265, %v11449
      %v11451 = vpop.f32.mrb[0].mxu0
      %v11452 = vpop.f32.mrb[0].mxu0
      %v11453 = vadd.f32 %v11265, %v11452
      %v11454 = vpop.f32.mrb[0].mxu0
      %11455 = vmatprep.mubr.bf16.mxu0 0
      %11456 = vmatmul.mubr.bf16.gmra.mrb[0].mxu0 %v11298
      %v11457 = vpop.f32.mrb[0].mxu0
      %v11458 = vadd.f32 %v11265, %v11457
      %v11459 = vpop.f32.mrb[0].mxu0
      %v11460 = vpop.f32.mrb[0].mxu0
      %v11461 = vadd.f32 %v11265, %v11460
      %v11462 = vpop.f32.mrb[0].mxu0
      %11463 = vmatprep.mubr.bf16.mxu0 0
      %11464 = vmatmul.mubr.bf16.gmra.mrb[0].mxu0 %v11301
      %v11465 = vpop.f32.mrb[0].mxu0
      %v11466 = vadd.f32 %v11265, %v11465
      %v11467 = vpop.f32.mrb[0].mxu0
      %v11468 = vpop.f32.mrb[0].mxu0
      %v11469 = vadd.f32 %v11265, %v11468
      %v11470 = vpop.f32.mrb[0].mxu0
      %11471 = vmatprep.mubr.bf16.mxu0 0
      %11472 = vmatmul.mubr.bf16.gmra.mrb[0].mxu0 %v11304
      %v11473 = vpop.f32.mrb[0].mxu0
      %v11474 = vadd.f32 %v11265, %v11473
      %v11475 = vpop.f32.mrb[0].mxu0
      %v11476 = vpop.f32.mrb[0].mxu0
      %v11477 = vadd.f32 %v11265, %v11476
      %v11478 = vpop.f32.mrb[0].mxu0
      %11479 = vmatprep.mubr.bf16.mxu0 0
      %11480 = vmatmul.mubr.bf16.gmra.mrb[0].mxu0 %v11307
      %v11481 = vpop.f32.mrb[0].mxu0
      %v11482 = vadd.f32 %v11265, %v11481
      %v11483 = vpop.f32.mrb[0].mxu0
      %v11484 = vpop.f32.mrb[0].mxu0
      %v11485 = vadd.f32 %v11265, %v11484
      %v11486 = vpop.f32.mrb[0].mxu0
      %11487 = vmatprep.mubr.bf16.mxu0 0
      %11488 = vmatmul.mubr.bf16.gmra.mrb[0].mxu0 %v11310
      %v11489 = vpop.f32.mrb[0].mxu0
      %v11490 = vadd.f32 %v11265, %v11489
      %v11491 = vpop.f32.mrb[0].mxu0
      %v11492 = vpop.f32.mrb[0].mxu0
      %v11493 = vadd.f32 %v11265, %v11492
      %v11494 = vpop.f32.mrb[0].mxu0
      %11495 = vmatprep.mubr.bf16.mxu0 0
      %11496 = vmatmul.mubr.bf16.gmra.mrb[0].mxu0 %v11313
      %v11497 = vpop.f32.mrb[0].mxu0
      %v11498 = vadd.f32 %v11265, %v11497
      %v11499 = vpop.f32.mrb[0].mxu0
      %v11500 = vpop.f32.mrb[0].mxu0
      %v11501 = vadd.f32 %v11265, %v11500
      %v11502 = vpop.f32.mrb[0].mxu0
      %11503 = vmatprep.mubr.bf16.mxu0 0
      %11504 = vmatmul.mubr.bf16.gmra.mrb[0].mxu0 %v11316
      %v11505 = vpop.f32.mrb[0].mxu0
      %v11506 = vadd.f32 %v11265, %v11505
      %v11507 = vpop.f32.mrb[0].mxu0
      %v11508 = vpop.f32.mrb[0].mxu0
      %v11509 = vadd.f32 %v11265, %v11508
      %v11510 = vpop.f32.mrb[0].mxu0
      %11511 = vmatprep.mubr.bf16.mxu0 0
      %11512 = vmatmul.mubr.bf16.gmra.mrb[0].mxu0 %v11319
      %v11513 = vpop.f32.mrb[0].mxu0
      %v11514 = vadd.f32 %v11265, %v11513
      %v11515 = vpop.f32.mrb[0].mxu0
      %v11516 = vpop.f32.mrb[0].mxu0
      %v11517 = vadd.f32 %v11265, %v11516
      %v11518 = vpop.f32.mrb[0].mxu0
      %11519 = vmatprep.mubr.bf16.mxu0 0
      %11520 = vmatmul.mubr.bf16.gmra.mrb[0].mxu0 %v11322
      %v11521 = vpop.f32.mrb[0].mxu0
      %v11522 = vadd.f32 %v11265, %v11521
      %v11523 = vpop.f32.mrb[0].mxu0
      %v11524 = vpop.f32.mrb[0].mxu0
      %v11525 = vadd.f32 %v11265, %v11524
      %v11526 = vpop.f32.mrb[0].mxu0
      %11527 = vmatprep.mubr.bf16.mxu0 0
      %11528 = vmatmul.mubr.bf16.gmra.mrb[0].mxu0 %v11325
      %v11529 = vpop.f32.mrb[0].mxu0
      %v11530 = vadd.f32 %v11265, %v11529
      %v11531 = vpop.f32.mrb[0].mxu0
      %v11532 = vpop.f32.mrb[0].mxu0
      %v11533 = vadd.f32 %v11265, %v11532
      %v11534 = vpop.f32.mrb[0].mxu0
      %11535 = vmatprep.mubr.bf16.mxu0 0
      %11536 = vmatmul.mubr.bf16.gmra.mrb[0].mxu0 %v11328
      %v11537 = vpop.f32.mrb[0].mxu0
      %v11538 = vadd.f32 %v11265, %v11537
      %v11539 = vpop.f32.mrb[0].mxu0
      %v11540 = vpop.f32.mrb[0].mxu0
      %v11541 = vadd.f32 %v11265, %v11540
      %v11542 = vpop.f32.mrb[0].mxu0
      %11543 = vmatprep.mubr.bf16.mxu0 0
      %11544 = vmatmul.mubr.bf16.gmra.mrb[0].mxu0 %v11331
      %v11545 = vpop.f32.mrb[0].mxu0
      %v11546 = vadd.f32 %v11265, %v11545
      %v11547 = vpop.f32.mrb[0].mxu0
      %v11548 = vpop.f32.mrb[0].mxu0
      %v11549 = vadd.f32 %v11265, %v11548
      %v11550 = vpop.f32.mrb[0].mxu0
      %11551 = vmatprep.mubr.bf16.mxu0 0
      %11552 = vmatmul.mubr.bf16.gmra.mrb[0].mxu0 %v11334
      %v11553 = vpop.f32.mrb[0].mxu0
      %v11554 = vadd.f32 %v11265, %v11553
      %v11555 = vpop.f32.mrb[0].mxu0
      %v11556 = vpop.f32.mrb[0].mxu0
      %v11557 = vadd.f32 %v11265, %v11556
      %v11558 = vpop.f32.mrb[0].mxu0
      %11559 = vmatprep.mubr.bf16.mxu0 0
      %11560 = vmatmul.mubr.bf16.gmra.mrb[0].mxu0 %v11337
      %v11561 = vpop.f32.mrb[0].mxu0
      %v11562 = vadd.f32 %v11265, %v11561
      %v11563 = vpop.f32.mrb[0].mxu0
      %v11564 = vpop.f32.mrb[0].mxu0
      %v11565 = vadd.f32 %v11265, %v11564
      %v11566 = vpop.f32.mrb[0].mxu0
      %11567 = vmatprep.mubr.bf16.mxu0 0
      %11568 = vmatmul.mubr.bf16.gmra.mrb[0].mxu0 %v11340
      %v11569 = vpop.f32.mrb[0].mxu0
      %v11570 = vadd.f32 %v11265, %v11569
      %v11571 = vpop.f32.mrb[0].mxu0
      %v11572 = vpop.f32.mrb[0].mxu0
      %v11573 = vadd.f32 %v11265, %v11572
      %v11574 = vpop.f32.mrb[0].mxu0
      %11575 = vmatprep.mubr.bf16.mxu0 0
      %11576 = vmatmul.mubr.bf16.gmra.mrb[0].mxu0 %v11343
      %v11577 = vpop.f32.mrb[0].mxu0
      %v11578 = vadd.f32 %v11265, %v11577
      %v11579 = vpop.f32.mrb[0].mxu0
      %v11580 = vpop.f32.mrb[0].mxu0
      %v11581 = vadd.f32 %v11265, %v11580
      %v11582 = vpop.f32.mrb[0].mxu0
      %11583 = vmatprep.mubr.bf16.mxu0 0
      %11584 = vmatmul.mubr.bf16.gmra.mrb[0].mxu0 %v11346
      %v11585 = vpop.f32.mrb[0].mxu0
      %v11586 = vadd.f32 %v11265, %v11585
      %v11587 = vpop.f32.mrb[0].mxu0
      %v11588 = vpop.f32.mrb[0].mxu0
      %v11589 = vadd.f32 %v11265, %v11588
      %v11590 = vpop.f32.mrb[0].mxu0
      %11591 = vmatprep.mubr.bf16.mxu0 0
      %11592 = vmatmul.mubr.bf16.gmra.mrb[0].mxu0 %v11349
      %v11593 = vpop.f32.mrb[0].mxu0
      %v11594 = vadd.f32 %v11265, %v11593
      %v11595 = vpop.f32.mrb[0].mxu0
      %v11596 = vpop.f32.mrb[0].mxu0
      %v11597 = vadd.f32 %v11265, %v11596
      %v11598 = vpop.f32.mrb[0].mxu0
      %11599 = vmatprep.mubr.bf16.mxu0 0
      %11600 = vmatmul.mubr.bf16.gmra.mrb[0].mxu0 %v11352
      %v11601 = vpop.f32.mrb[0].mxu0
      %v11602 = vadd.f32 %v11265, %v11601
      %v11603 = vpop.f32.mrb[0].mxu0
      %v11604 = vpop.f32.mrb[0].mxu0
      %v11605 = vadd.f32 %v11265, %v11604
      %v11606 = vpop.f32.mrb[0].mxu0
      %11607 = vmatprep.mubr.bf16.mxu0 0
      %11608 = vmatmul.mubr.bf16.gmra.mrb[0].mxu0 %v11355
      %v11609 = vpop.f32.mrb[0].mxu0
      %v11610 = vadd.f32 %v11265, %v11609
      %v11611 = vpop.f32.mrb[0].mxu0
      %v11612 = vpop.f32.mrb[0].mxu0
      %v11613 = vadd.f32 %v11265, %v11612
      %v11614 = vpop.f32.mrb[0].mxu0
      %11615 = vmatprep.mubr.bf16.mxu0 0
      %11616 = vmatmul.mubr.bf16.gmra.mrb[0].mxu0 %v11358
      %v11617 = vpop.f32.mrb[0].mxu0
      %v11618 = vadd.f32 %v11265, %v11617
      %v11619 = vpop.f32.mrb[0].mxu0
      %v11620 = vpop.f32.mrb[0].mxu0
      %v11621 = vadd.f32 %v11265, %v11620
      %v11622 = vpop.f32.mrb[0].mxu0
      %11623 = vmatprep.mubr.bf16.mxu0 0
      %11624 = vmatmul.mubr.bf16.gmra.mrb[0].mxu0 %v11361
      %v11625 = vpop.f32.mrb[0].mxu0
      %v11626 = vadd.f32 %v11265, %v11625
      %v11627 = vpop.f32.mrb[0].mxu0
      %v11628 = vpop.f32.mrb[0].mxu0
      %v11629 = vadd.f32 %v11265, %v11628
      %v11630 = vpop.f32.mrb[0].mxu0
      %11631 = vmatprep.mubr.bf16.mxu0 0
      %11632 = vmatmul.mubr.bf16.gmra.mrb[0].mxu0 %v11364
      %v11633 = vpop.f32.mrb[0].mxu0
      %v11634 = vadd.f32 %v11265, %v11633
      %v11635 = vpop.f32.mrb[0].mxu0
      %v11636 = vpop.f32.mrb[0].mxu0
      %v11637 = vadd.f32 %v11265, %v11636
      %v11638 = vpop.f32.mrb[0].mxu0
      %11639 = vmatprep.mubr.bf16.mxu0 0
      %11640 = vmatmul.mubr.bf16.gmra.mrb[0].mxu0 %v11367
      %v11641 = vpop.f32.mrb[0].mxu0
      %v11642 = vadd.f32 %v11265, %v11641
      %v11643 = vpop.f32.mrb[0].mxu0
      %v11644 = vpop.f32.mrb[0].mxu0
      %v11645 = vadd.f32 %v11265, %v11644
      %v11646 = vpop.f32.mrb[0].mxu0
      %11647 = vmatprep.mubr.bf16.mxu0 0
      %11648 = vmatmul.mubr.bf16.gmra.mrb[0].mxu0 %v11370
      %v11649 = vpop.f32.mrb[0].mxu0
      %v11650 = vadd.f32 %v11265, %v11649
      %v11651 = vpop.f32.mrb[0].mxu0
      %v11652 = vpop.f32.mrb[0].mxu0
      %v11653 = vadd.f32 %v11265, %v11652
      %v11654 = vpop.f32.mrb[0].mxu0
      %11655 = vmatprep.mubr.bf16.mxu0 0
      %11656 = vmatmul.mubr.bf16.gmra.mrb[0].mxu0 %v11373
      %v11657 = vpop.f32.mrb[0].mxu0
      %v11658 = vadd.f32 %v11265, %v11657
      %v11659 = vpop.f32.mrb[0].mxu0
      %v11660 = vpop.f32.mrb[0].mxu0
      %v11661 = vadd.f32 %v11265, %v11660
      %v11662 = vpop.f32.mrb[0].mxu0
      %11663 = vdwg.mxu0
      %11664 = vst.msk [vmem:[%s422] sm:$0xff] %vm1930, %v11410
      %11665 = vst.msk [vmem:[%s422 + $0x8] sm:$0xff] %vm1930, %v11413
      %11666 = vst.msk [vmem:[%s422 + $0x10] sm:$0xff] %vm1930, %v11418
      %11667 = vst.msk [vmem:[%s422 + $0x18] sm:$0xff] %vm1930, %v11421
      %11668 = vst.msk [vmem:[%s422 + $0x20] sm:$0xff] %vm1930, %v11426
      %11669 = vst.msk [vmem:[%s422 + $0x28] sm:$0xff] %vm1930, %v11429
      %11670 = vst.msk [vmem:[%s422 + $0x30] sm:$0xff] %vm1930, %v11434
      %11671 = vst.msk [vmem:[%s422 + $0x38] sm:$0xff] %vm1930, %v11437
      %11672 = vst.msk [vmem:[%s422 + $0x40] sm:$0xff] %vm1930, %v11442
      %11673 = vst.msk [vmem:[%s422 + $0x48] sm:$0xff] %vm1930, %v11445
      %11674 = vst.msk [vmem:[%s422 + $0x50] sm:$0xff] %vm1930, %v11450
      %11675 = vst.msk [vmem:[%s422 + $0x58] sm:$0xff] %vm1930, %v11453
      %11676 = vst.msk [vmem:[%s422 + $0x60] sm:$0xff] %vm1930, %v11458
      %11677 = vst.msk [vmem:[%s422 + $0x68] sm:$0xff] %vm1930, %v11461
      %11678 = vst.msk [vmem:[%s422 + $0x70] sm:$0xff] %vm1930, %v11466
      %11679 = vst.msk [vmem:[%s422 + $0x78] sm:$0xff] %vm1930, %v11469
      %11680 = vst.msk [vmem:[%s422 + $0x80] sm:$0xff] %vm1930, %v11474
      %11681 = vst.msk [vmem:[%s422 + $0x88] sm:$0xff] %vm1930, %v11477
      %11682 = vst.msk [vmem:[%s422 + $0x90] sm:$0xff] %vm1930, %v11482
      %11683 = vst.msk [vmem:[%s422 + $0x98] sm:$0xff] %vm1930, %v11485
      %11684 = vst.msk [vmem:[%s422 + $0xa0] sm:$0xff] %vm1930, %v11490
      %11685 = vst.msk [vmem:[%s422 + $0xa8] sm:$0xff] %vm1930, %v11493
      %11686 = vst.msk [vmem:[%s422 + $0xb0] sm:$0xff] %vm1930, %v11498
      %11687 = vst.msk [vmem:[%s422 + $0xb8] sm:$0xff] %vm1930, %v11501
      %11688 = vst.msk [vmem:[%s422 + $0xc0] sm:$0xff] %vm1930, %v11506
      %11689 = vst.msk [vmem:[%s422 + $0xc8] sm:$0xff] %vm1930, %v11509
      %11690 = vst.msk [vmem:[%s422 + $0xd0] sm:$0xff] %vm1930, %v11514
      %11691 = vst.msk [vmem:[%s422 + $0xd8] sm:$0xff] %vm1930, %v11517
      %11692 = vst.msk [vmem:[%s422 + $0xe0] sm:$0xff] %vm1930, %v11522
      %11693 = vst.msk [vmem:[%s422 + $0xe8] sm:$0xff] %vm1930, %v11525
      %11694 = vst.msk [vmem:[%s422 + $0xf0] sm:$0xff] %vm1930, %v11530
      %11695 = vst.msk [vmem:[%s422 + $0xf8] sm:$0xff] %vm1930, %v11533
      %11696 = vst.msk [vmem:[%s422 + $0x100] sm:$0xff] %vm1930, %v11538
      %11697 = vst.msk [vmem:[%s422 + $0x108] sm:$0xff] %vm1930, %v11541
      %11698 = vst.msk [vmem:[%s422 + $0x110] sm:$0xff] %vm1930, %v11546
      %11699 = vst.msk [vmem:[%s422 + $0x118] sm:$0xff] %vm1930, %v11549
      %11700 = vst.msk [vmem:[%s422 + $0x120] sm:$0xff] %vm1930, %v11554
      %11701 = vst.msk [vmem:[%s422 + $0x128] sm:$0xff] %vm1930, %v11557
      %11702 = vst.msk [vmem:[%s422 + $0x130] sm:$0xff] %vm1930, %v11562
      %11703 = vst.msk [vmem:[%s422 + $0x138] sm:$0xff] %vm1930, %v11565
      %11704 = vst.msk [vmem:[%s422 + $0x140] sm:$0xff] %vm1930, %v11570
      %11705 = vst.msk [vmem:[%s422 + $0x148] sm:$0xff] %vm1930, %v11573
      %11706 = vst.msk [vmem:[%s422 + $0x150] sm:$0xff] %vm1930, %v11578
      %11707 = vst.msk [vmem:[%s422 + $0x158] sm:$0xff] %vm1930, %v11581
      %11708 = vst.msk [vmem:[%s422 + $0x160] sm:$0xff] %vm1930, %v11586
      %11709 = vst.msk [vmem:[%s422 + $0x168] sm:$0xff] %vm1930, %v11589
      %11710 = vst.msk [vmem:[%s422 + $0x170] sm:$0xff] %vm1930, %v11594
      %11711 = vst.msk [vmem:[%s422 + $0x178] sm:$0xff] %vm1930, %v11597
      %11712 = vst.msk [vmem:[%s422 + $0x180] sm:$0xff] %vm1930, %v11602
      %11713 = vst.msk [vmem:[%s422 + $0x188] sm:$0xff] %vm1930, %v11605
      %11714 = vst.msk [vmem:[%s422 + $0x190] sm:$0xff] %vm1930, %v11610
      %11715 = vst.msk [vmem:[%s422 + $0x198] sm:$0xff] %vm1930, %v11613
      %11716 = vst.msk [vmem:[%s422 + $0x1a0] sm:$0xff] %vm1930, %v11618
      %11717 = vst.msk [vmem:[%s422 + $0x1a8] sm:$0xff] %vm1930, %v11621
      %11718 = vst.msk [vmem:[%s422 + $0x1b0] sm:$0xff] %vm1930, %v11626
      %11719 = vst.msk [vmem:[%s422 + $0x1b8] sm:$0xff] %vm1930, %v11629
      %11720 = vst.msk [vmem:[%s422 + $0x1c0] sm:$0xff] %vm1930, %v11634
      %11721 = vst.msk [vmem:[%s422 + $0x1c8] sm:$0xff] %vm1930, %v11637
      %11722 = vst.msk [vmem:[%s422 + $0x1d0] sm:$0xff] %vm1930, %v11642
      %11723 = vst.msk [vmem:[%s422 + $0x1d8] sm:$0xff] %vm1930, %v11645
      %11724 = vst.msk [vmem:[%s422 + $0x1e0] sm:$0xff] %vm1930, %v11650
      %11725 = vst.msk [vmem:[%s422 + $0x1e8] sm:$0xff] %vm1930, %v11653
      %11726 = vst.msk [vmem:[%s422 + $0x1f0] sm:$0xff] %vm1930, %v11658
      %11727 = vst.msk [vmem:[%s422 + $0x1f8] sm:$0xff] %vm1930, %v11661
      %s11728 = smul.u32 64, %s26
      %p11729 = scmp.lt.s32.totalorder %s25, 1
      %s11730 = scalar_select %p11729, %s25, 1
      %p11731 = scmp.lt.s32.totalorder %s11728, 127
      %s11732 = scalar_select %p11731, %s11728, 127
      %s11733 = smul.addr %s11730, 128
      %s11734 = sadd.s32 %s11732, %s11733
      %s11735 = smul.addr %s11734, 8
      %s11736 = scalar_lea.vmem %s10, %s11735
      // Predicated region
      $region65: #{tpu_custom_call.1} parent=59 // pred_check
        %p11737 = pneg %p275
      $region66: #{tpu_custom_call.1} parent=59 // pred_check_branch
        %11739 = sbr.rel (%p11737) target = $region68
      $region67: #{tpu_custom_call.1} parent=59 // pred_region
        %s11740 = smul.u32 64, %s26
      $region68: #{tpu_custom_call.1} parent=59 // pred_fallthru
        _
    $region60: #{tpu_custom_call.1} parent=5 // pred_fallthru
      _
    %p11741 = scmp.le.s32.totalorder 2, %s16
    // Predicated region
    $region69: #{tpu_custom_call.1} parent=5 // pred_check
      %p11742 = pneg %p11741
    $region70: #{tpu_custom_call.1} parent=5 // pred_check_branch
      %11744 = sbr.rel (%p11742) target = $region72
    $region71: #{tpu_custom_call.1} parent=5 // pred_region
      %s11745 = ssub.s32 %s16, 2
      // Predicated region
      $region73: #{tpu_custom_call.1} parent=71 // pred_check
        %p11746 = pneg %p281
      $region74: #{tpu_custom_call.1} parent=71 // pred_check_branch
        %11748 = sbr.rel (%p11746) target = $region76
      $region75: #{tpu_custom_call.1} parent=71 // pred_region
        %s11749 = smul.u32 64, %s28
        %p11750 = scmp.lt.s32.totalorder %s27, 1
        %s11751 = scalar_select %p11750, %s27, 1
        %p11752 = scmp.lt.s32.totalorder %s11749, 127
        %s11753 = scalar_select %p11752, %s11749, 127
        %s11754 = smul.addr %s11751, 128
        %s11755 = sadd.s32 %s11753, %s11754
        %s11756 = smul.addr %s11755, 8
        %s11757 = scalar_lea.vmem %s10, %s11756
      $region76: #{tpu_custom_call.1} parent=71 // pred_fallthru
        _
    $region72: #{tpu_custom_call.1} parent=5 // pred_fallthru
      _
  $region6: #{tpu_custom_call.1} parent=0 // loop_footer
    %s20 = sadd.s32 1, %s16
  $region7: #{tpu_custom_call.1} parent=0 // loop_footer_branch
    %15 = sbr.rel target = $region3
  $region8: #{tpu_custom_call.1} parent=0 // loop_exit
    _

</llo_original>
